<compile_context>
chip_gen: v5e
topology: v5e:2x2
jax: 0.10.0
libtpu: 0.0.40
codegen_flags: <defaults>
</compile_context>

<pallas_src>
import functools

import jax
import jax.numpy as jnp
from jax.experimental import pallas as pl
from jax.experimental.pallas import tpu as pltpu


# ----------------------------- fused draw kernel ---------------------------

def _draw_kernel(
    # inputs
    eps_ref, w_prior_ref, b_prior_ref, w_inf_ref, bias_inf_ref,
    w_post_ref, b_post_ref, w_gen_ref, bias_gen_ref, w_upobs_ref, b_obs_ref,
    # outputs
    x_out_ref, kl_ref,
    # scratch
    pad_h_ref, pad_z_ref, slab_h_ref, slab_z_ref, cell_i_ref, cell_g_ref,
    *, hs, ws, z_dim, h_dim, pad,
):
    l = pl.program_id(1)
    m = hs * ws

    # Per-column (x coordinate) validity masks for SAME zero-padding in x,
    # generated in-kernel (no DMA'd mask array).
    col = jax.lax.broadcasted_iota(jnp.int32, (m, 1), 0) % ws
    xmask = {-2: col >= 2, -1: col >= 1, 1: col < ws - 1, 2: col < ws - 2}

    def build_slab(src_ref, slab_ref, cin):
        """im2col: pack 25 shifted (m, cin) bf16 patches along the contraction
        dim so every 5x5 SAME conv is ONE long-K MXU matmul.  y zero-padding
        comes from the zero halo rows of src_ref; x zero-padding from the
        narrow per-dx masks applied to each (m, cin) copy."""
        for dy in range(5):
            for dx in range(5):
                s = (dy - 2) * ws + (dx - 2)
                patch = src_ref[pad + s: pad + s + m, :]
                off = dx - 2
                if off != 0:
                    patch = jnp.where(xmask[off], patch, jnp.zeros_like(patch))
                t = dy * 5 + dx
                slab_ref[:, t * cin:(t + 1) * cin] = patch

    def conv_lstm(slab_ref, w_ref, bias_ref, cell_ref):
        """Conv2dLSTM update with per-gate streaming: each gate is its own
        (m, 25*cin) x (25*cin, h) matmul fused with its activation, so the
        live accumulator never exceeds (m, h).  Gate order: f, i, o, s."""
        def gate(k, act):
            g = jnp.dot(slab_ref[...], w_ref[k],
                        preferred_element_type=jnp.float32) + bias_ref[0, k]
            return act(g)
        f = gate(0, jax.nn.sigmoid)
        i = gate(1, jax.nn.sigmoid)
        s = gate(3, jnp.tanh)
        c = f * cell_ref[...] + i * s
        cell_ref[...] = c
        o = gate(2, jax.nn.sigmoid)
        return o * jnp.tanh(c)

    @pl.when(l == 0)
    def _init():
        pad_h_ref[...] = jnp.zeros_like(pad_h_ref)
        pad_z_ref[...] = jnp.zeros_like(pad_z_ref)
        cell_i_ref[...] = jnp.zeros_like(cell_i_ref)
        cell_g_ref[...] = jnp.zeros_like(cell_g_ref)
        x_out_ref[...] = jnp.zeros_like(x_out_ref)
        kl_ref[...] = jnp.zeros_like(kl_ref)

    # ---- shared im2col slab over the current hidden_g ----------------------
    build_slab(pad_h_ref, slab_h_ref, h_dim)

    # prior density (5x5 conv over hidden_g)
    p_raw = jnp.dot(slab_h_ref[...], w_prior_ref[...],
                    preferred_element_type=jnp.float32) + b_prior_ref[...]
    p_mu = p_raw[:, :z_dim]
    p_std = jax.nn.softplus(p_raw[:, z_dim:]) + 1e-6

    # inference Conv2dLSTM (x / v / r channels are pre-folded into bias_inf)
    hidden_i = conv_lstm(slab_h_ref, w_inf_ref, bias_inf_ref, cell_i_ref)

    # posterior density (5x5 conv over hidden_i) -- reuse pad / slab buffers
    pad_h_ref[pad:pad + m, :] = hidden_i.astype(pad_h_ref.dtype)
    build_slab(pad_h_ref, slab_h_ref, h_dim)
    q_raw = jnp.dot(slab_h_ref[...], w_post_ref[...],
                    preferred_element_type=jnp.float32) + b_post_ref[...]
    q_mu = q_raw[:, :z_dim]
    q_std = jax.nn.softplus(q_raw[:, z_dim:]) + 1e-6

    # reparameterised sample + KL(q || p), accumulated into the resident output
    z = q_mu + q_std * eps_ref[0]
    inv_p = pl.reciprocal(p_std, approx=True)
    inv_q = pl.reciprocal(q_std, approx=True)
    d = q_mu - p_mu
    kl_ref[0] = kl_ref[0] + (jnp.log(p_std * inv_q)
                             + 0.5 * (q_std * q_std + d * d) * (inv_p * inv_p)
                             - 0.5)

    # generator Conv2dLSTM over z (v / r pre-folded into bias_gen)
    pad_z_ref[pad:pad + m, :] = z.astype(pad_z_ref.dtype)
    build_slab(pad_z_ref, slab_z_ref, z_dim)
    h_g = conv_lstm(slab_z_ref, w_gen_ref, bias_gen_ref, cell_g_ref)
    h_g = h_g.astype(jnp.bfloat16)
    # h_g becomes next step's hidden_g: written straight into the conv buffer
    pad_h_ref[pad:pad + m, :] = h_g

    # fused upsample (convT SxS stride S) + 1x1 obs conv; 128-lane-padded cout
    x_out_ref[0] = x_out_ref[0] + jnp.dot(h_g, w_upobs_ref[...],
                                          preferred_element_type=jnp.float32)

    @pl.when(l == pl.num_programs(1) - 1)
    def _finish():
        x_out_ref[0] = jax.nn.sigmoid(x_out_ref[0] + b_obs_ref[...])


# ----------------------------- loop-invariant prep (plain JAX) -------------

def _vr_bias_map(vr, w_vr, hs, ws):
    """Exact, hoisted contribution of the spatially-constant [v; r] channels to
    a SAME 5x5 zero-padded conv (boundary taps excluded).  -> (N, hs*ws, F)."""
    per_tap = jnp.einsum('nc,abcf->nabf', vr, w_vr)                    # (N,5,5,F)
    dy = jnp.arange(5)[:, None, None, None]
    dx = jnp.arange(5)[None, :, None, None]
    ii = jnp.arange(hs)[None, None, :, None]
    jj = jnp.arange(ws)[None, None, None, :]
    ok = ((ii + dy - 2 >= 0) & (ii + dy - 2 < hs)
          & (jj + dx - 2 >= 0) & (jj + dx - 2 < ws)).astype(vr.dtype)  # (5,5,hs,ws)
    out = jnp.einsum('nabf,abij->nijf', per_tap, ok)                   # (N,hs,ws,F)
    return out.reshape(vr.shape[0], hs * ws, -1)


def _vmem_limit_bytes():
    """Derive the scoped-VMEM limit from the actual generation (v7x only has
    64 MiB per TensorCore) instead of hard-coding; safe fallback otherwise."""
    try:
        cap = int(pltpu.get_tpu_info().vmem_capacity_bytes)
        return max(32 * 1024 * 1024, min(cap - 8 * 1024 * 1024, 100 * 1024 * 1024))
    except Exception:
        return 48 * 1024 * 1024


def init_params(key, x_dim, v_dim, r_dim, z_dim, h_dim, scale):
    ks = jax.random.split(key, 8)
    s = 0.05
    c_inf = h_dim + x_dim + v_dim + r_dim     # concat order: [hidden_g, x, v, r]
    c_gen = z_dim + v_dim + r_dim             # concat order: [z, v, r]
    f32 = jnp.float32
    return dict(
        w_inf=(jax.random.normal(ks[0], (5, 5, c_inf, 4 * h_dim)) * s).astype(f32),
        b_inf=jnp.zeros((4 * h_dim,), f32),
        w_gen=(jax.random.normal(ks[1], (5, 5, c_gen, 4 * h_dim)) * s).astype(f32),
        b_gen=jnp.zeros((4 * h_dim,), f32),
        w_prior=(jax.random.normal(ks[2], (5, 5, h_dim, 2 * z_dim)) * s).astype(f32),
        b_prior=jnp.zeros((2 * z_dim,), f32),
        w_post=(jax.random.normal(ks[3], (5, 5, h_dim, 2 * z_dim)) * s).astype(f32),
        b_post=jnp.zeros((2 * z_dim,), f32),
        w_obs=(jax.random.normal(ks[4], (h_dim, x_dim)) * s).astype(f32),
        b_obs=jnp.zeros((x_dim,), f32),
        # ConvTranspose2d(h, h, k=S, s=S, no bias): (Cin, S*S*Cout), order (di,dj,co)
        w_up=(jax.random.normal(ks[5], (h_dim, scale * scale * h_dim)) * s).astype(f32),
        # Conv2d(x, x, k=S, s=S, no bias): (S*S*Cin, Cout), row order (di,dj,ci)
        w_down=(jax.random.normal(ks[6], (scale * scale * x_dim, x_dim)) * s).astype(f32),
    )


def generator_forward(params, x, v, r, key, *, z_dim, h_dim, L, scale):
    """x: (N, H, W, x_dim) NHWC; v: (N, v_dim); r: (N, r_dim) (1x1 representation)."""
    N, H, W, x_dim = x.shape
    S = scale
    Hs, Ws = H // S, W // S
    M = Hs * Ws
    PAD = ((2 * Ws + 2 + 15) // 16) * 16          # sublane-aligned zero halo rows
    obs_w = ((S * S * x_dim + 127) // 128) * 128  # 128-lane-padded obs cout
    f32, bf16 = jnp.float32, jnp.bfloat16

    # ---- one-time (loop-invariant) precompute / weight repacking -----------
    # stride-S downsample (Conv2d k=S s=S, no bias) as a blocked matmul
    x_blk = (x.reshape(N, Hs, S, Ws, S, x_dim)
             .transpose(0, 1, 3, 2, 4, 5)
             .reshape(N, M, S * S * x_dim))
    x_ds = jnp.einsum('nmk,kc->nmc', x_blk, params['w_down'])          # (N, M, x)

    w_inf, w_gen = params['w_inf'], params['w_gen']
    n_sp = h_dim + x_dim                          # [hidden_g | x] channel span
    vr = jnp.concatenate([v, r], axis=-1)

    # x_ds never changes across L -> hoist its 5x5-conv contribution (through
    # the x channels of w_inf) out of the kernel and fold it into the per-batch
    # inference bias map, exactly like the spatially-constant v/r channels.
    x_contrib = jax.lax.conv_general_dilated(
        x_ds.reshape(N, Hs, Ws, x_dim), w_inf[:, :, h_dim:n_sp, :],
        window_strides=(1, 1), padding='SAME',
        dimension_numbers=('NHWC', 'HWIO', 'NHWC')).reshape(N, M, 4 * h_dim)

    bias_inf = (_vr_bias_map(vr, w_inf[:, :, n_sp:, :], Hs, Ws)
                + x_contrib + params['b_inf'])
    bias_gen = (_vr_bias_map(vr, w_gen[:, :, z_dim:, :], Hs, Ws)
                + params['b_gen'])
    # (N, M, 4h) -> (N, 4, M, h): clean per-gate indexing inside the kernel
    bias_inf = bias_inf.reshape(N, M, 4, h_dim).transpose(0, 2, 1, 3).astype(f32)
    bias_gen = bias_gen.reshape(N, M, 4, h_dim).transpose(0, 2, 1, 3).astype(f32)

    # weight repacking into im2col layout: row order (dy*5+dx)*cin + c
    def pack(w):                 # (5,5,cin,cout) -> (25*cin, cout)
        return w.reshape(25 * w.shape[2], w.shape[3]).astype(bf16)

    def pack_gates(w):           # (5,5,cin,4h)   -> (4, 25*cin, h)
        cin = w.shape[2]
        return w.reshape(25 * cin, 4, h_dim).transpose(1, 0, 2).astype(bf16)

    w_prior_pk = pack(params['w_prior'])
    w_post_pk = pack(params['w_post'])
    w_inf_pk = pack_gates(w_inf[:, :, :h_dim, :])    # hidden_g channels only
    w_gen_pk = pack_gates(w_gen[:, :, :z_dim, :])    # z channels only

    # fold upsample (convT SxS stride S, no bias) + 1x1 observation conv into
    # one (h, obs_w) matrix (both linear, so exact); pad cout to 128 lanes so
    # the per-step output accumulation uses unmasked stores.
    w_up = params['w_up'].reshape(h_dim, S, S, h_dim)
    w_upobs = jnp.einsum('cdeh,ho->cdeo', w_up, params['w_obs']).reshape(
        h_dim, S * S * x_dim)
    w_upobs = jnp.pad(w_upobs, ((0, 0), (0, obs_w - S * S * x_dim))).astype(bf16)
    b_obs = jnp.pad(jnp.tile(params['b_obs'], S * S),
                    (0, obs_w - S * S * x_dim)).reshape(1, obs_w).astype(f32)

    b_prior2 = params['b_prior'].reshape(1, 2 * z_dim).astype(f32)
    b_post2 = params['b_post'].reshape(1, 2 * z_dim).astype(f32)

    # TODO(synk): eps could be generated in-kernel (pltpu.prng_seed +
    # stateful_normal) to drop the only per-step HBM stream; kept as a
    # jax.random input so the noise stays host-controlled / reproducible.
    eps = jax.random.normal(key, (N * L, M, z_dim), f32)

    kernel = functools.partial(_draw_kernel, hs=Hs, ws=Ws, z_dim=z_dim,
                               h_dim=h_dim, pad=PAD)

    const2 = lambda b, l: (0, 0)
    const3 = lambda b, l: (0, 0, 0)
    per_b3 = lambda b, l: (b, 0, 0)
    per_b4 = lambda b, l: (b, 0, 0, 0)

    # TODO(synk): the constant-index weight/bias specs below could be
    # single-buffered (pipeline_mode=pl.Buffered(1)) to save VMEM on v7x once
    # that knob is reliably available for pallas_call BlockSpecs.
    x_out, kl = pl.pallas_call(
        kernel,
        out_shape=(
            jax.ShapeDtypeStruct((N, M, obs_w), f32),
            jax.ShapeDtypeStruct((N, M, z_dim), f32),
        ),
        grid=(N, L),
        in_specs=[
            pl.BlockSpec((1, M, z_dim), lambda b, l: (b * L + l, 0, 0)),   # eps
            pl.BlockSpec((25 * h_dim, 2 * z_dim), const2),                 # w_prior
            pl.BlockSpec((1, 2 * z_dim), const2),                          # b_prior
            pl.BlockSpec((4, 25 * h_dim, h_dim), const3),                  # w_inf gates
            pl.BlockSpec((1, 4, M, h_dim), per_b4),                        # bias_inf map
            pl.BlockSpec((25 * h_dim, 2 * z_dim), const2),                 # w_post
            pl.BlockSpec((1, 2 * z_dim), const2),                          # b_post
            pl.BlockSpec((4, 25 * z_dim, h_dim), const3),                  # w_gen gates
            pl.BlockSpec((1, 4, M, h_dim), per_b4),                        # bias_gen map
            pl.BlockSpec((h_dim, obs_w), const2),                          # w_up @ w_obs
            pl.BlockSpec((1, obs_w), const2),                              # b_obs (tiled)
        ],
        out_specs=(
            pl.BlockSpec((1, M, obs_w), per_b3),
            pl.BlockSpec((1, M, z_dim), per_b3),
        ),
        scratch_shapes=[
            pltpu.VMEM((M + 2 * PAD, h_dim), bf16),   # padded hidden_g / hidden_i
            pltpu.VMEM((M + 2 * PAD, z_dim), bf16),   # padded z
            pltpu.VMEM((M, 25 * h_dim), bf16),        # im2col slab (hidden convs)
            pltpu.VMEM((M, 25 * z_dim), bf16),        # im2col slab (z conv)
            pltpu.VMEM((M, h_dim), f32),              # cell_i
            pltpu.VMEM((M, h_dim), f32),              # cell_g
        ],
        # TODO(synk): on v7x the batch axis should use CORE_PARALLEL so both
        # TensorCores are used; kept "parallel" here for cross-gen portability.
        compiler_params=pltpu.CompilerParams(
            dimension_semantics=("parallel", "arbitrary"),
            vmem_limit_bytes=_vmem_limit_bytes(),
        ),
    )(eps, w_prior_pk, b_prior2, w_inf_pk, bias_inf,
      w_post_pk, b_post2, w_gen_pk, bias_gen, w_upobs, b_obs)

    x_recon = (x_out[:, :, :S * S * x_dim]
               .reshape(N, Hs, Ws, S, S, x_dim)
               .transpose(0, 1, 3, 2, 4, 5)
               .reshape(N, H, W, x_dim))
    return x_recon, kl.reshape(N, Hs, Ws, z_dim)


# ----------------------------- demo ----------------------------------------

if __name__ == "__main__":
    N, H, W = 2, 16, 16
    x_dim, v_dim, r_dim = 3, 7, 8
    z_dim, h_dim, L, SCALE = 8, 32, 3, 4

    key = jax.random.PRNGKey(0)
    k_p, k_x, k_v, k_r, k_eps = jax.random.split(key, 5)

    params = init_params(k_p, x_dim, v_dim, r_dim, z_dim, h_dim, SCALE)
    x = jax.random.uniform(k_x, (N, H, W, x_dim), jnp.float32)
    v = jax.random.normal(k_v, (N, v_dim), jnp.float32)
    r = jax.random.normal(k_r, (N, r_dim), jnp.float32)   # 1x1 representation, broadcast

    fwd = jax.jit(
        functools.partial(generator_forward, z_dim=z_dim, h_dim=h_dim, L=L, scale=SCALE)
    )
    x_recon, kl = fwd(params, x, v, r, k_eps)
    jax.block_until_ready((x_recon, kl))

    assert x_recon.shape == (N, H, W, x_dim)
    assert kl.shape == (N, H // SCALE, W // SCALE, z_dim)
    assert bool(jnp.all(jnp.isfinite(x_recon))) and bool(jnp.all(jnp.isfinite(kl)))
    print("KERNEL_OK")
</pallas_src>

<mosaic_0001>
module attributes {stable_mosaic.version = 11 : i64} {
  func.func @_draw_kernel(%arg0: i32, %arg1: i32, %arg2: memref<1x16x8xf32, #tpu.memory_space<vmem>>, %arg3: memref<800x16xbf16, #tpu.memory_space<vmem>>, %arg4: memref<1x16xf32, #tpu.memory_space<vmem>>, %arg5: memref<4x800x32xbf16, #tpu.memory_space<vmem>>, %arg6: memref<1x4x16x32xf32, #tpu.memory_space<vmem>>, %arg7: memref<800x16xbf16, #tpu.memory_space<vmem>>, %arg8: memref<1x16xf32, #tpu.memory_space<vmem>>, %arg9: memref<4x200x32xbf16, #tpu.memory_space<vmem>>, %arg10: memref<1x4x16x32xf32, #tpu.memory_space<vmem>>, %arg11: memref<32x128xbf16, #tpu.memory_space<vmem>>, %arg12: memref<1x128xf32, #tpu.memory_space<vmem>>, %arg13: memref<1x16x128xf32, #tpu.memory_space<vmem>>, %arg14: memref<1x16x8xf32, #tpu.memory_space<vmem>>, %arg15: memref<48x32xbf16, #tpu.memory_space<vmem>>, %arg16: memref<48x8xbf16, #tpu.memory_space<vmem>>, %arg17: memref<16x800xbf16, #tpu.memory_space<vmem>>, %arg18: memref<16x200xbf16, #tpu.memory_space<vmem>>, %arg19: memref<16x32xf32, #tpu.memory_space<vmem>>, %arg20: memref<16x32xf32, #tpu.memory_space<vmem>>) attributes {dimension_semantics = [#tpu.dimension_semantics<parallel>, #tpu.dimension_semantics<arbitrary>], iteration_bounds = array<i64: 2, 3>, scalar_prefetch = 0 : i64, scratch_operands = 6 : i64, tpu.core_type = #tpu.core_type<tc>, window_params = [{transform_indices = @transform_0, window_bounds = array<i64: 1, 16, 8>}, {pipeline_mode = #tpu.pipeline_mode<synchronous>, transform_indices = @transform_1, window_bounds = array<i64: 800, 16>}, {pipeline_mode = #tpu.pipeline_mode<synchronous>, transform_indices = @transform_2, window_bounds = array<i64: 1, 16>}, {pipeline_mode = #tpu.pipeline_mode<synchronous>, transform_indices = @transform_3, window_bounds = array<i64: 4, 800, 32>}, {transform_indices = @transform_4, window_bounds = array<i64: 1, 4, 16, 32>}, {pipeline_mode = #tpu.pipeline_mode<synchronous>, transform_indices = @transform_5, window_bounds = array<i64: 800, 16>}, {pipeline_mode = #tpu.pipeline_mode<synchronous>, transform_indices = @transform_6, window_bounds = array<i64: 1, 16>}, {pipeline_mode = #tpu.pipeline_mode<synchronous>, transform_indices = @transform_7, window_bounds = array<i64: 4, 200, 32>}, {transform_indices = @transform_8, window_bounds = array<i64: 1, 4, 16, 32>}, {pipeline_mode = #tpu.pipeline_mode<synchronous>, transform_indices = @transform_9, window_bounds = array<i64: 32, 128>}, {pipeline_mode = #tpu.pipeline_mode<synchronous>, transform_indices = @transform_10, window_bounds = array<i64: 1, 128>}, {transform_indices = @transform_11, window_bounds = array<i64: 1, 16, 128>}, {transform_indices = @transform_12, window_bounds = array<i64: 1, 16, 8>}]} {
    %0 = tpu.iota {dimensions = array<i32: 0>} : vector<16x1xi32>
    %c4_i32 = arith.constant 4 : i32
    %c0_i32 = arith.constant 0 : i32
    %1 = arith.cmpi eq, %c4_i32, %c0_i32 : i32
    %c1_i32 = arith.constant 1 : i32
    %2 = arith.select %1, %c1_i32, %c4_i32 : i32
    %3 = vector.broadcast %2 : i32 to vector<16x1xi32>
    %4 = arith.remsi %0, %3 : vector<16x1xi32>
    %c0_i32_0 = arith.constant 0 : i32
    %5 = vector.broadcast %c0_i32_0 : i32 to vector<16x1xi32>
    %6 = arith.cmpi ne, %4, %5 : vector<16x1xi32>
    %c0_i32_1 = arith.constant 0 : i32
    %7 = vector.broadcast %c0_i32_1 : i32 to vector<16x1xi32>
    %8 = arith.cmpi slt, %4, %7 : vector<16x1xi32>
    %c0_i32_2 = arith.constant 0 : i32
    %9 = arith.cmpi slt, %2, %c0_i32_2 : i32
    %10 = vector.broadcast %9 : i1 to vector<16x1xi1>
    %11 = vector.broadcast %10 : vector<16x1xi1> to vector<16x1xi1>
    %12 = arith.xori %8, %11 : vector<16x1xi1>
    %13 = arith.andi %12, %6 : vector<16x1xi1>
    %14 = vector.broadcast %2 : i32 to vector<16x1xi32>
    %15 = arith.addi %4, %14 : vector<16x1xi32>
    %16 = arith.select %13, %15, %4 : vector<16x1xi1>, vector<16x1xi32>
    %c2_i32 = arith.constant 2 : i32
    %17 = vector.broadcast %c2_i32 : i32 to vector<16x1xi32>
    %18 = arith.cmpi sge, %16, %17 : vector<16x1xi32>
    %c1_i32_3 = arith.constant 1 : i32
    %19 = vector.broadcast %c1_i32_3 : i32 to vector<16x1xi32>
    %20 = arith.cmpi sge, %16, %19 : vector<16x1xi32>
    %c3_i32 = arith.constant 3 : i32
    %21 = vector.broadcast %c3_i32 : i32 to vector<16x1xi32>
    %22 = arith.cmpi slt, %16, %21 : vector<16x1xi32>
    %c2_i32_4 = arith.constant 2 : i32
    %23 = vector.broadcast %c2_i32_4 : i32 to vector<16x1xi32>
    %24 = arith.cmpi slt, %16, %23 : vector<16x1xi32>
    %c0_i32_5 = arith.constant 0 : i32
    %25 = arith.cmpi eq, %arg1, %c0_i32_5 : i32
    %26 = arith.extui %25 : i1 to i32
    %c0_i32_6 = arith.constant 0 : i32
    %27 = arith.cmpi ne, %26, %c0_i32_6 : i32
    scf.if %27 {
      %cst_444 = arith.constant 0.000000e+00 : bf16
      %610 = vector.broadcast %cst_444 : bf16 to vector<48x32xbf16>
      %c0_445 = arith.constant 0 : index
      %c0_446 = arith.constant 0 : index
      %611 = vector.load %arg15[%c0_445, %c0_446] : memref<48x32xbf16, #tpu.memory_space<vmem>>, vector<48x32xbf16>
      tpu.vector_store %arg15[%c0_445, %c0_446], %610 {strides = array<i32>} : memref<48x32xbf16, #tpu.memory_space<vmem>>, vector<48x32xbf16>,
      %cst_447 = arith.constant 0.000000e+00 : bf16
      %612 = vector.broadcast %cst_447 : bf16 to vector<48x8xbf16>
      %c0_448 = arith.constant 0 : index
      %c0_449 = arith.constant 0 : index
      %613 = vector.load %arg16[%c0_448, %c0_449] : memref<48x8xbf16, #tpu.memory_space<vmem>>, vector<48x8xbf16>
      tpu.vector_store %arg16[%c0_448, %c0_449], %612 {strides = array<i32>} : memref<48x8xbf16, #tpu.memory_space<vmem>>, vector<48x8xbf16>,
      %cst_450 = arith.constant 0.000000e+00 : f32
      %614 = vector.broadcast %cst_450 : f32 to vector<16x32xf32>
      %c0_451 = arith.constant 0 : index
      %c0_452 = arith.constant 0 : index
      %615 = vector.load %arg19[%c0_451, %c0_452] : memref<16x32xf32, #tpu.memory_space<vmem>>, vector<16x32xf32>
      tpu.vector_store %arg19[%c0_451, %c0_452], %614 {strides = array<i32>} : memref<16x32xf32, #tpu.memory_space<vmem>>, vector<16x32xf32>,
      %cst_453 = arith.constant 0.000000e+00 : f32
      %616 = vector.broadcast %cst_453 : f32 to vector<16x32xf32>
      %c0_454 = arith.constant 0 : index
      %c0_455 = arith.constant 0 : index
      %617 = vector.load %arg20[%c0_454, %c0_455] : memref<16x32xf32, #tpu.memory_space<vmem>>, vector<16x32xf32>
      tpu.vector_store %arg20[%c0_454, %c0_455], %616 {strides = array<i32>} : memref<16x32xf32, #tpu.memory_space<vmem>>, vector<16x32xf32>,
      %cst_456 = arith.constant 0.000000e+00 : f32
      %618 = vector.broadcast %cst_456 : f32 to vector<1x16x128xf32>
      %c0_457 = arith.constant 0 : index
      %c0_458 = arith.constant 0 : index
      %c0_459 = arith.constant 0 : index
      %619 = vector.load %arg13[%c0_457, %c0_458, %c0_459] : memref<1x16x128xf32, #tpu.memory_space<vmem>>, vector<1x16x128xf32>
      tpu.vector_store %arg13[%c0_457, %c0_458, %c0_459], %618 {strides = array<i32>} : memref<1x16x128xf32, #tpu.memory_space<vmem>>, vector<1x16x128xf32>,
      %cst_460 = arith.constant 0.000000e+00 : f32
      %620 = vector.broadcast %cst_460 : f32 to vector<1x16x8xf32>
      %c0_461 = arith.constant 0 : index
      %c0_462 = arith.constant 0 : index
      %c0_463 = arith.constant 0 : index
      %621 = vector.load %arg14[%c0_461, %c0_462, %c0_463] : memref<1x16x8xf32, #tpu.memory_space<vmem>>, vector<1x16x8xf32>
      tpu.vector_store %arg14[%c0_461, %c0_462, %c0_463], %620 {strides = array<i32>} : memref<1x16x8xf32, #tpu.memory_space<vmem>>, vector<1x16x8xf32>,
    } else {
    }
    %c6 = arith.constant 6 : index
    %c0 = arith.constant 0 : index
    %28 = vector.load %arg15[%c6, %c0] : memref<48x32xbf16, #tpu.memory_space<vmem>>, vector<16x32xbf16>
    %cst = arith.constant 0.000000e+00 : bf16
    %29 = vector.broadcast %cst : bf16 to vector<16x32xbf16>
    %30 = vector.shape_cast %18 : vector<16x1xi1> to vector<16x1xi1>
    %31 = vector.broadcast %30 : vector<16x1xi1> to vector<16x32xi1>
    %32 = arith.select %31, %28, %29 : vector<16x32xi1>, vector<16x32xbf16>
    %c0_7 = arith.constant 0 : index
    %c0_8 = arith.constant 0 : index
    %33 = vector.load %arg17[%c0_7, %c0_8] : memref<16x800xbf16, #tpu.memory_space<vmem>>, vector<16x32xbf16>
    tpu.vector_store %arg17[%c0_7, %c0_8], %32 {strides = array<i32>} : memref<16x800xbf16, #tpu.memory_space<vmem>>, vector<16x32xbf16>,
    %c7 = arith.constant 7 : index
    %c0_9 = arith.constant 0 : index
    %34 = vector.load %arg15[%c7, %c0_9] : memref<48x32xbf16, #tpu.memory_space<vmem>>, vector<16x32xbf16>
    %cst_10 = arith.constant 0.000000e+00 : bf16
    %35 = vector.broadcast %cst_10 : bf16 to vector<16x32xbf16>
    %36 = vector.shape_cast %20 : vector<16x1xi1> to vector<16x1xi1>
    %37 = vector.broadcast %36 : vector<16x1xi1> to vector<16x32xi1>
    %38 = arith.select %37, %34, %35 : vector<16x32xi1>, vector<16x32xbf16>
    %c0_11 = arith.constant 0 : index
    %c32 = arith.constant 32 : index
    %39 = vector.load %arg17[%c0_11, %c32] : memref<16x800xbf16, #tpu.memory_space<vmem>>, vector<16x32xbf16>
    tpu.vector_store %arg17[%c0_11, %c32], %38 {strides = array<i32>} : memref<16x800xbf16, #tpu.memory_space<vmem>>, vector<16x32xbf16>,
    %c8 = arith.constant 8 : index
    %c0_12 = arith.constant 0 : index
    %40 = vector.load %arg15[%c8, %c0_12] : memref<48x32xbf16, #tpu.memory_space<vmem>>, vector<16x32xbf16>
    %c0_13 = arith.constant 0 : index
    %c64 = arith.constant 64 : index
    %41 = vector.load %arg17[%c0_13, %c64] : memref<16x800xbf16, #tpu.memory_space<vmem>>, vector<16x32xbf16>
    tpu.vector_store %arg17[%c0_13, %c64], %40 {strides = array<i32>} : memref<16x800xbf16, #tpu.memory_space<vmem>>, vector<16x32xbf16>,
    %c9 = arith.constant 9 : index
    %c0_14 = arith.constant 0 : index
    %42 = vector.load %arg15[%c9, %c0_14] : memref<48x32xbf16, #tpu.memory_space<vmem>>, vector<16x32xbf16>
    %cst_15 = arith.constant 0.000000e+00 : bf16
    %43 = vector.broadcast %cst_15 : bf16 to vector<16x32xbf16>
    %44 = vector.shape_cast %22 : vector<16x1xi1> to vector<16x1xi1>
    %45 = vector.broadcast %44 : vector<16x1xi1> to vector<16x32xi1>
    %46 = arith.select %45, %42, %43 : vector<16x32xi1>, vector<16x32xbf16>
    %c0_16 = arith.constant 0 : index
    %c96 = arith.constant 96 : index
    %47 = vector.load %arg17[%c0_16, %c96] : memref<16x800xbf16, #tpu.memory_space<vmem>>, vector<16x32xbf16>
    tpu.vector_store %arg17[%c0_16, %c96], %46 {strides = array<i32>} : memref<16x800xbf16, #tpu.memory_space<vmem>>, vector<16x32xbf16>,
    %c10 = arith.constant 10 : index
    %c0_17 = arith.constant 0 : index
    %48 = vector.load %arg15[%c10, %c0_17] : memref<48x32xbf16, #tpu.memory_space<vmem>>, vector<16x32xbf16>
    %cst_18 = arith.constant 0.000000e+00 : bf16
    %49 = vector.broadcast %cst_18 : bf16 to vector<16x32xbf16>
    %50 = vector.shape_cast %24 : vector<16x1xi1> to vector<16x1xi1>
    %51 = vector.broadcast %50 : vector<16x1xi1> to vector<16x32xi1>
    %52 = arith.select %51, %48, %49 : vector<16x32xi1>, vector<16x32xbf16>
    %c0_19 = arith.constant 0 : index
    %c128 = arith.constant 128 : index
    %53 = vector.load %arg17[%c0_19, %c128] : memref<16x800xbf16, #tpu.memory_space<vmem>>, vector<16x32xbf16>
    tpu.vector_store %arg17[%c0_19, %c128], %52 {strides = array<i32>} : memref<16x800xbf16, #tpu.memory_space<vmem>>, vector<16x32xbf16>,
    %c10_20 = arith.constant 10 : index
    %c0_21 = arith.constant 0 : index
    %54 = vector.load %arg15[%c10_20, %c0_21] : memref<48x32xbf16, #tpu.memory_space<vmem>>, vector<16x32xbf16>
    %cst_22 = arith.constant 0.000000e+00 : bf16
    %55 = vector.broadcast %cst_22 : bf16 to vector<16x32xbf16>
    %56 = vector.shape_cast %18 : vector<16x1xi1> to vector<16x1xi1>
    %57 = vector.broadcast %56 : vector<16x1xi1> to vector<16x32xi1>
    %58 = arith.select %57, %54, %55 : vector<16x32xi1>, vector<16x32xbf16>
    %c0_23 = arith.constant 0 : index
    %c160 = arith.constant 160 : index
    %59 = vector.load %arg17[%c0_23, %c160] : memref<16x800xbf16, #tpu.memory_space<vmem>>, vector<16x32xbf16>
    tpu.vector_store %arg17[%c0_23, %c160], %58 {strides = array<i32>} : memref<16x800xbf16, #tpu.memory_space<vmem>>, vector<16x32xbf16>,
    %c11 = arith.constant 11 : index
    %c0_24 = arith.constant 0 : index
    %60 = vector.load %arg15[%c11, %c0_24] : memref<48x32xbf16, #tpu.memory_space<vmem>>, vector<16x32xbf16>
    %cst_25 = arith.constant 0.000000e+00 : bf16
    %61 = vector.broadcast %cst_25 : bf16 to vector<16x32xbf16>
    %62 = vector.shape_cast %20 : vector<16x1xi1> to vector<16x1xi1>
    %63 = vector.broadcast %62 : vector<16x1xi1> to vector<16x32xi1>
    %64 = arith.select %63, %60, %61 : vector<16x32xi1>, vector<16x32xbf16>
    %c0_26 = arith.constant 0 : index
    %c192 = arith.constant 192 : index
    %65 = vector.load %arg17[%c0_26, %c192] : memref<16x800xbf16, #tpu.memory_space<vmem>>, vector<16x32xbf16>
    tpu.vector_store %arg17[%c0_26, %c192], %64 {strides = array<i32>} : memref<16x800xbf16, #tpu.memory_space<vmem>>, vector<16x32xbf16>,
    %c12 = arith.constant 12 : index
    %c0_27 = arith.constant 0 : index
    %66 = vector.load %arg15[%c12, %c0_27] : memref<48x32xbf16, #tpu.memory_space<vmem>>, vector<16x32xbf16>
    %c0_28 = arith.constant 0 : index
    %c224 = arith.constant 224 : index
    %67 = vector.load %arg17[%c0_28, %c224] : memref<16x800xbf16, #tpu.memory_space<vmem>>, vector<16x32xbf16>
    tpu.vector_store %arg17[%c0_28, %c224], %66 {strides = array<i32>} : memref<16x800xbf16, #tpu.memory_space<vmem>>, vector<16x32xbf16>,
    %c13 = arith.constant 13 : index
    %c0_29 = arith.constant 0 : index
    %68 = vector.load %arg15[%c13, %c0_29] : memref<48x32xbf16, #tpu.memory_space<vmem>>, vector<16x32xbf16>
    %cst_30 = arith.constant 0.000000e+00 : bf16
    %69 = vector.broadcast %cst_30 : bf16 to vector<16x32xbf16>
    %70 = vector.shape_cast %22 : vector<16x1xi1> to vector<16x1xi1>
    %71 = vector.broadcast %70 : vector<16x1xi1> to vector<16x32xi1>
    %72 = arith.select %71, %68, %69 : vector<16x32xi1>, vector<16x32xbf16>
    %c0_31 = arith.constant 0 : index
    %c256 = arith.constant 256 : index
    %73 = vector.load %arg17[%c0_31, %c256] : memref<16x800xbf16, #tpu.memory_space<vmem>>, vector<16x32xbf16>
    tpu.vector_store %arg17[%c0_31, %c256], %72 {strides = array<i32>} : memref<16x800xbf16, #tpu.memory_space<vmem>>, vector<16x32xbf16>,
    %c14 = arith.constant 14 : index
    %c0_32 = arith.constant 0 : index
    %74 = vector.load %arg15[%c14, %c0_32] : memref<48x32xbf16, #tpu.memory_space<vmem>>, vector<16x32xbf16>
    %cst_33 = arith.constant 0.000000e+00 : bf16
    %75 = vector.broadcast %cst_33 : bf16 to vector<16x32xbf16>
    %76 = vector.shape_cast %24 : vector<16x1xi1> to vector<16x1xi1>
    %77 = vector.broadcast %76 : vector<16x1xi1> to vector<16x32xi1>
    %78 = arith.select %77, %74, %75 : vector<16x32xi1>, vector<16x32xbf16>
    %c0_34 = arith.constant 0 : index
    %c288 = arith.constant 288 : index
    %79 = vector.load %arg17[%c0_34, %c288] : memref<16x800xbf16, #tpu.memory_space<vmem>>, vector<16x32xbf16>
    tpu.vector_store %arg17[%c0_34, %c288], %78 {strides = array<i32>} : memref<16x800xbf16, #tpu.memory_space<vmem>>, vector<16x32xbf16>,
    %c14_35 = arith.constant 14 : index
    %c0_36 = arith.constant 0 : index
    %80 = vector.load %arg15[%c14_35, %c0_36] : memref<48x32xbf16, #tpu.memory_space<vmem>>, vector<16x32xbf16>
    %cst_37 = arith.constant 0.000000e+00 : bf16
    %81 = vector.broadcast %cst_37 : bf16 to vector<16x32xbf16>
    %82 = vector.shape_cast %18 : vector<16x1xi1> to vector<16x1xi1>
    %83 = vector.broadcast %82 : vector<16x1xi1> to vector<16x32xi1>
    %84 = arith.select %83, %80, %81 : vector<16x32xi1>, vector<16x32xbf16>
    %c0_38 = arith.constant 0 : index
    %c320 = arith.constant 320 : index
    %85 = vector.load %arg17[%c0_38, %c320] : memref<16x800xbf16, #tpu.memory_space<vmem>>, vector<16x32xbf16>
    tpu.vector_store %arg17[%c0_38, %c320], %84 {strides = array<i32>} : memref<16x800xbf16, #tpu.memory_space<vmem>>, vector<16x32xbf16>,
    %c15 = arith.constant 15 : index
    %c0_39 = arith.constant 0 : index
    %86 = vector.load %arg15[%c15, %c0_39] : memref<48x32xbf16, #tpu.memory_space<vmem>>, vector<16x32xbf16>
    %cst_40 = arith.constant 0.000000e+00 : bf16
    %87 = vector.broadcast %cst_40 : bf16 to vector<16x32xbf16>
    %88 = vector.shape_cast %20 : vector<16x1xi1> to vector<16x1xi1>
    %89 = vector.broadcast %88 : vector<16x1xi1> to vector<16x32xi1>
    %90 = arith.select %89, %86, %87 : vector<16x32xi1>, vector<16x32xbf16>
    %c0_41 = arith.constant 0 : index
    %c352 = arith.constant 352 : index
    %91 = vector.load %arg17[%c0_41, %c352] : memref<16x800xbf16, #tpu.memory_space<vmem>>, vector<16x32xbf16>
    tpu.vector_store %arg17[%c0_41, %c352], %90 {strides = array<i32>} : memref<16x800xbf16, #tpu.memory_space<vmem>>, vector<16x32xbf16>,
    %c16 = arith.constant 16 : index
    %c0_42 = arith.constant 0 : index
    %92 = vector.load %arg15[%c16, %c0_42] : memref<48x32xbf16, #tpu.memory_space<vmem>>, vector<16x32xbf16>
    %c0_43 = arith.constant 0 : index
    %c384 = arith.constant 384 : index
    %93 = vector.load %arg17[%c0_43, %c384] : memref<16x800xbf16, #tpu.memory_space<vmem>>, vector<16x32xbf16>
    tpu.vector_store %arg17[%c0_43, %c384], %92 {strides = array<i32>} : memref<16x800xbf16, #tpu.memory_space<vmem>>, vector<16x32xbf16>,
    %c17 = arith.constant 17 : index
    %c0_44 = arith.constant 0 : index
    %94 = vector.load %arg15[%c17, %c0_44] : memref<48x32xbf16, #tpu.memory_space<vmem>>, vector<16x32xbf16>
    %cst_45 = arith.constant 0.000000e+00 : bf16
    %95 = vector.broadcast %cst_45 : bf16 to vector<16x32xbf16>
    %96 = vector.shape_cast %22 : vector<16x1xi1> to vector<16x1xi1>
    %97 = vector.broadcast %96 : vector<16x1xi1> to vector<16x32xi1>
    %98 = arith.select %97, %94, %95 : vector<16x32xi1>, vector<16x32xbf16>
    %c0_46 = arith.constant 0 : index
    %c416 = arith.constant 416 : index
    %99 = vector.load %arg17[%c0_46, %c416] : memref<16x800xbf16, #tpu.memory_space<vmem>>, vector<16x32xbf16>
    tpu.vector_store %arg17[%c0_46, %c416], %98 {strides = array<i32>} : memref<16x800xbf16, #tpu.memory_space<vmem>>, vector<16x32xbf16>,
    %c18 = arith.constant 18 : index
    %c0_47 = arith.constant 0 : index
    %100 = vector.load %arg15[%c18, %c0_47] : memref<48x32xbf16, #tpu.memory_space<vmem>>, vector<16x32xbf16>
    %cst_48 = arith.constant 0.000000e+00 : bf16
    %101 = vector.broadcast %cst_48 : bf16 to vector<16x32xbf16>
    %102 = vector.shape_cast %24 : vector<16x1xi1> to vector<16x1xi1>
    %103 = vector.broadcast %102 : vector<16x1xi1> to vector<16x32xi1>
    %104 = arith.select %103, %100, %101 : vector<16x32xi1>, vector<16x32xbf16>
    %c0_49 = arith.constant 0 : index
    %c448 = arith.constant 448 : index
    %105 = vector.load %arg17[%c0_49, %c448] : memref<16x800xbf16, #tpu.memory_space<vmem>>, vector<16x32xbf16>
    tpu.vector_store %arg17[%c0_49, %c448], %104 {strides = array<i32>} : memref<16x800xbf16, #tpu.memory_space<vmem>>, vector<16x32xbf16>,
    %c18_50 = arith.constant 18 : index
    %c0_51 = arith.constant 0 : index
    %106 = vector.load %arg15[%c18_50, %c0_51] : memref<48x32xbf16, #tpu.memory_space<vmem>>, vector<16x32xbf16>
    %cst_52 = arith.constant 0.000000e+00 : bf16
    %107 = vector.broadcast %cst_52 : bf16 to vector<16x32xbf16>
    %108 = vector.shape_cast %18 : vector<16x1xi1> to vector<16x1xi1>
    %109 = vector.broadcast %108 : vector<16x1xi1> to vector<16x32xi1>
    %110 = arith.select %109, %106, %107 : vector<16x32xi1>, vector<16x32xbf16>
    %c0_53 = arith.constant 0 : index
    %c480 = arith.constant 480 : index
    %111 = vector.load %arg17[%c0_53, %c480] : memref<16x800xbf16, #tpu.memory_space<vmem>>, vector<16x32xbf16>
    tpu.vector_store %arg17[%c0_53, %c480], %110 {strides = array<i32>} : memref<16x800xbf16, #tpu.memory_space<vmem>>, vector<16x32xbf16>,
    %c19 = arith.constant 19 : index
    %c0_54 = arith.constant 0 : index
    %112 = vector.load %arg15[%c19, %c0_54] : memref<48x32xbf16, #tpu.memory_space<vmem>>, vector<16x32xbf16>
    %cst_55 = arith.constant 0.000000e+00 : bf16
    %113 = vector.broadcast %cst_55 : bf16 to vector<16x32xbf16>
    %114 = vector.shape_cast %20 : vector<16x1xi1> to vector<16x1xi1>
    %115 = vector.broadcast %114 : vector<16x1xi1> to vector<16x32xi1>
    %116 = arith.select %115, %112, %113 : vector<16x32xi1>, vector<16x32xbf16>
    %c0_56 = arith.constant 0 : index
    %c512 = arith.constant 512 : index
    %117 = vector.load %arg17[%c0_56, %c512] : memref<16x800xbf16, #tpu.memory_space<vmem>>, vector<16x32xbf16>
    tpu.vector_store %arg17[%c0_56, %c512], %116 {strides = array<i32>} : memref<16x800xbf16, #tpu.memory_space<vmem>>, vector<16x32xbf16>,
    %c20 = arith.constant 20 : index
    %c0_57 = arith.constant 0 : index
    %118 = vector.load %arg15[%c20, %c0_57] : memref<48x32xbf16, #tpu.memory_space<vmem>>, vector<16x32xbf16>
    %c0_58 = arith.constant 0 : index
    %c544 = arith.constant 544 : index
    %119 = vector.load %arg17[%c0_58, %c544] : memref<16x800xbf16, #tpu.memory_space<vmem>>, vector<16x32xbf16>
    tpu.vector_store %arg17[%c0_58, %c544], %118 {strides = array<i32>} : memref<16x800xbf16, #tpu.memory_space<vmem>>, vector<16x32xbf16>,
    %c21 = arith.constant 21 : index
    %c0_59 = arith.constant 0 : index
    %120 = vector.load %arg15[%c21, %c0_59] : memref<48x32xbf16, #tpu.memory_space<vmem>>, vector<16x32xbf16>
    %cst_60 = arith.constant 0.000000e+00 : bf16
    %121 = vector.broadcast %cst_60 : bf16 to vector<16x32xbf16>
    %122 = vector.shape_cast %22 : vector<16x1xi1> to vector<16x1xi1>
    %123 = vector.broadcast %122 : vector<16x1xi1> to vector<16x32xi1>
    %124 = arith.select %123, %120, %121 : vector<16x32xi1>, vector<16x32xbf16>
    %c0_61 = arith.constant 0 : index
    %c576 = arith.constant 576 : index
    %125 = vector.load %arg17[%c0_61, %c576] : memref<16x800xbf16, #tpu.memory_space<vmem>>, vector<16x32xbf16>
    tpu.vector_store %arg17[%c0_61, %c576], %124 {strides = array<i32>} : memref<16x800xbf16, #tpu.memory_space<vmem>>, vector<16x32xbf16>,
    %c22 = arith.constant 22 : index
    %c0_62 = arith.constant 0 : index
    %126 = vector.load %arg15[%c22, %c0_62] : memref<48x32xbf16, #tpu.memory_space<vmem>>, vector<16x32xbf16>
    %cst_63 = arith.constant 0.000000e+00 : bf16
    %127 = vector.broadcast %cst_63 : bf16 to vector<16x32xbf16>
    %128 = vector.shape_cast %24 : vector<16x1xi1> to vector<16x1xi1>
    %129 = vector.broadcast %128 : vector<16x1xi1> to vector<16x32xi1>
    %130 = arith.select %129, %126, %127 : vector<16x32xi1>, vector<16x32xbf16>
    %c0_64 = arith.constant 0 : index
    %c608 = arith.constant 608 : index
    %131 = vector.load %arg17[%c0_64, %c608] : memref<16x800xbf16, #tpu.memory_space<vmem>>, vector<16x32xbf16>
    tpu.vector_store %arg17[%c0_64, %c608], %130 {strides = array<i32>} : memref<16x800xbf16, #tpu.memory_space<vmem>>, vector<16x32xbf16>,
    %c22_65 = arith.constant 22 : index
    %c0_66 = arith.constant 0 : index
    %132 = vector.load %arg15[%c22_65, %c0_66] : memref<48x32xbf16, #tpu.memory_space<vmem>>, vector<16x32xbf16>
    %cst_67 = arith.constant 0.000000e+00 : bf16
    %133 = vector.broadcast %cst_67 : bf16 to vector<16x32xbf16>
    %134 = vector.shape_cast %18 : vector<16x1xi1> to vector<16x1xi1>
    %135 = vector.broadcast %134 : vector<16x1xi1> to vector<16x32xi1>
    %136 = arith.select %135, %132, %133 : vector<16x32xi1>, vector<16x32xbf16>
    %c0_68 = arith.constant 0 : index
    %c640 = arith.constant 640 : index
    %137 = vector.load %arg17[%c0_68, %c640] : memref<16x800xbf16, #tpu.memory_space<vmem>>, vector<16x32xbf16>
    tpu.vector_store %arg17[%c0_68, %c640], %136 {strides = array<i32>} : memref<16x800xbf16, #tpu.memory_space<vmem>>, vector<16x32xbf16>,
    %c23 = arith.constant 23 : index
    %c0_69 = arith.constant 0 : index
    %138 = vector.load %arg15[%c23, %c0_69] : memref<48x32xbf16, #tpu.memory_space<vmem>>, vector<16x32xbf16>
    %cst_70 = arith.constant 0.000000e+00 : bf16
    %139 = vector.broadcast %cst_70 : bf16 to vector<16x32xbf16>
    %140 = vector.shape_cast %20 : vector<16x1xi1> to vector<16x1xi1>
    %141 = vector.broadcast %140 : vector<16x1xi1> to vector<16x32xi1>
    %142 = arith.select %141, %138, %139 : vector<16x32xi1>, vector<16x32xbf16>
    %c0_71 = arith.constant 0 : index
    %c672 = arith.constant 672 : index
    %143 = vector.load %arg17[%c0_71, %c672] : memref<16x800xbf16, #tpu.memory_space<vmem>>, vector<16x32xbf16>
    tpu.vector_store %arg17[%c0_71, %c672], %142 {strides = array<i32>} : memref<16x800xbf16, #tpu.memory_space<vmem>>, vector<16x32xbf16>,
    %c24 = arith.constant 24 : index
    %c0_72 = arith.constant 0 : index
    %144 = vector.load %arg15[%c24, %c0_72] : memref<48x32xbf16, #tpu.memory_space<vmem>>, vector<16x32xbf16>
    %c0_73 = arith.constant 0 : index
    %c704 = arith.constant 704 : index
    %145 = vector.load %arg17[%c0_73, %c704] : memref<16x800xbf16, #tpu.memory_space<vmem>>, vector<16x32xbf16>
    tpu.vector_store %arg17[%c0_73, %c704], %144 {strides = array<i32>} : memref<16x800xbf16, #tpu.memory_space<vmem>>, vector<16x32xbf16>,
    %c25 = arith.constant 25 : index
    %c0_74 = arith.constant 0 : index
    %146 = vector.load %arg15[%c25, %c0_74] : memref<48x32xbf16, #tpu.memory_space<vmem>>, vector<16x32xbf16>
    %cst_75 = arith.constant 0.000000e+00 : bf16
    %147 = vector.broadcast %cst_75 : bf16 to vector<16x32xbf16>
    %148 = vector.shape_cast %22 : vector<16x1xi1> to vector<16x1xi1>
    %149 = vector.broadcast %148 : vector<16x1xi1> to vector<16x32xi1>
    %150 = arith.select %149, %146, %147 : vector<16x32xi1>, vector<16x32xbf16>
    %c0_76 = arith.constant 0 : index
    %c736 = arith.constant 736 : index
    %151 = vector.load %arg17[%c0_76, %c736] : memref<16x800xbf16, #tpu.memory_space<vmem>>, vector<16x32xbf16>
    tpu.vector_store %arg17[%c0_76, %c736], %150 {strides = array<i32>} : memref<16x800xbf16, #tpu.memory_space<vmem>>, vector<16x32xbf16>,
    %c26 = arith.constant 26 : index
    %c0_77 = arith.constant 0 : index
    %152 = vector.load %arg15[%c26, %c0_77] : memref<48x32xbf16, #tpu.memory_space<vmem>>, vector<16x32xbf16>
    %cst_78 = arith.constant 0.000000e+00 : bf16
    %153 = vector.broadcast %cst_78 : bf16 to vector<16x32xbf16>
    %154 = vector.shape_cast %24 : vector<16x1xi1> to vector<16x1xi1>
    %155 = vector.broadcast %154 : vector<16x1xi1> to vector<16x32xi1>
    %156 = arith.select %155, %152, %153 : vector<16x32xi1>, vector<16x32xbf16>
    %c0_79 = arith.constant 0 : index
    %c768 = arith.constant 768 : index
    %157 = vector.load %arg17[%c0_79, %c768] : memref<16x800xbf16, #tpu.memory_space<vmem>>, vector<16x32xbf16>
    tpu.vector_store %arg17[%c0_79, %c768], %156 {strides = array<i32>} : memref<16x800xbf16, #tpu.memory_space<vmem>>, vector<16x32xbf16>,
    %c0_80 = arith.constant 0 : index
    %c0_81 = arith.constant 0 : index
    %158 = vector.load %arg17[%c0_80, %c0_81] : memref<16x800xbf16, #tpu.memory_space<vmem>>, vector<16x800xbf16>
    %c0_82 = arith.constant 0 : index
    %c0_83 = arith.constant 0 : index
    %159 = vector.load %arg3[%c0_82, %c0_83] : memref<800x16xbf16, #tpu.memory_space<vmem>>, vector<800x16xbf16>
    %cst_84 = arith.constant dense<0.000000e+00> : vector<16x16xf32>
    %160 = tpu.matmul %158, %159, %cst_84 {dimension_numbers = #tpu.dot_dimension_numbers<[1], [0], [0], [1], [0, 0, 1, 1], [], []>} : vector<16x800xbf16>, vector<800x16xbf16>, vector<16x16xf32> -> vector<16x16xf32>
    %c0_85 = arith.constant 0 : index
    %c0_86 = arith.constant 0 : index
    %161 = vector.load %arg4[%c0_85, %c0_86] : memref<1x16xf32, #tpu.memory_space<vmem>>, vector<1x16xf32>
    %162 = vector.broadcast %161 : vector<1x16xf32> to vector<16x16xf32>
    %163 = arith.addf %160, %162 : vector<16x16xf32>
    %164 = vector.extract_strided_slice %163 {offsets = [0, 0], sizes = [16, 8], strides = [1, 1]} : vector<16x16xf32> to vector<16x8xf32>
    %165 = vector.extract_strided_slice %163 {offsets = [0, 8], sizes = [16, 8], strides = [1, 1]} : vector<16x16xf32> to vector<16x8xf32>
    %cst_87 = arith.constant 0.000000e+00 : f32
    %166 = vector.broadcast %cst_87 : f32 to vector<16x8xf32>
    %167 = arith.maximumf %165, %166 : vector<16x8xf32>
    %168 = vector.broadcast %cst_87 : f32 to vector<16x8xf32>
    %169 = arith.subf %165, %168 : vector<16x8xf32>
    %170 = arith.cmpf one, %169, %169 : vector<16x8xf32>
    %171 = vector.broadcast %cst_87 : f32 to vector<16x8xf32>
    %172 = arith.addf %165, %171 : vector<16x8xf32>
    %173 = math.absf %169 : vector<16x8xf32>
    %cst_88 = arith.constant 0.000000e+00 : f32
    %174 = vector.broadcast %cst_88 : f32 to vector<16x8xf32>
    %175 = arith.subf %174, %173 : vector<16x8xf32>
    %176 = math.exp %175 : vector<16x8xf32>
    %177 = math.log1p %176 : vector<16x8xf32>
    %178 = arith.addf %167, %177 : vector<16x8xf32>
    %179 = arith.select %170, %172, %178 : vector<16x8xi1>, vector<16x8xf32>
    %cst_89 = arith.constant 9.99999997E-7 : f32
    %180 = vector.broadcast %cst_89 : f32 to vector<16x8xf32>
    %181 = arith.addf %179, %180 : vector<16x8xf32>
    %c0_90 = arith.constant 0 : index
    %c0_91 = arith.constant 0 : index
    %182 = vector.load %arg17[%c0_90, %c0_91] : memref<16x800xbf16, #tpu.memory_space<vmem>>, vector<16x800xbf16>
    %c0_92 = arith.constant 0 : index
    %c0_93 = arith.constant 0 : index
    %c0_94 = arith.constant 0 : index
    %183 = vector.load %arg5[%c0_92, %c0_93, %c0_94] : memref<4x800x32xbf16, #tpu.memory_space<vmem>>, vector<1x800x32xbf16>
    %184 = vector.shape_cast %183 : vector<1x800x32xbf16> to vector<800x32xbf16>
    %cst_95 = arith.constant dense<0.000000e+00> : vector<16x32xf32>
    %185 = tpu.matmul %182, %184, %cst_95 {dimension_numbers = #tpu.dot_dimension_numbers<[1], [0], [0], [1], [0, 0, 1, 1], [], []>} : vector<16x800xbf16>, vector<800x32xbf16>, vector<16x32xf32> -> vector<16x32xf32>
    %c0_96 = arith.constant 0 : index
    %c0_97 = arith.constant 0 : index
    %c0_98 = arith.constant 0 : index
    %c0_99 = arith.constant 0 : index
    %186 = vector.load %arg6[%c0_96, %c0_97, %c0_98, %c0_99] : memref<1x4x16x32xf32, #tpu.memory_space<vmem>>, vector<1x1x16x32xf32>
    %187 = vector.shape_cast %186 : vector<1x1x16x32xf32> to vector<16x32xf32>
    %188 = arith.addf %185, %187 : vector<16x32xf32>
    %189 = arith.negf %188 : vector<16x32xf32>
    %190 = math.exp %189 : vector<16x32xf32>
    %cst_100 = arith.constant 1.000000e+00 : f32
    %191 = vector.broadcast %cst_100 : f32 to vector<16x32xf32>
    %192 = arith.addf %191, %190 : vector<16x32xf32>
    %193 = arith.divf %191, %192 : vector<16x32xf32>
    %c0_101 = arith.constant 0 : index
    %c0_102 = arith.constant 0 : index
    %194 = vector.load %arg17[%c0_101, %c0_102] : memref<16x800xbf16, #tpu.memory_space<vmem>>, vector<16x800xbf16>
    %c1 = arith.constant 1 : index
    %c0_103 = arith.constant 0 : index
    %c0_104 = arith.constant 0 : index
    %195 = vector.load %arg5[%c1, %c0_103, %c0_104] : memref<4x800x32xbf16, #tpu.memory_space<vmem>>, vector<1x800x32xbf16>
    %196 = vector.shape_cast %195 : vector<1x800x32xbf16> to vector<800x32xbf16>
    %cst_105 = arith.constant dense<0.000000e+00> : vector<16x32xf32>
    %197 = tpu.matmul %194, %196, %cst_105 {dimension_numbers = #tpu.dot_dimension_numbers<[1], [0], [0], [1], [0, 0, 1, 1], [], []>} : vector<16x800xbf16>, vector<800x32xbf16>, vector<16x32xf32> -> vector<16x32xf32>
    %c0_106 = arith.constant 0 : index
    %c1_107 = arith.constant 1 : index
    %c0_108 = arith.constant 0 : index
    %c0_109 = arith.constant 0 : index
    %198 = vector.load %arg6[%c0_106, %c1_107, %c0_108, %c0_109] : memref<1x4x16x32xf32, #tpu.memory_space<vmem>>, vector<1x1x16x32xf32>
    %199 = vector.shape_cast %198 : vector<1x1x16x32xf32> to vector<16x32xf32>
    %200 = arith.addf %197, %199 : vector<16x32xf32>
    %201 = arith.negf %200 : vector<16x32xf32>
    %202 = math.exp %201 : vector<16x32xf32>
    %cst_110 = arith.constant 1.000000e+00 : f32
    %203 = vector.broadcast %cst_110 : f32 to vector<16x32xf32>
    %204 = arith.addf %203, %202 : vector<16x32xf32>
    %205 = arith.divf %203, %204 : vector<16x32xf32>
    %c0_111 = arith.constant 0 : index
    %c0_112 = arith.constant 0 : index
    %206 = vector.load %arg17[%c0_111, %c0_112] : memref<16x800xbf16, #tpu.memory_space<vmem>>, vector<16x800xbf16>
    %c3 = arith.constant 3 : index
    %c0_113 = arith.constant 0 : index
    %c0_114 = arith.constant 0 : index
    %207 = vector.load %arg5[%c3, %c0_113, %c0_114] : memref<4x800x32xbf16, #tpu.memory_space<vmem>>, vector<1x800x32xbf16>
    %208 = vector.shape_cast %207 : vector<1x800x32xbf16> to vector<800x32xbf16>
    %cst_115 = arith.constant dense<0.000000e+00> : vector<16x32xf32>
    %209 = tpu.matmul %206, %208, %cst_115 {dimension_numbers = #tpu.dot_dimension_numbers<[1], [0], [0], [1], [0, 0, 1, 1], [], []>} : vector<16x800xbf16>, vector<800x32xbf16>, vector<16x32xf32> -> vector<16x32xf32>
    %c0_116 = arith.constant 0 : index
    %c3_117 = arith.constant 3 : index
    %c0_118 = arith.constant 0 : index
    %c0_119 = arith.constant 0 : index
    %210 = vector.load %arg6[%c0_116, %c3_117, %c0_118, %c0_119] : memref<1x4x16x32xf32, #tpu.memory_space<vmem>>, vector<1x1x16x32xf32>
    %211 = vector.shape_cast %210 : vector<1x1x16x32xf32> to vector<16x32xf32>
    %212 = arith.addf %209, %211 : vector<16x32xf32>
    %213 = math.tanh %212 : vector<16x32xf32>
    %c0_120 = arith.constant 0 : index
    %c0_121 = arith.constant 0 : index
    %214 = vector.load %arg19[%c0_120, %c0_121] : memref<16x32xf32, #tpu.memory_space<vmem>>, vector<16x32xf32>
    %215 = arith.mulf %193, %214 : vector<16x32xf32>
    %216 = arith.mulf %205, %213 : vector<16x32xf32>
    %217 = arith.addf %215, %216 : vector<16x32xf32>
    %c0_122 = arith.constant 0 : index
    %c0_123 = arith.constant 0 : index
    %218 = vector.load %arg19[%c0_122, %c0_123] : memref<16x32xf32, #tpu.memory_space<vmem>>, vector<16x32xf32>
    tpu.vector_store %arg19[%c0_122, %c0_123], %217 {strides = array<i32>} : memref<16x32xf32, #tpu.memory_space<vmem>>, vector<16x32xf32>,
    %c0_124 = arith.constant 0 : index
    %c0_125 = arith.constant 0 : index
    %219 = vector.load %arg17[%c0_124, %c0_125] : memref<16x800xbf16, #tpu.memory_space<vmem>>, vector<16x800xbf16>
    %c2 = arith.constant 2 : index
    %c0_126 = arith.constant 0 : index
    %c0_127 = arith.constant 0 : index
    %220 = vector.load %arg5[%c2, %c0_126, %c0_127] : memref<4x800x32xbf16, #tpu.memory_space<vmem>>, vector<1x800x32xbf16>
    %221 = vector.shape_cast %220 : vector<1x800x32xbf16> to vector<800x32xbf16>
    %cst_128 = arith.constant dense<0.000000e+00> : vector<16x32xf32>
    %222 = tpu.matmul %219, %221, %cst_128 {dimension_numbers = #tpu.dot_dimension_numbers<[1], [0], [0], [1], [0, 0, 1, 1], [], []>} : vector<16x800xbf16>, vector<800x32xbf16>, vector<16x32xf32> -> vector<16x32xf32>
    %c0_129 = arith.constant 0 : index
    %c2_130 = arith.constant 2 : index
    %c0_131 = arith.constant 0 : index
    %c0_132 = arith.constant 0 : index
    %223 = vector.load %arg6[%c0_129, %c2_130, %c0_131, %c0_132] : memref<1x4x16x32xf32, #tpu.memory_space<vmem>>, vector<1x1x16x32xf32>
    %224 = vector.shape_cast %223 : vector<1x1x16x32xf32> to vector<16x32xf32>
    %225 = arith.addf %222, %224 : vector<16x32xf32>
    %226 = arith.negf %225 : vector<16x32xf32>
    %227 = math.exp %226 : vector<16x32xf32>
    %cst_133 = arith.constant 1.000000e+00 : f32
    %228 = vector.broadcast %cst_133 : f32 to vector<16x32xf32>
    %229 = arith.addf %228, %227 : vector<16x32xf32>
    %230 = arith.divf %228, %229 : vector<16x32xf32>
    %231 = math.tanh %217 : vector<16x32xf32>
    %232 = arith.mulf %230, %231 : vector<16x32xf32>
    %233 = arith.truncf %232 : vector<16x32xf32> to vector<16x32xbf16>
    %c16_134 = arith.constant 16 : index
    %c0_135 = arith.constant 0 : index
    %234 = vector.load %arg15[%c16_134, %c0_135] : memref<48x32xbf16, #tpu.memory_space<vmem>>, vector<16x32xbf16>
    tpu.vector_store %arg15[%c16_134, %c0_135], %233 {strides = array<i32>} : memref<48x32xbf16, #tpu.memory_space<vmem>>, vector<16x32xbf16>,
    %c6_136 = arith.constant 6 : index
    %c0_137 = arith.constant 0 : index
    %235 = vector.load %arg15[%c6_136, %c0_137] : memref<48x32xbf16, #tpu.memory_space<vmem>>, vector<16x32xbf16>
    %cst_138 = arith.constant 0.000000e+00 : bf16
    %236 = vector.broadcast %cst_138 : bf16 to vector<16x32xbf16>
    %237 = vector.shape_cast %18 : vector<16x1xi1> to vector<16x1xi1>
    %238 = vector.broadcast %237 : vector<16x1xi1> to vector<16x32xi1>
    %239 = arith.select %238, %235, %236 : vector<16x32xi1>, vector<16x32xbf16>
    %c0_139 = arith.constant 0 : index
    %c0_140 = arith.constant 0 : index
    %240 = vector.load %arg17[%c0_139, %c0_140] : memref<16x800xbf16, #tpu.memory_space<vmem>>, vector<16x32xbf16>
    tpu.vector_store %arg17[%c0_139, %c0_140], %239 {strides = array<i32>} : memref<16x800xbf16, #tpu.memory_space<vmem>>, vector<16x32xbf16>,
    %c7_141 = arith.constant 7 : index
    %c0_142 = arith.constant 0 : index
    %241 = vector.load %arg15[%c7_141, %c0_142] : memref<48x32xbf16, #tpu.memory_space<vmem>>, vector<16x32xbf16>
    %cst_143 = arith.constant 0.000000e+00 : bf16
    %242 = vector.broadcast %cst_143 : bf16 to vector<16x32xbf16>
    %243 = vector.shape_cast %20 : vector<16x1xi1> to vector<16x1xi1>
    %244 = vector.broadcast %243 : vector<16x1xi1> to vector<16x32xi1>
    %245 = arith.select %244, %241, %242 : vector<16x32xi1>, vector<16x32xbf16>
    %c0_144 = arith.constant 0 : index
    %c32_145 = arith.constant 32 : index
    %246 = vector.load %arg17[%c0_144, %c32_145] : memref<16x800xbf16, #tpu.memory_space<vmem>>, vector<16x32xbf16>
    tpu.vector_store %arg17[%c0_144, %c32_145], %245 {strides = array<i32>} : memref<16x800xbf16, #tpu.memory_space<vmem>>, vector<16x32xbf16>,
    %c8_146 = arith.constant 8 : index
    %c0_147 = arith.constant 0 : index
    %247 = vector.load %arg15[%c8_146, %c0_147] : memref<48x32xbf16, #tpu.memory_space<vmem>>, vector<16x32xbf16>
    %c0_148 = arith.constant 0 : index
    %c64_149 = arith.constant 64 : index
    %248 = vector.load %arg17[%c0_148, %c64_149] : memref<16x800xbf16, #tpu.memory_space<vmem>>, vector<16x32xbf16>
    tpu.vector_store %arg17[%c0_148, %c64_149], %247 {strides = array<i32>} : memref<16x800xbf16, #tpu.memory_space<vmem>>, vector<16x32xbf16>,
    %c9_150 = arith.constant 9 : index
    %c0_151 = arith.constant 0 : index
    %249 = vector.load %arg15[%c9_150, %c0_151] : memref<48x32xbf16, #tpu.memory_space<vmem>>, vector<16x32xbf16>
    %cst_152 = arith.constant 0.000000e+00 : bf16
    %250 = vector.broadcast %cst_152 : bf16 to vector<16x32xbf16>
    %251 = vector.shape_cast %22 : vector<16x1xi1> to vector<16x1xi1>
    %252 = vector.broadcast %251 : vector<16x1xi1> to vector<16x32xi1>
    %253 = arith.select %252, %249, %250 : vector<16x32xi1>, vector<16x32xbf16>
    %c0_153 = arith.constant 0 : index
    %c96_154 = arith.constant 96 : index
    %254 = vector.load %arg17[%c0_153, %c96_154] : memref<16x800xbf16, #tpu.memory_space<vmem>>, vector<16x32xbf16>
    tpu.vector_store %arg17[%c0_153, %c96_154], %253 {strides = array<i32>} : memref<16x800xbf16, #tpu.memory_space<vmem>>, vector<16x32xbf16>,
    %c10_155 = arith.constant 10 : index
    %c0_156 = arith.constant 0 : index
    %255 = vector.load %arg15[%c10_155, %c0_156] : memref<48x32xbf16, #tpu.memory_space<vmem>>, vector<16x32xbf16>
    %cst_157 = arith.constant 0.000000e+00 : bf16
    %256 = vector.broadcast %cst_157 : bf16 to vector<16x32xbf16>
    %257 = vector.shape_cast %24 : vector<16x1xi1> to vector<16x1xi1>
    %258 = vector.broadcast %257 : vector<16x1xi1> to vector<16x32xi1>
    %259 = arith.select %258, %255, %256 : vector<16x32xi1>, vector<16x32xbf16>
    %c0_158 = arith.constant 0 : index
    %c128_159 = arith.constant 128 : index
    %260 = vector.load %arg17[%c0_158, %c128_159] : memref<16x800xbf16, #tpu.memory_space<vmem>>, vector<16x32xbf16>
    tpu.vector_store %arg17[%c0_158, %c128_159], %259 {strides = array<i32>} : memref<16x800xbf16, #tpu.memory_space<vmem>>, vector<16x32xbf16>,
    %c10_160 = arith.constant 10 : index
    %c0_161 = arith.constant 0 : index
    %261 = vector.load %arg15[%c10_160, %c0_161] : memref<48x32xbf16, #tpu.memory_space<vmem>>, vector<16x32xbf16>
    %cst_162 = arith.constant 0.000000e+00 : bf16
    %262 = vector.broadcast %cst_162 : bf16 to vector<16x32xbf16>
    %263 = vector.shape_cast %18 : vector<16x1xi1> to vector<16x1xi1>
    %264 = vector.broadcast %263 : vector<16x1xi1> to vector<16x32xi1>
    %265 = arith.select %264, %261, %262 : vector<16x32xi1>, vector<16x32xbf16>
    %c0_163 = arith.constant 0 : index
    %c160_164 = arith.constant 160 : index
    %266 = vector.load %arg17[%c0_163, %c160_164] : memref<16x800xbf16, #tpu.memory_space<vmem>>, vector<16x32xbf16>
    tpu.vector_store %arg17[%c0_163, %c160_164], %265 {strides = array<i32>} : memref<16x800xbf16, #tpu.memory_space<vmem>>, vector<16x32xbf16>,
    %c11_165 = arith.constant 11 : index
    %c0_166 = arith.constant 0 : index
    %267 = vector.load %arg15[%c11_165, %c0_166] : memref<48x32xbf16, #tpu.memory_space<vmem>>, vector<16x32xbf16>
    %cst_167 = arith.constant 0.000000e+00 : bf16
    %268 = vector.broadcast %cst_167 : bf16 to vector<16x32xbf16>
    %269 = vector.shape_cast %20 : vector<16x1xi1> to vector<16x1xi1>
    %270 = vector.broadcast %269 : vector<16x1xi1> to vector<16x32xi1>
    %271 = arith.select %270, %267, %268 : vector<16x32xi1>, vector<16x32xbf16>
    %c0_168 = arith.constant 0 : index
    %c192_169 = arith.constant 192 : index
    %272 = vector.load %arg17[%c0_168, %c192_169] : memref<16x800xbf16, #tpu.memory_space<vmem>>, vector<16x32xbf16>
    tpu.vector_store %arg17[%c0_168, %c192_169], %271 {strides = array<i32>} : memref<16x800xbf16, #tpu.memory_space<vmem>>, vector<16x32xbf16>,
    %c12_170 = arith.constant 12 : index
    %c0_171 = arith.constant 0 : index
    %273 = vector.load %arg15[%c12_170, %c0_171] : memref<48x32xbf16, #tpu.memory_space<vmem>>, vector<16x32xbf16>
    %c0_172 = arith.constant 0 : index
    %c224_173 = arith.constant 224 : index
    %274 = vector.load %arg17[%c0_172, %c224_173] : memref<16x800xbf16, #tpu.memory_space<vmem>>, vector<16x32xbf16>
    tpu.vector_store %arg17[%c0_172, %c224_173], %273 {strides = array<i32>} : memref<16x800xbf16, #tpu.memory_space<vmem>>, vector<16x32xbf16>,
    %c13_174 = arith.constant 13 : index
    %c0_175 = arith.constant 0 : index
    %275 = vector.load %arg15[%c13_174, %c0_175] : memref<48x32xbf16, #tpu.memory_space<vmem>>, vector<16x32xbf16>
    %cst_176 = arith.constant 0.000000e+00 : bf16
    %276 = vector.broadcast %cst_176 : bf16 to vector<16x32xbf16>
    %277 = vector.shape_cast %22 : vector<16x1xi1> to vector<16x1xi1>
    %278 = vector.broadcast %277 : vector<16x1xi1> to vector<16x32xi1>
    %279 = arith.select %278, %275, %276 : vector<16x32xi1>, vector<16x32xbf16>
    %c0_177 = arith.constant 0 : index
    %c256_178 = arith.constant 256 : index
    %280 = vector.load %arg17[%c0_177, %c256_178] : memref<16x800xbf16, #tpu.memory_space<vmem>>, vector<16x32xbf16>
    tpu.vector_store %arg17[%c0_177, %c256_178], %279 {strides = array<i32>} : memref<16x800xbf16, #tpu.memory_space<vmem>>, vector<16x32xbf16>,
    %c14_179 = arith.constant 14 : index
    %c0_180 = arith.constant 0 : index
    %281 = vector.load %arg15[%c14_179, %c0_180] : memref<48x32xbf16, #tpu.memory_space<vmem>>, vector<16x32xbf16>
    %cst_181 = arith.constant 0.000000e+00 : bf16
    %282 = vector.broadcast %cst_181 : bf16 to vector<16x32xbf16>
    %283 = vector.shape_cast %24 : vector<16x1xi1> to vector<16x1xi1>
    %284 = vector.broadcast %283 : vector<16x1xi1> to vector<16x32xi1>
    %285 = arith.select %284, %281, %282 : vector<16x32xi1>, vector<16x32xbf16>
    %c0_182 = arith.constant 0 : index
    %c288_183 = arith.constant 288 : index
    %286 = vector.load %arg17[%c0_182, %c288_183] : memref<16x800xbf16, #tpu.memory_space<vmem>>, vector<16x32xbf16>
    tpu.vector_store %arg17[%c0_182, %c288_183], %285 {strides = array<i32>} : memref<16x800xbf16, #tpu.memory_space<vmem>>, vector<16x32xbf16>,
    %c14_184 = arith.constant 14 : index
    %c0_185 = arith.constant 0 : index
    %287 = vector.load %arg15[%c14_184, %c0_185] : memref<48x32xbf16, #tpu.memory_space<vmem>>, vector<16x32xbf16>
    %cst_186 = arith.constant 0.000000e+00 : bf16
    %288 = vector.broadcast %cst_186 : bf16 to vector<16x32xbf16>
    %289 = vector.shape_cast %18 : vector<16x1xi1> to vector<16x1xi1>
    %290 = vector.broadcast %289 : vector<16x1xi1> to vector<16x32xi1>
    %291 = arith.select %290, %287, %288 : vector<16x32xi1>, vector<16x32xbf16>
    %c0_187 = arith.constant 0 : index
    %c320_188 = arith.constant 320 : index
    %292 = vector.load %arg17[%c0_187, %c320_188] : memref<16x800xbf16, #tpu.memory_space<vmem>>, vector<16x32xbf16>
    tpu.vector_store %arg17[%c0_187, %c320_188], %291 {strides = array<i32>} : memref<16x800xbf16, #tpu.memory_space<vmem>>, vector<16x32xbf16>,
    %c15_189 = arith.constant 15 : index
    %c0_190 = arith.constant 0 : index
    %293 = vector.load %arg15[%c15_189, %c0_190] : memref<48x32xbf16, #tpu.memory_space<vmem>>, vector<16x32xbf16>
    %cst_191 = arith.constant 0.000000e+00 : bf16
    %294 = vector.broadcast %cst_191 : bf16 to vector<16x32xbf16>
    %295 = vector.shape_cast %20 : vector<16x1xi1> to vector<16x1xi1>
    %296 = vector.broadcast %295 : vector<16x1xi1> to vector<16x32xi1>
    %297 = arith.select %296, %293, %294 : vector<16x32xi1>, vector<16x32xbf16>
    %c0_192 = arith.constant 0 : index
    %c352_193 = arith.constant 352 : index
    %298 = vector.load %arg17[%c0_192, %c352_193] : memref<16x800xbf16, #tpu.memory_space<vmem>>, vector<16x32xbf16>
    tpu.vector_store %arg17[%c0_192, %c352_193], %297 {strides = array<i32>} : memref<16x800xbf16, #tpu.memory_space<vmem>>, vector<16x32xbf16>,
    %c16_194 = arith.constant 16 : index
    %c0_195 = arith.constant 0 : index
    %299 = vector.load %arg15[%c16_194, %c0_195] : memref<48x32xbf16, #tpu.memory_space<vmem>>, vector<16x32xbf16>
    %c0_196 = arith.constant 0 : index
    %c384_197 = arith.constant 384 : index
    %300 = vector.load %arg17[%c0_196, %c384_197] : memref<16x800xbf16, #tpu.memory_space<vmem>>, vector<16x32xbf16>
    tpu.vector_store %arg17[%c0_196, %c384_197], %299 {strides = array<i32>} : memref<16x800xbf16, #tpu.memory_space<vmem>>, vector<16x32xbf16>,
    %c17_198 = arith.constant 17 : index
    %c0_199 = arith.constant 0 : index
    %301 = vector.load %arg15[%c17_198, %c0_199] : memref<48x32xbf16, #tpu.memory_space<vmem>>, vector<16x32xbf16>
    %cst_200 = arith.constant 0.000000e+00 : bf16
    %302 = vector.broadcast %cst_200 : bf16 to vector<16x32xbf16>
    %303 = vector.shape_cast %22 : vector<16x1xi1> to vector<16x1xi1>
    %304 = vector.broadcast %303 : vector<16x1xi1> to vector<16x32xi1>
    %305 = arith.select %304, %301, %302 : vector<16x32xi1>, vector<16x32xbf16>
    %c0_201 = arith.constant 0 : index
    %c416_202 = arith.constant 416 : index
    %306 = vector.load %arg17[%c0_201, %c416_202] : memref<16x800xbf16, #tpu.memory_space<vmem>>, vector<16x32xbf16>
    tpu.vector_store %arg17[%c0_201, %c416_202], %305 {strides = array<i32>} : memref<16x800xbf16, #tpu.memory_space<vmem>>, vector<16x32xbf16>,
    %c18_203 = arith.constant 18 : index
    %c0_204 = arith.constant 0 : index
    %307 = vector.load %arg15[%c18_203, %c0_204] : memref<48x32xbf16, #tpu.memory_space<vmem>>, vector<16x32xbf16>
    %cst_205 = arith.constant 0.000000e+00 : bf16
    %308 = vector.broadcast %cst_205 : bf16 to vector<16x32xbf16>
    %309 = vector.shape_cast %24 : vector<16x1xi1> to vector<16x1xi1>
    %310 = vector.broadcast %309 : vector<16x1xi1> to vector<16x32xi1>
    %311 = arith.select %310, %307, %308 : vector<16x32xi1>, vector<16x32xbf16>
    %c0_206 = arith.constant 0 : index
    %c448_207 = arith.constant 448 : index
    %312 = vector.load %arg17[%c0_206, %c448_207] : memref<16x800xbf16, #tpu.memory_space<vmem>>, vector<16x32xbf16>
    tpu.vector_store %arg17[%c0_206, %c448_207], %311 {strides = array<i32>} : memref<16x800xbf16, #tpu.memory_space<vmem>>, vector<16x32xbf16>,
    %c18_208 = arith.constant 18 : index
    %c0_209 = arith.constant 0 : index
    %313 = vector.load %arg15[%c18_208, %c0_209] : memref<48x32xbf16, #tpu.memory_space<vmem>>, vector<16x32xbf16>
    %cst_210 = arith.constant 0.000000e+00 : bf16
    %314 = vector.broadcast %cst_210 : bf16 to vector<16x32xbf16>
    %315 = vector.shape_cast %18 : vector<16x1xi1> to vector<16x1xi1>
    %316 = vector.broadcast %315 : vector<16x1xi1> to vector<16x32xi1>
    %317 = arith.select %316, %313, %314 : vector<16x32xi1>, vector<16x32xbf16>
    %c0_211 = arith.constant 0 : index
    %c480_212 = arith.constant 480 : index
    %318 = vector.load %arg17[%c0_211, %c480_212] : memref<16x800xbf16, #tpu.memory_space<vmem>>, vector<16x32xbf16>
    tpu.vector_store %arg17[%c0_211, %c480_212], %317 {strides = array<i32>} : memref<16x800xbf16, #tpu.memory_space<vmem>>, vector<16x32xbf16>,
    %c19_213 = arith.constant 19 : index
    %c0_214 = arith.constant 0 : index
    %319 = vector.load %arg15[%c19_213, %c0_214] : memref<48x32xbf16, #tpu.memory_space<vmem>>, vector<16x32xbf16>
    %cst_215 = arith.constant 0.000000e+00 : bf16
    %320 = vector.broadcast %cst_215 : bf16 to vector<16x32xbf16>
    %321 = vector.shape_cast %20 : vector<16x1xi1> to vector<16x1xi1>
    %322 = vector.broadcast %321 : vector<16x1xi1> to vector<16x32xi1>
    %323 = arith.select %322, %319, %320 : vector<16x32xi1>, vector<16x32xbf16>
    %c0_216 = arith.constant 0 : index
    %c512_217 = arith.constant 512 : index
    %324 = vector.load %arg17[%c0_216, %c512_217] : memref<16x800xbf16, #tpu.memory_space<vmem>>, vector<16x32xbf16>
    tpu.vector_store %arg17[%c0_216, %c512_217], %323 {strides = array<i32>} : memref<16x800xbf16, #tpu.memory_space<vmem>>, vector<16x32xbf16>,
    %c20_218 = arith.constant 20 : index
    %c0_219 = arith.constant 0 : index
    %325 = vector.load %arg15[%c20_218, %c0_219] : memref<48x32xbf16, #tpu.memory_space<vmem>>, vector<16x32xbf16>
    %c0_220 = arith.constant 0 : index
    %c544_221 = arith.constant 544 : index
    %326 = vector.load %arg17[%c0_220, %c544_221] : memref<16x800xbf16, #tpu.memory_space<vmem>>, vector<16x32xbf16>
    tpu.vector_store %arg17[%c0_220, %c544_221], %325 {strides = array<i32>} : memref<16x800xbf16, #tpu.memory_space<vmem>>, vector<16x32xbf16>,
    %c21_222 = arith.constant 21 : index
    %c0_223 = arith.constant 0 : index
    %327 = vector.load %arg15[%c21_222, %c0_223] : memref<48x32xbf16, #tpu.memory_space<vmem>>, vector<16x32xbf16>
    %cst_224 = arith.constant 0.000000e+00 : bf16
    %328 = vector.broadcast %cst_224 : bf16 to vector<16x32xbf16>
    %329 = vector.shape_cast %22 : vector<16x1xi1> to vector<16x1xi1>
    %330 = vector.broadcast %329 : vector<16x1xi1> to vector<16x32xi1>
    %331 = arith.select %330, %327, %328 : vector<16x32xi1>, vector<16x32xbf16>
    %c0_225 = arith.constant 0 : index
    %c576_226 = arith.constant 576 : index
    %332 = vector.load %arg17[%c0_225, %c576_226] : memref<16x800xbf16, #tpu.memory_space<vmem>>, vector<16x32xbf16>
    tpu.vector_store %arg17[%c0_225, %c576_226], %331 {strides = array<i32>} : memref<16x800xbf16, #tpu.memory_space<vmem>>, vector<16x32xbf16>,
    %c22_227 = arith.constant 22 : index
    %c0_228 = arith.constant 0 : index
    %333 = vector.load %arg15[%c22_227, %c0_228] : memref<48x32xbf16, #tpu.memory_space<vmem>>, vector<16x32xbf16>
    %cst_229 = arith.constant 0.000000e+00 : bf16
    %334 = vector.broadcast %cst_229 : bf16 to vector<16x32xbf16>
    %335 = vector.shape_cast %24 : vector<16x1xi1> to vector<16x1xi1>
    %336 = vector.broadcast %335 : vector<16x1xi1> to vector<16x32xi1>
    %337 = arith.select %336, %333, %334 : vector<16x32xi1>, vector<16x32xbf16>
    %c0_230 = arith.constant 0 : index
    %c608_231 = arith.constant 608 : index
    %338 = vector.load %arg17[%c0_230, %c608_231] : memref<16x800xbf16, #tpu.memory_space<vmem>>, vector<16x32xbf16>
    tpu.vector_store %arg17[%c0_230, %c608_231], %337 {strides = array<i32>} : memref<16x800xbf16, #tpu.memory_space<vmem>>, vector<16x32xbf16>,
    %c22_232 = arith.constant 22 : index
    %c0_233 = arith.constant 0 : index
    %339 = vector.load %arg15[%c22_232, %c0_233] : memref<48x32xbf16, #tpu.memory_space<vmem>>, vector<16x32xbf16>
    %cst_234 = arith.constant 0.000000e+00 : bf16
    %340 = vector.broadcast %cst_234 : bf16 to vector<16x32xbf16>
    %341 = vector.shape_cast %18 : vector<16x1xi1> to vector<16x1xi1>
    %342 = vector.broadcast %341 : vector<16x1xi1> to vector<16x32xi1>
    %343 = arith.select %342, %339, %340 : vector<16x32xi1>, vector<16x32xbf16>
    %c0_235 = arith.constant 0 : index
    %c640_236 = arith.constant 640 : index
    %344 = vector.load %arg17[%c0_235, %c640_236] : memref<16x800xbf16, #tpu.memory_space<vmem>>, vector<16x32xbf16>
    tpu.vector_store %arg17[%c0_235, %c640_236], %343 {strides = array<i32>} : memref<16x800xbf16, #tpu.memory_space<vmem>>, vector<16x32xbf16>,
    %c23_237 = arith.constant 23 : index
    %c0_238 = arith.constant 0 : index
    %345 = vector.load %arg15[%c23_237, %c0_238] : memref<48x32xbf16, #tpu.memory_space<vmem>>, vector<16x32xbf16>
    %cst_239 = arith.constant 0.000000e+00 : bf16
    %346 = vector.broadcast %cst_239 : bf16 to vector<16x32xbf16>
    %347 = vector.shape_cast %20 : vector<16x1xi1> to vector<16x1xi1>
    %348 = vector.broadcast %347 : vector<16x1xi1> to vector<16x32xi1>
    %349 = arith.select %348, %345, %346 : vector<16x32xi1>, vector<16x32xbf16>
    %c0_240 = arith.constant 0 : index
    %c672_241 = arith.constant 672 : index
    %350 = vector.load %arg17[%c0_240, %c672_241] : memref<16x800xbf16, #tpu.memory_space<vmem>>, vector<16x32xbf16>
    tpu.vector_store %arg17[%c0_240, %c672_241], %349 {strides = array<i32>} : memref<16x800xbf16, #tpu.memory_space<vmem>>, vector<16x32xbf16>,
    %c24_242 = arith.constant 24 : index
    %c0_243 = arith.constant 0 : index
    %351 = vector.load %arg15[%c24_242, %c0_243] : memref<48x32xbf16, #tpu.memory_space<vmem>>, vector<16x32xbf16>
    %c0_244 = arith.constant 0 : index
    %c704_245 = arith.constant 704 : index
    %352 = vector.load %arg17[%c0_244, %c704_245] : memref<16x800xbf16, #tpu.memory_space<vmem>>, vector<16x32xbf16>
    tpu.vector_store %arg17[%c0_244, %c704_245], %351 {strides = array<i32>} : memref<16x800xbf16, #tpu.memory_space<vmem>>, vector<16x32xbf16>,
    %c25_246 = arith.constant 25 : index
    %c0_247 = arith.constant 0 : index
    %353 = vector.load %arg15[%c25_246, %c0_247] : memref<48x32xbf16, #tpu.memory_space<vmem>>, vector<16x32xbf16>
    %cst_248 = arith.constant 0.000000e+00 : bf16
    %354 = vector.broadcast %cst_248 : bf16 to vector<16x32xbf16>
    %355 = vector.shape_cast %22 : vector<16x1xi1> to vector<16x1xi1>
    %356 = vector.broadcast %355 : vector<16x1xi1> to vector<16x32xi1>
    %357 = arith.select %356, %353, %354 : vector<16x32xi1>, vector<16x32xbf16>
    %c0_249 = arith.constant 0 : index
    %c736_250 = arith.constant 736 : index
    %358 = vector.load %arg17[%c0_249, %c736_250] : memref<16x800xbf16, #tpu.memory_space<vmem>>, vector<16x32xbf16>
    tpu.vector_store %arg17[%c0_249, %c736_250], %357 {strides = array<i32>} : memref<16x800xbf16, #tpu.memory_space<vmem>>, vector<16x32xbf16>,
    %c26_251 = arith.constant 26 : index
    %c0_252 = arith.constant 0 : index
    %359 = vector.load %arg15[%c26_251, %c0_252] : memref<48x32xbf16, #tpu.memory_space<vmem>>, vector<16x32xbf16>
    %cst_253 = arith.constant 0.000000e+00 : bf16
    %360 = vector.broadcast %cst_253 : bf16 to vector<16x32xbf16>
    %361 = vector.shape_cast %24 : vector<16x1xi1> to vector<16x1xi1>
    %362 = vector.broadcast %361 : vector<16x1xi1> to vector<16x32xi1>
    %363 = arith.select %362, %359, %360 : vector<16x32xi1>, vector<16x32xbf16>
    %c0_254 = arith.constant 0 : index
    %c768_255 = arith.constant 768 : index
    %364 = vector.load %arg17[%c0_254, %c768_255] : memref<16x800xbf16, #tpu.memory_space<vmem>>, vector<16x32xbf16>
    tpu.vector_store %arg17[%c0_254, %c768_255], %363 {strides = array<i32>} : memref<16x800xbf16, #tpu.memory_space<vmem>>, vector<16x32xbf16>,
    %c0_256 = arith.constant 0 : index
    %c0_257 = arith.constant 0 : index
    %365 = vector.load %arg17[%c0_256, %c0_257] : memref<16x800xbf16, #tpu.memory_space<vmem>>, vector<16x800xbf16>
    %c0_258 = arith.constant 0 : index
    %c0_259 = arith.constant 0 : index
    %366 = vector.load %arg7[%c0_258, %c0_259] : memref<800x16xbf16, #tpu.memory_space<vmem>>, vector<800x16xbf16>
    %cst_260 = arith.constant dense<0.000000e+00> : vector<16x16xf32>
    %367 = tpu.matmul %365, %366, %cst_260 {dimension_numbers = #tpu.dot_dimension_numbers<[1], [0], [0], [1], [0, 0, 1, 1], [], []>} : vector<16x800xbf16>, vector<800x16xbf16>, vector<16x16xf32> -> vector<16x16xf32>
    %c0_261 = arith.constant 0 : index
    %c0_262 = arith.constant 0 : index
    %368 = vector.load %arg8[%c0_261, %c0_262] : memref<1x16xf32, #tpu.memory_space<vmem>>, vector<1x16xf32>
    %369 = vector.broadcast %368 : vector<1x16xf32> to vector<16x16xf32>
    %370 = arith.addf %367, %369 : vector<16x16xf32>
    %371 = vector.extract_strided_slice %370 {offsets = [0, 0], sizes = [16, 8], strides = [1, 1]} : vector<16x16xf32> to vector<16x8xf32>
    %372 = vector.extract_strided_slice %370 {offsets = [0, 8], sizes = [16, 8], strides = [1, 1]} : vector<16x16xf32> to vector<16x8xf32>
    %cst_263 = arith.constant 0.000000e+00 : f32
    %373 = vector.broadcast %cst_263 : f32 to vector<16x8xf32>
    %374 = arith.maximumf %372, %373 : vector<16x8xf32>
    %375 = vector.broadcast %cst_263 : f32 to vector<16x8xf32>
    %376 = arith.subf %372, %375 : vector<16x8xf32>
    %377 = arith.cmpf one, %376, %376 : vector<16x8xf32>
    %378 = vector.broadcast %cst_263 : f32 to vector<16x8xf32>
    %379 = arith.addf %372, %378 : vector<16x8xf32>
    %380 = math.absf %376 : vector<16x8xf32>
    %cst_264 = arith.constant 0.000000e+00 : f32
    %381 = vector.broadcast %cst_264 : f32 to vector<16x8xf32>
    %382 = arith.subf %381, %380 : vector<16x8xf32>
    %383 = math.exp %382 : vector<16x8xf32>
    %384 = math.log1p %383 : vector<16x8xf32>
    %385 = arith.addf %374, %384 : vector<16x8xf32>
    %386 = arith.select %377, %379, %385 : vector<16x8xi1>, vector<16x8xf32>
    %cst_265 = arith.constant 9.99999997E-7 : f32
    %387 = vector.broadcast %cst_265 : f32 to vector<16x8xf32>
    %388 = arith.addf %386, %387 : vector<16x8xf32>
    %c0_266 = arith.constant 0 : index
    %c0_267 = arith.constant 0 : index
    %c0_268 = arith.constant 0 : index
    %389 = vector.load %arg2[%c0_266, %c0_267, %c0_268] : memref<1x16x8xf32, #tpu.memory_space<vmem>>, vector<1x16x8xf32>
    %390 = vector.shape_cast %389 : vector<1x16x8xf32> to vector<16x8xf32>
    %391 = arith.mulf %388, %390 : vector<16x8xf32>
    %392 = arith.addf %371, %391 : vector<16x8xf32>
    %393 = tpu.reciprocal %181 {approx = true} : vector<16x8xf32> -> vector<16x8xf32>
    %394 = tpu.reciprocal %388 {approx = true} : vector<16x8xf32> -> vector<16x8xf32>
    %395 = arith.subf %371, %164 : vector<16x8xf32>
    %c0_269 = arith.constant 0 : index
    %c0_270 = arith.constant 0 : index
    %c0_271 = arith.constant 0 : index
    %396 = vector.load %arg14[%c0_269, %c0_270, %c0_271] : memref<1x16x8xf32, #tpu.memory_space<vmem>>, vector<1x16x8xf32>
    %397 = vector.shape_cast %396 : vector<1x16x8xf32> to vector<16x8xf32>
    %398 = arith.mulf %181, %394 : vector<16x8xf32>
    %399 = math.log %398 : vector<16x8xf32>
    %400 = arith.mulf %388, %388 : vector<16x8xf32>
    %401 = arith.mulf %395, %395 : vector<16x8xf32>
    %402 = arith.addf %400, %401 : vector<16x8xf32>
    %cst_272 = arith.constant 5.000000e-01 : f32
    %403 = vector.broadcast %cst_272 : f32 to vector<16x8xf32>
    %404 = arith.mulf %403, %402 : vector<16x8xf32>
    %405 = arith.mulf %393, %393 : vector<16x8xf32>
    %406 = arith.mulf %404, %405 : vector<16x8xf32>
    %407 = arith.addf %399, %406 : vector<16x8xf32>
    %cst_273 = arith.constant 5.000000e-01 : f32
    %408 = vector.broadcast %cst_273 : f32 to vector<16x8xf32>
    %409 = arith.subf %407, %408 : vector<16x8xf32>
    %410 = arith.addf %397, %409 : vector<16x8xf32>
    %c0_274 = arith.constant 0 : index
    %c0_275 = arith.constant 0 : index
    %c0_276 = arith.constant 0 : index
    %411 = vector.load %arg14[%c0_274, %c0_275, %c0_276] : memref<1x16x8xf32, #tpu.memory_space<vmem>>, vector<1x16x8xf32>
    %412 = vector.shape_cast %411 : vector<1x16x8xf32> to vector<16x8xf32>
    %413 = vector.shape_cast %410 : vector<16x8xf32> to vector<1x16x8xf32>
    tpu.vector_store %arg14[%c0_274, %c0_275, %c0_276], %413 {strides = array<i32>} : memref<1x16x8xf32, #tpu.memory_space<vmem>>, vector<1x16x8xf32>,
    %414 = arith.truncf %392 : vector<16x8xf32> to vector<16x8xbf16>
    %c16_277 = arith.constant 16 : index
    %c0_278 = arith.constant 0 : index
    %415 = vector.load %arg16[%c16_277, %c0_278] : memref<48x8xbf16, #tpu.memory_space<vmem>>, vector<16x8xbf16>
    tpu.vector_store %arg16[%c16_277, %c0_278], %414 {strides = array<i32>} : memref<48x8xbf16, #tpu.memory_space<vmem>>, vector<16x8xbf16>,
    %c6_279 = arith.constant 6 : index
    %c0_280 = arith.constant 0 : index
    %416 = vector.load %arg16[%c6_279, %c0_280] : memref<48x8xbf16, #tpu.memory_space<vmem>>, vector<16x8xbf16>
    %cst_281 = arith.constant 0.000000e+00 : bf16
    %417 = vector.broadcast %cst_281 : bf16 to vector<16x8xbf16>
    %418 = vector.shape_cast %18 : vector<16x1xi1> to vector<16x1xi1>
    %419 = vector.broadcast %418 : vector<16x1xi1> to vector<16x8xi1>
    %420 = arith.select %419, %416, %417 : vector<16x8xi1>, vector<16x8xbf16>
    %c0_282 = arith.constant 0 : index
    %c0_283 = arith.constant 0 : index
    %421 = vector.load %arg18[%c0_282, %c0_283] : memref<16x200xbf16, #tpu.memory_space<vmem>>, vector<16x8xbf16>
    tpu.vector_store %arg18[%c0_282, %c0_283], %420 {strides = array<i32>} : memref<16x200xbf16, #tpu.memory_space<vmem>>, vector<16x8xbf16>,
    %c7_284 = arith.constant 7 : index
    %c0_285 = arith.constant 0 : index
    %422 = vector.load %arg16[%c7_284, %c0_285] : memref<48x8xbf16, #tpu.memory_space<vmem>>, vector<16x8xbf16>
    %cst_286 = arith.constant 0.000000e+00 : bf16
    %423 = vector.broadcast %cst_286 : bf16 to vector<16x8xbf16>
    %424 = vector.shape_cast %20 : vector<16x1xi1> to vector<16x1xi1>
    %425 = vector.broadcast %424 : vector<16x1xi1> to vector<16x8xi1>
    %426 = arith.select %425, %422, %423 : vector<16x8xi1>, vector<16x8xbf16>
    %c0_287 = arith.constant 0 : index
    %c8_288 = arith.constant 8 : index
    %427 = vector.load %arg18[%c0_287, %c8_288] : memref<16x200xbf16, #tpu.memory_space<vmem>>, vector<16x8xbf16>
    tpu.vector_store %arg18[%c0_287, %c8_288], %426 {strides = array<i32>} : memref<16x200xbf16, #tpu.memory_space<vmem>>, vector<16x8xbf16>,
    %c8_289 = arith.constant 8 : index
    %c0_290 = arith.constant 0 : index
    %428 = vector.load %arg16[%c8_289, %c0_290] : memref<48x8xbf16, #tpu.memory_space<vmem>>, vector<16x8xbf16>
    %c0_291 = arith.constant 0 : index
    %c16_292 = arith.constant 16 : index
    %429 = vector.load %arg18[%c0_291, %c16_292] : memref<16x200xbf16, #tpu.memory_space<vmem>>, vector<16x8xbf16>
    tpu.vector_store %arg18[%c0_291, %c16_292], %428 {strides = array<i32>} : memref<16x200xbf16, #tpu.memory_space<vmem>>, vector<16x8xbf16>,
    %c9_293 = arith.constant 9 : index
    %c0_294 = arith.constant 0 : index
    %430 = vector.load %arg16[%c9_293, %c0_294] : memref<48x8xbf16, #tpu.memory_space<vmem>>, vector<16x8xbf16>
    %cst_295 = arith.constant 0.000000e+00 : bf16
    %431 = vector.broadcast %cst_295 : bf16 to vector<16x8xbf16>
    %432 = vector.shape_cast %22 : vector<16x1xi1> to vector<16x1xi1>
    %433 = vector.broadcast %432 : vector<16x1xi1> to vector<16x8xi1>
    %434 = arith.select %433, %430, %431 : vector<16x8xi1>, vector<16x8xbf16>
    %c0_296 = arith.constant 0 : index
    %c24_297 = arith.constant 24 : index
    %435 = vector.load %arg18[%c0_296, %c24_297] : memref<16x200xbf16, #tpu.memory_space<vmem>>, vector<16x8xbf16>
    tpu.vector_store %arg18[%c0_296, %c24_297], %434 {strides = array<i32>} : memref<16x200xbf16, #tpu.memory_space<vmem>>, vector<16x8xbf16>,
    %c10_298 = arith.constant 10 : index
    %c0_299 = arith.constant 0 : index
    %436 = vector.load %arg16[%c10_298, %c0_299] : memref<48x8xbf16, #tpu.memory_space<vmem>>, vector<16x8xbf16>
    %cst_300 = arith.constant 0.000000e+00 : bf16
    %437 = vector.broadcast %cst_300 : bf16 to vector<16x8xbf16>
    %438 = vector.shape_cast %24 : vector<16x1xi1> to vector<16x1xi1>
    %439 = vector.broadcast %438 : vector<16x1xi1> to vector<16x8xi1>
    %440 = arith.select %439, %436, %437 : vector<16x8xi1>, vector<16x8xbf16>
    %c0_301 = arith.constant 0 : index
    %c32_302 = arith.constant 32 : index
    %441 = vector.load %arg18[%c0_301, %c32_302] : memref<16x200xbf16, #tpu.memory_space<vmem>>, vector<16x8xbf16>
    tpu.vector_store %arg18[%c0_301, %c32_302], %440 {strides = array<i32>} : memref<16x200xbf16, #tpu.memory_space<vmem>>, vector<16x8xbf16>,
    %c10_303 = arith.constant 10 : index
    %c0_304 = arith.constant 0 : index
    %442 = vector.load %arg16[%c10_303, %c0_304] : memref<48x8xbf16, #tpu.memory_space<vmem>>, vector<16x8xbf16>
    %cst_305 = arith.constant 0.000000e+00 : bf16
    %443 = vector.broadcast %cst_305 : bf16 to vector<16x8xbf16>
    %444 = vector.shape_cast %18 : vector<16x1xi1> to vector<16x1xi1>
    %445 = vector.broadcast %444 : vector<16x1xi1> to vector<16x8xi1>
    %446 = arith.select %445, %442, %443 : vector<16x8xi1>, vector<16x8xbf16>
    %c0_306 = arith.constant 0 : index
    %c40 = arith.constant 40 : index
    %447 = vector.load %arg18[%c0_306, %c40] : memref<16x200xbf16, #tpu.memory_space<vmem>>, vector<16x8xbf16>
    tpu.vector_store %arg18[%c0_306, %c40], %446 {strides = array<i32>} : memref<16x200xbf16, #tpu.memory_space<vmem>>, vector<16x8xbf16>,
    %c11_307 = arith.constant 11 : index
    %c0_308 = arith.constant 0 : index
    %448 = vector.load %arg16[%c11_307, %c0_308] : memref<48x8xbf16, #tpu.memory_space<vmem>>, vector<16x8xbf16>
    %cst_309 = arith.constant 0.000000e+00 : bf16
    %449 = vector.broadcast %cst_309 : bf16 to vector<16x8xbf16>
    %450 = vector.shape_cast %20 : vector<16x1xi1> to vector<16x1xi1>
    %451 = vector.broadcast %450 : vector<16x1xi1> to vector<16x8xi1>
    %452 = arith.select %451, %448, %449 : vector<16x8xi1>, vector<16x8xbf16>
    %c0_310 = arith.constant 0 : index
    %c48 = arith.constant 48 : index
    %453 = vector.load %arg18[%c0_310, %c48] : memref<16x200xbf16, #tpu.memory_space<vmem>>, vector<16x8xbf16>
    tpu.vector_store %arg18[%c0_310, %c48], %452 {strides = array<i32>} : memref<16x200xbf16, #tpu.memory_space<vmem>>, vector<16x8xbf16>,
    %c12_311 = arith.constant 12 : index
    %c0_312 = arith.constant 0 : index
    %454 = vector.load %arg16[%c12_311, %c0_312] : memref<48x8xbf16, #tpu.memory_space<vmem>>, vector<16x8xbf16>
    %c0_313 = arith.constant 0 : index
    %c56 = arith.constant 56 : index
    %455 = vector.load %arg18[%c0_313, %c56] : memref<16x200xbf16, #tpu.memory_space<vmem>>, vector<16x8xbf16>
    tpu.vector_store %arg18[%c0_313, %c56], %454 {strides = array<i32>} : memref<16x200xbf16, #tpu.memory_space<vmem>>, vector<16x8xbf16>,
    %c13_314 = arith.constant 13 : index
    %c0_315 = arith.constant 0 : index
    %456 = vector.load %arg16[%c13_314, %c0_315] : memref<48x8xbf16, #tpu.memory_space<vmem>>, vector<16x8xbf16>
    %cst_316 = arith.constant 0.000000e+00 : bf16
    %457 = vector.broadcast %cst_316 : bf16 to vector<16x8xbf16>
    %458 = vector.shape_cast %22 : vector<16x1xi1> to vector<16x1xi1>
    %459 = vector.broadcast %458 : vector<16x1xi1> to vector<16x8xi1>
    %460 = arith.select %459, %456, %457 : vector<16x8xi1>, vector<16x8xbf16>
    %c0_317 = arith.constant 0 : index
    %c64_318 = arith.constant 64 : index
    %461 = vector.load %arg18[%c0_317, %c64_318] : memref<16x200xbf16, #tpu.memory_space<vmem>>, vector<16x8xbf16>
    tpu.vector_store %arg18[%c0_317, %c64_318], %460 {strides = array<i32>} : memref<16x200xbf16, #tpu.memory_space<vmem>>, vector<16x8xbf16>,
    %c14_319 = arith.constant 14 : index
    %c0_320 = arith.constant 0 : index
    %462 = vector.load %arg16[%c14_319, %c0_320] : memref<48x8xbf16, #tpu.memory_space<vmem>>, vector<16x8xbf16>
    %cst_321 = arith.constant 0.000000e+00 : bf16
    %463 = vector.broadcast %cst_321 : bf16 to vector<16x8xbf16>
    %464 = vector.shape_cast %24 : vector<16x1xi1> to vector<16x1xi1>
    %465 = vector.broadcast %464 : vector<16x1xi1> to vector<16x8xi1>
    %466 = arith.select %465, %462, %463 : vector<16x8xi1>, vector<16x8xbf16>
    %c0_322 = arith.constant 0 : index
    %c72 = arith.constant 72 : index
    %467 = vector.load %arg18[%c0_322, %c72] : memref<16x200xbf16, #tpu.memory_space<vmem>>, vector<16x8xbf16>
    tpu.vector_store %arg18[%c0_322, %c72], %466 {strides = array<i32>} : memref<16x200xbf16, #tpu.memory_space<vmem>>, vector<16x8xbf16>,
    %c14_323 = arith.constant 14 : index
    %c0_324 = arith.constant 0 : index
    %468 = vector.load %arg16[%c14_323, %c0_324] : memref<48x8xbf16, #tpu.memory_space<vmem>>, vector<16x8xbf16>
    %cst_325 = arith.constant 0.000000e+00 : bf16
    %469 = vector.broadcast %cst_325 : bf16 to vector<16x8xbf16>
    %470 = vector.shape_cast %18 : vector<16x1xi1> to vector<16x1xi1>
    %471 = vector.broadcast %470 : vector<16x1xi1> to vector<16x8xi1>
    %472 = arith.select %471, %468, %469 : vector<16x8xi1>, vector<16x8xbf16>
    %c0_326 = arith.constant 0 : index
    %c80 = arith.constant 80 : index
    %473 = vector.load %arg18[%c0_326, %c80] : memref<16x200xbf16, #tpu.memory_space<vmem>>, vector<16x8xbf16>
    tpu.vector_store %arg18[%c0_326, %c80], %472 {strides = array<i32>} : memref<16x200xbf16, #tpu.memory_space<vmem>>, vector<16x8xbf16>,
    %c15_327 = arith.constant 15 : index
    %c0_328 = arith.constant 0 : index
    %474 = vector.load %arg16[%c15_327, %c0_328] : memref<48x8xbf16, #tpu.memory_space<vmem>>, vector<16x8xbf16>
    %cst_329 = arith.constant 0.000000e+00 : bf16
    %475 = vector.broadcast %cst_329 : bf16 to vector<16x8xbf16>
    %476 = vector.shape_cast %20 : vector<16x1xi1> to vector<16x1xi1>
    %477 = vector.broadcast %476 : vector<16x1xi1> to vector<16x8xi1>
    %478 = arith.select %477, %474, %475 : vector<16x8xi1>, vector<16x8xbf16>
    %c0_330 = arith.constant 0 : index
    %c88 = arith.constant 88 : index
    %479 = vector.load %arg18[%c0_330, %c88] : memref<16x200xbf16, #tpu.memory_space<vmem>>, vector<16x8xbf16>
    tpu.vector_store %arg18[%c0_330, %c88], %478 {strides = array<i32>} : memref<16x200xbf16, #tpu.memory_space<vmem>>, vector<16x8xbf16>,
    %c16_331 = arith.constant 16 : index
    %c0_332 = arith.constant 0 : index
    %480 = vector.load %arg16[%c16_331, %c0_332] : memref<48x8xbf16, #tpu.memory_space<vmem>>, vector<16x8xbf16>
    %c0_333 = arith.constant 0 : index
    %c96_334 = arith.constant 96 : index
    %481 = vector.load %arg18[%c0_333, %c96_334] : memref<16x200xbf16, #tpu.memory_space<vmem>>, vector<16x8xbf16>
    tpu.vector_store %arg18[%c0_333, %c96_334], %480 {strides = array<i32>} : memref<16x200xbf16, #tpu.memory_space<vmem>>, vector<16x8xbf16>,
    %c17_335 = arith.constant 17 : index
    %c0_336 = arith.constant 0 : index
    %482 = vector.load %arg16[%c17_335, %c0_336] : memref<48x8xbf16, #tpu.memory_space<vmem>>, vector<16x8xbf16>
    %cst_337 = arith.constant 0.000000e+00 : bf16
    %483 = vector.broadcast %cst_337 : bf16 to vector<16x8xbf16>
    %484 = vector.shape_cast %22 : vector<16x1xi1> to vector<16x1xi1>
    %485 = vector.broadcast %484 : vector<16x1xi1> to vector<16x8xi1>
    %486 = arith.select %485, %482, %483 : vector<16x8xi1>, vector<16x8xbf16>
    %c0_338 = arith.constant 0 : index
    %c104 = arith.constant 104 : index
    %487 = vector.load %arg18[%c0_338, %c104] : memref<16x200xbf16, #tpu.memory_space<vmem>>, vector<16x8xbf16>
    tpu.vector_store %arg18[%c0_338, %c104], %486 {strides = array<i32>} : memref<16x200xbf16, #tpu.memory_space<vmem>>, vector<16x8xbf16>,
    %c18_339 = arith.constant 18 : index
    %c0_340 = arith.constant 0 : index
    %488 = vector.load %arg16[%c18_339, %c0_340] : memref<48x8xbf16, #tpu.memory_space<vmem>>, vector<16x8xbf16>
    %cst_341 = arith.constant 0.000000e+00 : bf16
    %489 = vector.broadcast %cst_341 : bf16 to vector<16x8xbf16>
    %490 = vector.shape_cast %24 : vector<16x1xi1> to vector<16x1xi1>
    %491 = vector.broadcast %490 : vector<16x1xi1> to vector<16x8xi1>
    %492 = arith.select %491, %488, %489 : vector<16x8xi1>, vector<16x8xbf16>
    %c0_342 = arith.constant 0 : index
    %c112 = arith.constant 112 : index
    %493 = vector.load %arg18[%c0_342, %c112] : memref<16x200xbf16, #tpu.memory_space<vmem>>, vector<16x8xbf16>
    tpu.vector_store %arg18[%c0_342, %c112], %492 {strides = array<i32>} : memref<16x200xbf16, #tpu.memory_space<vmem>>, vector<16x8xbf16>,
    %c18_343 = arith.constant 18 : index
    %c0_344 = arith.constant 0 : index
    %494 = vector.load %arg16[%c18_343, %c0_344] : memref<48x8xbf16, #tpu.memory_space<vmem>>, vector<16x8xbf16>
    %cst_345 = arith.constant 0.000000e+00 : bf16
    %495 = vector.broadcast %cst_345 : bf16 to vector<16x8xbf16>
    %496 = vector.shape_cast %18 : vector<16x1xi1> to vector<16x1xi1>
    %497 = vector.broadcast %496 : vector<16x1xi1> to vector<16x8xi1>
    %498 = arith.select %497, %494, %495 : vector<16x8xi1>, vector<16x8xbf16>
    %c0_346 = arith.constant 0 : index
    %c120 = arith.constant 120 : index
    %499 = vector.load %arg18[%c0_346, %c120] : memref<16x200xbf16, #tpu.memory_space<vmem>>, vector<16x8xbf16>
    tpu.vector_store %arg18[%c0_346, %c120], %498 {strides = array<i32>} : memref<16x200xbf16, #tpu.memory_space<vmem>>, vector<16x8xbf16>,
    %c19_347 = arith.constant 19 : index
    %c0_348 = arith.constant 0 : index
    %500 = vector.load %arg16[%c19_347, %c0_348] : memref<48x8xbf16, #tpu.memory_space<vmem>>, vector<16x8xbf16>
    %cst_349 = arith.constant 0.000000e+00 : bf16
    %501 = vector.broadcast %cst_349 : bf16 to vector<16x8xbf16>
    %502 = vector.shape_cast %20 : vector<16x1xi1> to vector<16x1xi1>
    %503 = vector.broadcast %502 : vector<16x1xi1> to vector<16x8xi1>
    %504 = arith.select %503, %500, %501 : vector<16x8xi1>, vector<16x8xbf16>
    %c0_350 = arith.constant 0 : index
    %c128_351 = arith.constant 128 : index
    %505 = vector.load %arg18[%c0_350, %c128_351] : memref<16x200xbf16, #tpu.memory_space<vmem>>, vector<16x8xbf16>
    tpu.vector_store %arg18[%c0_350, %c128_351], %504 {strides = array<i32>} : memref<16x200xbf16, #tpu.memory_space<vmem>>, vector<16x8xbf16>,
    %c20_352 = arith.constant 20 : index
    %c0_353 = arith.constant 0 : index
    %506 = vector.load %arg16[%c20_352, %c0_353] : memref<48x8xbf16, #tpu.memory_space<vmem>>, vector<16x8xbf16>
    %c0_354 = arith.constant 0 : index
    %c136 = arith.constant 136 : index
    %507 = vector.load %arg18[%c0_354, %c136] : memref<16x200xbf16, #tpu.memory_space<vmem>>, vector<16x8xbf16>
    tpu.vector_store %arg18[%c0_354, %c136], %506 {strides = array<i32>} : memref<16x200xbf16, #tpu.memory_space<vmem>>, vector<16x8xbf16>,
    %c21_355 = arith.constant 21 : index
    %c0_356 = arith.constant 0 : index
    %508 = vector.load %arg16[%c21_355, %c0_356] : memref<48x8xbf16, #tpu.memory_space<vmem>>, vector<16x8xbf16>
    %cst_357 = arith.constant 0.000000e+00 : bf16
    %509 = vector.broadcast %cst_357 : bf16 to vector<16x8xbf16>
    %510 = vector.shape_cast %22 : vector<16x1xi1> to vector<16x1xi1>
    %511 = vector.broadcast %510 : vector<16x1xi1> to vector<16x8xi1>
    %512 = arith.select %511, %508, %509 : vector<16x8xi1>, vector<16x8xbf16>
    %c0_358 = arith.constant 0 : index
    %c144 = arith.constant 144 : index
    %513 = vector.load %arg18[%c0_358, %c144] : memref<16x200xbf16, #tpu.memory_space<vmem>>, vector<16x8xbf16>
    tpu.vector_store %arg18[%c0_358, %c144], %512 {strides = array<i32>} : memref<16x200xbf16, #tpu.memory_space<vmem>>, vector<16x8xbf16>,
    %c22_359 = arith.constant 22 : index
    %c0_360 = arith.constant 0 : index
    %514 = vector.load %arg16[%c22_359, %c0_360] : memref<48x8xbf16, #tpu.memory_space<vmem>>, vector<16x8xbf16>
    %cst_361 = arith.constant 0.000000e+00 : bf16
    %515 = vector.broadcast %cst_361 : bf16 to vector<16x8xbf16>
    %516 = vector.shape_cast %24 : vector<16x1xi1> to vector<16x1xi1>
    %517 = vector.broadcast %516 : vector<16x1xi1> to vector<16x8xi1>
    %518 = arith.select %517, %514, %515 : vector<16x8xi1>, vector<16x8xbf16>
    %c0_362 = arith.constant 0 : index
    %c152 = arith.constant 152 : index
    %519 = vector.load %arg18[%c0_362, %c152] : memref<16x200xbf16, #tpu.memory_space<vmem>>, vector<16x8xbf16>
    tpu.vector_store %arg18[%c0_362, %c152], %518 {strides = array<i32>} : memref<16x200xbf16, #tpu.memory_space<vmem>>, vector<16x8xbf16>,
    %c22_363 = arith.constant 22 : index
    %c0_364 = arith.constant 0 : index
    %520 = vector.load %arg16[%c22_363, %c0_364] : memref<48x8xbf16, #tpu.memory_space<vmem>>, vector<16x8xbf16>
    %cst_365 = arith.constant 0.000000e+00 : bf16
    %521 = vector.broadcast %cst_365 : bf16 to vector<16x8xbf16>
    %522 = vector.shape_cast %18 : vector<16x1xi1> to vector<16x1xi1>
    %523 = vector.broadcast %522 : vector<16x1xi1> to vector<16x8xi1>
    %524 = arith.select %523, %520, %521 : vector<16x8xi1>, vector<16x8xbf16>
    %c0_366 = arith.constant 0 : index
    %c160_367 = arith.constant 160 : index
    %525 = vector.load %arg18[%c0_366, %c160_367] : memref<16x200xbf16, #tpu.memory_space<vmem>>, vector<16x8xbf16>
    tpu.vector_store %arg18[%c0_366, %c160_367], %524 {strides = array<i32>} : memref<16x200xbf16, #tpu.memory_space<vmem>>, vector<16x8xbf16>,
    %c23_368 = arith.constant 23 : index
    %c0_369 = arith.constant 0 : index
    %526 = vector.load %arg16[%c23_368, %c0_369] : memref<48x8xbf16, #tpu.memory_space<vmem>>, vector<16x8xbf16>
    %cst_370 = arith.constant 0.000000e+00 : bf16
    %527 = vector.broadcast %cst_370 : bf16 to vector<16x8xbf16>
    %528 = vector.shape_cast %20 : vector<16x1xi1> to vector<16x1xi1>
    %529 = vector.broadcast %528 : vector<16x1xi1> to vector<16x8xi1>
    %530 = arith.select %529, %526, %527 : vector<16x8xi1>, vector<16x8xbf16>
    %c0_371 = arith.constant 0 : index
    %c168 = arith.constant 168 : index
    %531 = vector.load %arg18[%c0_371, %c168] : memref<16x200xbf16, #tpu.memory_space<vmem>>, vector<16x8xbf16>
    tpu.vector_store %arg18[%c0_371, %c168], %530 {strides = array<i32>} : memref<16x200xbf16, #tpu.memory_space<vmem>>, vector<16x8xbf16>,
    %c24_372 = arith.constant 24 : index
    %c0_373 = arith.constant 0 : index
    %532 = vector.load %arg16[%c24_372, %c0_373] : memref<48x8xbf16, #tpu.memory_space<vmem>>, vector<16x8xbf16>
    %c0_374 = arith.constant 0 : index
    %c176 = arith.constant 176 : index
    %533 = vector.load %arg18[%c0_374, %c176] : memref<16x200xbf16, #tpu.memory_space<vmem>>, vector<16x8xbf16>
    tpu.vector_store %arg18[%c0_374, %c176], %532 {strides = array<i32>} : memref<16x200xbf16, #tpu.memory_space<vmem>>, vector<16x8xbf16>,
    %c25_375 = arith.constant 25 : index
    %c0_376 = arith.constant 0 : index
    %534 = vector.load %arg16[%c25_375, %c0_376] : memref<48x8xbf16, #tpu.memory_space<vmem>>, vector<16x8xbf16>
    %cst_377 = arith.constant 0.000000e+00 : bf16
    %535 = vector.broadcast %cst_377 : bf16 to vector<16x8xbf16>
    %536 = vector.shape_cast %22 : vector<16x1xi1> to vector<16x1xi1>
    %537 = vector.broadcast %536 : vector<16x1xi1> to vector<16x8xi1>
    %538 = arith.select %537, %534, %535 : vector<16x8xi1>, vector<16x8xbf16>
    %c0_378 = arith.constant 0 : index
    %c184 = arith.constant 184 : index
    %539 = vector.load %arg18[%c0_378, %c184] : memref<16x200xbf16, #tpu.memory_space<vmem>>, vector<16x8xbf16>
    tpu.vector_store %arg18[%c0_378, %c184], %538 {strides = array<i32>} : memref<16x200xbf16, #tpu.memory_space<vmem>>, vector<16x8xbf16>,
    %c26_379 = arith.constant 26 : index
    %c0_380 = arith.constant 0 : index
    %540 = vector.load %arg16[%c26_379, %c0_380] : memref<48x8xbf16, #tpu.memory_space<vmem>>, vector<16x8xbf16>
    %cst_381 = arith.constant 0.000000e+00 : bf16
    %541 = vector.broadcast %cst_381 : bf16 to vector<16x8xbf16>
    %542 = vector.shape_cast %24 : vector<16x1xi1> to vector<16x1xi1>
    %543 = vector.broadcast %542 : vector<16x1xi1> to vector<16x8xi1>
    %544 = arith.select %543, %540, %541 : vector<16x8xi1>, vector<16x8xbf16>
    %c0_382 = arith.constant 0 : index
    %c192_383 = arith.constant 192 : index
    %545 = vector.load %arg18[%c0_382, %c192_383] : memref<16x200xbf16, #tpu.memory_space<vmem>>, vector<16x8xbf16>
    tpu.vector_store %arg18[%c0_382, %c192_383], %544 {strides = array<i32>} : memref<16x200xbf16, #tpu.memory_space<vmem>>, vector<16x8xbf16>,
    %c0_384 = arith.constant 0 : index
    %c0_385 = arith.constant 0 : index
    %546 = vector.load %arg18[%c0_384, %c0_385] : memref<16x200xbf16, #tpu.memory_space<vmem>>, vector<16x200xbf16>
    %c0_386 = arith.constant 0 : index
    %c0_387 = arith.constant 0 : index
    %c0_388 = arith.constant 0 : index
    %547 = vector.load %arg9[%c0_386, %c0_387, %c0_388] : memref<4x200x32xbf16, #tpu.memory_space<vmem>>, vector<1x200x32xbf16>
    %548 = vector.shape_cast %547 : vector<1x200x32xbf16> to vector<200x32xbf16>
    %cst_389 = arith.constant dense<0.000000e+00> : vector<16x32xf32>
    %549 = tpu.matmul %546, %548, %cst_389 {dimension_numbers = #tpu.dot_dimension_numbers<[1], [0], [0], [1], [0, 0, 1, 1], [], []>} : vector<16x200xbf16>, vector<200x32xbf16>, vector<16x32xf32> -> vector<16x32xf32>
    %c0_390 = arith.constant 0 : index
    %c0_391 = arith.constant 0 : index
    %c0_392 = arith.constant 0 : index
    %c0_393 = arith.constant 0 : index
    %550 = vector.load %arg10[%c0_390, %c0_391, %c0_392, %c0_393] : memref<1x4x16x32xf32, #tpu.memory_space<vmem>>, vector<1x1x16x32xf32>
    %551 = vector.shape_cast %550 : vector<1x1x16x32xf32> to vector<16x32xf32>
    %552 = arith.addf %549, %551 : vector<16x32xf32>
    %553 = arith.negf %552 : vector<16x32xf32>
    %554 = math.exp %553 : vector<16x32xf32>
    %cst_394 = arith.constant 1.000000e+00 : f32
    %555 = vector.broadcast %cst_394 : f32 to vector<16x32xf32>
    %556 = arith.addf %555, %554 : vector<16x32xf32>
    %557 = arith.divf %555, %556 : vector<16x32xf32>
    %c0_395 = arith.constant 0 : index
    %c0_396 = arith.constant 0 : index
    %558 = vector.load %arg18[%c0_395, %c0_396] : memref<16x200xbf16, #tpu.memory_space<vmem>>, vector<16x200xbf16>
    %c1_397 = arith.constant 1 : index
    %c0_398 = arith.constant 0 : index
    %c0_399 = arith.constant 0 : index
    %559 = vector.load %arg9[%c1_397, %c0_398, %c0_399] : memref<4x200x32xbf16, #tpu.memory_space<vmem>>, vector<1x200x32xbf16>
    %560 = vector.shape_cast %559 : vector<1x200x32xbf16> to vector<200x32xbf16>
    %cst_400 = arith.constant dense<0.000000e+00> : vector<16x32xf32>
    %561 = tpu.matmul %558, %560, %cst_400 {dimension_numbers = #tpu.dot_dimension_numbers<[1], [0], [0], [1], [0, 0, 1, 1], [], []>} : vector<16x200xbf16>, vector<200x32xbf16>, vector<16x32xf32> -> vector<16x32xf32>
    %c0_401 = arith.constant 0 : index
    %c1_402 = arith.constant 1 : index
    %c0_403 = arith.constant 0 : index
    %c0_404 = arith.constant 0 : index
    %562 = vector.load %arg10[%c0_401, %c1_402, %c0_403, %c0_404] : memref<1x4x16x32xf32, #tpu.memory_space<vmem>>, vector<1x1x16x32xf32>
    %563 = vector.shape_cast %562 : vector<1x1x16x32xf32> to vector<16x32xf32>
    %564 = arith.addf %561, %563 : vector<16x32xf32>
    %565 = arith.negf %564 : vector<16x32xf32>
    %566 = math.exp %565 : vector<16x32xf32>
    %cst_405 = arith.constant 1.000000e+00 : f32
    %567 = vector.broadcast %cst_405 : f32 to vector<16x32xf32>
    %568 = arith.addf %567, %566 : vector<16x32xf32>
    %569 = arith.divf %567, %568 : vector<16x32xf32>
    %c0_406 = arith.constant 0 : index
    %c0_407 = arith.constant 0 : index
    %570 = vector.load %arg18[%c0_406, %c0_407] : memref<16x200xbf16, #tpu.memory_space<vmem>>, vector<16x200xbf16>
    %c3_408 = arith.constant 3 : index
    %c0_409 = arith.constant 0 : index
    %c0_410 = arith.constant 0 : index
    %571 = vector.load %arg9[%c3_408, %c0_409, %c0_410] : memref<4x200x32xbf16, #tpu.memory_space<vmem>>, vector<1x200x32xbf16>
    %572 = vector.shape_cast %571 : vector<1x200x32xbf16> to vector<200x32xbf16>
    %cst_411 = arith.constant dense<0.000000e+00> : vector<16x32xf32>
    %573 = tpu.matmul %570, %572, %cst_411 {dimension_numbers = #tpu.dot_dimension_numbers<[1], [0], [0], [1], [0, 0, 1, 1], [], []>} : vector<16x200xbf16>, vector<200x32xbf16>, vector<16x32xf32> -> vector<16x32xf32>
    %c0_412 = arith.constant 0 : index
    %c3_413 = arith.constant 3 : index
    %c0_414 = arith.constant 0 : index
    %c0_415 = arith.constant 0 : index
    %574 = vector.load %arg10[%c0_412, %c3_413, %c0_414, %c0_415] : memref<1x4x16x32xf32, #tpu.memory_space<vmem>>, vector<1x1x16x32xf32>
    %575 = vector.shape_cast %574 : vector<1x1x16x32xf32> to vector<16x32xf32>
    %576 = arith.addf %573, %575 : vector<16x32xf32>
    %577 = math.tanh %576 : vector<16x32xf32>
    %c0_416 = arith.constant 0 : index
    %c0_417 = arith.constant 0 : index
    %578 = vector.load %arg20[%c0_416, %c0_417] : memref<16x32xf32, #tpu.memory_space<vmem>>, vector<16x32xf32>
    %579 = arith.mulf %557, %578 : vector<16x32xf32>
    %580 = arith.mulf %569, %577 : vector<16x32xf32>
    %581 = arith.addf %579, %580 : vector<16x32xf32>
    %c0_418 = arith.constant 0 : index
    %c0_419 = arith.constant 0 : index
    %582 = vector.load %arg20[%c0_418, %c0_419] : memref<16x32xf32, #tpu.memory_space<vmem>>, vector<16x32xf32>
    tpu.vector_store %arg20[%c0_418, %c0_419], %581 {strides = array<i32>} : memref<16x32xf32, #tpu.memory_space<vmem>>, vector<16x32xf32>,
    %c0_420 = arith.constant 0 : index
    %c0_421 = arith.constant 0 : index
    %583 = vector.load %arg18[%c0_420, %c0_421] : memref<16x200xbf16, #tpu.memory_space<vmem>>, vector<16x200xbf16>
    %c2_422 = arith.constant 2 : index
    %c0_423 = arith.constant 0 : index
    %c0_424 = arith.constant 0 : index
    %584 = vector.load %arg9[%c2_422, %c0_423, %c0_424] : memref<4x200x32xbf16, #tpu.memory_space<vmem>>, vector<1x200x32xbf16>
    %585 = vector.shape_cast %584 : vector<1x200x32xbf16> to vector<200x32xbf16>
    %cst_425 = arith.constant dense<0.000000e+00> : vector<16x32xf32>
    %586 = tpu.matmul %583, %585, %cst_425 {dimension_numbers = #tpu.dot_dimension_numbers<[1], [0], [0], [1], [0, 0, 1, 1], [], []>} : vector<16x200xbf16>, vector<200x32xbf16>, vector<16x32xf32> -> vector<16x32xf32>
    %c0_426 = arith.constant 0 : index
    %c2_427 = arith.constant 2 : index
    %c0_428 = arith.constant 0 : index
    %c0_429 = arith.constant 0 : index
    %587 = vector.load %arg10[%c0_426, %c2_427, %c0_428, %c0_429] : memref<1x4x16x32xf32, #tpu.memory_space<vmem>>, vector<1x1x16x32xf32>
    %588 = vector.shape_cast %587 : vector<1x1x16x32xf32> to vector<16x32xf32>
    %589 = arith.addf %586, %588 : vector<16x32xf32>
    %590 = arith.negf %589 : vector<16x32xf32>
    %591 = math.exp %590 : vector<16x32xf32>
    %cst_430 = arith.constant 1.000000e+00 : f32
    %592 = vector.broadcast %cst_430 : f32 to vector<16x32xf32>
    %593 = arith.addf %592, %591 : vector<16x32xf32>
    %594 = arith.divf %592, %593 : vector<16x32xf32>
    %595 = math.tanh %581 : vector<16x32xf32>
    %596 = arith.mulf %594, %595 : vector<16x32xf32>
    %597 = arith.truncf %596 : vector<16x32xf32> to vector<16x32xbf16>
    %c16_431 = arith.constant 16 : index
    %c0_432 = arith.constant 0 : index
    %598 = vector.load %arg15[%c16_431, %c0_432] : memref<48x32xbf16, #tpu.memory_space<vmem>>, vector<16x32xbf16>
    tpu.vector_store %arg15[%c16_431, %c0_432], %597 {strides = array<i32>} : memref<48x32xbf16, #tpu.memory_space<vmem>>, vector<16x32xbf16>,
    %c0_433 = arith.constant 0 : index
    %c0_434 = arith.constant 0 : index
    %c0_435 = arith.constant 0 : index
    %599 = vector.load %arg13[%c0_433, %c0_434, %c0_435] : memref<1x16x128xf32, #tpu.memory_space<vmem>>, vector<1x16x128xf32>
    %600 = vector.shape_cast %599 : vector<1x16x128xf32> to vector<16x128xf32>
    %c0_436 = arith.constant 0 : index
    %c0_437 = arith.constant 0 : index
    %601 = vector.load %arg11[%c0_436, %c0_437] : memref<32x128xbf16, #tpu.memory_space<vmem>>, vector<32x128xbf16>
    %cst_438 = arith.constant dense<0.000000e+00> : vector<16x128xf32>
    %602 = tpu.matmul %597, %601, %cst_438 {dimension_numbers = #tpu.dot_dimension_numbers<[1], [0], [0], [1], [0, 0, 1, 1], [], []>} : vector<16x32xbf16>, vector<32x128xbf16>, vector<16x128xf32> -> vector<16x128xf32>
    %603 = arith.addf %600, %602 : vector<16x128xf32>
    %c0_439 = arith.constant 0 : index
    %c0_440 = arith.constant 0 : index
    %c0_441 = arith.constant 0 : index
    %604 = vector.load %arg13[%c0_439, %c0_440, %c0_441] : memref<1x16x128xf32, #tpu.memory_space<vmem>>, vector<1x16x128xf32>
    %605 = vector.shape_cast %604 : vector<1x16x128xf32> to vector<16x128xf32>
    %606 = vector.shape_cast %603 : vector<16x128xf32> to vector<1x16x128xf32>
    tpu.vector_store %arg13[%c0_439, %c0_440, %c0_441], %606 {strides = array<i32>} : memref<1x16x128xf32, #tpu.memory_space<vmem>>, vector<1x16x128xf32>,
    %c2_i32_442 = arith.constant 2 : i32
    %607 = arith.cmpi eq, %arg1, %c2_i32_442 : i32
    %608 = arith.extui %607 : i1 to i32
    %c0_i32_443 = arith.constant 0 : i32
    %609 = arith.cmpi ne, %608, %c0_i32_443 : i32
    scf.if %609 {
      %c0_444 = arith.constant 0 : index
      %c0_445 = arith.constant 0 : index
      %c0_446 = arith.constant 0 : index
      %610 = vector.load %arg13[%c0_444, %c0_445, %c0_446] : memref<1x16x128xf32, #tpu.memory_space<vmem>>, vector<1x16x128xf32>
      %611 = vector.shape_cast %610 : vector<1x16x128xf32> to vector<16x128xf32>
      %c0_447 = arith.constant 0 : index
      %c0_448 = arith.constant 0 : index
      %612 = vector.load %arg12[%c0_447, %c0_448] : memref<1x128xf32, #tpu.memory_space<vmem>>, vector<1x128xf32>
      %613 = vector.broadcast %612 : vector<1x128xf32> to vector<16x128xf32>
      %614 = arith.addf %611, %613 : vector<16x128xf32>
      %615 = arith.negf %614 : vector<16x128xf32>
      %616 = math.exp %615 : vector<16x128xf32>
      %cst_449 = arith.constant 1.000000e+00 : f32
      %617 = vector.broadcast %cst_449 : f32 to vector<16x128xf32>
      %618 = arith.addf %617, %616 : vector<16x128xf32>
      %619 = arith.divf %617, %618 : vector<16x128xf32>
      %c0_450 = arith.constant 0 : index
      %c0_451 = arith.constant 0 : index
      %c0_452 = arith.constant 0 : index
      %620 = vector.load %arg13[%c0_450, %c0_451, %c0_452] : memref<1x16x128xf32, #tpu.memory_space<vmem>>, vector<1x16x128xf32>
      %621 = vector.shape_cast %620 : vector<1x16x128xf32> to vector<16x128xf32>
      %622 = vector.shape_cast %619 : vector<16x128xf32> to vector<1x16x128xf32>
      tpu.vector_store %arg13[%c0_450, %c0_451, %c0_452], %622 {strides = array<i32>} : memref<1x16x128xf32, #tpu.memory_space<vmem>>, vector<1x16x128xf32>,
    } else {
    }
    return
  }
  func.func @transform_0(%arg0: i32, %arg1: i32) -> (i32, i32, i32) {
    %c3_i32 = arith.constant 3 : i32
    %0 = arith.muli %arg0, %c3_i32 : i32
    %1 = arith.addi %0, %arg1 : i32
    %c0_i32 = arith.constant 0 : i32
    %c0_i32_0 = arith.constant 0 : i32
    %c0_i32_1 = arith.constant 0 : i32
    return %1, %c0_i32, %c0_i32_0 : i32, i32, i32
  }
  func.func @transform_1(%arg0: i32, %arg1: i32) -> (i32, i32) {
    %c0_i32 = arith.constant 0 : i32
    %c0_i32_0 = arith.constant 0 : i32
    %c0_i32_1 = arith.constant 0 : i32
    return %c0_i32, %c0_i32_0 : i32, i32
  }
  func.func @transform_2(%arg0: i32, %arg1: i32) -> (i32, i32) {
    %c0_i32 = arith.constant 0 : i32
    %c0_i32_0 = arith.constant 0 : i32
    %c0_i32_1 = arith.constant 0 : i32
    return %c0_i32, %c0_i32_0 : i32, i32
  }
  func.func @transform_3(%arg0: i32, %arg1: i32) -> (i32, i32, i32) {
    %c0_i32 = arith.constant 0 : i32
    %c0_i32_0 = arith.constant 0 : i32
    %c0_i32_1 = arith.constant 0 : i32
    %c0_i32_2 = arith.constant 0 : i32
    return %c0_i32, %c0_i32_0, %c0_i32_1 : i32, i32, i32
  }
  func.func @transform_4(%arg0: i32, %arg1: i32) -> (i32, i32, i32, i32) {
    %c0_i32 = arith.constant 0 : i32
    %c0_i32_0 = arith.constant 0 : i32
    %c0_i32_1 = arith.constant 0 : i32
    %c0_i32_2 = arith.constant 0 : i32
    return %arg0, %c0_i32, %c0_i32_0, %c0_i32_1 : i32, i32, i32, i32
  }
  func.func @transform_5(%arg0: i32, %arg1: i32) -> (i32, i32) {
    %c0_i32 = arith.constant 0 : i32
    %c0_i32_0 = arith.constant 0 : i32
    %c0_i32_1 = arith.constant 0 : i32
    return %c0_i32, %c0_i32_0 : i32, i32
  }
  func.func @transform_6(%arg0: i32, %arg1: i32) -> (i32, i32) {
    %c0_i32 = arith.constant 0 : i32
    %c0_i32_0 = arith.constant 0 : i32
    %c0_i32_1 = arith.constant 0 : i32
    return %c0_i32, %c0_i32_0 : i32, i32
  }
  func.func @transform_7(%arg0: i32, %arg1: i32) -> (i32, i32, i32) {
    %c0_i32 = arith.constant 0 : i32
    %c0_i32_0 = arith.constant 0 : i32
    %c0_i32_1 = arith.constant 0 : i32
    %c0_i32_2 = arith.constant 0 : i32
    return %c0_i32, %c0_i32_0, %c0_i32_1 : i32, i32, i32
  }
  func.func @transform_8(%arg0: i32, %arg1: i32) -> (i32, i32, i32, i32) {
    %c0_i32 = arith.constant 0 : i32
    %c0_i32_0 = arith.constant 0 : i32
    %c0_i32_1 = arith.constant 0 : i32
    %c0_i32_2 = arith.constant 0 : i32
    return %arg0, %c0_i32, %c0_i32_0, %c0_i32_1 : i32, i32, i32, i32
  }
  func.func @transform_9(%arg0: i32, %arg1: i32) -> (i32, i32) {
    %c0_i32 = arith.constant 0 : i32
    %c0_i32_0 = arith.constant 0 : i32
    %c0_i32_1 = arith.constant 0 : i32
    return %c0_i32, %c0_i32_0 : i32, i32
  }
  func.func @transform_10(%arg0: i32, %arg1: i32) -> (i32, i32) {
    %c0_i32 = arith.constant 0 : i32
    %c0_i32_0 = arith.constant 0 : i32
    %c0_i32_1 = arith.constant 0 : i32
    return %c0_i32, %c0_i32_0 : i32, i32
  }
  func.func @transform_11(%arg0: i32, %arg1: i32) -> (i32, i32, i32) {
    %c0_i32 = arith.constant 0 : i32
    %c0_i32_0 = arith.constant 0 : i32
    %c0_i32_1 = arith.constant 0 : i32
    return %arg0, %c0_i32, %c0_i32_0 : i32, i32, i32
  }
  func.func @transform_12(%arg0: i32, %arg1: i32) -> (i32, i32, i32) {
    %c0_i32 = arith.constant 0 : i32
    %c0_i32_0 = arith.constant 0 : i32
    %c0_i32_1 = arith.constant 0 : i32
    return %arg0, %c0_i32, %c0_i32_0 : i32, i32, i32
  }
}

</mosaic_0001>

<llo_original>
// kernel: reverse
$region0: #{reverse}
  #allocation0 [shape = 's32[1]{0}', space=sflag, size = 0x4, scoped, tag = 'scoped memory for reverse']
  %s0 = inlined_call_operand.vmem [shape: bf16[5,5,3,128], index: 0, kind: input, shape index: {}]
  %s1 = inlined_call_operand.vmem [shape: bf16[5,5,3,128], index: 1, kind: output, shape index: {}]
  %s2 = scalar_lea.vmem %s0, 48
  %s4 = sor.u32 15, 7
  %s5 = sand.u32 %s4, 5
  %s6 = sshrl.u32 %s5, 1
  %s7 = sor.u32 %s5, %s6
  %s8 = sand.u32 3, %s7
  %v9 = vld [vmem:[%s2] sm:%s8]
  %v10 = vunpack.c.l.bf16 %v9
  %v11 = vunpack.c.h.bf16 %v9
  %v12 = vpack.c.bf16 0.0, %v10
  %13 = vst [vmem:[%s1] sm:$0x3] %v12
  %s14 = scalar_lea.vmem %s0, 38
  %s16 = sor.u32 15, 7
  %s17 = sand.u32 %s16, 5
  %s18 = sshrl.u32 %s17, 1
  %s19 = sor.u32 %s17, %s18
  %s20 = sand.u32 3, %s19
  %v21 = vld [vmem:[%s14] sm:%s20]
  %v22 = vunpack.c.l.bf16 %v21
  %v23 = vunpack.c.h.bf16 %v21
  %s24 = scalar_lea.vmem %s1, 10
  %v25 = vpack.c.bf16 0.0, %v22
  %26 = vst [vmem:[%s24] sm:$0x3] %v25
  %s27 = scalar_lea.vmem %s0, 28
  %s29 = sor.u32 15, 7
  %s30 = sand.u32 %s29, 5
  %s31 = sshrl.u32 %s30, 1
  %s32 = sor.u32 %s30, %s31
  %s33 = sand.u32 3, %s32
  %v34 = vld [vmem:[%s27] sm:%s33]
  %v35 = vunpack.c.l.bf16 %v34
  %v36 = vunpack.c.h.bf16 %v34
  %s37 = scalar_lea.vmem %s1, 20
  %v38 = vpack.c.bf16 0.0, %v35
  %39 = vst [vmem:[%s37] sm:$0x3] %v38
  %s40 = scalar_lea.vmem %s0, 18
  %s42 = sor.u32 15, 7
  %s43 = sand.u32 %s42, 5
  %s44 = sshrl.u32 %s43, 1
  %s45 = sor.u32 %s43, %s44
  %s46 = sand.u32 3, %s45
  %v47 = vld [vmem:[%s40] sm:%s46]
  %v48 = vunpack.c.l.bf16 %v47
  %v49 = vunpack.c.h.bf16 %v47
  %s50 = scalar_lea.vmem %s1, 30
  %v51 = vpack.c.bf16 0.0, %v48
  %52 = vst [vmem:[%s50] sm:$0x3] %v51
  %s53 = scalar_lea.vmem %s0, 8
  %s55 = sor.u32 15, 7
  %s56 = sand.u32 %s55, 5
  %s57 = sshrl.u32 %s56, 1
  %s58 = sor.u32 %s56, %s57
  %s59 = sand.u32 3, %s58
  %v60 = vld [vmem:[%s53] sm:%s59]
  %v61 = vunpack.c.l.bf16 %v60
  %v62 = vunpack.c.h.bf16 %v60
  %s63 = scalar_lea.vmem %s1, 40
  %v64 = vpack.c.bf16 0.0, %v61
  %65 = vst [vmem:[%s63] sm:$0x3] %v64
  %s66 = scalar_lea.vmem %s0, 46
  %s68 = sor.u32 15, 7
  %s69 = sand.u32 %s68, 5
  %s70 = sshrl.u32 %s69, 1
  %s71 = sor.u32 %s69, %s70
  %s72 = sand.u32 3, %s71
  %v73 = vld [vmem:[%s66] sm:%s72]
  %v74 = vunpack.c.l.bf16 %v73
  %v75 = vunpack.c.h.bf16 %v73
  %s76 = scalar_lea.vmem %s1, 2
  %v77 = vpack.c.bf16 0.0, %v74
  %78 = vst [vmem:[%s76] sm:$0x3] %v77
  %s79 = scalar_lea.vmem %s0, 36
  %s81 = sor.u32 15, 7
  %s82 = sand.u32 %s81, 5
  %s83 = sshrl.u32 %s82, 1
  %s84 = sor.u32 %s82, %s83
  %s85 = sand.u32 3, %s84
  %v86 = vld [vmem:[%s79] sm:%s85]
  %v87 = vunpack.c.l.bf16 %v86
  %v88 = vunpack.c.h.bf16 %v86
  %s89 = scalar_lea.vmem %s1, 12
  %v90 = vpack.c.bf16 0.0, %v87
  %91 = vst [vmem:[%s89] sm:$0x3] %v90
  %s92 = scalar_lea.vmem %s0, 26
  %s94 = sor.u32 15, 7
  %s95 = sand.u32 %s94, 5
  %s96 = sshrl.u32 %s95, 1
  %s97 = sor.u32 %s95, %s96
  %s98 = sand.u32 3, %s97
  %v99 = vld [vmem:[%s92] sm:%s98]
  %v100 = vunpack.c.l.bf16 %v99
  %v101 = vunpack.c.h.bf16 %v99
  %s102 = scalar_lea.vmem %s1, 22
  %v103 = vpack.c.bf16 0.0, %v100
  %104 = vst [vmem:[%s102] sm:$0x3] %v103
  %s105 = scalar_lea.vmem %s0, 16
  %s107 = sor.u32 15, 7
  %s108 = sand.u32 %s107, 5
  %s109 = sshrl.u32 %s108, 1
  %s110 = sor.u32 %s108, %s109
  %s111 = sand.u32 3, %s110
  %v112 = vld [vmem:[%s105] sm:%s111]
  %v113 = vunpack.c.l.bf16 %v112
  %v114 = vunpack.c.h.bf16 %v112
  %s115 = scalar_lea.vmem %s1, 32
  %v116 = vpack.c.bf16 0.0, %v113
  %117 = vst [vmem:[%s115] sm:$0x3] %v116
  %s118 = scalar_lea.vmem %s0, 6
  %s120 = sor.u32 15, 7
  %s121 = sand.u32 %s120, 5
  %s122 = sshrl.u32 %s121, 1
  %s123 = sor.u32 %s121, %s122
  %s124 = sand.u32 3, %s123
  %v125 = vld [vmem:[%s118] sm:%s124]
  %v126 = vunpack.c.l.bf16 %v125
  %v127 = vunpack.c.h.bf16 %v125
  %s128 = scalar_lea.vmem %s1, 42
  %v129 = vpack.c.bf16 0.0, %v126
  %130 = vst [vmem:[%s128] sm:$0x3] %v129
  %s131 = scalar_lea.vmem %s0, 44
  %s133 = sor.u32 15, 7
  %s134 = sand.u32 %s133, 5
  %s135 = sshrl.u32 %s134, 1
  %s136 = sor.u32 %s134, %s135
  %s137 = sand.u32 3, %s136
  %v138 = vld [vmem:[%s131] sm:%s137]
  %v139 = vunpack.c.l.bf16 %v138
  %v140 = vunpack.c.h.bf16 %v138
  %s141 = scalar_lea.vmem %s1, 4
  %v142 = vpack.c.bf16 0.0, %v139
  %143 = vst [vmem:[%s141] sm:$0x3] %v142
  %s144 = scalar_lea.vmem %s0, 34
  %s146 = sor.u32 15, 7
  %s147 = sand.u32 %s146, 5
  %s148 = sshrl.u32 %s147, 1
  %s149 = sor.u32 %s147, %s148
  %s150 = sand.u32 3, %s149
  %v151 = vld [vmem:[%s144] sm:%s150]
  %v152 = vunpack.c.l.bf16 %v151
  %v153 = vunpack.c.h.bf16 %v151
  %s154 = scalar_lea.vmem %s1, 14
  %v155 = vpack.c.bf16 0.0, %v152
  %156 = vst [vmem:[%s154] sm:$0x3] %v155
  %s157 = scalar_lea.vmem %s0, 24
  %s159 = sor.u32 15, 7
  %s160 = sand.u32 %s159, 5
  %s161 = sshrl.u32 %s160, 1
  %s162 = sor.u32 %s160, %s161
  %s163 = sand.u32 3, %s162
  %v164 = vld [vmem:[%s157] sm:%s163]
  %v165 = vunpack.c.l.bf16 %v164
  %v166 = vunpack.c.h.bf16 %v164
  %s167 = scalar_lea.vmem %s1, 24
  %v168 = vpack.c.bf16 0.0, %v165
  %169 = vst [vmem:[%s167] sm:$0x3] %v168
  %s170 = scalar_lea.vmem %s0, 14
  %s172 = sor.u32 15, 7
  %s173 = sand.u32 %s172, 5
  %s174 = sshrl.u32 %s173, 1
  %s175 = sor.u32 %s173, %s174
  %s176 = sand.u32 3, %s175
  %v177 = vld [vmem:[%s170] sm:%s176]
  %v178 = vunpack.c.l.bf16 %v177
  %v179 = vunpack.c.h.bf16 %v177
  %s180 = scalar_lea.vmem %s1, 34
  %v181 = vpack.c.bf16 0.0, %v178
  %182 = vst [vmem:[%s180] sm:$0x3] %v181
  %s183 = scalar_lea.vmem %s0, 4
  %s185 = sor.u32 15, 7
  %s186 = sand.u32 %s185, 5
  %s187 = sshrl.u32 %s186, 1
  %s188 = sor.u32 %s186, %s187
  %s189 = sand.u32 3, %s188
  %v190 = vld [vmem:[%s183] sm:%s189]
  %v191 = vunpack.c.l.bf16 %v190
  %v192 = vunpack.c.h.bf16 %v190
  %s193 = scalar_lea.vmem %s1, 44
  %v194 = vpack.c.bf16 0.0, %v191
  %195 = vst [vmem:[%s193] sm:$0x3] %v194
  %s196 = scalar_lea.vmem %s0, 42
  %s198 = sor.u32 15, 7
  %s199 = sand.u32 %s198, 5
  %s200 = sshrl.u32 %s199, 1
  %s201 = sor.u32 %s199, %s200
  %s202 = sand.u32 3, %s201
  %v203 = vld [vmem:[%s196] sm:%s202]
  %v204 = vunpack.c.l.bf16 %v203
  %v205 = vunpack.c.h.bf16 %v203
  %s206 = scalar_lea.vmem %s1, 6
  %v207 = vpack.c.bf16 0.0, %v204
  %208 = vst [vmem:[%s206] sm:$0x3] %v207
  %s209 = scalar_lea.vmem %s0, 32
  %s211 = sor.u32 15, 7
  %s212 = sand.u32 %s211, 5
  %s213 = sshrl.u32 %s212, 1
  %s214 = sor.u32 %s212, %s213
  %s215 = sand.u32 3, %s214
  %v216 = vld [vmem:[%s209] sm:%s215]
  %v217 = vunpack.c.l.bf16 %v216
  %v218 = vunpack.c.h.bf16 %v216
  %s219 = scalar_lea.vmem %s1, 16
  %v220 = vpack.c.bf16 0.0, %v217
  %221 = vst [vmem:[%s219] sm:$0x3] %v220
  %s222 = scalar_lea.vmem %s0, 22
  %s224 = sor.u32 15, 7
  %s225 = sand.u32 %s224, 5
  %s226 = sshrl.u32 %s225, 1
  %s227 = sor.u32 %s225, %s226
  %s228 = sand.u32 3, %s227
  %v229 = vld [vmem:[%s222] sm:%s228]
  %v230 = vunpack.c.l.bf16 %v229
  %v231 = vunpack.c.h.bf16 %v229
  %s232 = scalar_lea.vmem %s1, 26
  %v233 = vpack.c.bf16 0.0, %v230
  %234 = vst [vmem:[%s232] sm:$0x3] %v233
  %s235 = scalar_lea.vmem %s0, 12
  %s237 = sor.u32 15, 7
  %s238 = sand.u32 %s237, 5
  %s239 = sshrl.u32 %s238, 1
  %s240 = sor.u32 %s238, %s239
  %s241 = sand.u32 3, %s240
  %v242 = vld [vmem:[%s235] sm:%s241]
  %v243 = vunpack.c.l.bf16 %v242
  %v244 = vunpack.c.h.bf16 %v242
  %s245 = scalar_lea.vmem %s1, 36
  %v246 = vpack.c.bf16 0.0, %v243
  %247 = vst [vmem:[%s245] sm:$0x3] %v246
  %s248 = scalar_lea.vmem %s0, 2
  %s250 = sor.u32 15, 7
  %s251 = sand.u32 %s250, 5
  %s252 = sshrl.u32 %s251, 1
  %s253 = sor.u32 %s251, %s252
  %s254 = sand.u32 3, %s253
  %v255 = vld [vmem:[%s248] sm:%s254]
  %v256 = vunpack.c.l.bf16 %v255
  %v257 = vunpack.c.h.bf16 %v255
  %s258 = scalar_lea.vmem %s1, 46
  %v259 = vpack.c.bf16 0.0, %v256
  %260 = vst [vmem:[%s258] sm:$0x3] %v259
  %s261 = scalar_lea.vmem %s0, 40
  %s263 = sor.u32 15, 7
  %s264 = sand.u32 %s263, 5
  %s265 = sshrl.u32 %s264, 1
  %s266 = sor.u32 %s264, %s265
  %s267 = sand.u32 3, %s266
  %v268 = vld [vmem:[%s261] sm:%s267]
  %v269 = vunpack.c.l.bf16 %v268
  %v270 = vunpack.c.h.bf16 %v268
  %s271 = scalar_lea.vmem %s1, 8
  %v272 = vpack.c.bf16 0.0, %v269
  %273 = vst [vmem:[%s271] sm:$0x3] %v272
  %s274 = scalar_lea.vmem %s0, 30
  %s276 = sor.u32 15, 7
  %s277 = sand.u32 %s276, 5
  %s278 = sshrl.u32 %s277, 1
  %s279 = sor.u32 %s277, %s278
  %s280 = sand.u32 3, %s279
  %v281 = vld [vmem:[%s274] sm:%s280]
  %v282 = vunpack.c.l.bf16 %v281
  %v283 = vunpack.c.h.bf16 %v281
  %s284 = scalar_lea.vmem %s1, 18
  %v285 = vpack.c.bf16 0.0, %v282
  %286 = vst [vmem:[%s284] sm:$0x3] %v285
  %s287 = scalar_lea.vmem %s0, 20
  %s289 = sor.u32 15, 7
  %s290 = sand.u32 %s289, 5
  %s291 = sshrl.u32 %s290, 1
  %s292 = sor.u32 %s290, %s291
  %s293 = sand.u32 3, %s292
  %v294 = vld [vmem:[%s287] sm:%s293]
  %v295 = vunpack.c.l.bf16 %v294
  %v296 = vunpack.c.h.bf16 %v294
  %s297 = scalar_lea.vmem %s1, 28
  %v298 = vpack.c.bf16 0.0, %v295
  %299 = vst [vmem:[%s297] sm:$0x3] %v298
  %s300 = scalar_lea.vmem %s0, 10
  %s302 = sor.u32 15, 7
  %s303 = sand.u32 %s302, 5
  %s304 = sshrl.u32 %s303, 1
  %s305 = sor.u32 %s303, %s304
  %s306 = sand.u32 3, %s305
  %v307 = vld [vmem:[%s300] sm:%s306]
  %v308 = vunpack.c.l.bf16 %v307
  %v309 = vunpack.c.h.bf16 %v307
  %s310 = scalar_lea.vmem %s1, 38
  %v311 = vpack.c.bf16 0.0, %v308
  %312 = vst [vmem:[%s310] sm:$0x3] %v311
  %s314 = sor.u32 15, 7
  %s315 = sand.u32 %s314, 5
  %s316 = sshrl.u32 %s315, 1
  %s317 = sor.u32 %s315, %s316
  %s318 = sand.u32 3, %s317
  %v319 = vld [vmem:[%s0] sm:%s318]
  %v320 = vunpack.c.l.bf16 %v319
  %v321 = vunpack.c.h.bf16 %v319
  %s322 = scalar_lea.vmem %s1, 48
  %v323 = vpack.c.bf16 0.0, %v320
  %324 = vst [vmem:[%s322] sm:$0x3] %v323

// kernel: tile.8
$region0: #{tile.8}
  #allocation0 [shape = 's32[1]{0}', space=sflag, size = 0x4, scoped, tag = 'scoped memory for tile.8']
  %s0 = inlined_call_operand.vmem [shape: f32[3], index: 0, kind: input, shape index: {}]
  %s1 = inlined_call_operand.vmem [shape: f32[16,3], index: 1, kind: output, shape index: {}]
  // Predicated region
  $region2: #{tile.8} parent=0 // pred_check
    _
  $region3: #{tile.8} parent=0 // pred_check_branch
    %3 = sbr.rel (0) target = $region5
  $region4: #{tile.8} parent=0 // pred_region
    _
  $region5: #{tile.8} parent=0 // pred_fallthru
    _
  %v4 = vld [vmem:[%s0] ss:$0 sm:$0xff]
  %5 = vst [vmem:[%s1] sm:$0xff] %v4
  %s6 = scalar_lea.vmem %s1, 8
  %7 = vst [vmem:[%s6] sm:$0xff] %v4

// kernel: tile.9
$region0: #{tile.9}
  %s0 = inlined_call_operand.vmem [shape: f32[16,3], index: 0, kind: input, shape index: {}]
  %s1 = inlined_call_operand.vmem [shape: f32[48], index: 1, kind: output, shape index: {}]
  $region1: #{tile.9} parent=0
    #allocation0 [shape = 'u8[4096]{0}', space=vmem, size = 0x1000, scoped, tag = 'scoped mem for output reshape']
    %v2 = vld [vmem:[%s0] sm:$0x1]
    %vm3 = vcmask 23552
    %4 = vst.msk [vmem:[#allocation0] sm:$0x1] %vm3, %v2
    %s5 = scalar_lea.vmem %s0, 15
    %v6 = vld [vmem:[%s5] sm:$0x1]
    %7 = vrot.lane.b32.xlu0 %v6, 45
    %v8 = vpop.permute.xlu0 %7
    %vm9 = vcmask 392552
    %10 = vst.msk [vmem:[#allocation0] sm:$0x1] %vm9, %v8
    %s11 = scalar_lea.vmem %s0, 14
    %v12 = vld [vmem:[%s11] sm:$0x1]
    %13 = vrot.lane.b32.xlu0 %v12, 42
    %v14 = vpop.permute.xlu0 %13
    %vm15 = vcmask 367952
    %16 = vst.msk [vmem:[#allocation0] sm:$0x1] %vm15, %v14
    %s17 = scalar_lea.vmem %s0, 13
    %v18 = vld [vmem:[%s17] sm:$0x1]
    %19 = vrot.lane.b32.xlu0 %v18, 39
    %v20 = vpop.permute.xlu0 %19
    %vm21 = vcmask 343352
    %22 = vst.msk [vmem:[#allocation0] sm:$0x1] %vm21, %v20
    %s23 = scalar_lea.vmem %s0, 12
    %v24 = vld [vmem:[%s23] sm:$0x1]
    %25 = vrot.lane.b32.xlu0 %v24, 36
    %v26 = vpop.permute.xlu0 %25
    %vm27 = vcmask 318752
    %28 = vst.msk [vmem:[#allocation0] sm:$0x1] %vm27, %v26
    %s29 = scalar_lea.vmem %s0, 11
    %v30 = vld [vmem:[%s29] sm:$0x1]
    %31 = vrot.lane.b32.xlu0 %v30, 33
    %v32 = vpop.permute.xlu0 %31
    %vm33 = vcmask 294152
    %34 = vst.msk [vmem:[#allocation0] sm:$0x1] %vm33, %v32
    %s35 = scalar_lea.vmem %s0, 10
    %v36 = vld [vmem:[%s35] sm:$0x1]
    %37 = vrot.lane.b32.xlu0 %v36, 30
    %v38 = vpop.permute.xlu0 %37
    %vm39 = vcmask 269552
    %40 = vst.msk [vmem:[#allocation0] sm:$0x1] %vm39, %v38
    %s41 = scalar_lea.vmem %s0, 9
    %v42 = vld [vmem:[%s41] sm:$0x1]
    %43 = vrot.lane.b32.xlu0 %v42, 27
    %v44 = vpop.permute.xlu0 %43
    %vm45 = vcmask 244952
    %46 = vst.msk [vmem:[#allocation0] sm:$0x1] %vm45, %v44
    %s47 = scalar_lea.vmem %s0, 8
    %v48 = vld [vmem:[%s47] sm:$0x1]
    %49 = vrot.lane.b32.xlu0 %v48, 24
    %v50 = vpop.permute.xlu0 %49
    %vm51 = vcmask 220352
    %52 = vst.msk [vmem:[#allocation0] sm:$0x1] %vm51, %v50
    %s53 = scalar_lea.vmem %s0, 7
    %v54 = vld [vmem:[%s53] sm:$0x1]
    %55 = vrot.lane.b32.xlu0 %v54, 21
    %v56 = vpop.permute.xlu0 %55
    %vm57 = vcmask 195752
    %58 = vst.msk [vmem:[#allocation0] sm:$0x1] %vm57, %v56
    %s59 = scalar_lea.vmem %s0, 6
    %v60 = vld [vmem:[%s59] sm:$0x1]
    %61 = vrot.lane.b32.xlu0 %v60, 18
    %v62 = vpop.permute.xlu0 %61
    %vm63 = vcmask 171152
    %64 = vst.msk [vmem:[#allocation0] sm:$0x1] %vm63, %v62
    %s65 = scalar_lea.vmem %s0, 5
    %v66 = vld [vmem:[%s65] sm:$0x1]
    %67 = vrot.lane.b32.xlu0 %v66, 15
    %v68 = vpop.permute.xlu0 %67
    %vm69 = vcmask 146552
    %70 = vst.msk [vmem:[#allocation0] sm:$0x1] %vm69, %v68
    %s71 = scalar_lea.vmem %s0, 4
    %v72 = vld [vmem:[%s71] sm:$0x1]
    %73 = vrot.lane.b32.xlu0 %v72, 12
    %v74 = vpop.permute.xlu0 %73
    %vm75 = vcmask 121952
    %76 = vst.msk [vmem:[#allocation0] sm:$0x1] %vm75, %v74
    %s77 = scalar_lea.vmem %s0, 3
    %v78 = vld [vmem:[%s77] sm:$0x1]
    %79 = vrot.lane.b32.xlu0 %v78, 9
    %v80 = vpop.permute.xlu0 %79
    %vm81 = vcmask 97352
    %82 = vst.msk [vmem:[#allocation0] sm:$0x1] %vm81, %v80
    %s83 = scalar_lea.vmem %s0, 2
    %v84 = vld [vmem:[%s83] sm:$0x1]
    %85 = vrot.lane.b32.xlu0 %v84, 6
    %v86 = vpop.permute.xlu0 %85
    %vm87 = vcmask 72752
    %88 = vst.msk [vmem:[#allocation0] sm:$0x1] %vm87, %v86
    %s89 = scalar_lea.vmem %s0, 1
    %v90 = vld [vmem:[%s89] sm:$0x1]
    %91 = vrot.lane.b32.xlu0 %v90, 3
    %v92 = vpop.permute.xlu0 %91
    %vm93 = vcmask 48152
    %94 = vst.msk [vmem:[#allocation0] sm:$0x1] %vm93, %v92
    %s96 = ssub.s32 2, 1
    %v97 = vld [vmem:[#allocation0] sm:%s96]
    %s99 = ssub.s32 2, 1
    %100 = vst [vmem:[%s1] sm:%s99] %v97

// kernel: generator_forward.1
$region0: #{generator_forward.1}
  #allocation0 [shape = 'u32[]', space=smem, size = 0x4, offset = 0x4, fixed_abs, tag = 'smem constant byte address 0x4 - core index']
  #allocation1 [shape = 'u32[72,128]{1,0:T(1,128)}', space=vmem, size = 0x9000, scoped, tag = 'internal scratch']
  #allocation2 [shape = 'bf16[48,32]{1,0:T(8,128)(2,1)}', space=vmem, size = 0x3000, scoped, tag = 'scratch operand']
  #allocation3 [shape = 'bf16[48,8]{1,0:T(8,128)(2,1)}', space=vmem, size = 0x3000, scoped, tag = 'scratch operand']
  #allocation4 [shape = 'bf16[16,800]{1,0:T(8,128)(2,1)}', space=vmem, size = 0x7000, scoped, tag = 'scratch operand']
  #allocation5 [shape = 'bf16[16,200]{1,0:T(8,128)(2,1)}', space=vmem, size = 0x2000, scoped, tag = 'scratch operand']
  #allocation6 [shape = 'f32[16,32]{1,0:T(8,128)}', space=vmem, size = 0x2000, scoped, tag = 'scratch operand']
  #allocation7 [shape = 'f32[16,32]{1,0:T(8,128)}', space=vmem, size = 0x2000, scoped, tag = 'scratch operand']
  %s0 = inlined_call_operand.vmem [shape: f32[6,16,8], index: 0, kind: input, shape index: {}]
  %s1 = inlined_call_operand.vmem [shape: bf16[800,16], index: 1, kind: input, shape index: {}]
  %s2 = inlined_call_operand.vmem [shape: f32[1,16], index: 2, kind: input, shape index: {}]
  %s3 = inlined_call_operand.vmem [shape: bf16[4,800,32], index: 3, kind: input, shape index: {}]
  %s4 = inlined_call_operand.vmem [shape: f32[2,4,16,32], index: 4, kind: input, shape index: {}]
  %s5 = inlined_call_operand.vmem [shape: bf16[800,16], index: 5, kind: input, shape index: {}]
  %s6 = inlined_call_operand.vmem [shape: f32[1,16], index: 6, kind: input, shape index: {}]
  %s7 = inlined_call_operand.vmem [shape: bf16[4,200,32], index: 7, kind: input, shape index: {}]
  %s8 = inlined_call_operand.vmem [shape: f32[2,4,16,32], index: 8, kind: input, shape index: {}]
  %s9 = inlined_call_operand.vmem [shape: bf16[32,128], index: 9, kind: input, shape index: {}]
  %s10 = inlined_call_operand.vmem [shape: f32[1,128], index: 10, kind: input, shape index: {}]
  %s11 = inlined_call_operand.vmem [shape: f32[2,16,128], index: 11, kind: output, shape index: {0}]
  %s12 = inlined_call_operand.hbm [shape: f32[2,16,8], index: 12, kind: output, shape index: {1}]
  %13 = xla_tuple %s11, %s12
  %s14 = sld [smem:[#allocation0]]
  $region93: #{generator_forward.1} parent=0
    _
  %s16 = ssub.s32 1, %s14
  %s17 = scalar_select 0, %s16, %s14
  $region1: #{generator_forward.1} parent=0
    #allocation8 [shape = 'u8[16384]{0}', space=vmem, size = 0x4000, scoped, tag = 'output window, operand 1']
    #allocation9 [shape = 's32[2]{0}', space=sflag, size = 0x8, scoped, tag = 'scoped memory for generator_forward.1']
    %18 = vsyncpa [#allocation9], 0
    %s19 = scalar_lea.sflag [#allocation9], 1
    %20 = vsyncpa %s19, 0
    loop: start=0, step=1, limit=8
    $region2: #{generator_forward.1} parent=1 // loop_pre_header
      _
    $region3: #{generator_forward.1} parent=1 // loop_header
      %s22 = sphi 0, %s26
      %p23 = scmp.ge.s32.totalorder %s22, 8
      %s29 = sphi 0, %s41
      %s30 = sphi 0, %s37
      %s31 = sphi 0, %s29
      %s32 = sphi 0, %s30
      %s33 = sphi 0, %s31
      %s34 = sphi 0, %s32
      %s48 = sphi 0, %s50
      %s51 = sphi 0, %s48
      %s52 = sphi 0, %s51
      %s68 = sphi 0, %s52
      %s72 = sphi 0, %s72
      %s74 = sphi 0, %s72
      %s75 = sphi 0, %s74
      %s89 = sphi 0, %s75
      %s93 = sphi 0, %s93
      %s95 = sphi 0, %s93
      %s96 = sphi 0, %s95
      %s110 = sphi 0, %s96
      %s114 = sphi 0, %s114
      %s116 = sphi 0, %s114
      %s117 = sphi 0, %s116
      %s131 = sphi 0, %s117
      %s137 = sphi 0, %s139
      %s140 = sphi 0, %s137
      %s141 = sphi 0, %s140
      %s157 = sphi 0, %s141
      %s161 = sphi 0, %s161
      %s163 = sphi 0, %s161
      %s164 = sphi 0, %s163
      %s178 = sphi 0, %s164
      %s182 = sphi 0, %s182
      %s184 = sphi 0, %s182
      %s185 = sphi 0, %s184
      %s199 = sphi 0, %s185
      %s203 = sphi 0, %s203
      %s205 = sphi 0, %s203
      %s206 = sphi 0, %s205
      %s220 = sphi 0, %s206
      %s226 = sphi 0, %s228
      %s229 = sphi 0, %s226
      %s230 = sphi 0, %s229
      %s246 = sphi 0, %s230
      %s250 = sphi 0, %s250
      %s252 = sphi 0, %s250
      %s253 = sphi 0, %s252
      %s267 = sphi 0, %s253
      %s271 = sphi 0, %s271
      %s273 = sphi 0, %s271
      %s274 = sphi 0, %s273
      %s288 = sphi 0, %s274
      %s294 = sphi 0, %s296
      %s297 = sphi 0, %s294
      %s298 = sphi 0, %s297
      %s314 = sphi 0, %s298
      %s320 = sphi 0, %s322
      %s323 = sphi 0, %s320
      %s324 = sphi 0, %s323
      %s340 = sphi 0, %s324
    $region4: #{generator_forward.1} parent=1 // loop_header_branch
      %25 = sbr.rel (%p23) target = $region8
    $region5: #{generator_forward.1} parent=1 // loop_body
      %s27 = ssub.s32 %s22, 1
      %s28 = ssub.s32 %s22, 2
      %s35 = sadd.s32 1, %s30
      %p36 = scmp.ge.s32.totalorder %s35, 3
      %s37 = scalar_select %p36, 0, %s35
      %s38 = sadd.s32 1, %s29
      %s39 = scalar_select %p36, %s38, %s29
      %p40 = scmp.ge.s32.totalorder %s39, 2
      %s41 = scalar_select %p40, 0, %s39
      %s42 = smul.u32 %s29, 3
      %s43 = sadd.s32 %s42, %s30
      %s44 = smul.u32 %s41, 3
      %s45 = sadd.s32 %s44, %s37
      %s46 = ssub.s32 %s43, %s45
      %p47 = scmp.eq.s32.totalorder %s46, 0
      %s49 = sadd.s32 %s48, 1
      %s50 = scalar_select %p47, %s48, %s49
      %p53 = pneg %p47
      %p54 = scmp.eq.s32.totalorder %s22, 5
      %p55 = por %p53, %p54
      %p56 = scmp.ne.s32.totalorder %s48, %s51
      %p57 = scmp.eq.s32.totalorder %s22, 0
      %p58 = por %p56, %p57
      %p59 = scmp.ne.s32.totalorder %s48, %s51
      %p60 = scmp.eq.s32.totalorder %s27, 5
      %p61 = por %p59, %p60
      %p62 = scmp.ne.s32.totalorder %s51, %s52
      %p63 = scmp.eq.s32.totalorder %s27, 0
      %p64 = por %p62, %p63
      %p65 = scmp.ne.s32.totalorder %s51, %s52
      %p66 = scmp.eq.s32.totalorder %s28, 5
      %p67 = por %p65, %p66
      %p69 = scmp.ne.s32.totalorder %s52, %s68
      %p70 = scmp.eq.s32.totalorder %s28, 0
      %p71 = por %p69, %p70
      %s73 = sadd.s32 %s72, 1
      %p76 = scmp.eq.s32.totalorder %s22, 5
      %p77 = scmp.ne.s32.totalorder %s72, %s74
      %p78 = scmp.eq.s32.totalorder %s22, 0
      %p79 = por %p77, %p78
      %p80 = scmp.ne.s32.totalorder %s72, %s74
      %p81 = scmp.eq.s32.totalorder %s27, 5
      %p82 = por %p80, %p81
      %p83 = scmp.ne.s32.totalorder %s74, %s75
      %p84 = scmp.eq.s32.totalorder %s27, 0
      %p85 = por %p83, %p84
      %p86 = scmp.ne.s32.totalorder %s74, %s75
      %p87 = scmp.eq.s32.totalorder %s28, 5
      %p88 = por %p86, %p87
      %p90 = scmp.ne.s32.totalorder %s75, %s89
      %p91 = scmp.eq.s32.totalorder %s28, 0
      %p92 = por %p90, %p91
      %s94 = sadd.s32 %s93, 1
      %p97 = scmp.eq.s32.totalorder %s22, 5
      %p98 = scmp.ne.s32.totalorder %s93, %s95
      %p99 = scmp.eq.s32.totalorder %s22, 0
      %p100 = por %p98, %p99
      %p101 = scmp.ne.s32.totalorder %s93, %s95
      %p102 = scmp.eq.s32.totalorder %s27, 5
      %p103 = por %p101, %p102
      %p104 = scmp.ne.s32.totalorder %s95, %s96
      %p105 = scmp.eq.s32.totalorder %s27, 0
      %p106 = por %p104, %p105
      %p107 = scmp.ne.s32.totalorder %s95, %s96
      %p108 = scmp.eq.s32.totalorder %s28, 5
      %p109 = por %p107, %p108
      %p111 = scmp.ne.s32.totalorder %s96, %s110
      %p112 = scmp.eq.s32.totalorder %s28, 0
      %p113 = por %p111, %p112
      %s115 = sadd.s32 %s114, 1
      %p118 = scmp.eq.s32.totalorder %s22, 5
      %p119 = scmp.ne.s32.totalorder %s114, %s116
      %p120 = scmp.eq.s32.totalorder %s22, 0
      %p121 = por %p119, %p120
      %p122 = scmp.ne.s32.totalorder %s114, %s116
      %p123 = scmp.eq.s32.totalorder %s27, 5
      %p124 = por %p122, %p123
      %p125 = scmp.ne.s32.totalorder %s116, %s117
      %p126 = scmp.eq.s32.totalorder %s27, 0
      %p127 = por %p125, %p126
      %p128 = scmp.ne.s32.totalorder %s116, %s117
      %p129 = scmp.eq.s32.totalorder %s28, 5
      %p130 = por %p128, %p129
      %p132 = scmp.ne.s32.totalorder %s117, %s131
      %p133 = scmp.eq.s32.totalorder %s28, 0
      %p134 = por %p132, %p133
      %s135 = ssub.s32 %s29, %s41
      %p136 = scmp.eq.s32.totalorder %s135, 0
      %s138 = sadd.s32 %s137, 1
      %s139 = scalar_select %p136, %s137, %s138
      %p142 = pneg %p136
      %p143 = scmp.eq.s32.totalorder %s22, 5
      %p144 = por %p142, %p143
      %p145 = scmp.ne.s32.totalorder %s137, %s140
      %p146 = scmp.eq.s32.totalorder %s22, 0
      %p147 = por %p145, %p146
      %p148 = scmp.ne.s32.totalorder %s137, %s140
      %p149 = scmp.eq.s32.totalorder %s27, 5
      %p150 = por %p148, %p149
      %p151 = scmp.ne.s32.totalorder %s140, %s141
      %p152 = scmp.eq.s32.totalorder %s27, 0
      %p153 = por %p151, %p152
      %p154 = scmp.ne.s32.totalorder %s140, %s141
      %p155 = scmp.eq.s32.totalorder %s28, 5
      %p156 = por %p154, %p155
      %p158 = scmp.ne.s32.totalorder %s141, %s157
      %p159 = scmp.eq.s32.totalorder %s28, 0
      %p160 = por %p158, %p159
      %s162 = sadd.s32 %s161, 1
      %p165 = scmp.eq.s32.totalorder %s22, 5
      %p166 = scmp.ne.s32.totalorder %s161, %s163
      %p167 = scmp.eq.s32.totalorder %s22, 0
      %p168 = por %p166, %p167
      %p169 = scmp.ne.s32.totalorder %s161, %s163
      %p170 = scmp.eq.s32.totalorder %s27, 5
      %p171 = por %p169, %p170
      %p172 = scmp.ne.s32.totalorder %s163, %s164
      %p173 = scmp.eq.s32.totalorder %s27, 0
      %p174 = por %p172, %p173
      %p175 = scmp.ne.s32.totalorder %s163, %s164
      %p176 = scmp.eq.s32.totalorder %s28, 5
      %p177 = por %p175, %p176
      %p179 = scmp.ne.s32.totalorder %s164, %s178
      %p180 = scmp.eq.s32.totalorder %s28, 0
      %p181 = por %p179, %p180
      %s183 = sadd.s32 %s182, 1
      %p186 = scmp.eq.s32.totalorder %s22, 5
      %p187 = scmp.ne.s32.totalorder %s182, %s184
      %p188 = scmp.eq.s32.totalorder %s22, 0
      %p189 = por %p187, %p188
      %p190 = scmp.ne.s32.totalorder %s182, %s184
      %p191 = scmp.eq.s32.totalorder %s27, 5
      %p192 = por %p190, %p191
      %p193 = scmp.ne.s32.totalorder %s184, %s185
      %p194 = scmp.eq.s32.totalorder %s27, 0
      %p195 = por %p193, %p194
      %p196 = scmp.ne.s32.totalorder %s184, %s185
      %p197 = scmp.eq.s32.totalorder %s28, 5
      %p198 = por %p196, %p197
      %p200 = scmp.ne.s32.totalorder %s185, %s199
      %p201 = scmp.eq.s32.totalorder %s28, 0
      %p202 = por %p200, %p201
      %s204 = sadd.s32 %s203, 1
      %p207 = scmp.eq.s32.totalorder %s22, 5
      %p208 = scmp.ne.s32.totalorder %s203, %s205
      %p209 = scmp.eq.s32.totalorder %s22, 0
      %p210 = por %p208, %p209
      %p211 = scmp.ne.s32.totalorder %s203, %s205
      %p212 = scmp.eq.s32.totalorder %s27, 5
      %p213 = por %p211, %p212
      %p214 = scmp.ne.s32.totalorder %s205, %s206
      %p215 = scmp.eq.s32.totalorder %s27, 0
      %p216 = por %p214, %p215
      %p217 = scmp.ne.s32.totalorder %s205, %s206
      %p218 = scmp.eq.s32.totalorder %s28, 5
      %p219 = por %p217, %p218
      %p221 = scmp.ne.s32.totalorder %s206, %s220
      %p222 = scmp.eq.s32.totalorder %s28, 0
      %p223 = por %p221, %p222
      %s224 = ssub.s32 %s29, %s41
      %p225 = scmp.eq.s32.totalorder %s224, 0
      %s227 = sadd.s32 %s226, 1
      %s228 = scalar_select %p225, %s226, %s227
      %p231 = pneg %p225
      %p232 = scmp.eq.s32.totalorder %s22, 5
      %p233 = por %p231, %p232
      %p234 = scmp.ne.s32.totalorder %s226, %s229
      %p235 = scmp.eq.s32.totalorder %s22, 0
      %p236 = por %p234, %p235
      %p237 = scmp.ne.s32.totalorder %s226, %s229
      %p238 = scmp.eq.s32.totalorder %s27, 5
      %p239 = por %p237, %p238
      %p240 = scmp.ne.s32.totalorder %s229, %s230
      %p241 = scmp.eq.s32.totalorder %s27, 0
      %p242 = por %p240, %p241
      %p243 = scmp.ne.s32.totalorder %s229, %s230
      %p244 = scmp.eq.s32.totalorder %s28, 5
      %p245 = por %p243, %p244
      %p247 = scmp.ne.s32.totalorder %s230, %s246
      %p248 = scmp.eq.s32.totalorder %s28, 0
      %p249 = por %p247, %p248
      %s251 = sadd.s32 %s250, 1
      %p254 = scmp.eq.s32.totalorder %s22, 5
      %p255 = scmp.ne.s32.totalorder %s250, %s252
      %p256 = scmp.eq.s32.totalorder %s22, 0
      %p257 = por %p255, %p256
      %p258 = scmp.ne.s32.totalorder %s250, %s252
      %p259 = scmp.eq.s32.totalorder %s27, 5
      %p260 = por %p258, %p259
      %p261 = scmp.ne.s32.totalorder %s252, %s253
      %p262 = scmp.eq.s32.totalorder %s27, 0
      %p263 = por %p261, %p262
      %p264 = scmp.ne.s32.totalorder %s252, %s253
      %p265 = scmp.eq.s32.totalorder %s28, 5
      %p266 = por %p264, %p265
      %p268 = scmp.ne.s32.totalorder %s253, %s267
      %p269 = scmp.eq.s32.totalorder %s28, 0
      %p270 = por %p268, %p269
      %s272 = sadd.s32 %s271, 1
      %p275 = scmp.eq.s32.totalorder %s22, 5
      %p276 = scmp.ne.s32.totalorder %s271, %s273
      %p277 = scmp.eq.s32.totalorder %s22, 0
      %p278 = por %p276, %p277
      %p279 = scmp.ne.s32.totalorder %s271, %s273
      %p280 = scmp.eq.s32.totalorder %s27, 5
      %p281 = por %p279, %p280
      %p282 = scmp.ne.s32.totalorder %s273, %s274
      %p283 = scmp.eq.s32.totalorder %s27, 0
      %p284 = por %p282, %p283
      %p285 = scmp.ne.s32.totalorder %s273, %s274
      %p286 = scmp.eq.s32.totalorder %s28, 5
      %p287 = por %p285, %p286
      %p289 = scmp.ne.s32.totalorder %s274, %s288
      %p290 = scmp.eq.s32.totalorder %s28, 0
      %p291 = por %p289, %p290
      %s292 = ssub.s32 %s29, %s41
      %p293 = scmp.eq.s32.totalorder %s292, 0
      %s295 = sadd.s32 %s294, 1
      %s296 = scalar_select %p293, %s294, %s295
      %p299 = pneg %p293
      %p300 = scmp.eq.s32.totalorder %s22, 5
      %p301 = por %p299, %p300
      %p302 = scmp.ne.s32.totalorder %s294, %s297
      %p303 = scmp.eq.s32.totalorder %s22, 0
      %p304 = por %p302, %p303
      %p305 = scmp.ne.s32.totalorder %s294, %s297
      %p306 = scmp.eq.s32.totalorder %s27, 5
      %p307 = por %p305, %p306
      %p308 = scmp.ne.s32.totalorder %s297, %s298
      %p309 = scmp.eq.s32.totalorder %s27, 0
      %p310 = por %p308, %p309
      %p311 = scmp.ne.s32.totalorder %s297, %s298
      %p312 = scmp.eq.s32.totalorder %s28, 5
      %p313 = por %p311, %p312
      %p315 = scmp.ne.s32.totalorder %s298, %s314
      %p316 = scmp.eq.s32.totalorder %s28, 0
      %p317 = por %p315, %p316
      %s318 = ssub.s32 %s29, %s41
      %p319 = scmp.eq.s32.totalorder %s318, 0
      %s321 = sadd.s32 %s320, 1
      %s322 = scalar_select %p319, %s320, %s321
      %p325 = pneg %p319
      %p326 = scmp.eq.s32.totalorder %s22, 5
      %p327 = por %p325, %p326
      %p328 = scmp.ne.s32.totalorder %s320, %s323
      %p329 = scmp.eq.s32.totalorder %s22, 0
      %p330 = por %p328, %p329
      %p331 = scmp.ne.s32.totalorder %s320, %s323
      %p332 = scmp.eq.s32.totalorder %s27, 5
      %p333 = por %p331, %p332
      %p334 = scmp.ne.s32.totalorder %s323, %s324
      %p335 = scmp.eq.s32.totalorder %s27, 0
      %p336 = por %p334, %p335
      %p337 = scmp.ne.s32.totalorder %s323, %s324
      %p338 = scmp.eq.s32.totalorder %s28, 5
      %p339 = por %p337, %p338
      %p341 = scmp.ne.s32.totalorder %s324, %s340
      %p342 = scmp.eq.s32.totalorder %s28, 0
      %p343 = por %p341, %p342
      %p344 = scmp.le.s32.totalorder 1, %s22
      %p345 = scmp.lt.s32.totalorder %s22, 7
      %p346 = pnand %p344, %p345
      %p347 = pneg %p346
      // Predicated region
      $region9: #{generator_forward.1} parent=5 // pred_check
        _
      $region10: #{generator_forward.1} parent=5 // pred_check_branch
        %349 = sbr.rel (%p346) target = $region12
      $region11: #{generator_forward.1} parent=5 // pred_region
        %s350 = ssub.s32 %s22, 1
        // Predicated region
        $region13: #{generator_forward.1} parent=11 // pred_check
          %p351 = pneg %p85
        $region14: #{generator_forward.1} parent=11 // pred_check_branch
          %353 = sbr.rel (%p351) target = $region16
        $region15: #{generator_forward.1} parent=11 // pred_region
          _
        $region16: #{generator_forward.1} parent=11 // pred_fallthru
          _
        // Predicated region
        $region17: #{generator_forward.1} parent=11 // pred_check
          %p354 = pneg %p106
        $region18: #{generator_forward.1} parent=11 // pred_check_branch
          %356 = sbr.rel (%p354) target = $region20
        $region19: #{generator_forward.1} parent=11 // pred_region
          _
        $region20: #{generator_forward.1} parent=11 // pred_fallthru
          _
        // Predicated region
        $region21: #{generator_forward.1} parent=11 // pred_check
          %p357 = pneg %p127
        $region22: #{generator_forward.1} parent=11 // pred_check_branch
          %359 = sbr.rel (%p357) target = $region24
        $region23: #{generator_forward.1} parent=11 // pred_region
          _
        $region24: #{generator_forward.1} parent=11 // pred_fallthru
          _
        // Predicated region
        $region25: #{generator_forward.1} parent=11 // pred_check
          %p360 = pneg %p174
        $region26: #{generator_forward.1} parent=11 // pred_check_branch
          %362 = sbr.rel (%p360) target = $region28
        $region27: #{generator_forward.1} parent=11 // pred_region
          _
        $region28: #{generator_forward.1} parent=11 // pred_fallthru
          _
        // Predicated region
        $region29: #{generator_forward.1} parent=11 // pred_check
          %p363 = pneg %p195
        $region30: #{generator_forward.1} parent=11 // pred_check_branch
          %365 = sbr.rel (%p363) target = $region32
        $region31: #{generator_forward.1} parent=11 // pred_region
          _
        $region32: #{generator_forward.1} parent=11 // pred_fallthru
          _
        // Predicated region
        $region33: #{generator_forward.1} parent=11 // pred_check
          %p366 = pneg %p216
        $region34: #{generator_forward.1} parent=11 // pred_check_branch
          %368 = sbr.rel (%p366) target = $region36
        $region35: #{generator_forward.1} parent=11 // pred_region
          _
        $region36: #{generator_forward.1} parent=11 // pred_fallthru
          _
        // Predicated region
        $region37: #{generator_forward.1} parent=11 // pred_check
          %p369 = pneg %p263
        $region38: #{generator_forward.1} parent=11 // pred_check_branch
          %371 = sbr.rel (%p369) target = $region40
        $region39: #{generator_forward.1} parent=11 // pred_region
          _
        $region40: #{generator_forward.1} parent=11 // pred_fallthru
          _
        // Predicated region
        $region41: #{generator_forward.1} parent=11 // pred_check
          %p372 = pneg %p284
        $region42: #{generator_forward.1} parent=11 // pred_check_branch
          %374 = sbr.rel (%p372) target = $region44
        $region43: #{generator_forward.1} parent=11 // pred_region
          _
        $region44: #{generator_forward.1} parent=11 // pred_fallthru
          _
      $region12: #{generator_forward.1} parent=5 // pred_fallthru
        _
      %p375 = scmp.lt.s32.totalorder %s22, 6
      // Predicated region
      $region45: #{generator_forward.1} parent=5 // pred_check
        %p376 = pneg %p375
      $region46: #{generator_forward.1} parent=5 // pred_check_branch
        %378 = sbr.rel (%p376) target = $region48
      $region47: #{generator_forward.1} parent=5 // pred_region
        // Predicated region
        $region49: #{generator_forward.1} parent=47 // pred_check
          %p379 = pneg %p58
        $region50: #{generator_forward.1} parent=47 // pred_check_branch
          %381 = sbr.rel (%p379) target = $region52
        $region51: #{generator_forward.1} parent=47 // pred_region
          %s382 = smul.u32 %s29, 3
          %s383 = sadd.s32 %s382, %s30
          %p384 = scmp.lt.s32.totalorder %s383, 5
          %s385 = scalar_select %p384, %s383, 5
          %s386 = smul.addr %s385, 2
          %s387 = smul.addr %s386, 8
          %s388 = scalar_lea.vmem %s0, %s387
          %s389 = smul.u32 %s29, 3
          %s390 = sadd.s32 %s389, %s30
        $region52: #{generator_forward.1} parent=47 // pred_fallthru
          _
        // Predicated region
        $region53: #{generator_forward.1} parent=47 // pred_check
          %p391 = pneg %p147
        $region54: #{generator_forward.1} parent=47 // pred_check_branch
          %393 = sbr.rel (%p391) target = $region56
        $region55: #{generator_forward.1} parent=47 // pred_region
          %p394 = scmp.lt.s32.totalorder %s29, 1
          %s395 = scalar_select %p394, %s29, 1
          %s396 = smul.addr %s395, 8
          %s397 = smul.addr %s396, 8
          %s398 = scalar_lea.vmem %s4, %s397
        $region56: #{generator_forward.1} parent=47 // pred_fallthru
          _
        // Predicated region
        $region57: #{generator_forward.1} parent=47 // pred_check
          %p399 = pneg %p236
        $region58: #{generator_forward.1} parent=47 // pred_check_branch
          %401 = sbr.rel (%p399) target = $region60
        $region59: #{generator_forward.1} parent=47 // pred_region
          %p402 = scmp.lt.s32.totalorder %s29, 1
          %s403 = scalar_select %p402, %s29, 1
          %s404 = smul.addr %s403, 8
          %s405 = smul.addr %s404, 8
          %s406 = scalar_lea.vmem %s8, %s405
        $region60: #{generator_forward.1} parent=47 // pred_fallthru
          _
      $region48: #{generator_forward.1} parent=5 // pred_fallthru
        _
      %p407 = scmp.le.s32.totalorder 1, %s22
      %p408 = scmp.lt.s32.totalorder %s22, 7
      %p409 = pnand %p407, %p408
      %p410 = pneg %p409
      // Predicated region
      $region61: #{generator_forward.1} parent=5 // pred_check
        _
      $region62: #{generator_forward.1} parent=5 // pred_check_branch
        %412 = sbr.rel (%p409) target = $region64
      $region63: #{generator_forward.1} parent=5 // pred_region
        %s413 = ssub.s32 %s22, 1
        %s414 = smul.u32 %s31, 3
        %s415 = sadd.s32 %s414, %s32
        %p416 = scmp.lt.s32.totalorder %s415, 5
        %s417 = scalar_select %p416, %s415, 5
        %s418 = smul.addr %s417, 2
        %s419 = smul.addr %s418, 8
        %s420 = scalar_lea.vmem %s0, %s419
        %p421 = pneg %p64
        %p422 = pneg %p61
        %p423 = pneg %p85
        %p424 = pneg %p82
        %p425 = pneg %p106
        %p426 = pneg %p103
        %p427 = pneg %p127
        %p428 = pneg %p124
        %p429 = scmp.lt.s32.totalorder %s31, 1
        %s430 = scalar_select %p429, %s31, 1
        %s431 = smul.addr %s430, 8
        %s432 = smul.addr %s431, 8
        %s433 = scalar_lea.vmem %s4, %s432
        %p434 = pneg %p153
        %p435 = pneg %p150
        %p436 = pneg %p174
        %p437 = pneg %p171
        %p438 = pneg %p195
        %p439 = pneg %p192
        %p440 = pneg %p216
        %p441 = pneg %p213
        %p442 = scmp.lt.s32.totalorder %s31, 1
        %s443 = scalar_select %p442, %s31, 1
        %s444 = smul.addr %s443, 8
        %s445 = smul.addr %s444, 8
        %s446 = scalar_lea.vmem %s8, %s445
        %p447 = pneg %p242
        %p448 = pneg %p239
        %p449 = pneg %p263
        %p450 = pneg %p260
        %p451 = pneg %p284
        %p452 = pneg %p281
        %p453 = pneg %p310
        %p454 = pneg %p307
        %p455 = scmp.lt.s32.totalorder %s31, 1
        %s456 = scalar_select %p455, %s31, 1
        %s457 = smul.addr %s456, 2
        %s458 = smul.addr %s457, 8
        %s459 = scalar_lea.vmem %s11, %s458
        %p460 = pneg %p336
        %p461 = pneg %p333
        %s462 = sand.u32 %s323, 1
        %s463 = scalar_lea.sflag [#allocation9], %s462
        %s464 = sand.u32 %s323, 1
        %s465 = smul.addr %s464, 16
        %s466 = scalar_lea.vmem [#allocation8], %s465
        %s467 = smul.u32 %s31, 3
        %s468 = sadd.s32 %s467, %s32
        %p469 = scmp.lt.s32.totalorder %s468, 5
        %s470 = scalar_select %p469, %s468, 5
        %s471 = smul.addr %s470, 2
        %s472 = smul.addr %s471, 8
        %s473 = scalar_lea.vmem %s0, %s472
        %s474 = smul.u32 %s31, 3
        %s475 = sadd.s32 %s474, %s32
        %p476 = scmp.lt.s32.totalorder %s31, 1
        %s477 = scalar_select %p476, %s31, 1
        %s478 = smul.addr %s477, 8
        %s479 = smul.addr %s478, 8
        %s480 = scalar_lea.vmem %s4, %s479
        %p481 = scmp.lt.s32.totalorder %s31, 1
        %s482 = scalar_select %p481, %s31, 1
        %s483 = smul.addr %s482, 8
        %s484 = smul.addr %s483, 8
        %s485 = scalar_lea.vmem %s8, %s484
        %p486 = scmp.lt.s32.totalorder %s31, 1
        %s487 = scalar_select %p486, %s31, 1
        %s488 = smul.addr %s487, 2
        %s489 = smul.addr %s488, 8
        %s490 = scalar_lea.vmem %s11, %s489
        %v494 = vlaneseq
        %v495 = vshrl.u32 %v494, 7
        %v496 = vadd.s32 %v495, 8
        %vm497 = vcmp.lt.s32.totalorder %v495, 0
        %v498 = vsub.s32 0, %v495
        %v499 = vsel %vm497, %v498, %v495
        %v500 = vshrl.u32 %v499, 2
        %v501 = vand.u32 %v499, 3
        %v502 = vsub.s32 0, %v501
        %v503 = vsel %vm497, %v502, %v501
        %vm504 = vcmp.lt.s32.totalorder %v496, 0
        %v505 = vsub.s32 0, %v496
        %v506 = vsel %vm504, %v505, %v496
        %v507 = vshrl.u32 %v506, 2
        %v508 = vand.u32 %v506, 3
        %v509 = vsub.s32 0, %v508
        %v510 = vsel %vm504, %v509, %v508
        %vm511 = vcmp.ne.s32.totalorder %v503, 0
        %vm512 = vcmp.ne.s32.totalorder %v510, 0
        %vm513 = vcmp.lt.s32.totalorder %v503, 0
        %vm514 = vcmp.lt.s32.totalorder %v510, 0
        %vm515 = vmand %vm513, %vm511
        %vm516 = vmand %vm514, %vm512
        %v517 = vadd.s32 %v503, 4
        %v518 = vadd.s32 %v510, 4
        %v519 = vsel %vm515, %v517, %v503
        %v520 = vsel %vm516, %v518, %v510
        %vm521 = vcmp.ge.s32.totalorder %v519, 2
        %vm522 = vcmp.ge.s32.totalorder %v520, 2
        %vm523 = vcmp.ge.s32.totalorder %v519, 1
        %vm524 = vcmp.ge.s32.totalorder %v520, 1
        %vm525 = vcmp.lt.s32.totalorder %v519, 3
        %vm526 = vcmp.lt.s32.totalorder %v520, 3
        %vm527 = vcmp.lt.s32.totalorder %v519, 2
        %vm528 = vcmp.lt.s32.totalorder %v520, 2
        %p529 = scmp.eq.s32.totalorder %s32, 0
        // Predicated region
        $region65: #{generator_forward.1} parent=63 // pred_check
          %p530 = pneg %p529
        $region66: #{generator_forward.1} parent=63 // pred_check_branch
          %532 = sbr.rel (%p530) target = $region68
        $region67: #{generator_forward.1} parent=63 // pred_region
          %vm533 = vcmask 257024
          %534 = vst.msk [vmem:[#allocation2] sm:$0xf] %vm533, 0
          %535 = vst.msk [vmem:[#allocation2 + $0x4] sm:$0xf] %vm533, 0
          %536 = vst.msk [vmem:[#allocation2 + $0x8] sm:$0xf] %vm533, 0
          %537 = vst.msk [vmem:[#allocation2 + $0xc] sm:$0xf] %vm533, 0
          %538 = vst.msk [vmem:[#allocation2 + $0x10] sm:$0xf] %vm533, 0
          %539 = vst.msk [vmem:[#allocation2 + $0x14] sm:$0xf] %vm533, 0
          %vm540 = vcmask 60416
          %541 = vst.msk [vmem:[#allocation3] sm:$0xf] %vm540, 0
          %542 = vst.msk [vmem:[#allocation3 + $0x4] sm:$0xf] %vm540, 0
          %543 = vst.msk [vmem:[#allocation3 + $0x8] sm:$0xf] %vm540, 0
          %544 = vst.msk [vmem:[#allocation3 + $0xc] sm:$0xf] %vm540, 0
          %545 = vst.msk [vmem:[#allocation3 + $0x10] sm:$0xf] %vm540, 0
          %546 = vst.msk [vmem:[#allocation3 + $0x14] sm:$0xf] %vm540, 0
          %vm547 = vcmask 261120
          %548 = vst.msk [vmem:[#allocation6] sm:$0xff] %vm547, 0.0
          %549 = vst.msk [vmem:[#allocation6 + $0x8] sm:$0xff] %vm547, 0.0
          %550 = vst.msk [vmem:[#allocation7] sm:$0xff] %vm547, 0.0
          %551 = vst.msk [vmem:[#allocation7 + $0x8] sm:$0xff] %vm547, 0.0
          %552 = vst [vmem:[%s490] sm:$0xff] 0.0
          %553 = vst [vmem:[%s490 + $0x8] sm:$0xff] 0.0
          %vm554 = vcmask 64512
          %555 = vst.msk [vmem:[%s466] sm:$0xff] %vm554, 0.0
          %556 = vst.msk [vmem:[%s466 + $0x8] sm:$0xff] %vm554, 0.0
        $region68: #{generator_forward.1} parent=63 // pred_fallthru
          _
        %v557 = vld [vmem:[#allocation2] sm:$0x8]
        %v558 = vld [vmem:[#allocation2 + $0x4] sm:$0xf]
        %v559 = vld [vmem:[#allocation2 + $0x8] sm:$0x7]
        %v560 = vsel %vm521, 1, 0
        %v561 = vsel %vm522, 1, 0
        %vm562 = vcmp.eq.s32.totalorder %v560, 1
        %vm563 = vcmp.eq.s32.totalorder %v561, 1
        %vm564 = vmpackc.low %vm562, %vm562
        %vm565 = vmpackc.low %vm563, %vm563
        %v566 = vsel %vm564, 65537, 0
        %v567 = vsel %vm565, 65537, 0
        %vm568 = vcmask 1042432
        %vm569 = vcmask 1046532
        %vm570 = vmor %vm568, %vm569
        %v571 = vrot.slane %v566, 5
        %v572 = vrot.slane %v571, 4
        %v573 = vrot.slane %v567, 5
        %v574 = vsel %vm570, %v572, %v573
        %v575 = vrot.slane %v573, 4
        %v576 = vunpack.c.l.b16 %v571
        %v577 = vunpack.c.h.b16 %v571
        %v578 = vunpack.c.l.b16 0
        %v579 = vunpack.c.h.b16 0
        %vm580 = vcmp.ne.s32.totalorder %v576, %v578
        %vm581 = vcmp.ne.s32.totalorder %v577, %v579
        %vm582 = vmpackc.low %vm581, %vm580
        %v583 = vunpack.c.l.b16 %v574
        %v584 = vunpack.c.h.b16 %v574
        %v585 = vunpack.c.l.b16 0
        %v586 = vunpack.c.h.b16 0
        %vm587 = vcmp.ne.s32.totalorder %v583, %v585
        %vm588 = vcmp.ne.s32.totalorder %v584, %v586
        %vm589 = vmpackc.low %vm588, %vm587
        %v590 = vunpack.c.l.b16 %v575
        %v591 = vunpack.c.h.b16 %v575
        %v592 = vunpack.c.l.b16 0
        %v593 = vunpack.c.h.b16 0
        %vm594 = vcmp.ne.s32.totalorder %v590, %v592
        %vm595 = vcmp.ne.s32.totalorder %v591, %v593
        %vm596 = vmpackc.low %vm595, %vm594
        %v597 = vsel %vm582, %v557, 0
        %v598 = vsel %vm589, %v558, 0
        %v599 = vsel %vm596, %v559, 0
        %vm603 = vcmask 1040384
        %vm604 = vcmask 1044484
        %vm605 = vmor %vm603, %vm604
        %v606 = vrot.slane %v597, 7
        %v607 = vrot.slane %v606, 4
        %v608 = vrot.slane %v598, 7
        %v609 = vsel %vm605, %v607, %v608
        %v610 = vrot.slane %v608, 4
        %v611 = vrot.slane %v599, 7
        %v612 = vsel %vm605, %v610, %v611
        %vm615 = vcmask 257024
        %616 = vst.msk [vmem:[#allocation4] sm:$0xf] %vm615, %v609
        %617 = vst.msk [vmem:[#allocation4 + $0x1c] sm:$0xf] %vm615, %v612
        %v618 = vld [vmem:[#allocation2] sm:$0x8]
        %v619 = vld [vmem:[#allocation2 + $0x4] sm:$0xf]
        %v620 = vld [vmem:[#allocation2 + $0x8] sm:$0xf]
        %v621 = vsel %vm523, 1, 0
        %v622 = vsel %vm524, 1, 0
        %vm623 = vcmp.eq.s32.totalorder %v621, 1
        %vm624 = vcmp.eq.s32.totalorder %v622, 1
        %vm625 = vmpackc.low %vm623, %vm623
        %vm626 = vmpackc.low %vm624, %vm624
        %v627 = vsel %vm625, 65537, 0
        %v628 = vsel %vm626, 65537, 0
        %vm629 = vsmask.f32 3328
        %vm630 = vsmask.f32 7440
        %vm631 = vmor %vm629, %vm630
        %v633 = vshll.u32 %v627, 16
        %v635 = vrot.slane %v633, 5
        %v636 = vshrl.u32 %v627, 16
        %v638 = vrot.slane %v636, 4
        %v639 = vor.u32 %v638, %v635
        %v640 = vrot.slane %v639, 4
        %v642 = vshll.u32 %v628, 16
        %v644 = vrot.slane %v642, 5
        %v645 = vsel %vm631, %v640, %v644
        %v646 = vshrl.u32 %v628, 16
        %v648 = vrot.slane %v646, 4
        %v649 = vor.u32 %v648, %v644
        %v650 = vrot.slane %v649, 4
        %v651 = vunpack.c.l.b16 %v635
        %v652 = vunpack.c.h.b16 %v635
        %v653 = vunpack.c.l.b16 0
        %v654 = vunpack.c.h.b16 0
        %vm655 = vcmp.ne.s32.totalorder %v651, %v653
        %vm656 = vcmp.ne.s32.totalorder %v652, %v654
        %vm657 = vmpackc.low %vm656, %vm655
        %v658 = vunpack.c.l.b16 %v645
        %v659 = vunpack.c.h.b16 %v645
        %v660 = vunpack.c.l.b16 0
        %v661 = vunpack.c.h.b16 0
        %vm662 = vcmp.ne.s32.totalorder %v658, %v660
        %vm663 = vcmp.ne.s32.totalorder %v659, %v661
        %vm664 = vmpackc.low %vm663, %vm662
        %v665 = vunpack.c.l.b16 %v650
        %v666 = vunpack.c.h.b16 %v650
        %v667 = vunpack.c.l.b16 0
        %v668 = vunpack.c.h.b16 0
        %vm669 = vcmp.ne.s32.totalorder %v665, %v667
        %vm670 = vcmp.ne.s32.totalorder %v666, %v668
        %vm671 = vmpackc.low %vm670, %vm669
        %v672 = vsel %vm657, %v618, 0
        %v673 = vsel %vm664, %v619, 0
        %v674 = vsel %vm671, %v620, 0
        %vm675 = vsmask.f32 256
        %vm676 = vsmask.f32 4368
        %vm677 = vmor %vm675, %vm676
        %v679 = vshrl.u32 %v672, 16
        %v681 = vrot.slane %v679, 7
        %v682 = vrot.slane %v681, 4
        %v684 = vshrl.u32 %v673, 16
        %v686 = vrot.slane %v684, 7
        %v687 = vshll.u32 %v673, 16
        %v689 = vor.u32 %v686, %v687
        %v690 = vsel %vm677, %v682, %v689
        %v691 = vrot.slane %v686, 4
        %v693 = vshrl.u32 %v674, 16
        %v695 = vrot.slane %v693, 7
        %v696 = vshll.u32 %v674, 16
        %v698 = vor.u32 %v695, %v696
        %v699 = vsel %vm677, %v691, %v698
        %700 = vrot.lane.b32.xlu0 %v690, 32
        %v701 = vpop.permute.xlu0 %700
        %702 = vrot.lane.b32.xlu0 %v699, 32
        %v703 = vpop.permute.xlu0 %702
        %vm706 = vcmask 519424
        %707 = vst.msk [vmem:[#allocation4] sm:$0xf] %vm706, %v701
        %708 = vst.msk [vmem:[#allocation4 + $0x1c] sm:$0xf] %vm706, %v703
        %v709 = vld [vmem:[#allocation2 + $0x4] sm:$0xf]
        %v710 = vld [vmem:[#allocation2 + $0x8] sm:$0xf]
        %713 = vrot.lane.b32.xlu0 %v709, 64
        %v714 = vpop.permute.xlu0 %713
        %715 = vrot.lane.b32.xlu0 %v710, 64
        %v716 = vpop.permute.xlu0 %715
        %vm719 = vcmask 781824
        %720 = vst.msk [vmem:[#allocation4] sm:$0xf] %vm719, %v714
        %721 = vst.msk [vmem:[#allocation4 + $0x1c] sm:$0xf] %vm719, %v716
        %v722 = vld [vmem:[#allocation2 + $0x4] sm:$0xf]
        %v723 = vld [vmem:[#allocation2 + $0x8] sm:$0xf]
        %v724 = vld [vmem:[#allocation2 + $0xc] sm:$0x1]
        %v725 = vsel %vm525, 1, 0
        %v726 = vsel %vm526, 1, 0
        %vm727 = vcmp.eq.s32.totalorder %v725, 1
        %vm728 = vcmp.eq.s32.totalorder %v726, 1
        %vm729 = vmpackc.low %vm727, %vm727
        %vm730 = vmpackc.low %vm728, %vm728
        %v731 = vsel %vm729, 65537, 0
        %v732 = vsel %vm730, 65537, 0
        %v734 = vshrl.u32 %v731, 16
        %v736 = vrot.slane %v734, 7
        %v737 = vshll.u32 %v731, 16
        %v739 = vor.u32 %v736, %v737
        %v740 = vrot.slane %v736, 4
        %v742 = vshrl.u32 %v732, 16
        %v744 = vrot.slane %v742, 7
        %v745 = vshll.u32 %v732, 16
        %v747 = vor.u32 %v744, %v745
        %v748 = vsel %vm677, %v740, %v747
        %v749 = vrot.slane %v744, 4
        %v750 = vunpack.c.l.b16 %v739
        %v751 = vunpack.c.h.b16 %v739
        %v752 = vunpack.c.l.b16 0
        %v753 = vunpack.c.h.b16 0
        %vm754 = vcmp.ne.s32.totalorder %v750, %v752
        %vm755 = vcmp.ne.s32.totalorder %v751, %v753
        %vm756 = vmpackc.low %vm755, %vm754
        %v757 = vunpack.c.l.b16 %v748
        %v758 = vunpack.c.h.b16 %v748
        %v759 = vunpack.c.l.b16 0
        %v760 = vunpack.c.h.b16 0
        %vm761 = vcmp.ne.s32.totalorder %v757, %v759
        %vm762 = vcmp.ne.s32.totalorder %v758, %v760
        %vm763 = vmpackc.low %vm762, %vm761
        %v764 = vunpack.c.l.b16 %v749
        %v765 = vunpack.c.h.b16 %v749
        %v766 = vunpack.c.l.b16 0
        %v767 = vunpack.c.h.b16 0
        %vm768 = vcmp.ne.s32.totalorder %v764, %v766
        %vm769 = vcmp.ne.s32.totalorder %v765, %v767
        %vm770 = vmpackc.low %vm769, %vm768
        %v771 = vsel %vm756, %v722, 0
        %v772 = vsel %vm763, %v723, 0
        %v773 = vsel %vm770, %v724, 0
        %v775 = vshrl.u32 %v771, 16
        %v777 = vrot.slane %v775, 4
        %v778 = vshll.u32 %v771, 16
        %v780 = vrot.slane %v778, 5
        %v781 = vor.u32 %v777, %v780
        %v782 = vrot.slane %v781, 4
        %v784 = vshll.u32 %v772, 16
        %v786 = vrot.slane %v784, 5
        %v787 = vsel %vm631, %v782, %v786
        %v788 = vshrl.u32 %v772, 16
        %v790 = vrot.slane %v788, 4
        %v791 = vor.u32 %v790, %v786
        %v792 = vrot.slane %v791, 4
        %v794 = vshll.u32 %v773, 16
        %v796 = vrot.slane %v794, 5
        %v797 = vsel %vm631, %v792, %v796
        %798 = vrot.lane.b32.xlu0 %v787, 96
        %v799 = vpop.permute.xlu0 %798
        %800 = vrot.lane.b32.xlu0 %v797, 96
        %v801 = vpop.permute.xlu0 %800
        %vm804 = vcmask 1044224
        %805 = vst.msk [vmem:[#allocation4] sm:$0xf] %vm804, %v799
        %806 = vst.msk [vmem:[#allocation4 + $0x1c] sm:$0xf] %vm804, %v801
        %v807 = vld [vmem:[#allocation2 + $0x4] sm:$0xe]
        %v808 = vld [vmem:[#allocation2 + $0x8] sm:$0xf]
        %v809 = vld [vmem:[#allocation2 + $0xc] sm:$0x1]
        %v810 = vsel %vm527, 1, 0
        %v811 = vsel %vm528, 1, 0
        %vm812 = vcmp.eq.s32.totalorder %v810, 1
        %vm813 = vcmp.eq.s32.totalorder %v811, 1
        %vm814 = vmpackc.low %vm812, %vm812
        %vm815 = vmpackc.low %vm813, %vm813
        %v816 = vsel %vm814, 65537, 0
        %v817 = vsel %vm815, 65537, 0
        %v818 = vrot.slane %v816, 7
        %v819 = vrot.slane %v818, 4
        %v820 = vrot.slane %v817, 7
        %v821 = vsel %vm605, %v819, %v820
        %v822 = vrot.slane %v820, 4
        %v823 = vunpack.c.l.b16 %v818
        %v824 = vunpack.c.h.b16 %v818
        %v825 = vunpack.c.l.b16 0
        %v826 = vunpack.c.h.b16 0
        %vm827 = vcmp.ne.s32.totalorder %v823, %v825
        %vm828 = vcmp.ne.s32.totalorder %v824, %v826
        %vm829 = vmpackc.low %vm828, %vm827
        %v830 = vunpack.c.l.b16 %v821
        %v831 = vunpack.c.h.b16 %v821
        %v832 = vunpack.c.l.b16 0
        %v833 = vunpack.c.h.b16 0
        %vm834 = vcmp.ne.s32.totalorder %v830, %v832
        %vm835 = vcmp.ne.s32.totalorder %v831, %v833
        %vm836 = vmpackc.low %vm835, %vm834
        %v837 = vunpack.c.l.b16 %v822
        %v838 = vunpack.c.h.b16 %v822
        %v839 = vunpack.c.l.b16 0
        %v840 = vunpack.c.h.b16 0
        %vm841 = vcmp.ne.s32.totalorder %v837, %v839
        %vm842 = vcmp.ne.s32.totalorder %v838, %v840
        %vm843 = vmpackc.low %vm842, %vm841
        %v844 = vsel %vm829, %v807, 0
        %v845 = vsel %vm836, %v808, 0
        %v846 = vsel %vm843, %v809, 0
        %v850 = vrot.slane %v844, 5
        %v851 = vrot.slane %v850, 4
        %v852 = vrot.slane %v845, 5
        %v853 = vsel %vm570, %v851, %v852
        %v854 = vrot.slane %v852, 4
        %v855 = vrot.slane %v846, 5
        %v856 = vsel %vm570, %v854, %v855
        %859 = vst.msk [vmem:[#allocation4 + $0x4] sm:$0xf] %vm615, %v853
        %860 = vst.msk [vmem:[#allocation4 + $0x20] sm:$0xf] %vm615, %v856
        %v861 = vld [vmem:[#allocation2 + $0x4] sm:$0xe]
        %v862 = vld [vmem:[#allocation2 + $0x8] sm:$0xf]
        %v863 = vld [vmem:[#allocation2 + $0xc] sm:$0x1]
        %v864 = vrot.slane %v566, 7
        %v865 = vrot.slane %v864, 4
        %v866 = vrot.slane %v567, 7
        %v867 = vsel %vm605, %v865, %v866
        %v868 = vrot.slane %v866, 4
        %v869 = vunpack.c.l.b16 %v864
        %v870 = vunpack.c.h.b16 %v864
        %v871 = vunpack.c.l.b16 0
        %v872 = vunpack.c.h.b16 0
        %vm873 = vcmp.ne.s32.totalorder %v869, %v871
        %vm874 = vcmp.ne.s32.totalorder %v870, %v872
        %vm875 = vmpackc.low %vm874, %vm873
        %v876 = vunpack.c.l.b16 %v867
        %v877 = vunpack.c.h.b16 %v867
        %v878 = vunpack.c.l.b16 0
        %v879 = vunpack.c.h.b16 0
        %vm880 = vcmp.ne.s32.totalorder %v876, %v878
        %vm881 = vcmp.ne.s32.totalorder %v877, %v879
        %vm882 = vmpackc.low %vm881, %vm880
        %v883 = vunpack.c.l.b16 %v868
        %v884 = vunpack.c.h.b16 %v868
        %v885 = vunpack.c.l.b16 0
        %v886 = vunpack.c.h.b16 0
        %vm887 = vcmp.ne.s32.totalorder %v883, %v885
        %vm888 = vcmp.ne.s32.totalorder %v884, %v886
        %vm889 = vmpackc.low %vm888, %vm887
        %v890 = vsel %vm875, %v861, 0
        %v891 = vsel %vm882, %v862, 0
        %v892 = vsel %vm889, %v863, 0
        %v896 = vrot.slane %v890, 5
        %v897 = vrot.slane %v896, 4
        %v898 = vrot.slane %v891, 5
        %v899 = vsel %vm570, %v897, %v898
        %v900 = vrot.slane %v898, 4
        %v901 = vrot.slane %v892, 5
        %v902 = vsel %vm570, %v900, %v901
        %903 = vrot.lane.b32.xlu0 %v899, 32
        %v904 = vpop.permute.xlu0 %903
        %905 = vrot.lane.b32.xlu0 %v902, 32
        %v906 = vpop.permute.xlu0 %905
        %909 = vst.msk [vmem:[#allocation4 + $0x4] sm:$0xf] %vm706, %v904
        %910 = vst.msk [vmem:[#allocation4 + $0x20] sm:$0xf] %vm706, %v906
        %v911 = vld [vmem:[#allocation2 + $0x4] sm:$0xe]
        %v912 = vld [vmem:[#allocation2 + $0x8] sm:$0xf]
        %v913 = vld [vmem:[#allocation2 + $0xc] sm:$0x3]
        %vm914 = vsmask.f32 1280
        %vm915 = vsmask.f32 5392
        %vm916 = vmor %vm914, %vm915
        %v917 = vrot.slane %v636, 6
        %v918 = vrot.slane %v633, 7
        %v919 = vor.u32 %v917, %v918
        %v920 = vrot.slane %v919, 4
        %v921 = vrot.slane %v646, 6
        %v922 = vrot.slane %v642, 7
        %v923 = vor.u32 %v921, %v922
        %v924 = vsel %vm916, %v920, %v923
        %v925 = vrot.slane %v923, 4
        %v926 = vunpack.c.l.b16 %v919
        %v927 = vunpack.c.h.b16 %v919
        %v928 = vunpack.c.l.b16 0
        %v929 = vunpack.c.h.b16 0
        %vm930 = vcmp.ne.s32.totalorder %v926, %v928
        %vm931 = vcmp.ne.s32.totalorder %v927, %v929
        %vm932 = vmpackc.low %vm931, %vm930
        %v933 = vunpack.c.l.b16 %v924
        %v934 = vunpack.c.h.b16 %v924
        %v935 = vunpack.c.l.b16 0
        %v936 = vunpack.c.h.b16 0
        %vm937 = vcmp.ne.s32.totalorder %v933, %v935
        %vm938 = vcmp.ne.s32.totalorder %v934, %v936
        %vm939 = vmpackc.low %vm938, %vm937
        %v940 = vunpack.c.l.b16 %v925
        %v941 = vunpack.c.h.b16 %v925
        %v942 = vunpack.c.l.b16 0
        %v943 = vunpack.c.h.b16 0
        %vm944 = vcmp.ne.s32.totalorder %v940, %v942
        %vm945 = vcmp.ne.s32.totalorder %v941, %v943
        %vm946 = vmpackc.low %vm945, %vm944
        %v947 = vsel %vm932, %v911, 0
        %v948 = vsel %vm939, %v912, 0
        %v949 = vsel %vm946, %v913, 0
        %vm950 = vsmask.f32 2304
        %vm951 = vsmask.f32 6416
        %vm952 = vmor %vm950, %vm951
        %v954 = vshrl.u32 %v947, 16
        %v956 = vrot.slane %v954, 5
        %v957 = vshll.u32 %v947, 16
        %v959 = vrot.slane %v957, 6
        %v960 = vor.u32 %v956, %v959
        %v961 = vrot.slane %v960, 4
        %v963 = vshrl.u32 %v948, 16
        %v965 = vrot.slane %v963, 5
        %v966 = vshll.u32 %v948, 16
        %v968 = vrot.slane %v966, 6
        %v969 = vor.u32 %v965, %v968
        %v970 = vsel %vm952, %v961, %v969
        %v971 = vrot.slane %v969, 4
        %v973 = vshrl.u32 %v949, 16
        %v975 = vrot.slane %v973, 5
        %v976 = vshll.u32 %v949, 16
        %v978 = vrot.slane %v976, 6
        %v979 = vor.u32 %v975, %v978
        %v980 = vsel %vm952, %v971, %v979
        %981 = vrot.lane.b32.xlu0 %v970, 64
        %v982 = vpop.permute.xlu0 %981
        %983 = vrot.lane.b32.xlu0 %v980, 64
        %v984 = vpop.permute.xlu0 %983
        %987 = vst.msk [vmem:[#allocation4 + $0x4] sm:$0xf] %vm719, %v982
        %988 = vst.msk [vmem:[#allocation4 + $0x20] sm:$0xf] %vm719, %v984
        %v989 = vld [vmem:[#allocation2 + $0x4] sm:$0xc]
        %v990 = vld [vmem:[#allocation2 + $0x8] sm:$0xf]
        %v991 = vld [vmem:[#allocation2 + $0xc] sm:$0x3]
        %vm995 = vcmask 1041408
        %vm996 = vcmask 1045508
        %vm997 = vmor %vm995, %vm996
        %v998 = vrot.slane %v989, 6
        %v999 = vrot.slane %v998, 4
        %v1000 = vrot.slane %v990, 6
        %v1001 = vsel %vm997, %v999, %v1000
        %v1002 = vrot.slane %v1000, 4
        %v1003 = vrot.slane %v991, 6
        %v1004 = vsel %vm997, %v1002, %v1003
        %1005 = vrot.lane.b32.xlu0 %v1001, 96
        %v1006 = vpop.permute.xlu0 %1005
        %1007 = vrot.lane.b32.xlu0 %v1004, 96
        %v1008 = vpop.permute.xlu0 %1007
        %1011 = vst.msk [vmem:[#allocation4 + $0x4] sm:$0xf] %vm804, %v1006
        %1012 = vst.msk [vmem:[#allocation4 + $0x20] sm:$0xf] %vm804, %v1008
        %v1013 = vld [vmem:[#allocation2 + $0x4] sm:$0xc]
        %v1014 = vld [vmem:[#allocation2 + $0x8] sm:$0xf]
        %v1015 = vld [vmem:[#allocation2 + $0xc] sm:$0x7]
        %v1016 = vrot.slane %v734, 5
        %v1017 = vrot.slane %v737, 6
        %v1018 = vor.u32 %v1016, %v1017
        %v1019 = vrot.slane %v1018, 4
        %v1020 = vrot.slane %v742, 5
        %v1021 = vrot.slane %v745, 6
        %v1022 = vor.u32 %v1020, %v1021
        %v1023 = vsel %vm952, %v1019, %v1022
        %v1024 = vrot.slane %v1022, 4
        %v1025 = vunpack.c.l.b16 %v1018
        %v1026 = vunpack.c.h.b16 %v1018
        %v1027 = vunpack.c.l.b16 0
        %v1028 = vunpack.c.h.b16 0
        %vm1029 = vcmp.ne.s32.totalorder %v1025, %v1027
        %vm1030 = vcmp.ne.s32.totalorder %v1026, %v1028
        %vm1031 = vmpackc.low %vm1030, %vm1029
        %v1032 = vunpack.c.l.b16 %v1023
        %v1033 = vunpack.c.h.b16 %v1023
        %v1034 = vunpack.c.l.b16 0
        %v1035 = vunpack.c.h.b16 0
        %vm1036 = vcmp.ne.s32.totalorder %v1032, %v1034
        %vm1037 = vcmp.ne.s32.totalorder %v1033, %v1035
        %vm1038 = vmpackc.low %vm1037, %vm1036
        %v1039 = vunpack.c.l.b16 %v1024
        %v1040 = vunpack.c.h.b16 %v1024
        %v1041 = vunpack.c.l.b16 0
        %v1042 = vunpack.c.h.b16 0
        %vm1043 = vcmp.ne.s32.totalorder %v1039, %v1041
        %vm1044 = vcmp.ne.s32.totalorder %v1040, %v1042
        %vm1045 = vmpackc.low %vm1044, %vm1043
        %v1046 = vsel %vm1031, %v1013, 0
        %v1047 = vsel %vm1038, %v1014, 0
        %v1048 = vsel %vm1045, %v1015, 0
        %v1050 = vshrl.u32 %v1046, 16
        %v1052 = vrot.slane %v1050, 6
        %v1053 = vshll.u32 %v1046, 16
        %v1055 = vrot.slane %v1053, 7
        %v1056 = vor.u32 %v1052, %v1055
        %v1057 = vrot.slane %v1056, 4
        %v1059 = vshrl.u32 %v1047, 16
        %v1061 = vrot.slane %v1059, 6
        %v1062 = vshll.u32 %v1047, 16
        %v1064 = vrot.slane %v1062, 7
        %v1065 = vor.u32 %v1061, %v1064
        %v1066 = vsel %vm916, %v1057, %v1065
        %v1067 = vrot.slane %v1065, 4
        %v1069 = vshrl.u32 %v1048, 16
        %v1071 = vrot.slane %v1069, 6
        %v1072 = vshll.u32 %v1048, 16
        %v1074 = vrot.slane %v1072, 7
        %v1075 = vor.u32 %v1071, %v1074
        %v1076 = vsel %vm916, %v1067, %v1075
        %1079 = vst.msk [vmem:[#allocation4 + $0x8] sm:$0xf] %vm615, %v1066
        %1080 = vst.msk [vmem:[#allocation4 + $0x24] sm:$0xf] %vm615, %v1076
        %v1081 = vld [vmem:[#allocation2 + $0x4] sm:$0x8]
        %v1082 = vld [vmem:[#allocation2 + $0x8] sm:$0xf]
        %v1083 = vld [vmem:[#allocation2 + $0xc] sm:$0x7]
        %v1084 = vrot.slane %v816, 5
        %v1085 = vrot.slane %v1084, 4
        %v1086 = vrot.slane %v817, 5
        %v1087 = vsel %vm570, %v1085, %v1086
        %v1088 = vrot.slane %v1086, 4
        %v1089 = vunpack.c.l.b16 %v1084
        %v1090 = vunpack.c.h.b16 %v1084
        %v1091 = vunpack.c.l.b16 0
        %v1092 = vunpack.c.h.b16 0
        %vm1093 = vcmp.ne.s32.totalorder %v1089, %v1091
        %vm1094 = vcmp.ne.s32.totalorder %v1090, %v1092
        %vm1095 = vmpackc.low %vm1094, %vm1093
        %v1096 = vunpack.c.l.b16 %v1087
        %v1097 = vunpack.c.h.b16 %v1087
        %v1098 = vunpack.c.l.b16 0
        %v1099 = vunpack.c.h.b16 0
        %vm1100 = vcmp.ne.s32.totalorder %v1096, %v1098
        %vm1101 = vcmp.ne.s32.totalorder %v1097, %v1099
        %vm1102 = vmpackc.low %vm1101, %vm1100
        %v1103 = vunpack.c.l.b16 %v1088
        %v1104 = vunpack.c.h.b16 %v1088
        %v1105 = vunpack.c.l.b16 0
        %v1106 = vunpack.c.h.b16 0
        %vm1107 = vcmp.ne.s32.totalorder %v1103, %v1105
        %vm1108 = vcmp.ne.s32.totalorder %v1104, %v1106
        %vm1109 = vmpackc.low %vm1108, %vm1107
        %v1110 = vsel %vm1095, %v1081, 0
        %v1111 = vsel %vm1102, %v1082, 0
        %v1112 = vsel %vm1109, %v1083, 0
        %v1116 = vrot.slane %v1110, 7
        %v1117 = vrot.slane %v1116, 4
        %v1118 = vrot.slane %v1111, 7
        %v1119 = vsel %vm605, %v1117, %v1118
        %v1120 = vrot.slane %v1118, 4
        %v1121 = vrot.slane %v1112, 7
        %v1122 = vsel %vm605, %v1120, %v1121
        %1123 = vrot.lane.b32.xlu0 %v1119, 32
        %v1124 = vpop.permute.xlu0 %1123
        %1125 = vrot.lane.b32.xlu0 %v1122, 32
        %v1126 = vpop.permute.xlu0 %1125
        %1129 = vst.msk [vmem:[#allocation4 + $0x8] sm:$0xf] %vm706, %v1124
        %1130 = vst.msk [vmem:[#allocation4 + $0x24] sm:$0xf] %vm706, %v1126
        %v1131 = vld [vmem:[#allocation2 + $0x4] sm:$0x8]
        %v1132 = vld [vmem:[#allocation2 + $0x8] sm:$0xf]
        %v1133 = vld [vmem:[#allocation2 + $0xc] sm:$0x7]
        %v1134 = vsel %vm582, %v1131, 0
        %v1135 = vsel %vm589, %v1132, 0
        %v1136 = vsel %vm596, %v1133, 0
        %v1140 = vrot.slane %v1134, 7
        %v1141 = vrot.slane %v1140, 4
        %v1142 = vrot.slane %v1135, 7
        %v1143 = vsel %vm605, %v1141, %v1142
        %v1144 = vrot.slane %v1142, 4
        %v1145 = vrot.slane %v1136, 7
        %v1146 = vsel %vm605, %v1144, %v1145
        %1147 = vrot.lane.b32.xlu0 %v1143, 64
        %v1148 = vpop.permute.xlu0 %1147
        %1149 = vrot.lane.b32.xlu0 %v1146, 64
        %v1150 = vpop.permute.xlu0 %1149
        %1153 = vst.msk [vmem:[#allocation4 + $0x8] sm:$0xf] %vm719, %v1148
        %1154 = vst.msk [vmem:[#allocation4 + $0x24] sm:$0xf] %vm719, %v1150
        %v1155 = vld [vmem:[#allocation2 + $0x4] sm:$0x8]
        %v1156 = vld [vmem:[#allocation2 + $0x8] sm:$0xf]
        %v1157 = vld [vmem:[#allocation2 + $0xc] sm:$0xf]
        %v1158 = vsel %vm657, %v1155, 0
        %v1159 = vsel %vm664, %v1156, 0
        %v1160 = vsel %vm671, %v1157, 0
        %v1162 = vshrl.u32 %v1158, 16
        %v1164 = vrot.slane %v1162, 7
        %v1165 = vrot.slane %v1164, 4
        %v1167 = vshrl.u32 %v1159, 16
        %v1169 = vrot.slane %v1167, 7
        %v1170 = vshll.u32 %v1159, 16
        %v1172 = vor.u32 %v1169, %v1170
        %v1173 = vsel %vm677, %v1165, %v1172
        %v1174 = vrot.slane %v1169, 4
        %v1176 = vshrl.u32 %v1160, 16
        %v1178 = vrot.slane %v1176, 7
        %v1179 = vshll.u32 %v1160, 16
        %v1181 = vor.u32 %v1178, %v1179
        %v1182 = vsel %vm677, %v1174, %v1181
        %1183 = vrot.lane.b32.xlu0 %v1173, 96
        %v1184 = vpop.permute.xlu0 %1183
        %1185 = vrot.lane.b32.xlu0 %v1182, 96
        %v1186 = vpop.permute.xlu0 %1185
        %1189 = vst.msk [vmem:[#allocation4 + $0x8] sm:$0xf] %vm804, %v1184
        %1190 = vst.msk [vmem:[#allocation4 + $0x24] sm:$0xf] %vm804, %v1186
        %v1191 = vld [vmem:[#allocation2 + $0x8] sm:$0xf]
        %v1192 = vld [vmem:[#allocation2 + $0xc] sm:$0xf]
        %1193 = vst.msk [vmem:[#allocation4 + $0xc] sm:$0xf] %vm615, %v1191
        %1194 = vst.msk [vmem:[#allocation4 + $0x28] sm:$0xf] %vm615, %v1192
        %v1195 = vld [vmem:[#allocation2 + $0x8] sm:$0xf]
        %v1196 = vld [vmem:[#allocation2 + $0xc] sm:$0xf]
        %v1197 = vld [vmem:[#allocation2 + $0x10] sm:$0x1]
        %v1198 = vsel %vm756, %v1195, 0
        %v1199 = vsel %vm763, %v1196, 0
        %v1200 = vsel %vm770, %v1197, 0
        %v1202 = vshrl.u32 %v1198, 16
        %v1204 = vrot.slane %v1202, 4
        %v1205 = vshll.u32 %v1198, 16
        %v1207 = vrot.slane %v1205, 5
        %v1208 = vor.u32 %v1204, %v1207
        %v1209 = vrot.slane %v1208, 4
        %v1211 = vshll.u32 %v1199, 16
        %v1213 = vrot.slane %v1211, 5
        %v1214 = vsel %vm631, %v1209, %v1213
        %v1215 = vshrl.u32 %v1199, 16
        %v1217 = vrot.slane %v1215, 4
        %v1218 = vor.u32 %v1217, %v1213
        %v1219 = vrot.slane %v1218, 4
        %v1221 = vshll.u32 %v1200, 16
        %v1223 = vrot.slane %v1221, 5
        %v1224 = vsel %vm631, %v1219, %v1223
        %1225 = vrot.lane.b32.xlu0 %v1214, 32
        %v1226 = vpop.permute.xlu0 %1225
        %1227 = vrot.lane.b32.xlu0 %v1224, 32
        %v1228 = vpop.permute.xlu0 %1227
        %1231 = vst.msk [vmem:[#allocation4 + $0xc] sm:$0xf] %vm706, %v1226
        %1232 = vst.msk [vmem:[#allocation4 + $0x28] sm:$0xf] %vm706, %v1228
        %v1233 = vld [vmem:[#allocation2 + $0x8] sm:$0xe]
        %v1234 = vld [vmem:[#allocation2 + $0xc] sm:$0xf]
        %v1235 = vld [vmem:[#allocation2 + $0x10] sm:$0x1]
        %v1236 = vsel %vm829, %v1233, 0
        %v1237 = vsel %vm836, %v1234, 0
        %v1238 = vsel %vm843, %v1235, 0
        %v1242 = vrot.slane %v1236, 5
        %v1243 = vrot.slane %v1242, 4
        %v1244 = vrot.slane %v1237, 5
        %v1245 = vsel %vm570, %v1243, %v1244
        %v1246 = vrot.slane %v1244, 4
        %v1247 = vrot.slane %v1238, 5
        %v1248 = vsel %vm570, %v1246, %v1247
        %1249 = vrot.lane.b32.xlu0 %v1245, 64
        %v1250 = vpop.permute.xlu0 %1249
        %1251 = vrot.lane.b32.xlu0 %v1248, 64
        %v1252 = vpop.permute.xlu0 %1251
        %1255 = vst.msk [vmem:[#allocation4 + $0xc] sm:$0xf] %vm719, %v1250
        %1256 = vst.msk [vmem:[#allocation4 + $0x28] sm:$0xf] %vm719, %v1252
        %v1257 = vld [vmem:[#allocation2 + $0x8] sm:$0xe]
        %v1258 = vld [vmem:[#allocation2 + $0xc] sm:$0xf]
        %v1259 = vld [vmem:[#allocation2 + $0x10] sm:$0x1]
        %v1260 = vsel %vm875, %v1257, 0
        %v1261 = vsel %vm882, %v1258, 0
        %v1262 = vsel %vm889, %v1259, 0
        %v1266 = vrot.slane %v1260, 5
        %v1267 = vrot.slane %v1266, 4
        %v1268 = vrot.slane %v1261, 5
        %v1269 = vsel %vm570, %v1267, %v1268
        %v1270 = vrot.slane %v1268, 4
        %v1271 = vrot.slane %v1262, 5
        %v1272 = vsel %vm570, %v1270, %v1271
        %1273 = vrot.lane.b32.xlu0 %v1269, 96
        %v1274 = vpop.permute.xlu0 %1273
        %1275 = vrot.lane.b32.xlu0 %v1272, 96
        %v1276 = vpop.permute.xlu0 %1275
        %1279 = vst.msk [vmem:[#allocation4 + $0xc] sm:$0xf] %vm804, %v1274
        %1280 = vst.msk [vmem:[#allocation4 + $0x28] sm:$0xf] %vm804, %v1276
        %v1281 = vld [vmem:[#allocation2 + $0x8] sm:$0xe]
        %v1282 = vld [vmem:[#allocation2 + $0xc] sm:$0xf]
        %v1283 = vld [vmem:[#allocation2 + $0x10] sm:$0x3]
        %v1284 = vsel %vm932, %v1281, 0
        %v1285 = vsel %vm939, %v1282, 0
        %v1286 = vsel %vm946, %v1283, 0
        %v1288 = vshrl.u32 %v1284, 16
        %v1290 = vrot.slane %v1288, 5
        %v1291 = vshll.u32 %v1284, 16
        %v1293 = vrot.slane %v1291, 6
        %v1294 = vor.u32 %v1290, %v1293
        %v1295 = vrot.slane %v1294, 4
        %v1297 = vshrl.u32 %v1285, 16
        %v1299 = vrot.slane %v1297, 5
        %v1300 = vshll.u32 %v1285, 16
        %v1302 = vrot.slane %v1300, 6
        %v1303 = vor.u32 %v1299, %v1302
        %v1304 = vsel %vm952, %v1295, %v1303
        %v1305 = vrot.slane %v1303, 4
        %v1307 = vshrl.u32 %v1286, 16
        %v1309 = vrot.slane %v1307, 5
        %v1310 = vshll.u32 %v1286, 16
        %v1312 = vrot.slane %v1310, 6
        %v1313 = vor.u32 %v1309, %v1312
        %v1314 = vsel %vm952, %v1305, %v1313
        %1317 = vst.msk [vmem:[#allocation4 + $0x10] sm:$0xf] %vm615, %v1304
        %1318 = vst.msk [vmem:[#allocation4 + $0x2c] sm:$0xf] %vm615, %v1314
        %v1319 = vld [vmem:[#allocation2 + $0x8] sm:$0xc]
        %v1320 = vld [vmem:[#allocation2 + $0xc] sm:$0xf]
        %v1321 = vld [vmem:[#allocation2 + $0x10] sm:$0x3]
        %v1325 = vrot.slane %v1319, 6
        %v1326 = vrot.slane %v1325, 4
        %v1327 = vrot.slane %v1320, 6
        %v1328 = vsel %vm997, %v1326, %v1327
        %v1329 = vrot.slane %v1327, 4
        %v1330 = vrot.slane %v1321, 6
        %v1331 = vsel %vm997, %v1329, %v1330
        %1332 = vrot.lane.b32.xlu0 %v1328, 32
        %v1333 = vpop.permute.xlu0 %1332
        %1334 = vrot.lane.b32.xlu0 %v1331, 32
        %v1335 = vpop.permute.xlu0 %1334
        %1338 = vst.msk [vmem:[#allocation4 + $0x10] sm:$0xf] %vm706, %v1333
        %1339 = vst.msk [vmem:[#allocation4 + $0x2c] sm:$0xf] %vm706, %v1335
        %v1340 = vld [vmem:[#allocation2 + $0x8] sm:$0xc]
        %v1341 = vld [vmem:[#allocation2 + $0xc] sm:$0xf]
        %v1342 = vld [vmem:[#allocation2 + $0x10] sm:$0x7]
        %v1343 = vsel %vm1031, %v1340, 0
        %v1344 = vsel %vm1038, %v1341, 0
        %v1345 = vsel %vm1045, %v1342, 0
        %v1347 = vshrl.u32 %v1343, 16
        %v1349 = vrot.slane %v1347, 6
        %v1350 = vshll.u32 %v1343, 16
        %v1352 = vrot.slane %v1350, 7
        %v1353 = vor.u32 %v1349, %v1352
        %v1354 = vrot.slane %v1353, 4
        %v1356 = vshrl.u32 %v1344, 16
        %v1358 = vrot.slane %v1356, 6
        %v1359 = vshll.u32 %v1344, 16
        %v1361 = vrot.slane %v1359, 7
        %v1362 = vor.u32 %v1358, %v1361
        %v1363 = vsel %vm916, %v1354, %v1362
        %v1364 = vrot.slane %v1362, 4
        %v1366 = vshrl.u32 %v1345, 16
        %v1368 = vrot.slane %v1366, 6
        %v1369 = vshll.u32 %v1345, 16
        %v1371 = vrot.slane %v1369, 7
        %v1372 = vor.u32 %v1368, %v1371
        %v1373 = vsel %vm916, %v1364, %v1372
        %1374 = vrot.lane.b32.xlu0 %v1363, 64
        %v1375 = vpop.permute.xlu0 %1374
        %1376 = vrot.lane.b32.xlu0 %v1373, 64
        %v1377 = vpop.permute.xlu0 %1376
        %1380 = vst.msk [vmem:[#allocation4 + $0x10] sm:$0xf] %vm719, %v1375
        %1381 = vst.msk [vmem:[#allocation4 + $0x2c] sm:$0xf] %vm719, %v1377
        %v1382 = vld [vmem:[#allocation2 + $0x8] sm:$0x8]
        %v1383 = vld [vmem:[#allocation2 + $0xc] sm:$0xf]
        %v1384 = vld [vmem:[#allocation2 + $0x10] sm:$0x7]
        %v1385 = vsel %vm1095, %v1382, 0
        %v1386 = vsel %vm1102, %v1383, 0
        %v1387 = vsel %vm1109, %v1384, 0
        %v1391 = vrot.slane %v1385, 7
        %v1392 = vrot.slane %v1391, 4
        %v1393 = vrot.slane %v1386, 7
        %v1394 = vsel %vm605, %v1392, %v1393
        %v1395 = vrot.slane %v1393, 4
        %v1396 = vrot.slane %v1387, 7
        %v1397 = vsel %vm605, %v1395, %v1396
        %1398 = vrot.lane.b32.xlu0 %v1394, 96
        %v1399 = vpop.permute.xlu0 %1398
        %1400 = vrot.lane.b32.xlu0 %v1397, 96
        %v1401 = vpop.permute.xlu0 %1400
        %1404 = vst.msk [vmem:[#allocation4 + $0x10] sm:$0xf] %vm804, %v1399
        %1405 = vst.msk [vmem:[#allocation4 + $0x2c] sm:$0xf] %vm804, %v1401
        %v1406 = vld [vmem:[#allocation2 + $0x8] sm:$0x8]
        %v1407 = vld [vmem:[#allocation2 + $0xc] sm:$0xf]
        %v1408 = vld [vmem:[#allocation2 + $0x10] sm:$0x7]
        %v1409 = vsel %vm582, %v1406, 0
        %v1410 = vsel %vm589, %v1407, 0
        %v1411 = vsel %vm596, %v1408, 0
        %v1415 = vrot.slane %v1409, 7
        %v1416 = vrot.slane %v1415, 4
        %v1417 = vrot.slane %v1410, 7
        %v1418 = vsel %vm605, %v1416, %v1417
        %v1419 = vrot.slane %v1417, 4
        %v1420 = vrot.slane %v1411, 7
        %v1421 = vsel %vm605, %v1419, %v1420
        %1424 = vst.msk [vmem:[#allocation4 + $0x14] sm:$0xf] %vm615, %v1418
        %1425 = vst.msk [vmem:[#allocation4 + $0x30] sm:$0xf] %vm615, %v1421
        %v1426 = vld [vmem:[#allocation2 + $0x8] sm:$0x8]
        %v1427 = vld [vmem:[#allocation2 + $0xc] sm:$0xf]
        %v1428 = vld [vmem:[#allocation2 + $0x10] sm:$0xf]
        %v1429 = vsel %vm657, %v1426, 0
        %v1430 = vsel %vm664, %v1427, 0
        %v1431 = vsel %vm671, %v1428, 0
        %v1433 = vshrl.u32 %v1429, 16
        %v1435 = vrot.slane %v1433, 7
        %v1436 = vrot.slane %v1435, 4
        %v1438 = vshrl.u32 %v1430, 16
        %v1440 = vrot.slane %v1438, 7
        %v1441 = vshll.u32 %v1430, 16
        %v1443 = vor.u32 %v1440, %v1441
        %v1444 = vsel %vm677, %v1436, %v1443
        %v1445 = vrot.slane %v1440, 4
        %v1447 = vshrl.u32 %v1431, 16
        %v1449 = vrot.slane %v1447, 7
        %v1450 = vshll.u32 %v1431, 16
        %v1452 = vor.u32 %v1449, %v1450
        %v1453 = vsel %vm677, %v1445, %v1452
        %1454 = vrot.lane.b32.xlu0 %v1444, 32
        %v1455 = vpop.permute.xlu0 %1454
        %1456 = vrot.lane.b32.xlu0 %v1453, 32
        %v1457 = vpop.permute.xlu0 %1456
        %1460 = vst.msk [vmem:[#allocation4 + $0x14] sm:$0xf] %vm706, %v1455
        %1461 = vst.msk [vmem:[#allocation4 + $0x30] sm:$0xf] %vm706, %v1457
        %v1462 = vld [vmem:[#allocation2 + $0xc] sm:$0xf]
        %v1463 = vld [vmem:[#allocation2 + $0x10] sm:$0xf]
        %1466 = vrot.lane.b32.xlu0 %v1462, 64
        %v1467 = vpop.permute.xlu0 %1466
        %1468 = vrot.lane.b32.xlu0 %v1463, 64
        %v1469 = vpop.permute.xlu0 %1468
        %1472 = vst.msk [vmem:[#allocation4 + $0x14] sm:$0xf] %vm719, %v1467
        %1473 = vst.msk [vmem:[#allocation4 + $0x30] sm:$0xf] %vm719, %v1469
        %v1474 = vld [vmem:[#allocation2 + $0xc] sm:$0xf]
        %v1475 = vld [vmem:[#allocation2 + $0x10] sm:$0xf]
        %v1476 = vld [vmem:[#allocation2 + $0x14] sm:$0x1]
        %v1477 = vsel %vm756, %v1474, 0
        %v1478 = vsel %vm763, %v1475, 0
        %v1479 = vsel %vm770, %v1476, 0
        %v1481 = vshrl.u32 %v1477, 16
        %v1483 = vrot.slane %v1481, 4
        %v1484 = vshll.u32 %v1477, 16
        %v1486 = vrot.slane %v1484, 5
        %v1487 = vor.u32 %v1483, %v1486
        %v1488 = vrot.slane %v1487, 4
        %v1490 = vshll.u32 %v1478, 16
        %v1492 = vrot.slane %v1490, 5
        %v1493 = vsel %vm631, %v1488, %v1492
        %v1494 = vshrl.u32 %v1478, 16
        %v1496 = vrot.slane %v1494, 4
        %v1497 = vor.u32 %v1496, %v1492
        %v1498 = vrot.slane %v1497, 4
        %v1500 = vshll.u32 %v1479, 16
        %v1502 = vrot.slane %v1500, 5
        %v1503 = vsel %vm631, %v1498, %v1502
        %1504 = vrot.lane.b32.xlu0 %v1493, 96
        %v1505 = vpop.permute.xlu0 %1504
        %1506 = vrot.lane.b32.xlu0 %v1503, 96
        %v1507 = vpop.permute.xlu0 %1506
        %1510 = vst.msk [vmem:[#allocation4 + $0x14] sm:$0xf] %vm804, %v1505
        %1511 = vst.msk [vmem:[#allocation4 + $0x30] sm:$0xf] %vm804, %v1507
        %v1512 = vld [vmem:[#allocation2 + $0xc] sm:$0xe]
        %v1513 = vld [vmem:[#allocation2 + $0x10] sm:$0xf]
        %v1514 = vld [vmem:[#allocation2 + $0x14] sm:$0x1]
        %v1515 = vsel %vm829, %v1512, 0
        %v1516 = vsel %vm836, %v1513, 0
        %v1517 = vsel %vm843, %v1514, 0
        %v1521 = vrot.slane %v1515, 5
        %v1522 = vrot.slane %v1521, 4
        %v1523 = vrot.slane %v1516, 5
        %v1524 = vsel %vm570, %v1522, %v1523
        %v1525 = vrot.slane %v1523, 4
        %v1526 = vrot.slane %v1517, 5
        %v1527 = vsel %vm570, %v1525, %v1526
        %1530 = vst.msk [vmem:[#allocation4 + $0x18] sm:$0xf] %vm615, %v1524
        %1531 = vst.msk [vmem:[#allocation4 + $0x34] sm:$0xf] %vm615, %v1527
        %v1532 = vld [vmem:[#allocation4] sm:$0xff]
        %v1533 = vld [vmem:[#allocation4 + $0x8] sm:$0xff]
        %v1534 = vld [vmem:[#allocation4 + $0x10] sm:$0xff]
        %v1535 = vld [vmem:[#allocation4 + $0x18] sm:$0xf]
        %v1536 = vld [vmem:[#allocation4 + $0x1c] sm:$0xff]
        %v1537 = vld [vmem:[#allocation4 + $0x24] sm:$0xff]
        %v1538 = vld [vmem:[#allocation4 + $0x2c] sm:$0xff]
        %v1539 = vld [vmem:[#allocation4 + $0x34] sm:$0xf]
        %v1540 = vld [vmem:[%s1] sm:$0xf]
        %v1541 = vld [vmem:[%s1 + $0x4] sm:$0xf]
        %v1542 = vld [vmem:[%s1 + $0x8] sm:$0xf]
        %v1543 = vld [vmem:[%s1 + $0xc] sm:$0xf]
        %v1544 = vld [vmem:[%s1 + $0x10] sm:$0xf]
        %v1545 = vld [vmem:[%s1 + $0x14] sm:$0xf]
        %v1546 = vld [vmem:[%s1 + $0x18] sm:$0xf]
        %v1547 = vld [vmem:[%s1 + $0x1c] sm:$0xf]
        %v1548 = vld [vmem:[%s1 + $0x20] sm:$0xf]
        %v1549 = vld [vmem:[%s1 + $0x24] sm:$0xf]
        %v1550 = vld [vmem:[%s1 + $0x28] sm:$0xf]
        %v1551 = vld [vmem:[%s1 + $0x2c] sm:$0xf]
        %v1552 = vld [vmem:[%s1 + $0x30] sm:$0xf]
        %v1553 = vld [vmem:[%s1 + $0x34] sm:$0xf]
        %v1554 = vld [vmem:[%s1 + $0x38] sm:$0xf]
        %v1555 = vld [vmem:[%s1 + $0x3c] sm:$0xf]
        %v1556 = vld [vmem:[%s1 + $0x40] sm:$0xf]
        %v1557 = vld [vmem:[%s1 + $0x44] sm:$0xf]
        %v1558 = vld [vmem:[%s1 + $0x48] sm:$0xf]
        %v1559 = vld [vmem:[%s1 + $0x4c] sm:$0xf]
        %v1560 = vld [vmem:[%s1 + $0x50] sm:$0xf]
        %v1561 = vld [vmem:[%s1 + $0x54] sm:$0xf]
        %v1562 = vld [vmem:[%s1 + $0x58] sm:$0xf]
        %v1563 = vld [vmem:[%s1 + $0x5c] sm:$0xf]
        %v1564 = vld [vmem:[%s1 + $0x60] sm:$0xf]
        %v1565 = vld [vmem:[%s1 + $0x64] sm:$0xf]
        %v1566 = vld [vmem:[%s1 + $0x68] sm:$0xf]
        %v1567 = vld [vmem:[%s1 + $0x6c] sm:$0xf]
        %v1568 = vld [vmem:[%s1 + $0x70] sm:$0xf]
        %v1569 = vld [vmem:[%s1 + $0x74] sm:$0xf]
        %v1570 = vld [vmem:[%s1 + $0x78] sm:$0xf]
        %v1571 = vld [vmem:[%s1 + $0x7c] sm:$0xf]
        %v1572 = vld [vmem:[%s1 + $0x80] sm:$0xf]
        %v1573 = vld [vmem:[%s1 + $0x84] sm:$0xf]
        %v1574 = vld [vmem:[%s1 + $0x88] sm:$0xf]
        %v1575 = vld [vmem:[%s1 + $0x8c] sm:$0xf]
        %v1576 = vld [vmem:[%s1 + $0x90] sm:$0xf]
        %v1577 = vld [vmem:[%s1 + $0x94] sm:$0xf]
        %v1578 = vld [vmem:[%s1 + $0x98] sm:$0xf]
        %v1579 = vld [vmem:[%s1 + $0x9c] sm:$0xf]
        %v1580 = vld [vmem:[%s1 + $0xa0] sm:$0xf]
        %v1581 = vld [vmem:[%s1 + $0xa4] sm:$0xf]
        %v1582 = vld [vmem:[%s1 + $0xa8] sm:$0xf]
        %v1583 = vld [vmem:[%s1 + $0xac] sm:$0xf]
        %v1584 = vld [vmem:[%s1 + $0xb0] sm:$0xf]
        %v1585 = vld [vmem:[%s1 + $0xb4] sm:$0xf]
        %v1586 = vld [vmem:[%s1 + $0xb8] sm:$0xf]
        %v1587 = vld [vmem:[%s1 + $0xbc] sm:$0xf]
        %v1588 = vld [vmem:[%s1 + $0xc0] sm:$0xf]
        %v1589 = vld [vmem:[%s1 + $0xc4] sm:$0xf]
        %v1590 = vld [vmem:[%s1 + $0xc8] sm:$0xf]
        %v1591 = vld [vmem:[%s1 + $0xcc] sm:$0xf]
        %v1592 = vld [vmem:[%s1 + $0xd0] sm:$0xf]
        %v1593 = vld [vmem:[%s1 + $0xd4] sm:$0xf]
        %v1594 = vld [vmem:[%s1 + $0xd8] sm:$0xf]
        %v1595 = vld [vmem:[%s1 + $0xdc] sm:$0xf]
        %v1596 = vld [vmem:[%s1 + $0xe0] sm:$0xf]
        %v1597 = vld [vmem:[%s1 + $0xe4] sm:$0xf]
        %v1598 = vld [vmem:[%s1 + $0xe8] sm:$0xf]
        %v1599 = vld [vmem:[%s1 + $0xec] sm:$0xf]
        %v1600 = vld [vmem:[%s1 + $0xf0] sm:$0xf]
        %v1601 = vld [vmem:[%s1 + $0xf4] sm:$0xf]
        %v1602 = vld [vmem:[%s1 + $0xf8] sm:$0xf]
        %v1603 = vld [vmem:[%s1 + $0xfc] sm:$0xf]
        %v1604 = vld [vmem:[%s1 + $0x100] sm:$0xf]
        %v1605 = vld [vmem:[%s1 + $0x104] sm:$0xf]
        %v1606 = vld [vmem:[%s1 + $0x108] sm:$0xf]
        %v1607 = vld [vmem:[%s1 + $0x10c] sm:$0xf]
        %v1608 = vld [vmem:[%s1 + $0x110] sm:$0xf]
        %v1609 = vld [vmem:[%s1 + $0x114] sm:$0xf]
        %v1610 = vld [vmem:[%s1 + $0x118] sm:$0xf]
        %v1611 = vld [vmem:[%s1 + $0x11c] sm:$0xf]
        %v1612 = vld [vmem:[%s1 + $0x120] sm:$0xf]
        %v1613 = vld [vmem:[%s1 + $0x124] sm:$0xf]
        %v1614 = vld [vmem:[%s1 + $0x128] sm:$0xf]
        %v1615 = vld [vmem:[%s1 + $0x12c] sm:$0xf]
        %v1616 = vld [vmem:[%s1 + $0x130] sm:$0xf]
        %v1617 = vld [vmem:[%s1 + $0x134] sm:$0xf]
        %v1618 = vld [vmem:[%s1 + $0x138] sm:$0xf]
        %v1619 = vld [vmem:[%s1 + $0x13c] sm:$0xf]
        %v1620 = vld [vmem:[%s1 + $0x140] sm:$0xf]
        %v1621 = vld [vmem:[%s1 + $0x144] sm:$0xf]
        %v1622 = vld [vmem:[%s1 + $0x148] sm:$0xf]
        %v1623 = vld [vmem:[%s1 + $0x14c] sm:$0xf]
        %v1624 = vld [vmem:[%s1 + $0x150] sm:$0xf]
        %v1625 = vld [vmem:[%s1 + $0x154] sm:$0xf]
        %v1626 = vld [vmem:[%s1 + $0x158] sm:$0xf]
        %v1627 = vld [vmem:[%s1 + $0x15c] sm:$0xf]
        %v1628 = vld [vmem:[%s1 + $0x160] sm:$0xf]
        %v1629 = vld [vmem:[%s1 + $0x164] sm:$0xf]
        %v1630 = vld [vmem:[%s1 + $0x168] sm:$0xf]
        %v1631 = vld [vmem:[%s1 + $0x16c] sm:$0xf]
        %v1632 = vld [vmem:[%s1 + $0x170] sm:$0xf]
        %v1633 = vld [vmem:[%s1 + $0x174] sm:$0xf]
        %v1634 = vld [vmem:[%s1 + $0x178] sm:$0xf]
        %v1635 = vld [vmem:[%s1 + $0x17c] sm:$0xf]
        %v1636 = vld [vmem:[%s1 + $0x180] sm:$0xf]
        %v1637 = vld [vmem:[%s1 + $0x184] sm:$0xf]
        %v1638 = vld [vmem:[%s1 + $0x188] sm:$0xf]
        %v1639 = vld [vmem:[%s1 + $0x18c] sm:$0xf]
        %v1640 = vld [vmem:[%s2] sm:$0x1]
        %v1642 = vperm.slane %v1640, 0
        %v1652 = vunpack.c.l.b16 %v1532
        %v1653 = vunpack.c.h.b16 %v1532
        %v1654 = vunpack.c.l.b16 %v1533
        %v1655 = vunpack.c.h.b16 %v1533
        %v1656 = vunpack.c.l.b16 %v1534
        %v1657 = vunpack.c.h.b16 %v1534
        %v1658 = vunpack.c.l.b16 %v1535
        %v1659 = vunpack.c.l.b16 %v1536
        %v1660 = vunpack.c.h.b16 %v1536
        %v1661 = vunpack.c.l.b16 %v1537
        %v1662 = vunpack.c.h.b16 %v1537
        %v1663 = vunpack.c.l.b16 %v1538
        %v1664 = vunpack.c.h.b16 %v1538
        %v1665 = vunpack.c.l.b16 %v1539
        %v1666 = vpack.c.b16 %v1659, %v1652
        %v1667 = vpack.c.b16 %v1660, %v1653
        %v1668 = vpack.c.b16 %v1661, %v1654
        %v1669 = vpack.c.b16 %v1662, %v1655
        %v1670 = vpack.c.b16 %v1663, %v1656
        %v1671 = vpack.c.b16 %v1664, %v1657
        %v1672 = vpack.c.b16 %v1665, %v1658
        %v1779 = vunpack.c.l.b16 %v1540
        %v1780 = vunpack.c.l.b16 %v1541
        %v1781 = vunpack.c.l.b16 %v1542
        %v1782 = vunpack.c.l.b16 %v1543
        %v1783 = vunpack.c.l.b16 %v1544
        %v1784 = vunpack.c.l.b16 %v1545
        %v1785 = vunpack.c.l.b16 %v1546
        %v1786 = vunpack.c.l.b16 %v1547
        %v1787 = vunpack.c.l.b16 %v1548
        %v1788 = vunpack.c.l.b16 %v1549
        %v1789 = vunpack.c.l.b16 %v1550
        %v1790 = vunpack.c.l.b16 %v1551
        %v1791 = vunpack.c.l.b16 %v1552
        %v1792 = vunpack.c.l.b16 %v1553
        %v1793 = vunpack.c.l.b16 %v1554
        %v1794 = vunpack.c.l.b16 %v1555
        %v1795 = vunpack.c.l.b16 %v1556
        %v1796 = vunpack.c.l.b16 %v1557
        %v1797 = vunpack.c.l.b16 %v1558
        %v1798 = vunpack.c.l.b16 %v1559
        %v1799 = vunpack.c.l.b16 %v1560
        %v1800 = vunpack.c.l.b16 %v1561
        %v1801 = vunpack.c.l.b16 %v1562
        %v1802 = vunpack.c.l.b16 %v1563
        %v1803 = vunpack.c.l.b16 %v1564
        %v1804 = vunpack.c.l.b16 %v1565
        %v1805 = vunpack.c.l.b16 %v1566
        %v1806 = vunpack.c.l.b16 %v1567
        %v1807 = vunpack.c.l.b16 %v1568
        %v1808 = vunpack.c.l.b16 %v1569
        %v1809 = vunpack.c.l.b16 %v1570
        %v1810 = vunpack.c.l.b16 %v1571
        %v1811 = vunpack.c.l.b16 %v1572
        %v1812 = vunpack.c.l.b16 %v1573
        %v1813 = vunpack.c.l.b16 %v1574
        %v1814 = vunpack.c.l.b16 %v1575
        %v1815 = vunpack.c.l.b16 %v1576
        %v1816 = vunpack.c.l.b16 %v1577
        %v1817 = vunpack.c.l.b16 %v1578
        %v1818 = vunpack.c.l.b16 %v1579
        %v1819 = vunpack.c.l.b16 %v1580
        %v1820 = vunpack.c.l.b16 %v1581
        %v1821 = vunpack.c.l.b16 %v1582
        %v1822 = vunpack.c.l.b16 %v1583
        %v1823 = vunpack.c.l.b16 %v1584
        %v1824 = vunpack.c.l.b16 %v1585
        %v1825 = vunpack.c.l.b16 %v1586
        %v1826 = vunpack.c.l.b16 %v1587
        %v1827 = vunpack.c.l.b16 %v1588
        %v1828 = vunpack.c.l.b16 %v1589
        %v1829 = vunpack.c.l.b16 %v1590
        %v1830 = vunpack.c.l.b16 %v1591
        %v1831 = vunpack.c.l.b16 %v1592
        %v1832 = vunpack.c.l.b16 %v1593
        %v1833 = vunpack.c.l.b16 %v1594
        %v1834 = vunpack.c.l.b16 %v1595
        %v1835 = vunpack.c.l.b16 %v1596
        %v1836 = vunpack.c.l.b16 %v1597
        %v1837 = vunpack.c.l.b16 %v1598
        %v1838 = vunpack.c.l.b16 %v1599
        %v1839 = vunpack.c.l.b16 %v1600
        %v1840 = vunpack.c.l.b16 %v1601
        %v1841 = vunpack.c.l.b16 %v1602
        %v1842 = vunpack.c.l.b16 %v1603
        %v1843 = vunpack.c.l.b16 %v1604
        %v1844 = vunpack.c.l.b16 %v1605
        %v1845 = vunpack.c.l.b16 %v1606
        %v1846 = vunpack.c.l.b16 %v1607
        %v1847 = vunpack.c.l.b16 %v1608
        %v1848 = vunpack.c.l.b16 %v1609
        %v1849 = vunpack.c.l.b16 %v1610
        %v1850 = vunpack.c.l.b16 %v1611
        %v1851 = vunpack.c.l.b16 %v1612
        %v1852 = vunpack.c.l.b16 %v1613
        %v1853 = vunpack.c.l.b16 %v1614
        %v1854 = vunpack.c.l.b16 %v1615
        %v1855 = vunpack.c.l.b16 %v1616
        %v1856 = vunpack.c.l.b16 %v1617
        %v1857 = vunpack.c.l.b16 %v1618
        %v1858 = vunpack.c.l.b16 %v1619
        %v1859 = vunpack.c.l.b16 %v1620
        %v1860 = vunpack.c.l.b16 %v1621
        %v1861 = vunpack.c.l.b16 %v1622
        %v1862 = vunpack.c.l.b16 %v1623
        %v1863 = vunpack.c.l.b16 %v1624
        %v1864 = vunpack.c.l.b16 %v1625
        %v1865 = vunpack.c.l.b16 %v1626
        %v1866 = vunpack.c.l.b16 %v1627
        %v1867 = vunpack.c.l.b16 %v1628
        %v1868 = vunpack.c.l.b16 %v1629
        %v1869 = vunpack.c.l.b16 %v1630
        %v1870 = vunpack.c.l.b16 %v1631
        %v1871 = vunpack.c.l.b16 %v1632
        %v1872 = vunpack.c.l.b16 %v1633
        %v1873 = vunpack.c.l.b16 %v1634
        %v1874 = vunpack.c.l.b16 %v1635
        %v1875 = vunpack.c.l.b16 %v1636
        %v1876 = vunpack.c.l.b16 %v1637
        %v1877 = vunpack.c.l.b16 %v1638
        %v1878 = vunpack.c.l.b16 %v1639
        %v1879 = vpack.c.b16 %v1780, %v1779
        %v1880 = vpack.c.b16 %v1782, %v1781
        %v1881 = vpack.c.b16 %v1784, %v1783
        %v1882 = vpack.c.b16 %v1786, %v1785
        %v1883 = vpack.c.b16 %v1788, %v1787
        %v1884 = vpack.c.b16 %v1790, %v1789
        %v1885 = vpack.c.b16 %v1792, %v1791
        %v1886 = vpack.c.b16 %v1794, %v1793
        %v1887 = vpack.c.b16 %v1796, %v1795
        %v1888 = vpack.c.b16 %v1798, %v1797
        %v1889 = vpack.c.b16 %v1800, %v1799
        %v1890 = vpack.c.b16 %v1802, %v1801
        %v1891 = vpack.c.b16 %v1804, %v1803
        %v1892 = vpack.c.b16 %v1806, %v1805
        %v1893 = vpack.c.b16 %v1808, %v1807
        %v1894 = vpack.c.b16 %v1810, %v1809
        %v1895 = vpack.c.b16 %v1812, %v1811
        %v1896 = vpack.c.b16 %v1814, %v1813
        %v1897 = vpack.c.b16 %v1816, %v1815
        %v1898 = vpack.c.b16 %v1818, %v1817
        %v1899 = vpack.c.b16 %v1820, %v1819
        %v1900 = vpack.c.b16 %v1822, %v1821
        %v1901 = vpack.c.b16 %v1824, %v1823
        %v1902 = vpack.c.b16 %v1826, %v1825
        %v1903 = vpack.c.b16 %v1828, %v1827
        %v1904 = vpack.c.b16 %v1830, %v1829
        %v1905 = vpack.c.b16 %v1832, %v1831
        %v1906 = vpack.c.b16 %v1834, %v1833
        %v1907 = vpack.c.b16 %v1836, %v1835
        %v1908 = vpack.c.b16 %v1838, %v1837
        %v1909 = vpack.c.b16 %v1840, %v1839
        %v1910 = vpack.c.b16 %v1842, %v1841
        %v1911 = vpack.c.b16 %v1844, %v1843
        %v1912 = vpack.c.b16 %v1846, %v1845
        %v1913 = vpack.c.b16 %v1848, %v1847
        %v1914 = vpack.c.b16 %v1850, %v1849
        %v1915 = vpack.c.b16 %v1852, %v1851
        %v1916 = vpack.c.b16 %v1854, %v1853
        %v1917 = vpack.c.b16 %v1856, %v1855
        %v1918 = vpack.c.b16 %v1858, %v1857
        %v1919 = vpack.c.b16 %v1860, %v1859
        %v1920 = vpack.c.b16 %v1862, %v1861
        %v1921 = vpack.c.b16 %v1864, %v1863
        %v1922 = vpack.c.b16 %v1866, %v1865
        %v1923 = vpack.c.b16 %v1868, %v1867
        %v1924 = vpack.c.b16 %v1870, %v1869
        %v1925 = vpack.c.b16 %v1872, %v1871
        %v1926 = vpack.c.b16 %v1874, %v1873
        %v1927 = vpack.c.b16 %v1876, %v1875
        %v1928 = vpack.c.b16 %v1878, %v1877
        %vm1979 = vcmask 261120
        %v1981 = vsel %vm1979, %v1672, 0
        %1983 = vmatpush.bf16.msra.mxu0 %v1886
        %1984 = vmatpush.bf16.msra.mxu0 %v1885
        %1985 = vmatpush.bf16.msra.mxu0 %v1884
        %1986 = vmatpush.bf16.msra.mxu0 %v1883
        %1987 = vmatpush.bf16.msra.mxu0 %v1882
        %1988 = vmatpush.bf16.msra.mxu0 %v1881
        %1989 = vmatpush.bf16.msra.mxu0 %v1880
        %1990 = vmatpush.bf16.msra.mxu0 %v1879
        %1991 = vmatmul.bf16.gmra.mxu0 %v1666
        %v1992 = vpop.f32.mrf.mxu0
        %v1993 = vadd.f32 %v1642, %v1992
        %v1994 = vpop.f32.mrf.mxu0
        %v1995 = vadd.f32 %v1642, %v1994
        %1996 = vdwg.mxu0
        %1997 = vmatpush.bf16.msra.mxu0 %v1894
        %1998 = vmatpush.bf16.msra.mxu0 %v1893
        %1999 = vmatpush.bf16.msra.mxu0 %v1892
        %2000 = vmatpush.bf16.msra.mxu0 %v1891
        %2001 = vmatpush.bf16.msra.mxu0 %v1890
        %2002 = vmatpush.bf16.msra.mxu0 %v1889
        %2003 = vmatpush.bf16.msra.mxu0 %v1888
        %2004 = vmatpush.bf16.msra.mxu0 %v1887
        %2005 = vmatmul.bf16.gmra.mxu0 %v1667
        %v2006 = vpop.f32.mrf.mxu0
        %v2007 = vadd.f32 %v1993, %v2006
        %v2008 = vpop.f32.mrf.mxu0
        %v2009 = vadd.f32 %v1995, %v2008
        %2010 = vdwg.mxu0
        %2011 = vmatpush.bf16.msra.mxu0 %v1902
        %2012 = vmatpush.bf16.msra.mxu0 %v1901
        %2013 = vmatpush.bf16.msra.mxu0 %v1900
        %2014 = vmatpush.bf16.msra.mxu0 %v1899
        %2015 = vmatpush.bf16.msra.mxu0 %v1898
        %2016 = vmatpush.bf16.msra.mxu0 %v1897
        %2017 = vmatpush.bf16.msra.mxu0 %v1896
        %2018 = vmatpush.bf16.msra.mxu0 %v1895
        %2019 = vmatmul.bf16.gmra.mxu0 %v1668
        %v2020 = vpop.f32.mrf.mxu0
        %v2021 = vadd.f32 %v2007, %v2020
        %v2022 = vpop.f32.mrf.mxu0
        %v2023 = vadd.f32 %v2009, %v2022
        %2024 = vdwg.mxu0
        %2025 = vmatpush.bf16.msra.mxu0 %v1910
        %2026 = vmatpush.bf16.msra.mxu0 %v1909
        %2027 = vmatpush.bf16.msra.mxu0 %v1908
        %2028 = vmatpush.bf16.msra.mxu0 %v1907
        %2029 = vmatpush.bf16.msra.mxu0 %v1906
        %2030 = vmatpush.bf16.msra.mxu0 %v1905
        %2031 = vmatpush.bf16.msra.mxu0 %v1904
        %2032 = vmatpush.bf16.msra.mxu0 %v1903
        %2033 = vmatmul.bf16.gmra.mxu0 %v1669
        %v2034 = vpop.f32.mrf.mxu0
        %v2035 = vadd.f32 %v2021, %v2034
        %v2036 = vpop.f32.mrf.mxu0
        %v2037 = vadd.f32 %v2023, %v2036
        %2038 = vdwg.mxu0
        %2039 = vmatpush.bf16.msra.mxu0 %v1918
        %2040 = vmatpush.bf16.msra.mxu0 %v1917
        %2041 = vmatpush.bf16.msra.mxu0 %v1916
        %2042 = vmatpush.bf16.msra.mxu0 %v1915
        %2043 = vmatpush.bf16.msra.mxu0 %v1914
        %2044 = vmatpush.bf16.msra.mxu0 %v1913
        %2045 = vmatpush.bf16.msra.mxu0 %v1912
        %2046 = vmatpush.bf16.msra.mxu0 %v1911
        %2047 = vmatmul.bf16.gmra.mxu0 %v1670
        %v2048 = vpop.f32.mrf.mxu0
        %v2049 = vadd.f32 %v2035, %v2048
        %v2050 = vpop.f32.mrf.mxu0
        %v2051 = vadd.f32 %v2037, %v2050
        %2052 = vdwg.mxu0
        %2053 = vmatpush.bf16.msra.mxu0 %v1926
        %2054 = vmatpush.bf16.msra.mxu0 %v1925
        %2055 = vmatpush.bf16.msra.mxu0 %v1924
        %2056 = vmatpush.bf16.msra.mxu0 %v1923
        %2057 = vmatpush.bf16.msra.mxu0 %v1922
        %2058 = vmatpush.bf16.msra.mxu0 %v1921
        %2059 = vmatpush.bf16.msra.mxu0 %v1920
        %2060 = vmatpush.bf16.msra.mxu0 %v1919
        %2061 = vmatmul.bf16.gmra.mxu0 %v1671
        %v2062 = vpop.f32.mrf.mxu0
        %v2063 = vadd.f32 %v2049, %v2062
        %v2064 = vpop.f32.mrf.mxu0
        %v2065 = vadd.f32 %v2051, %v2064
        %2066 = vdwg.mxu0
        %2067 = vmatpush.bf16.msra.mxu0 0
        %2068 = vmatpush.bf16.msra.mxu0 0
        %2069 = vmatpush.bf16.msra.mxu0 0
        %2070 = vmatpush.bf16.msra.mxu0 0
        %2071 = vmatpush.bf16.msra.mxu0 0
        %2072 = vmatpush.bf16.msra.mxu0 0
        %2073 = vmatpush.bf16.msra.mxu0 %v1928
        %2074 = vmatpush.bf16.msra.mxu0 %v1927
        %2075 = vmatmul.bf16.gmra.mxu0 %v1981
        %v2076 = vpop.f32.mrf.mxu0
        %v2077 = vadd.f32 %v2063, %v2076
        %v2078 = vpop.f32.mrf.mxu0
        %v2079 = vadd.f32 %v2065, %v2078
        %2080 = vdwg.mxu0
        %v2081 = vmax.f32 %v2077, 0.0
        %v2082 = vmax.f32 %v2079, 0.0
        %vm2083 = vcmp.ne.f32.partialorder %v2077, %v2077
        %vm2084 = vcmp.ne.f32.partialorder %v2079, %v2079
        %v2085 = vadd.f32 %v2077, 0.0
        %v2086 = vadd.f32 %v2079, 0.0
        %v2087 = vand.u32 2147483647, %v2077
        %v2088 = vand.u32 2147483647, %v2079
        %v2089 = vsub.f32 0.0, %v2087
        %v2090 = vsub.f32 0.0, %v2088
        %v2091 = vmul.f32 %v2089, 1.442695
        %v2092 = vpow.pop %v2091
        %v2093 = vmul.f32 %v2090, 1.442695
        %v2094 = vpow.pop %v2093
        %v2095 = vadd.f32 %v2092, 1.0
        %v2096 = vlog2.pop %v2095
        %v2097 = vmul.f32 %v2096, 0.6931472
        %v2098 = vmul.f32 -0.5, %v2092
        %v2099 = vadd.f32 %v2098, 1.0
        %v2100 = vmul.f32 %v2099, %v2092
        %v2101 = vand.u32 2147483647, %v2092
        %vm2102 = vcmp.lt.f32.partialorder %v2101, 0.0004427343
        %v2103 = vsel %vm2102, %v2100, %v2097
        %v2104 = vadd.f32 %v2094, 1.0
        %v2105 = vlog2.pop %v2104
        %v2106 = vmul.f32 %v2105, 0.6931472
        %v2107 = vmul.f32 -0.5, %v2094
        %v2108 = vadd.f32 %v2107, 1.0
        %v2109 = vmul.f32 %v2108, %v2094
        %v2110 = vand.u32 2147483647, %v2094
        %vm2111 = vcmp.lt.f32.partialorder %v2110, 0.0004427343
        %v2112 = vsel %vm2111, %v2109, %v2106
        %v2113 = vadd.f32 %v2081, %v2103
        %v2114 = vadd.f32 %v2082, %v2112
        %v2115 = vsel %vm2083, %v2085, %v2113
        %v2116 = vsel %vm2084, %v2086, %v2114
        %v2117 = vadd.f32 %v2115, 1e-06
        %v2118 = vadd.f32 %v2116, 1e-06
        %v2119 = vld [vmem:[%s3] sm:$0xf]
        %v2120 = vld [vmem:[%s3 + $0x4] sm:$0xf]
        %v2121 = vld [vmem:[%s3 + $0x8] sm:$0xf]
        %v2122 = vld [vmem:[%s3 + $0xc] sm:$0xf]
        %v2123 = vld [vmem:[%s3 + $0x10] sm:$0xf]
        %v2124 = vld [vmem:[%s3 + $0x14] sm:$0xf]
        %v2125 = vld [vmem:[%s3 + $0x18] sm:$0xf]
        %v2126 = vld [vmem:[%s3 + $0x1c] sm:$0xf]
        %v2127 = vld [vmem:[%s3 + $0x20] sm:$0xf]
        %v2128 = vld [vmem:[%s3 + $0x24] sm:$0xf]
        %v2129 = vld [vmem:[%s3 + $0x28] sm:$0xf]
        %v2130 = vld [vmem:[%s3 + $0x2c] sm:$0xf]
        %v2131 = vld [vmem:[%s3 + $0x30] sm:$0xf]
        %v2132 = vld [vmem:[%s3 + $0x34] sm:$0xf]
        %v2133 = vld [vmem:[%s3 + $0x38] sm:$0xf]
        %v2134 = vld [vmem:[%s3 + $0x3c] sm:$0xf]
        %v2135 = vld [vmem:[%s3 + $0x40] sm:$0xf]
        %v2136 = vld [vmem:[%s3 + $0x44] sm:$0xf]
        %v2137 = vld [vmem:[%s3 + $0x48] sm:$0xf]
        %v2138 = vld [vmem:[%s3 + $0x4c] sm:$0xf]
        %v2139 = vld [vmem:[%s3 + $0x50] sm:$0xf]
        %v2140 = vld [vmem:[%s3 + $0x54] sm:$0xf]
        %v2141 = vld [vmem:[%s3 + $0x58] sm:$0xf]
        %v2142 = vld [vmem:[%s3 + $0x5c] sm:$0xf]
        %v2143 = vld [vmem:[%s3 + $0x60] sm:$0xf]
        %v2144 = vld [vmem:[%s3 + $0x64] sm:$0xf]
        %v2145 = vld [vmem:[%s3 + $0x68] sm:$0xf]
        %v2146 = vld [vmem:[%s3 + $0x6c] sm:$0xf]
        %v2147 = vld [vmem:[%s3 + $0x70] sm:$0xf]
        %v2148 = vld [vmem:[%s3 + $0x74] sm:$0xf]
        %v2149 = vld [vmem:[%s3 + $0x78] sm:$0xf]
        %v2150 = vld [vmem:[%s3 + $0x7c] sm:$0xf]
        %v2151 = vld [vmem:[%s3 + $0x80] sm:$0xf]
        %v2152 = vld [vmem:[%s3 + $0x84] sm:$0xf]
        %v2153 = vld [vmem:[%s3 + $0x88] sm:$0xf]
        %v2154 = vld [vmem:[%s3 + $0x8c] sm:$0xf]
        %v2155 = vld [vmem:[%s3 + $0x90] sm:$0xf]
        %v2156 = vld [vmem:[%s3 + $0x94] sm:$0xf]
        %v2157 = vld [vmem:[%s3 + $0x98] sm:$0xf]
        %v2158 = vld [vmem:[%s3 + $0x9c] sm:$0xf]
        %v2159 = vld [vmem:[%s3 + $0xa0] sm:$0xf]
        %v2160 = vld [vmem:[%s3 + $0xa4] sm:$0xf]
        %v2161 = vld [vmem:[%s3 + $0xa8] sm:$0xf]
        %v2162 = vld [vmem:[%s3 + $0xac] sm:$0xf]
        %v2163 = vld [vmem:[%s3 + $0xb0] sm:$0xf]
        %v2164 = vld [vmem:[%s3 + $0xb4] sm:$0xf]
        %v2165 = vld [vmem:[%s3 + $0xb8] sm:$0xf]
        %v2166 = vld [vmem:[%s3 + $0xbc] sm:$0xf]
        %v2167 = vld [vmem:[%s3 + $0xc0] sm:$0xf]
        %v2168 = vld [vmem:[%s3 + $0xc4] sm:$0xf]
        %v2169 = vld [vmem:[%s3 + $0xc8] sm:$0xf]
        %v2170 = vld [vmem:[%s3 + $0xcc] sm:$0xf]
        %v2171 = vld [vmem:[%s3 + $0xd0] sm:$0xf]
        %v2172 = vld [vmem:[%s3 + $0xd4] sm:$0xf]
        %v2173 = vld [vmem:[%s3 + $0xd8] sm:$0xf]
        %v2174 = vld [vmem:[%s3 + $0xdc] sm:$0xf]
        %v2175 = vld [vmem:[%s3 + $0xe0] sm:$0xf]
        %v2176 = vld [vmem:[%s3 + $0xe4] sm:$0xf]
        %v2177 = vld [vmem:[%s3 + $0xe8] sm:$0xf]
        %v2178 = vld [vmem:[%s3 + $0xec] sm:$0xf]
        %v2179 = vld [vmem:[%s3 + $0xf0] sm:$0xf]
        %v2180 = vld [vmem:[%s3 + $0xf4] sm:$0xf]
        %v2181 = vld [vmem:[%s3 + $0xf8] sm:$0xf]
        %v2182 = vld [vmem:[%s3 + $0xfc] sm:$0xf]
        %v2183 = vld [vmem:[%s3 + $0x100] sm:$0xf]
        %v2184 = vld [vmem:[%s3 + $0x104] sm:$0xf]
        %v2185 = vld [vmem:[%s3 + $0x108] sm:$0xf]
        %v2186 = vld [vmem:[%s3 + $0x10c] sm:$0xf]
        %v2187 = vld [vmem:[%s3 + $0x110] sm:$0xf]
        %v2188 = vld [vmem:[%s3 + $0x114] sm:$0xf]
        %v2189 = vld [vmem:[%s3 + $0x118] sm:$0xf]
        %v2190 = vld [vmem:[%s3 + $0x11c] sm:$0xf]
        %v2191 = vld [vmem:[%s3 + $0x120] sm:$0xf]
        %v2192 = vld [vmem:[%s3 + $0x124] sm:$0xf]
        %v2193 = vld [vmem:[%s3 + $0x128] sm:$0xf]
        %v2194 = vld [vmem:[%s3 + $0x12c] sm:$0xf]
        %v2195 = vld [vmem:[%s3 + $0x130] sm:$0xf]
        %v2196 = vld [vmem:[%s3 + $0x134] sm:$0xf]
        %v2197 = vld [vmem:[%s3 + $0x138] sm:$0xf]
        %v2198 = vld [vmem:[%s3 + $0x13c] sm:$0xf]
        %v2199 = vld [vmem:[%s3 + $0x140] sm:$0xf]
        %v2200 = vld [vmem:[%s3 + $0x144] sm:$0xf]
        %v2201 = vld [vmem:[%s3 + $0x148] sm:$0xf]
        %v2202 = vld [vmem:[%s3 + $0x14c] sm:$0xf]
        %v2203 = vld [vmem:[%s3 + $0x150] sm:$0xf]
        %v2204 = vld [vmem:[%s3 + $0x154] sm:$0xf]
        %v2205 = vld [vmem:[%s3 + $0x158] sm:$0xf]
        %v2206 = vld [vmem:[%s3 + $0x15c] sm:$0xf]
        %v2207 = vld [vmem:[%s3 + $0x160] sm:$0xf]
        %v2208 = vld [vmem:[%s3 + $0x164] sm:$0xf]
        %v2209 = vld [vmem:[%s3 + $0x168] sm:$0xf]
        %v2210 = vld [vmem:[%s3 + $0x16c] sm:$0xf]
        %v2211 = vld [vmem:[%s3 + $0x170] sm:$0xf]
        %v2212 = vld [vmem:[%s3 + $0x174] sm:$0xf]
        %v2213 = vld [vmem:[%s3 + $0x178] sm:$0xf]
        %v2214 = vld [vmem:[%s3 + $0x17c] sm:$0xf]
        %v2215 = vld [vmem:[%s3 + $0x180] sm:$0xf]
        %v2216 = vld [vmem:[%s3 + $0x184] sm:$0xf]
        %v2217 = vld [vmem:[%s3 + $0x188] sm:$0xf]
        %v2218 = vld [vmem:[%s3 + $0x18c] sm:$0xf]
        %v2219 = vld [vmem:[%s480] sm:$0xff]
        %v2220 = vld [vmem:[%s480 + $0x8] sm:$0xff]
        %v2321 = vunpack.c.l.b16 %v2119
        %v2322 = vunpack.c.l.b16 %v2120
        %v2323 = vunpack.c.l.b16 %v2121
        %v2324 = vunpack.c.l.b16 %v2122
        %v2325 = vunpack.c.l.b16 %v2123
        %v2326 = vunpack.c.l.b16 %v2124
        %v2327 = vunpack.c.l.b16 %v2125
        %v2328 = vunpack.c.l.b16 %v2126
        %v2329 = vunpack.c.l.b16 %v2127
        %v2330 = vunpack.c.l.b16 %v2128
        %v2331 = vunpack.c.l.b16 %v2129
        %v2332 = vunpack.c.l.b16 %v2130
        %v2333 = vunpack.c.l.b16 %v2131
        %v2334 = vunpack.c.l.b16 %v2132
        %v2335 = vunpack.c.l.b16 %v2133
        %v2336 = vunpack.c.l.b16 %v2134
        %v2337 = vunpack.c.l.b16 %v2135
        %v2338 = vunpack.c.l.b16 %v2136
        %v2339 = vunpack.c.l.b16 %v2137
        %v2340 = vunpack.c.l.b16 %v2138
        %v2341 = vunpack.c.l.b16 %v2139
        %v2342 = vunpack.c.l.b16 %v2140
        %v2343 = vunpack.c.l.b16 %v2141
        %v2344 = vunpack.c.l.b16 %v2142
        %v2345 = vunpack.c.l.b16 %v2143
        %v2346 = vunpack.c.l.b16 %v2144
        %v2347 = vunpack.c.l.b16 %v2145
        %v2348 = vunpack.c.l.b16 %v2146
        %v2349 = vunpack.c.l.b16 %v2147
        %v2350 = vunpack.c.l.b16 %v2148
        %v2351 = vunpack.c.l.b16 %v2149
        %v2352 = vunpack.c.l.b16 %v2150
        %v2353 = vunpack.c.l.b16 %v2151
        %v2354 = vunpack.c.l.b16 %v2152
        %v2355 = vunpack.c.l.b16 %v2153
        %v2356 = vunpack.c.l.b16 %v2154
        %v2357 = vunpack.c.l.b16 %v2155
        %v2358 = vunpack.c.l.b16 %v2156
        %v2359 = vunpack.c.l.b16 %v2157
        %v2360 = vunpack.c.l.b16 %v2158
        %v2361 = vunpack.c.l.b16 %v2159
        %v2362 = vunpack.c.l.b16 %v2160
        %v2363 = vunpack.c.l.b16 %v2161
        %v2364 = vunpack.c.l.b16 %v2162
        %v2365 = vunpack.c.l.b16 %v2163
        %v2366 = vunpack.c.l.b16 %v2164
        %v2367 = vunpack.c.l.b16 %v2165
        %v2368 = vunpack.c.l.b16 %v2166
        %v2369 = vunpack.c.l.b16 %v2167
        %v2370 = vunpack.c.l.b16 %v2168
        %v2371 = vunpack.c.l.b16 %v2169
        %v2372 = vunpack.c.l.b16 %v2170
        %v2373 = vunpack.c.l.b16 %v2171
        %v2374 = vunpack.c.l.b16 %v2172
        %v2375 = vunpack.c.l.b16 %v2173
        %v2376 = vunpack.c.l.b16 %v2174
        %v2377 = vunpack.c.l.b16 %v2175
        %v2378 = vunpack.c.l.b16 %v2176
        %v2379 = vunpack.c.l.b16 %v2177
        %v2380 = vunpack.c.l.b16 %v2178
        %v2381 = vunpack.c.l.b16 %v2179
        %v2382 = vunpack.c.l.b16 %v2180
        %v2383 = vunpack.c.l.b16 %v2181
        %v2384 = vunpack.c.l.b16 %v2182
        %v2385 = vunpack.c.l.b16 %v2183
        %v2386 = vunpack.c.l.b16 %v2184
        %v2387 = vunpack.c.l.b16 %v2185
        %v2388 = vunpack.c.l.b16 %v2186
        %v2389 = vunpack.c.l.b16 %v2187
        %v2390 = vunpack.c.l.b16 %v2188
        %v2391 = vunpack.c.l.b16 %v2189
        %v2392 = vunpack.c.l.b16 %v2190
        %v2393 = vunpack.c.l.b16 %v2191
        %v2394 = vunpack.c.l.b16 %v2192
        %v2395 = vunpack.c.l.b16 %v2193
        %v2396 = vunpack.c.l.b16 %v2194
        %v2397 = vunpack.c.l.b16 %v2195
        %v2398 = vunpack.c.l.b16 %v2196
        %v2399 = vunpack.c.l.b16 %v2197
        %v2400 = vunpack.c.l.b16 %v2198
        %v2401 = vunpack.c.l.b16 %v2199
        %v2402 = vunpack.c.l.b16 %v2200
        %v2403 = vunpack.c.l.b16 %v2201
        %v2404 = vunpack.c.l.b16 %v2202
        %v2405 = vunpack.c.l.b16 %v2203
        %v2406 = vunpack.c.l.b16 %v2204
        %v2407 = vunpack.c.l.b16 %v2205
        %v2408 = vunpack.c.l.b16 %v2206
        %v2409 = vunpack.c.l.b16 %v2207
        %v2410 = vunpack.c.l.b16 %v2208
        %v2411 = vunpack.c.l.b16 %v2209
        %v2412 = vunpack.c.l.b16 %v2210
        %v2413 = vunpack.c.l.b16 %v2211
        %v2414 = vunpack.c.l.b16 %v2212
        %v2415 = vunpack.c.l.b16 %v2213
        %v2416 = vunpack.c.l.b16 %v2214
        %v2417 = vunpack.c.l.b16 %v2215
        %v2418 = vunpack.c.l.b16 %v2216
        %v2419 = vunpack.c.l.b16 %v2217
        %v2420 = vunpack.c.l.b16 %v2218
        %v2421 = vpack.c.b16 %v2322, %v2321
        %v2422 = vpack.c.b16 %v2324, %v2323
        %v2423 = vpack.c.b16 %v2326, %v2325
        %v2424 = vpack.c.b16 %v2328, %v2327
        %v2425 = vpack.c.b16 %v2330, %v2329
        %v2426 = vpack.c.b16 %v2332, %v2331
        %v2427 = vpack.c.b16 %v2334, %v2333
        %v2428 = vpack.c.b16 %v2336, %v2335
        %v2429 = vpack.c.b16 %v2338, %v2337
        %v2430 = vpack.c.b16 %v2340, %v2339
        %v2431 = vpack.c.b16 %v2342, %v2341
        %v2432 = vpack.c.b16 %v2344, %v2343
        %v2433 = vpack.c.b16 %v2346, %v2345
        %v2434 = vpack.c.b16 %v2348, %v2347
        %v2435 = vpack.c.b16 %v2350, %v2349
        %v2436 = vpack.c.b16 %v2352, %v2351
        %v2437 = vpack.c.b16 %v2354, %v2353
        %v2438 = vpack.c.b16 %v2356, %v2355
        %v2439 = vpack.c.b16 %v2358, %v2357
        %v2440 = vpack.c.b16 %v2360, %v2359
        %v2441 = vpack.c.b16 %v2362, %v2361
        %v2442 = vpack.c.b16 %v2364, %v2363
        %v2443 = vpack.c.b16 %v2366, %v2365
        %v2444 = vpack.c.b16 %v2368, %v2367
        %v2445 = vpack.c.b16 %v2370, %v2369
        %v2446 = vpack.c.b16 %v2372, %v2371
        %v2447 = vpack.c.b16 %v2374, %v2373
        %v2448 = vpack.c.b16 %v2376, %v2375
        %v2449 = vpack.c.b16 %v2378, %v2377
        %v2450 = vpack.c.b16 %v2380, %v2379
        %v2451 = vpack.c.b16 %v2382, %v2381
        %v2452 = vpack.c.b16 %v2384, %v2383
        %v2453 = vpack.c.b16 %v2386, %v2385
        %v2454 = vpack.c.b16 %v2388, %v2387
        %v2455 = vpack.c.b16 %v2390, %v2389
        %v2456 = vpack.c.b16 %v2392, %v2391
        %v2457 = vpack.c.b16 %v2394, %v2393
        %v2458 = vpack.c.b16 %v2396, %v2395
        %v2459 = vpack.c.b16 %v2398, %v2397
        %v2460 = vpack.c.b16 %v2400, %v2399
        %v2461 = vpack.c.b16 %v2402, %v2401
        %v2462 = vpack.c.b16 %v2404, %v2403
        %v2463 = vpack.c.b16 %v2406, %v2405
        %v2464 = vpack.c.b16 %v2408, %v2407
        %v2465 = vpack.c.b16 %v2410, %v2409
        %v2466 = vpack.c.b16 %v2412, %v2411
        %v2467 = vpack.c.b16 %v2414, %v2413
        %v2468 = vpack.c.b16 %v2416, %v2415
        %v2469 = vpack.c.b16 %v2418, %v2417
        %v2470 = vpack.c.b16 %v2420, %v2419
        %2521 = vmatpush.bf16.msra.mxu0 %v2428
        %2522 = vmatpush.bf16.msra.mxu0 %v2427
        %2523 = vmatpush.bf16.msra.mxu0 %v2426
        %2524 = vmatpush.bf16.msra.mxu0 %v2425
        %2525 = vmatpush.bf16.msra.mxu0 %v2424
        %2526 = vmatpush.bf16.msra.mxu0 %v2423
        %2527 = vmatpush.bf16.msra.mxu0 %v2422
        %2528 = vmatpush.bf16.msra.mxu0 %v2421
        %2529 = vmatmul.bf16.gmra.mxu0 %v1666
        %v2530 = vpop.f32.mrf.mxu0
        %v2531 = vadd.f32 %v2219, %v2530
        %v2532 = vpop.f32.mrf.mxu0
        %v2533 = vadd.f32 %v2220, %v2532
        %2534 = vdwg.mxu0
        %2535 = vmatpush.bf16.msra.mxu0 %v2436
        %2536 = vmatpush.bf16.msra.mxu0 %v2435
        %2537 = vmatpush.bf16.msra.mxu0 %v2434
        %2538 = vmatpush.bf16.msra.mxu0 %v2433
        %2539 = vmatpush.bf16.msra.mxu0 %v2432
        %2540 = vmatpush.bf16.msra.mxu0 %v2431
        %2541 = vmatpush.bf16.msra.mxu0 %v2430
        %2542 = vmatpush.bf16.msra.mxu0 %v2429
        %2543 = vmatmul.bf16.gmra.mxu0 %v1667
        %v2544 = vpop.f32.mrf.mxu0
        %v2545 = vadd.f32 %v2531, %v2544
        %v2546 = vpop.f32.mrf.mxu0
        %v2547 = vadd.f32 %v2533, %v2546
        %2548 = vdwg.mxu0
        %2549 = vmatpush.bf16.msra.mxu0 %v2444
        %2550 = vmatpush.bf16.msra.mxu0 %v2443
        %2551 = vmatpush.bf16.msra.mxu0 %v2442
        %2552 = vmatpush.bf16.msra.mxu0 %v2441
        %2553 = vmatpush.bf16.msra.mxu0 %v2440
        %2554 = vmatpush.bf16.msra.mxu0 %v2439
        %2555 = vmatpush.bf16.msra.mxu0 %v2438
        %2556 = vmatpush.bf16.msra.mxu0 %v2437
        %2557 = vmatmul.bf16.gmra.mxu0 %v1668
        %v2558 = vpop.f32.mrf.mxu0
        %v2559 = vadd.f32 %v2545, %v2558
        %v2560 = vpop.f32.mrf.mxu0
        %v2561 = vadd.f32 %v2547, %v2560
        %2562 = vdwg.mxu0
        %2563 = vmatpush.bf16.msra.mxu0 %v2452
        %2564 = vmatpush.bf16.msra.mxu0 %v2451
        %2565 = vmatpush.bf16.msra.mxu0 %v2450
        %2566 = vmatpush.bf16.msra.mxu0 %v2449
        %2567 = vmatpush.bf16.msra.mxu0 %v2448
        %2568 = vmatpush.bf16.msra.mxu0 %v2447
        %2569 = vmatpush.bf16.msra.mxu0 %v2446
        %2570 = vmatpush.bf16.msra.mxu0 %v2445
        %2571 = vmatmul.bf16.gmra.mxu0 %v1669
        %v2572 = vpop.f32.mrf.mxu0
        %v2573 = vadd.f32 %v2559, %v2572
        %v2574 = vpop.f32.mrf.mxu0
        %v2575 = vadd.f32 %v2561, %v2574
        %2576 = vdwg.mxu0
        %2577 = vmatpush.bf16.msra.mxu0 %v2460
        %2578 = vmatpush.bf16.msra.mxu0 %v2459
        %2579 = vmatpush.bf16.msra.mxu0 %v2458
        %2580 = vmatpush.bf16.msra.mxu0 %v2457
        %2581 = vmatpush.bf16.msra.mxu0 %v2456
        %2582 = vmatpush.bf16.msra.mxu0 %v2455
        %2583 = vmatpush.bf16.msra.mxu0 %v2454
        %2584 = vmatpush.bf16.msra.mxu0 %v2453
        %2585 = vmatmul.bf16.gmra.mxu0 %v1670
        %v2586 = vpop.f32.mrf.mxu0
        %v2587 = vadd.f32 %v2573, %v2586
        %v2588 = vpop.f32.mrf.mxu0
        %v2589 = vadd.f32 %v2575, %v2588
        %2590 = vdwg.mxu0
        %2591 = vmatpush.bf16.msra.mxu0 %v2468
        %2592 = vmatpush.bf16.msra.mxu0 %v2467
        %2593 = vmatpush.bf16.msra.mxu0 %v2466
        %2594 = vmatpush.bf16.msra.mxu0 %v2465
        %2595 = vmatpush.bf16.msra.mxu0 %v2464
        %2596 = vmatpush.bf16.msra.mxu0 %v2463
        %2597 = vmatpush.bf16.msra.mxu0 %v2462
        %2598 = vmatpush.bf16.msra.mxu0 %v2461
        %2599 = vmatmul.bf16.gmra.mxu0 %v1671
        %v2600 = vpop.f32.mrf.mxu0
        %v2601 = vadd.f32 %v2587, %v2600
        %v2602 = vpop.f32.mrf.mxu0
        %v2603 = vadd.f32 %v2589, %v2602
        %2604 = vdwg.mxu0
        %2605 = vmatpush.bf16.msra.mxu0 0
        %2606 = vmatpush.bf16.msra.mxu0 0
        %2607 = vmatpush.bf16.msra.mxu0 0
        %2608 = vmatpush.bf16.msra.mxu0 0
        %2609 = vmatpush.bf16.msra.mxu0 0
        %2610 = vmatpush.bf16.msra.mxu0 0
        %2611 = vmatpush.bf16.msra.mxu0 %v2470
        %2612 = vmatpush.bf16.msra.mxu0 %v2469
        %2613 = vmatmul.bf16.gmra.mxu0 %v1981
        %v2614 = vpop.f32.mrf.mxu0
        %v2615 = vadd.f32 %v2601, %v2614
        %v2616 = vpop.f32.mrf.mxu0
        %v2617 = vadd.f32 %v2603, %v2616
        %2618 = vdwg.mxu0
        %v2619 = vxor.u32 %v2615, 2147483648
        %v2620 = vxor.u32 %v2617, 2147483648
        %v2621 = vmul.f32 %v2619, 1.442695
        %v2622 = vpow.pop %v2621
        %v2623 = vmul.f32 %v2620, 1.442695
        %v2624 = vpow.pop %v2623
        %v2625 = vadd.f32 %v2622, 1.0
        %v2626 = vadd.f32 %v2624, 1.0
        %v2627 = vrcp.pop %v2625
        %v2628 = vmul.f32 %v2625, %v2627
        %v2629 = vsub.f32 1.0, %v2628
        %v2630 = vmul.f32 %v2627, %v2629
        %v2631 = vadd.f32 %v2627, %v2630
        %vm2632 = vweird.f32 %v2625
        %vm2633 = vweird.f32 %v2627
        %vm2634 = vmor %vm2632, %vm2633
        %v2635 = vsel %vm2634, %v2627, %v2631
        %v2636 = vand.u32 2147483647, %v2625
        %vm2637 = vcmp.eq.f32.partialorder %v2636, 8.507059e+37
        %v2638 = vand.u32 %v2625, 2147483648
        %v2639 = vor.u32 1.1754944e-38, %v2638
        %v2640 = vsel %vm2637, %v2639, %v2635
        %v2641 = vmul.f32 1.0, %v2640
        %v2642 = vrcp.pop %v2626
        %v2643 = vmul.f32 %v2626, %v2642
        %v2644 = vsub.f32 1.0, %v2643
        %v2645 = vmul.f32 %v2642, %v2644
        %v2646 = vadd.f32 %v2642, %v2645
        %vm2647 = vweird.f32 %v2626
        %vm2648 = vweird.f32 %v2642
        %vm2649 = vmor %vm2647, %vm2648
        %v2650 = vsel %vm2649, %v2642, %v2646
        %v2651 = vand.u32 2147483647, %v2626
        %vm2652 = vcmp.eq.f32.partialorder %v2651, 8.507059e+37
        %v2653 = vand.u32 %v2626, 2147483648
        %v2654 = vor.u32 1.1754944e-38, %v2653
        %v2655 = vsel %vm2652, %v2654, %v2650
        %v2656 = vmul.f32 1.0, %v2655
        %s2657 = scalar_lea.vmem %s3, 400
        %v2658 = vld [vmem:[%s2657] sm:$0xf]
        %v2659 = vld [vmem:[%s2657 + $0x4] sm:$0xf]
        %v2660 = vld [vmem:[%s2657 + $0x8] sm:$0xf]
        %v2661 = vld [vmem:[%s2657 + $0xc] sm:$0xf]
        %v2662 = vld [vmem:[%s2657 + $0x10] sm:$0xf]
        %v2663 = vld [vmem:[%s2657 + $0x14] sm:$0xf]
        %v2664 = vld [vmem:[%s2657 + $0x18] sm:$0xf]
        %v2665 = vld [vmem:[%s2657 + $0x1c] sm:$0xf]
        %v2666 = vld [vmem:[%s2657 + $0x20] sm:$0xf]
        %v2667 = vld [vmem:[%s2657 + $0x24] sm:$0xf]
        %v2668 = vld [vmem:[%s2657 + $0x28] sm:$0xf]
        %v2669 = vld [vmem:[%s2657 + $0x2c] sm:$0xf]
        %v2670 = vld [vmem:[%s2657 + $0x30] sm:$0xf]
        %v2671 = vld [vmem:[%s2657 + $0x34] sm:$0xf]
        %v2672 = vld [vmem:[%s2657 + $0x38] sm:$0xf]
        %v2673 = vld [vmem:[%s2657 + $0x3c] sm:$0xf]
        %v2674 = vld [vmem:[%s2657 + $0x40] sm:$0xf]
        %v2675 = vld [vmem:[%s2657 + $0x44] sm:$0xf]
        %v2676 = vld [vmem:[%s2657 + $0x48] sm:$0xf]
        %v2677 = vld [vmem:[%s2657 + $0x4c] sm:$0xf]
        %v2678 = vld [vmem:[%s2657 + $0x50] sm:$0xf]
        %v2679 = vld [vmem:[%s2657 + $0x54] sm:$0xf]
        %v2680 = vld [vmem:[%s2657 + $0x58] sm:$0xf]
        %v2681 = vld [vmem:[%s2657 + $0x5c] sm:$0xf]
        %v2682 = vld [vmem:[%s2657 + $0x60] sm:$0xf]
        %v2683 = vld [vmem:[%s2657 + $0x64] sm:$0xf]
        %v2684 = vld [vmem:[%s2657 + $0x68] sm:$0xf]
        %v2685 = vld [vmem:[%s2657 + $0x6c] sm:$0xf]
        %v2686 = vld [vmem:[%s2657 + $0x70] sm:$0xf]
        %v2687 = vld [vmem:[%s2657 + $0x74] sm:$0xf]
        %v2688 = vld [vmem:[%s2657 + $0x78] sm:$0xf]
        %v2689 = vld [vmem:[%s2657 + $0x7c] sm:$0xf]
        %v2690 = vld [vmem:[%s2657 + $0x80] sm:$0xf]
        %v2691 = vld [vmem:[%s2657 + $0x84] sm:$0xf]
        %v2692 = vld [vmem:[%s2657 + $0x88] sm:$0xf]
        %v2693 = vld [vmem:[%s2657 + $0x8c] sm:$0xf]
        %v2694 = vld [vmem:[%s2657 + $0x90] sm:$0xf]
        %v2695 = vld [vmem:[%s2657 + $0x94] sm:$0xf]
        %v2696 = vld [vmem:[%s2657 + $0x98] sm:$0xf]
        %v2697 = vld [vmem:[%s2657 + $0x9c] sm:$0xf]
        %v2698 = vld [vmem:[%s2657 + $0xa0] sm:$0xf]
        %v2699 = vld [vmem:[%s2657 + $0xa4] sm:$0xf]
        %v2700 = vld [vmem:[%s2657 + $0xa8] sm:$0xf]
        %v2701 = vld [vmem:[%s2657 + $0xac] sm:$0xf]
        %v2702 = vld [vmem:[%s2657 + $0xb0] sm:$0xf]
        %v2703 = vld [vmem:[%s2657 + $0xb4] sm:$0xf]
        %v2704 = vld [vmem:[%s2657 + $0xb8] sm:$0xf]
        %v2705 = vld [vmem:[%s2657 + $0xbc] sm:$0xf]
        %v2706 = vld [vmem:[%s2657 + $0xc0] sm:$0xf]
        %v2707 = vld [vmem:[%s2657 + $0xc4] sm:$0xf]
        %v2708 = vld [vmem:[%s2657 + $0xc8] sm:$0xf]
        %v2709 = vld [vmem:[%s2657 + $0xcc] sm:$0xf]
        %v2710 = vld [vmem:[%s2657 + $0xd0] sm:$0xf]
        %v2711 = vld [vmem:[%s2657 + $0xd4] sm:$0xf]
        %v2712 = vld [vmem:[%s2657 + $0xd8] sm:$0xf]
        %v2713 = vld [vmem:[%s2657 + $0xdc] sm:$0xf]
        %v2714 = vld [vmem:[%s2657 + $0xe0] sm:$0xf]
        %v2715 = vld [vmem:[%s2657 + $0xe4] sm:$0xf]
        %v2716 = vld [vmem:[%s2657 + $0xe8] sm:$0xf]
        %v2717 = vld [vmem:[%s2657 + $0xec] sm:$0xf]
        %v2718 = vld [vmem:[%s2657 + $0xf0] sm:$0xf]
        %v2719 = vld [vmem:[%s2657 + $0xf4] sm:$0xf]
        %v2720 = vld [vmem:[%s2657 + $0xf8] sm:$0xf]
        %v2721 = vld [vmem:[%s2657 + $0xfc] sm:$0xf]
        %v2722 = vld [vmem:[%s2657 + $0x100] sm:$0xf]
        %v2723 = vld [vmem:[%s2657 + $0x104] sm:$0xf]
        %v2724 = vld [vmem:[%s2657 + $0x108] sm:$0xf]
        %v2725 = vld [vmem:[%s2657 + $0x10c] sm:$0xf]
        %v2726 = vld [vmem:[%s2657 + $0x110] sm:$0xf]
        %v2727 = vld [vmem:[%s2657 + $0x114] sm:$0xf]
        %v2728 = vld [vmem:[%s2657 + $0x118] sm:$0xf]
        %v2729 = vld [vmem:[%s2657 + $0x11c] sm:$0xf]
        %v2730 = vld [vmem:[%s2657 + $0x120] sm:$0xf]
        %v2731 = vld [vmem:[%s2657 + $0x124] sm:$0xf]
        %v2732 = vld [vmem:[%s2657 + $0x128] sm:$0xf]
        %v2733 = vld [vmem:[%s2657 + $0x12c] sm:$0xf]
        %v2734 = vld [vmem:[%s2657 + $0x130] sm:$0xf]
        %v2735 = vld [vmem:[%s2657 + $0x134] sm:$0xf]
        %v2736 = vld [vmem:[%s2657 + $0x138] sm:$0xf]
        %v2737 = vld [vmem:[%s2657 + $0x13c] sm:$0xf]
        %v2738 = vld [vmem:[%s2657 + $0x140] sm:$0xf]
        %v2739 = vld [vmem:[%s2657 + $0x144] sm:$0xf]
        %v2740 = vld [vmem:[%s2657 + $0x148] sm:$0xf]
        %v2741 = vld [vmem:[%s2657 + $0x14c] sm:$0xf]
        %v2742 = vld [vmem:[%s2657 + $0x150] sm:$0xf]
        %v2743 = vld [vmem:[%s2657 + $0x154] sm:$0xf]
        %v2744 = vld [vmem:[%s2657 + $0x158] sm:$0xf]
        %v2745 = vld [vmem:[%s2657 + $0x15c] sm:$0xf]
        %v2746 = vld [vmem:[%s2657 + $0x160] sm:$0xf]
        %v2747 = vld [vmem:[%s2657 + $0x164] sm:$0xf]
        %v2748 = vld [vmem:[%s2657 + $0x168] sm:$0xf]
        %v2749 = vld [vmem:[%s2657 + $0x16c] sm:$0xf]
        %v2750 = vld [vmem:[%s2657 + $0x170] sm:$0xf]
        %v2751 = vld [vmem:[%s2657 + $0x174] sm:$0xf]
        %v2752 = vld [vmem:[%s2657 + $0x178] sm:$0xf]
        %v2753 = vld [vmem:[%s2657 + $0x17c] sm:$0xf]
        %v2754 = vld [vmem:[%s2657 + $0x180] sm:$0xf]
        %v2755 = vld [vmem:[%s2657 + $0x184] sm:$0xf]
        %v2756 = vld [vmem:[%s2657 + $0x188] sm:$0xf]
        %v2757 = vld [vmem:[%s2657 + $0x18c] sm:$0xf]
        %s2758 = scalar_lea.vmem %s480, 16
        %v2759 = vld [vmem:[%s2758] sm:$0xff]
        %v2760 = vld [vmem:[%s2758 + $0x8] sm:$0xff]
        %v2861 = vunpack.c.l.b16 %v2658
        %v2862 = vunpack.c.l.b16 %v2659
        %v2863 = vunpack.c.l.b16 %v2660
        %v2864 = vunpack.c.l.b16 %v2661
        %v2865 = vunpack.c.l.b16 %v2662
        %v2866 = vunpack.c.l.b16 %v2663
        %v2867 = vunpack.c.l.b16 %v2664
        %v2868 = vunpack.c.l.b16 %v2665
        %v2869 = vunpack.c.l.b16 %v2666
        %v2870 = vunpack.c.l.b16 %v2667
        %v2871 = vunpack.c.l.b16 %v2668
        %v2872 = vunpack.c.l.b16 %v2669
        %v2873 = vunpack.c.l.b16 %v2670
        %v2874 = vunpack.c.l.b16 %v2671
        %v2875 = vunpack.c.l.b16 %v2672
        %v2876 = vunpack.c.l.b16 %v2673
        %v2877 = vunpack.c.l.b16 %v2674
        %v2878 = vunpack.c.l.b16 %v2675
        %v2879 = vunpack.c.l.b16 %v2676
        %v2880 = vunpack.c.l.b16 %v2677
        %v2881 = vunpack.c.l.b16 %v2678
        %v2882 = vunpack.c.l.b16 %v2679
        %v2883 = vunpack.c.l.b16 %v2680
        %v2884 = vunpack.c.l.b16 %v2681
        %v2885 = vunpack.c.l.b16 %v2682
        %v2886 = vunpack.c.l.b16 %v2683
        %v2887 = vunpack.c.l.b16 %v2684
        %v2888 = vunpack.c.l.b16 %v2685
        %v2889 = vunpack.c.l.b16 %v2686
        %v2890 = vunpack.c.l.b16 %v2687
        %v2891 = vunpack.c.l.b16 %v2688
        %v2892 = vunpack.c.l.b16 %v2689
        %v2893 = vunpack.c.l.b16 %v2690
        %v2894 = vunpack.c.l.b16 %v2691
        %v2895 = vunpack.c.l.b16 %v2692
        %v2896 = vunpack.c.l.b16 %v2693
        %v2897 = vunpack.c.l.b16 %v2694
        %v2898 = vunpack.c.l.b16 %v2695
        %v2899 = vunpack.c.l.b16 %v2696
        %v2900 = vunpack.c.l.b16 %v2697
        %v2901 = vunpack.c.l.b16 %v2698
        %v2902 = vunpack.c.l.b16 %v2699
        %v2903 = vunpack.c.l.b16 %v2700
        %v2904 = vunpack.c.l.b16 %v2701
        %v2905 = vunpack.c.l.b16 %v2702
        %v2906 = vunpack.c.l.b16 %v2703
        %v2907 = vunpack.c.l.b16 %v2704
        %v2908 = vunpack.c.l.b16 %v2705
        %v2909 = vunpack.c.l.b16 %v2706
        %v2910 = vunpack.c.l.b16 %v2707
        %v2911 = vunpack.c.l.b16 %v2708
        %v2912 = vunpack.c.l.b16 %v2709
        %v2913 = vunpack.c.l.b16 %v2710
        %v2914 = vunpack.c.l.b16 %v2711
        %v2915 = vunpack.c.l.b16 %v2712
        %v2916 = vunpack.c.l.b16 %v2713
        %v2917 = vunpack.c.l.b16 %v2714
        %v2918 = vunpack.c.l.b16 %v2715
        %v2919 = vunpack.c.l.b16 %v2716
        %v2920 = vunpack.c.l.b16 %v2717
        %v2921 = vunpack.c.l.b16 %v2718
        %v2922 = vunpack.c.l.b16 %v2719
        %v2923 = vunpack.c.l.b16 %v2720
        %v2924 = vunpack.c.l.b16 %v2721
        %v2925 = vunpack.c.l.b16 %v2722
        %v2926 = vunpack.c.l.b16 %v2723
        %v2927 = vunpack.c.l.b16 %v2724
        %v2928 = vunpack.c.l.b16 %v2725
        %v2929 = vunpack.c.l.b16 %v2726
        %v2930 = vunpack.c.l.b16 %v2727
        %v2931 = vunpack.c.l.b16 %v2728
        %v2932 = vunpack.c.l.b16 %v2729
        %v2933 = vunpack.c.l.b16 %v2730
        %v2934 = vunpack.c.l.b16 %v2731
        %v2935 = vunpack.c.l.b16 %v2732
        %v2936 = vunpack.c.l.b16 %v2733
        %v2937 = vunpack.c.l.b16 %v2734
        %v2938 = vunpack.c.l.b16 %v2735
        %v2939 = vunpack.c.l.b16 %v2736
        %v2940 = vunpack.c.l.b16 %v2737
        %v2941 = vunpack.c.l.b16 %v2738
        %v2942 = vunpack.c.l.b16 %v2739
        %v2943 = vunpack.c.l.b16 %v2740
        %v2944 = vunpack.c.l.b16 %v2741
        %v2945 = vunpack.c.l.b16 %v2742
        %v2946 = vunpack.c.l.b16 %v2743
        %v2947 = vunpack.c.l.b16 %v2744
        %v2948 = vunpack.c.l.b16 %v2745
        %v2949 = vunpack.c.l.b16 %v2746
        %v2950 = vunpack.c.l.b16 %v2747
        %v2951 = vunpack.c.l.b16 %v2748
        %v2952 = vunpack.c.l.b16 %v2749
        %v2953 = vunpack.c.l.b16 %v2750
        %v2954 = vunpack.c.l.b16 %v2751
        %v2955 = vunpack.c.l.b16 %v2752
        %v2956 = vunpack.c.l.b16 %v2753
        %v2957 = vunpack.c.l.b16 %v2754
        %v2958 = vunpack.c.l.b16 %v2755
        %v2959 = vunpack.c.l.b16 %v2756
        %v2960 = vunpack.c.l.b16 %v2757
        %v2961 = vpack.c.b16 %v2862, %v2861
        %v2962 = vpack.c.b16 %v2864, %v2863
        %v2963 = vpack.c.b16 %v2866, %v2865
        %v2964 = vpack.c.b16 %v2868, %v2867
        %v2965 = vpack.c.b16 %v2870, %v2869
        %v2966 = vpack.c.b16 %v2872, %v2871
        %v2967 = vpack.c.b16 %v2874, %v2873
        %v2968 = vpack.c.b16 %v2876, %v2875
        %v2969 = vpack.c.b16 %v2878, %v2877
        %v2970 = vpack.c.b16 %v2880, %v2879
        %v2971 = vpack.c.b16 %v2882, %v2881
        %v2972 = vpack.c.b16 %v2884, %v2883
        %v2973 = vpack.c.b16 %v2886, %v2885
        %v2974 = vpack.c.b16 %v2888, %v2887
        %v2975 = vpack.c.b16 %v2890, %v2889
        %v2976 = vpack.c.b16 %v2892, %v2891
        %v2977 = vpack.c.b16 %v2894, %v2893
        %v2978 = vpack.c.b16 %v2896, %v2895
        %v2979 = vpack.c.b16 %v2898, %v2897
        %v2980 = vpack.c.b16 %v2900, %v2899
        %v2981 = vpack.c.b16 %v2902, %v2901
        %v2982 = vpack.c.b16 %v2904, %v2903
        %v2983 = vpack.c.b16 %v2906, %v2905
        %v2984 = vpack.c.b16 %v2908, %v2907
        %v2985 = vpack.c.b16 %v2910, %v2909
        %v2986 = vpack.c.b16 %v2912, %v2911
        %v2987 = vpack.c.b16 %v2914, %v2913
        %v2988 = vpack.c.b16 %v2916, %v2915
        %v2989 = vpack.c.b16 %v2918, %v2917
        %v2990 = vpack.c.b16 %v2920, %v2919
        %v2991 = vpack.c.b16 %v2922, %v2921
        %v2992 = vpack.c.b16 %v2924, %v2923
        %v2993 = vpack.c.b16 %v2926, %v2925
        %v2994 = vpack.c.b16 %v2928, %v2927
        %v2995 = vpack.c.b16 %v2930, %v2929
        %v2996 = vpack.c.b16 %v2932, %v2931
        %v2997 = vpack.c.b16 %v2934, %v2933
        %v2998 = vpack.c.b16 %v2936, %v2935
        %v2999 = vpack.c.b16 %v2938, %v2937
        %v3000 = vpack.c.b16 %v2940, %v2939
        %v3001 = vpack.c.b16 %v2942, %v2941
        %v3002 = vpack.c.b16 %v2944, %v2943
        %v3003 = vpack.c.b16 %v2946, %v2945
        %v3004 = vpack.c.b16 %v2948, %v2947
        %v3005 = vpack.c.b16 %v2950, %v2949
        %v3006 = vpack.c.b16 %v2952, %v2951
        %v3007 = vpack.c.b16 %v2954, %v2953
        %v3008 = vpack.c.b16 %v2956, %v2955
        %v3009 = vpack.c.b16 %v2958, %v2957
        %v3010 = vpack.c.b16 %v2960, %v2959
        %3061 = vmatpush.bf16.msra.mxu0 %v2968
        %3062 = vmatpush.bf16.msra.mxu0 %v2967
        %3063 = vmatpush.bf16.msra.mxu0 %v2966
        %3064 = vmatpush.bf16.msra.mxu0 %v2965
        %3065 = vmatpush.bf16.msra.mxu0 %v2964
        %3066 = vmatpush.bf16.msra.mxu0 %v2963
        %3067 = vmatpush.bf16.msra.mxu0 %v2962
        %3068 = vmatpush.bf16.msra.mxu0 %v2961
        %3069 = vmatmul.bf16.gmra.mxu0 %v1666
        %v3070 = vpop.f32.mrf.mxu0
        %v3071 = vadd.f32 %v2759, %v3070
        %v3072 = vpop.f32.mrf.mxu0
        %v3073 = vadd.f32 %v2760, %v3072
        %3074 = vdwg.mxu0
        %3075 = vmatpush.bf16.msra.mxu0 %v2976
        %3076 = vmatpush.bf16.msra.mxu0 %v2975
        %3077 = vmatpush.bf16.msra.mxu0 %v2974
        %3078 = vmatpush.bf16.msra.mxu0 %v2973
        %3079 = vmatpush.bf16.msra.mxu0 %v2972
        %3080 = vmatpush.bf16.msra.mxu0 %v2971
        %3081 = vmatpush.bf16.msra.mxu0 %v2970
        %3082 = vmatpush.bf16.msra.mxu0 %v2969
        %3083 = vmatmul.bf16.gmra.mxu0 %v1667
        %v3084 = vpop.f32.mrf.mxu0
        %v3085 = vadd.f32 %v3071, %v3084
        %v3086 = vpop.f32.mrf.mxu0
        %v3087 = vadd.f32 %v3073, %v3086
        %3088 = vdwg.mxu0
        %3089 = vmatpush.bf16.msra.mxu0 %v2984
        %3090 = vmatpush.bf16.msra.mxu0 %v2983
        %3091 = vmatpush.bf16.msra.mxu0 %v2982
        %3092 = vmatpush.bf16.msra.mxu0 %v2981
        %3093 = vmatpush.bf16.msra.mxu0 %v2980
        %3094 = vmatpush.bf16.msra.mxu0 %v2979
        %3095 = vmatpush.bf16.msra.mxu0 %v2978
        %3096 = vmatpush.bf16.msra.mxu0 %v2977
        %3097 = vmatmul.bf16.gmra.mxu0 %v1668
        %v3098 = vpop.f32.mrf.mxu0
        %v3099 = vadd.f32 %v3085, %v3098
        %v3100 = vpop.f32.mrf.mxu0
        %v3101 = vadd.f32 %v3087, %v3100
        %3102 = vdwg.mxu0
        %3103 = vmatpush.bf16.msra.mxu0 %v2992
        %3104 = vmatpush.bf16.msra.mxu0 %v2991
        %3105 = vmatpush.bf16.msra.mxu0 %v2990
        %3106 = vmatpush.bf16.msra.mxu0 %v2989
        %3107 = vmatpush.bf16.msra.mxu0 %v2988
        %3108 = vmatpush.bf16.msra.mxu0 %v2987
        %3109 = vmatpush.bf16.msra.mxu0 %v2986
        %3110 = vmatpush.bf16.msra.mxu0 %v2985
        %3111 = vmatmul.bf16.gmra.mxu0 %v1669
        %v3112 = vpop.f32.mrf.mxu0
        %v3113 = vadd.f32 %v3099, %v3112
        %v3114 = vpop.f32.mrf.mxu0
        %v3115 = vadd.f32 %v3101, %v3114
        %3116 = vdwg.mxu0
        %3117 = vmatpush.bf16.msra.mxu0 %v3000
        %3118 = vmatpush.bf16.msra.mxu0 %v2999
        %3119 = vmatpush.bf16.msra.mxu0 %v2998
        %3120 = vmatpush.bf16.msra.mxu0 %v2997
        %3121 = vmatpush.bf16.msra.mxu0 %v2996
        %3122 = vmatpush.bf16.msra.mxu0 %v2995
        %3123 = vmatpush.bf16.msra.mxu0 %v2994
        %3124 = vmatpush.bf16.msra.mxu0 %v2993
        %3125 = vmatmul.bf16.gmra.mxu0 %v1670
        %v3126 = vpop.f32.mrf.mxu0
        %v3127 = vadd.f32 %v3113, %v3126
        %v3128 = vpop.f32.mrf.mxu0
        %v3129 = vadd.f32 %v3115, %v3128
        %3130 = vdwg.mxu0
        %3131 = vmatpush.bf16.msra.mxu0 %v3008
        %3132 = vmatpush.bf16.msra.mxu0 %v3007
        %3133 = vmatpush.bf16.msra.mxu0 %v3006
        %3134 = vmatpush.bf16.msra.mxu0 %v3005
        %3135 = vmatpush.bf16.msra.mxu0 %v3004
        %3136 = vmatpush.bf16.msra.mxu0 %v3003
        %3137 = vmatpush.bf16.msra.mxu0 %v3002
        %3138 = vmatpush.bf16.msra.mxu0 %v3001
        %3139 = vmatmul.bf16.gmra.mxu0 %v1671
        %v3140 = vpop.f32.mrf.mxu0
        %v3141 = vadd.f32 %v3127, %v3140
        %v3142 = vpop.f32.mrf.mxu0
        %v3143 = vadd.f32 %v3129, %v3142
        %3144 = vdwg.mxu0
        %3145 = vmatpush.bf16.msra.mxu0 0
        %3146 = vmatpush.bf16.msra.mxu0 0
        %3147 = vmatpush.bf16.msra.mxu0 0
        %3148 = vmatpush.bf16.msra.mxu0 0
        %3149 = vmatpush.bf16.msra.mxu0 0
        %3150 = vmatpush.bf16.msra.mxu0 0
        %3151 = vmatpush.bf16.msra.mxu0 %v3010
        %3152 = vmatpush.bf16.msra.mxu0 %v3009
        %3153 = vmatmul.bf16.gmra.mxu0 %v1981
        %v3154 = vpop.f32.mrf.mxu0
        %v3155 = vadd.f32 %v3141, %v3154
        %v3156 = vpop.f32.mrf.mxu0
        %v3157 = vadd.f32 %v3143, %v3156
        %3158 = vdwg.mxu0
        %v3159 = vxor.u32 %v3155, 2147483648
        %v3160 = vxor.u32 %v3157, 2147483648
        %v3161 = vmul.f32 %v3159, 1.442695
        %v3162 = vpow.pop %v3161
        %v3163 = vmul.f32 %v3160, 1.442695
        %v3164 = vpow.pop %v3163
        %v3165 = vadd.f32 %v3162, 1.0
        %v3166 = vadd.f32 %v3164, 1.0
        %v3167 = vrcp.pop %v3165
        %v3168 = vmul.f32 %v3165, %v3167
        %v3169 = vsub.f32 1.0, %v3168
        %v3170 = vmul.f32 %v3167, %v3169
        %v3171 = vadd.f32 %v3167, %v3170
        %vm3172 = vweird.f32 %v3165
        %vm3173 = vweird.f32 %v3167
        %vm3174 = vmor %vm3172, %vm3173
        %v3175 = vsel %vm3174, %v3167, %v3171
        %v3176 = vand.u32 2147483647, %v3165
        %vm3177 = vcmp.eq.f32.partialorder %v3176, 8.507059e+37
        %v3178 = vand.u32 %v3165, 2147483648
        %v3179 = vor.u32 1.1754944e-38, %v3178
        %v3180 = vsel %vm3177, %v3179, %v3175
        %v3181 = vmul.f32 1.0, %v3180
        %v3182 = vrcp.pop %v3166
        %v3183 = vmul.f32 %v3166, %v3182
        %v3184 = vsub.f32 1.0, %v3183
        %v3185 = vmul.f32 %v3182, %v3184
        %v3186 = vadd.f32 %v3182, %v3185
        %vm3187 = vweird.f32 %v3166
        %vm3188 = vweird.f32 %v3182
        %vm3189 = vmor %vm3187, %vm3188
        %v3190 = vsel %vm3189, %v3182, %v3186
        %v3191 = vand.u32 2147483647, %v3166
        %vm3192 = vcmp.eq.f32.partialorder %v3191, 8.507059e+37
        %v3193 = vand.u32 %v3166, 2147483648
        %v3194 = vor.u32 1.1754944e-38, %v3193
        %v3195 = vsel %vm3192, %v3194, %v3190
        %v3196 = vmul.f32 1.0, %v3195
        %s3197 = scalar_lea.vmem %s3, 1200
        %v3198 = vld [vmem:[%s3197] sm:$0xf]
        %v3199 = vld [vmem:[%s3197 + $0x4] sm:$0xf]
        %v3200 = vld [vmem:[%s3197 + $0x8] sm:$0xf]
        %v3201 = vld [vmem:[%s3197 + $0xc] sm:$0xf]
        %v3202 = vld [vmem:[%s3197 + $0x10] sm:$0xf]
        %v3203 = vld [vmem:[%s3197 + $0x14] sm:$0xf]
        %v3204 = vld [vmem:[%s3197 + $0x18] sm:$0xf]
        %v3205 = vld [vmem:[%s3197 + $0x1c] sm:$0xf]
        %v3206 = vld [vmem:[%s3197 + $0x20] sm:$0xf]
        %v3207 = vld [vmem:[%s3197 + $0x24] sm:$0xf]
        %v3208 = vld [vmem:[%s3197 + $0x28] sm:$0xf]
        %v3209 = vld [vmem:[%s3197 + $0x2c] sm:$0xf]
        %v3210 = vld [vmem:[%s3197 + $0x30] sm:$0xf]
        %v3211 = vld [vmem:[%s3197 + $0x34] sm:$0xf]
        %v3212 = vld [vmem:[%s3197 + $0x38] sm:$0xf]
        %v3213 = vld [vmem:[%s3197 + $0x3c] sm:$0xf]
        %v3214 = vld [vmem:[%s3197 + $0x40] sm:$0xf]
        %v3215 = vld [vmem:[%s3197 + $0x44] sm:$0xf]
        %v3216 = vld [vmem:[%s3197 + $0x48] sm:$0xf]
        %v3217 = vld [vmem:[%s3197 + $0x4c] sm:$0xf]
        %v3218 = vld [vmem:[%s3197 + $0x50] sm:$0xf]
        %v3219 = vld [vmem:[%s3197 + $0x54] sm:$0xf]
        %v3220 = vld [vmem:[%s3197 + $0x58] sm:$0xf]
        %v3221 = vld [vmem:[%s3197 + $0x5c] sm:$0xf]
        %v3222 = vld [vmem:[%s3197 + $0x60] sm:$0xf]
        %v3223 = vld [vmem:[%s3197 + $0x64] sm:$0xf]
        %v3224 = vld [vmem:[%s3197 + $0x68] sm:$0xf]
        %v3225 = vld [vmem:[%s3197 + $0x6c] sm:$0xf]
        %v3226 = vld [vmem:[%s3197 + $0x70] sm:$0xf]
        %v3227 = vld [vmem:[%s3197 + $0x74] sm:$0xf]
        %v3228 = vld [vmem:[%s3197 + $0x78] sm:$0xf]
        %v3229 = vld [vmem:[%s3197 + $0x7c] sm:$0xf]
        %v3230 = vld [vmem:[%s3197 + $0x80] sm:$0xf]
        %v3231 = vld [vmem:[%s3197 + $0x84] sm:$0xf]
        %v3232 = vld [vmem:[%s3197 + $0x88] sm:$0xf]
        %v3233 = vld [vmem:[%s3197 + $0x8c] sm:$0xf]
        %v3234 = vld [vmem:[%s3197 + $0x90] sm:$0xf]
        %v3235 = vld [vmem:[%s3197 + $0x94] sm:$0xf]
        %v3236 = vld [vmem:[%s3197 + $0x98] sm:$0xf]
        %v3237 = vld [vmem:[%s3197 + $0x9c] sm:$0xf]
        %v3238 = vld [vmem:[%s3197 + $0xa0] sm:$0xf]
        %v3239 = vld [vmem:[%s3197 + $0xa4] sm:$0xf]
        %v3240 = vld [vmem:[%s3197 + $0xa8] sm:$0xf]
        %v3241 = vld [vmem:[%s3197 + $0xac] sm:$0xf]
        %v3242 = vld [vmem:[%s3197 + $0xb0] sm:$0xf]
        %v3243 = vld [vmem:[%s3197 + $0xb4] sm:$0xf]
        %v3244 = vld [vmem:[%s3197 + $0xb8] sm:$0xf]
        %v3245 = vld [vmem:[%s3197 + $0xbc] sm:$0xf]
        %v3246 = vld [vmem:[%s3197 + $0xc0] sm:$0xf]
        %v3247 = vld [vmem:[%s3197 + $0xc4] sm:$0xf]
        %v3248 = vld [vmem:[%s3197 + $0xc8] sm:$0xf]
        %v3249 = vld [vmem:[%s3197 + $0xcc] sm:$0xf]
        %v3250 = vld [vmem:[%s3197 + $0xd0] sm:$0xf]
        %v3251 = vld [vmem:[%s3197 + $0xd4] sm:$0xf]
        %v3252 = vld [vmem:[%s3197 + $0xd8] sm:$0xf]
        %v3253 = vld [vmem:[%s3197 + $0xdc] sm:$0xf]
        %v3254 = vld [vmem:[%s3197 + $0xe0] sm:$0xf]
        %v3255 = vld [vmem:[%s3197 + $0xe4] sm:$0xf]
        %v3256 = vld [vmem:[%s3197 + $0xe8] sm:$0xf]
        %v3257 = vld [vmem:[%s3197 + $0xec] sm:$0xf]
        %v3258 = vld [vmem:[%s3197 + $0xf0] sm:$0xf]
        %v3259 = vld [vmem:[%s3197 + $0xf4] sm:$0xf]
        %v3260 = vld [vmem:[%s3197 + $0xf8] sm:$0xf]
        %v3261 = vld [vmem:[%s3197 + $0xfc] sm:$0xf]
        %v3262 = vld [vmem:[%s3197 + $0x100] sm:$0xf]
        %v3263 = vld [vmem:[%s3197 + $0x104] sm:$0xf]
        %v3264 = vld [vmem:[%s3197 + $0x108] sm:$0xf]
        %v3265 = vld [vmem:[%s3197 + $0x10c] sm:$0xf]
        %v3266 = vld [vmem:[%s3197 + $0x110] sm:$0xf]
        %v3267 = vld [vmem:[%s3197 + $0x114] sm:$0xf]
        %v3268 = vld [vmem:[%s3197 + $0x118] sm:$0xf]
        %v3269 = vld [vmem:[%s3197 + $0x11c] sm:$0xf]
        %v3270 = vld [vmem:[%s3197 + $0x120] sm:$0xf]
        %v3271 = vld [vmem:[%s3197 + $0x124] sm:$0xf]
        %v3272 = vld [vmem:[%s3197 + $0x128] sm:$0xf]
        %v3273 = vld [vmem:[%s3197 + $0x12c] sm:$0xf]
        %v3274 = vld [vmem:[%s3197 + $0x130] sm:$0xf]
        %v3275 = vld [vmem:[%s3197 + $0x134] sm:$0xf]
        %v3276 = vld [vmem:[%s3197 + $0x138] sm:$0xf]
        %v3277 = vld [vmem:[%s3197 + $0x13c] sm:$0xf]
        %v3278 = vld [vmem:[%s3197 + $0x140] sm:$0xf]
        %v3279 = vld [vmem:[%s3197 + $0x144] sm:$0xf]
        %v3280 = vld [vmem:[%s3197 + $0x148] sm:$0xf]
        %v3281 = vld [vmem:[%s3197 + $0x14c] sm:$0xf]
        %v3282 = vld [vmem:[%s3197 + $0x150] sm:$0xf]
        %v3283 = vld [vmem:[%s3197 + $0x154] sm:$0xf]
        %v3284 = vld [vmem:[%s3197 + $0x158] sm:$0xf]
        %v3285 = vld [vmem:[%s3197 + $0x15c] sm:$0xf]
        %v3286 = vld [vmem:[%s3197 + $0x160] sm:$0xf]
        %v3287 = vld [vmem:[%s3197 + $0x164] sm:$0xf]
        %v3288 = vld [vmem:[%s3197 + $0x168] sm:$0xf]
        %v3289 = vld [vmem:[%s3197 + $0x16c] sm:$0xf]
        %v3290 = vld [vmem:[%s3197 + $0x170] sm:$0xf]
        %v3291 = vld [vmem:[%s3197 + $0x174] sm:$0xf]
        %v3292 = vld [vmem:[%s3197 + $0x178] sm:$0xf]
        %v3293 = vld [vmem:[%s3197 + $0x17c] sm:$0xf]
        %v3294 = vld [vmem:[%s3197 + $0x180] sm:$0xf]
        %v3295 = vld [vmem:[%s3197 + $0x184] sm:$0xf]
        %v3296 = vld [vmem:[%s3197 + $0x188] sm:$0xf]
        %v3297 = vld [vmem:[%s3197 + $0x18c] sm:$0xf]
        %s3298 = scalar_lea.vmem %s480, 48
        %v3299 = vld [vmem:[%s3298] sm:$0xff]
        %v3300 = vld [vmem:[%s3298 + $0x8] sm:$0xff]
        %v3401 = vunpack.c.l.b16 %v3198
        %v3402 = vunpack.c.l.b16 %v3199
        %v3403 = vunpack.c.l.b16 %v3200
        %v3404 = vunpack.c.l.b16 %v3201
        %v3405 = vunpack.c.l.b16 %v3202
        %v3406 = vunpack.c.l.b16 %v3203
        %v3407 = vunpack.c.l.b16 %v3204
        %v3408 = vunpack.c.l.b16 %v3205
        %v3409 = vunpack.c.l.b16 %v3206
        %v3410 = vunpack.c.l.b16 %v3207
        %v3411 = vunpack.c.l.b16 %v3208
        %v3412 = vunpack.c.l.b16 %v3209
        %v3413 = vunpack.c.l.b16 %v3210
        %v3414 = vunpack.c.l.b16 %v3211
        %v3415 = vunpack.c.l.b16 %v3212
        %v3416 = vunpack.c.l.b16 %v3213
        %v3417 = vunpack.c.l.b16 %v3214
        %v3418 = vunpack.c.l.b16 %v3215
        %v3419 = vunpack.c.l.b16 %v3216
        %v3420 = vunpack.c.l.b16 %v3217
        %v3421 = vunpack.c.l.b16 %v3218
        %v3422 = vunpack.c.l.b16 %v3219
        %v3423 = vunpack.c.l.b16 %v3220
        %v3424 = vunpack.c.l.b16 %v3221
        %v3425 = vunpack.c.l.b16 %v3222
        %v3426 = vunpack.c.l.b16 %v3223
        %v3427 = vunpack.c.l.b16 %v3224
        %v3428 = vunpack.c.l.b16 %v3225
        %v3429 = vunpack.c.l.b16 %v3226
        %v3430 = vunpack.c.l.b16 %v3227
        %v3431 = vunpack.c.l.b16 %v3228
        %v3432 = vunpack.c.l.b16 %v3229
        %v3433 = vunpack.c.l.b16 %v3230
        %v3434 = vunpack.c.l.b16 %v3231
        %v3435 = vunpack.c.l.b16 %v3232
        %v3436 = vunpack.c.l.b16 %v3233
        %v3437 = vunpack.c.l.b16 %v3234
        %v3438 = vunpack.c.l.b16 %v3235
        %v3439 = vunpack.c.l.b16 %v3236
        %v3440 = vunpack.c.l.b16 %v3237
        %v3441 = vunpack.c.l.b16 %v3238
        %v3442 = vunpack.c.l.b16 %v3239
        %v3443 = vunpack.c.l.b16 %v3240
        %v3444 = vunpack.c.l.b16 %v3241
        %v3445 = vunpack.c.l.b16 %v3242
        %v3446 = vunpack.c.l.b16 %v3243
        %v3447 = vunpack.c.l.b16 %v3244
        %v3448 = vunpack.c.l.b16 %v3245
        %v3449 = vunpack.c.l.b16 %v3246
        %v3450 = vunpack.c.l.b16 %v3247
        %v3451 = vunpack.c.l.b16 %v3248
        %v3452 = vunpack.c.l.b16 %v3249
        %v3453 = vunpack.c.l.b16 %v3250
        %v3454 = vunpack.c.l.b16 %v3251
        %v3455 = vunpack.c.l.b16 %v3252
        %v3456 = vunpack.c.l.b16 %v3253
        %v3457 = vunpack.c.l.b16 %v3254
        %v3458 = vunpack.c.l.b16 %v3255
        %v3459 = vunpack.c.l.b16 %v3256
        %v3460 = vunpack.c.l.b16 %v3257
        %v3461 = vunpack.c.l.b16 %v3258
        %v3462 = vunpack.c.l.b16 %v3259
        %v3463 = vunpack.c.l.b16 %v3260
        %v3464 = vunpack.c.l.b16 %v3261
        %v3465 = vunpack.c.l.b16 %v3262
        %v3466 = vunpack.c.l.b16 %v3263
        %v3467 = vunpack.c.l.b16 %v3264
        %v3468 = vunpack.c.l.b16 %v3265
        %v3469 = vunpack.c.l.b16 %v3266
        %v3470 = vunpack.c.l.b16 %v3267
        %v3471 = vunpack.c.l.b16 %v3268
        %v3472 = vunpack.c.l.b16 %v3269
        %v3473 = vunpack.c.l.b16 %v3270
        %v3474 = vunpack.c.l.b16 %v3271
        %v3475 = vunpack.c.l.b16 %v3272
        %v3476 = vunpack.c.l.b16 %v3273
        %v3477 = vunpack.c.l.b16 %v3274
        %v3478 = vunpack.c.l.b16 %v3275
        %v3479 = vunpack.c.l.b16 %v3276
        %v3480 = vunpack.c.l.b16 %v3277
        %v3481 = vunpack.c.l.b16 %v3278
        %v3482 = vunpack.c.l.b16 %v3279
        %v3483 = vunpack.c.l.b16 %v3280
        %v3484 = vunpack.c.l.b16 %v3281
        %v3485 = vunpack.c.l.b16 %v3282
        %v3486 = vunpack.c.l.b16 %v3283
        %v3487 = vunpack.c.l.b16 %v3284
        %v3488 = vunpack.c.l.b16 %v3285
        %v3489 = vunpack.c.l.b16 %v3286
        %v3490 = vunpack.c.l.b16 %v3287
        %v3491 = vunpack.c.l.b16 %v3288
        %v3492 = vunpack.c.l.b16 %v3289
        %v3493 = vunpack.c.l.b16 %v3290
        %v3494 = vunpack.c.l.b16 %v3291
        %v3495 = vunpack.c.l.b16 %v3292
        %v3496 = vunpack.c.l.b16 %v3293
        %v3497 = vunpack.c.l.b16 %v3294
        %v3498 = vunpack.c.l.b16 %v3295
        %v3499 = vunpack.c.l.b16 %v3296
        %v3500 = vunpack.c.l.b16 %v3297
        %v3501 = vpack.c.b16 %v3402, %v3401
        %v3502 = vpack.c.b16 %v3404, %v3403
        %v3503 = vpack.c.b16 %v3406, %v3405
        %v3504 = vpack.c.b16 %v3408, %v3407
        %v3505 = vpack.c.b16 %v3410, %v3409
        %v3506 = vpack.c.b16 %v3412, %v3411
        %v3507 = vpack.c.b16 %v3414, %v3413
        %v3508 = vpack.c.b16 %v3416, %v3415
        %v3509 = vpack.c.b16 %v3418, %v3417
        %v3510 = vpack.c.b16 %v3420, %v3419
        %v3511 = vpack.c.b16 %v3422, %v3421
        %v3512 = vpack.c.b16 %v3424, %v3423
        %v3513 = vpack.c.b16 %v3426, %v3425
        %v3514 = vpack.c.b16 %v3428, %v3427
        %v3515 = vpack.c.b16 %v3430, %v3429
        %v3516 = vpack.c.b16 %v3432, %v3431
        %v3517 = vpack.c.b16 %v3434, %v3433
        %v3518 = vpack.c.b16 %v3436, %v3435
        %v3519 = vpack.c.b16 %v3438, %v3437
        %v3520 = vpack.c.b16 %v3440, %v3439
        %v3521 = vpack.c.b16 %v3442, %v3441
        %v3522 = vpack.c.b16 %v3444, %v3443
        %v3523 = vpack.c.b16 %v3446, %v3445
        %v3524 = vpack.c.b16 %v3448, %v3447
        %v3525 = vpack.c.b16 %v3450, %v3449
        %v3526 = vpack.c.b16 %v3452, %v3451
        %v3527 = vpack.c.b16 %v3454, %v3453
        %v3528 = vpack.c.b16 %v3456, %v3455
        %v3529 = vpack.c.b16 %v3458, %v3457
        %v3530 = vpack.c.b16 %v3460, %v3459
        %v3531 = vpack.c.b16 %v3462, %v3461
        %v3532 = vpack.c.b16 %v3464, %v3463
        %v3533 = vpack.c.b16 %v3466, %v3465
        %v3534 = vpack.c.b16 %v3468, %v3467
        %v3535 = vpack.c.b16 %v3470, %v3469
        %v3536 = vpack.c.b16 %v3472, %v3471
        %v3537 = vpack.c.b16 %v3474, %v3473
        %v3538 = vpack.c.b16 %v3476, %v3475
        %v3539 = vpack.c.b16 %v3478, %v3477
        %v3540 = vpack.c.b16 %v3480, %v3479
        %v3541 = vpack.c.b16 %v3482, %v3481
        %v3542 = vpack.c.b16 %v3484, %v3483
        %v3543 = vpack.c.b16 %v3486, %v3485
        %v3544 = vpack.c.b16 %v3488, %v3487
        %v3545 = vpack.c.b16 %v3490, %v3489
        %v3546 = vpack.c.b16 %v3492, %v3491
        %v3547 = vpack.c.b16 %v3494, %v3493
        %v3548 = vpack.c.b16 %v3496, %v3495
        %v3549 = vpack.c.b16 %v3498, %v3497
        %v3550 = vpack.c.b16 %v3500, %v3499
        %3601 = vmatpush.bf16.msra.mxu0 %v3508
        %3602 = vmatpush.bf16.msra.mxu0 %v3507
        %3603 = vmatpush.bf16.msra.mxu0 %v3506
        %3604 = vmatpush.bf16.msra.mxu0 %v3505
        %3605 = vmatpush.bf16.msra.mxu0 %v3504
        %3606 = vmatpush.bf16.msra.mxu0 %v3503
        %3607 = vmatpush.bf16.msra.mxu0 %v3502
        %3608 = vmatpush.bf16.msra.mxu0 %v3501
        %3609 = vmatmul.bf16.gmra.mxu0 %v1666
        %v3610 = vpop.f32.mrf.mxu0
        %v3611 = vadd.f32 %v3299, %v3610
        %v3612 = vpop.f32.mrf.mxu0
        %v3613 = vadd.f32 %v3300, %v3612
        %3614 = vdwg.mxu0
        %3615 = vmatpush.bf16.msra.mxu0 %v3516
        %3616 = vmatpush.bf16.msra.mxu0 %v3515
        %3617 = vmatpush.bf16.msra.mxu0 %v3514
        %3618 = vmatpush.bf16.msra.mxu0 %v3513
        %3619 = vmatpush.bf16.msra.mxu0 %v3512
        %3620 = vmatpush.bf16.msra.mxu0 %v3511
        %3621 = vmatpush.bf16.msra.mxu0 %v3510
        %3622 = vmatpush.bf16.msra.mxu0 %v3509
        %3623 = vmatmul.bf16.gmra.mxu0 %v1667
        %v3624 = vpop.f32.mrf.mxu0
        %v3625 = vadd.f32 %v3611, %v3624
        %v3626 = vpop.f32.mrf.mxu0
        %v3627 = vadd.f32 %v3613, %v3626
        %3628 = vdwg.mxu0
        %3629 = vmatpush.bf16.msra.mxu0 %v3524
        %3630 = vmatpush.bf16.msra.mxu0 %v3523
        %3631 = vmatpush.bf16.msra.mxu0 %v3522
        %3632 = vmatpush.bf16.msra.mxu0 %v3521
        %3633 = vmatpush.bf16.msra.mxu0 %v3520
        %3634 = vmatpush.bf16.msra.mxu0 %v3519
        %3635 = vmatpush.bf16.msra.mxu0 %v3518
        %3636 = vmatpush.bf16.msra.mxu0 %v3517
        %3637 = vmatmul.bf16.gmra.mxu0 %v1668
        %v3638 = vpop.f32.mrf.mxu0
        %v3639 = vadd.f32 %v3625, %v3638
        %v3640 = vpop.f32.mrf.mxu0
        %v3641 = vadd.f32 %v3627, %v3640
        %3642 = vdwg.mxu0
        %3643 = vmatpush.bf16.msra.mxu0 %v3532
        %3644 = vmatpush.bf16.msra.mxu0 %v3531
        %3645 = vmatpush.bf16.msra.mxu0 %v3530
        %3646 = vmatpush.bf16.msra.mxu0 %v3529
        %3647 = vmatpush.bf16.msra.mxu0 %v3528
        %3648 = vmatpush.bf16.msra.mxu0 %v3527
        %3649 = vmatpush.bf16.msra.mxu0 %v3526
        %3650 = vmatpush.bf16.msra.mxu0 %v3525
        %3651 = vmatmul.bf16.gmra.mxu0 %v1669
        %v3652 = vpop.f32.mrf.mxu0
        %v3653 = vadd.f32 %v3639, %v3652
        %v3654 = vpop.f32.mrf.mxu0
        %v3655 = vadd.f32 %v3641, %v3654
        %3656 = vdwg.mxu0
        %3657 = vmatpush.bf16.msra.mxu0 %v3540
        %3658 = vmatpush.bf16.msra.mxu0 %v3539
        %3659 = vmatpush.bf16.msra.mxu0 %v3538
        %3660 = vmatpush.bf16.msra.mxu0 %v3537
        %3661 = vmatpush.bf16.msra.mxu0 %v3536
        %3662 = vmatpush.bf16.msra.mxu0 %v3535
        %3663 = vmatpush.bf16.msra.mxu0 %v3534
        %3664 = vmatpush.bf16.msra.mxu0 %v3533
        %3665 = vmatmul.bf16.gmra.mxu0 %v1670
        %v3666 = vpop.f32.mrf.mxu0
        %v3667 = vadd.f32 %v3653, %v3666
        %v3668 = vpop.f32.mrf.mxu0
        %v3669 = vadd.f32 %v3655, %v3668
        %3670 = vdwg.mxu0
        %3671 = vmatpush.bf16.msra.mxu0 %v3548
        %3672 = vmatpush.bf16.msra.mxu0 %v3547
        %3673 = vmatpush.bf16.msra.mxu0 %v3546
        %3674 = vmatpush.bf16.msra.mxu0 %v3545
        %3675 = vmatpush.bf16.msra.mxu0 %v3544
        %3676 = vmatpush.bf16.msra.mxu0 %v3543
        %3677 = vmatpush.bf16.msra.mxu0 %v3542
        %3678 = vmatpush.bf16.msra.mxu0 %v3541
        %3679 = vmatmul.bf16.gmra.mxu0 %v1671
        %v3680 = vpop.f32.mrf.mxu0
        %v3681 = vadd.f32 %v3667, %v3680
        %v3682 = vpop.f32.mrf.mxu0
        %v3683 = vadd.f32 %v3669, %v3682
        %3684 = vdwg.mxu0
        %3685 = vmatpush.bf16.msra.mxu0 0
        %3686 = vmatpush.bf16.msra.mxu0 0
        %3687 = vmatpush.bf16.msra.mxu0 0
        %3688 = vmatpush.bf16.msra.mxu0 0
        %3689 = vmatpush.bf16.msra.mxu0 0
        %3690 = vmatpush.bf16.msra.mxu0 0
        %3691 = vmatpush.bf16.msra.mxu0 %v3550
        %3692 = vmatpush.bf16.msra.mxu0 %v3549
        %3693 = vmatmul.bf16.gmra.mxu0 %v1981
        %v3694 = vpop.f32.mrf.mxu0
        %v3695 = vadd.f32 %v3681, %v3694
        %v3696 = vpop.f32.mrf.mxu0
        %v3697 = vadd.f32 %v3683, %v3696
        %3698 = vdwg.mxu0
        %v3699 = vtanh.pop %v3695
        %v3700 = vtanh.pop %v3697
        %v3701 = vld [vmem:[#allocation6] sm:$0xff]
        %v3702 = vld [vmem:[#allocation6 + $0x8] sm:$0xff]
        %v3703 = vmul.f32 %v2641, %v3701
        %v3704 = vmul.f32 %v2656, %v3702
        %v3705 = vmul.f32 %v3181, %v3699
        %v3706 = vmul.f32 %v3196, %v3700
        %v3707 = vadd.f32 %v3703, %v3705
        %v3708 = vadd.f32 %v3704, %v3706
        %3709 = vst.msk [vmem:[#allocation6] sm:$0xff] %vm1979, %v3707
        %3710 = vst.msk [vmem:[#allocation6 + $0x8] sm:$0xff] %vm1979, %v3708
        %v3711 = vld [vmem:[#allocation4] sm:$0xff]
        %v3712 = vld [vmem:[#allocation4 + $0x8] sm:$0xff]
        %v3713 = vld [vmem:[#allocation4 + $0x10] sm:$0xff]
        %v3714 = vld [vmem:[#allocation4 + $0x18] sm:$0xf]
        %v3715 = vld [vmem:[#allocation4 + $0x1c] sm:$0xff]
        %v3716 = vld [vmem:[#allocation4 + $0x24] sm:$0xff]
        %v3717 = vld [vmem:[#allocation4 + $0x2c] sm:$0xff]
        %v3718 = vld [vmem:[#allocation4 + $0x34] sm:$0xf]
        %s3719 = scalar_lea.vmem %s3, 800
        %v3720 = vld [vmem:[%s3719] sm:$0xf]
        %v3721 = vld [vmem:[%s3719 + $0x4] sm:$0xf]
        %v3722 = vld [vmem:[%s3719 + $0x8] sm:$0xf]
        %v3723 = vld [vmem:[%s3719 + $0xc] sm:$0xf]
        %v3724 = vld [vmem:[%s3719 + $0x10] sm:$0xf]
        %v3725 = vld [vmem:[%s3719 + $0x14] sm:$0xf]
        %v3726 = vld [vmem:[%s3719 + $0x18] sm:$0xf]
        %v3727 = vld [vmem:[%s3719 + $0x1c] sm:$0xf]
        %v3728 = vld [vmem:[%s3719 + $0x20] sm:$0xf]
        %v3729 = vld [vmem:[%s3719 + $0x24] sm:$0xf]
        %v3730 = vld [vmem:[%s3719 + $0x28] sm:$0xf]
        %v3731 = vld [vmem:[%s3719 + $0x2c] sm:$0xf]
        %v3732 = vld [vmem:[%s3719 + $0x30] sm:$0xf]
        %v3733 = vld [vmem:[%s3719 + $0x34] sm:$0xf]
        %v3734 = vld [vmem:[%s3719 + $0x38] sm:$0xf]
        %v3735 = vld [vmem:[%s3719 + $0x3c] sm:$0xf]
        %v3736 = vld [vmem:[%s3719 + $0x40] sm:$0xf]
        %v3737 = vld [vmem:[%s3719 + $0x44] sm:$0xf]
        %v3738 = vld [vmem:[%s3719 + $0x48] sm:$0xf]
        %v3739 = vld [vmem:[%s3719 + $0x4c] sm:$0xf]
        %v3740 = vld [vmem:[%s3719 + $0x50] sm:$0xf]
        %v3741 = vld [vmem:[%s3719 + $0x54] sm:$0xf]
        %v3742 = vld [vmem:[%s3719 + $0x58] sm:$0xf]
        %v3743 = vld [vmem:[%s3719 + $0x5c] sm:$0xf]
        %v3744 = vld [vmem:[%s3719 + $0x60] sm:$0xf]
        %v3745 = vld [vmem:[%s3719 + $0x64] sm:$0xf]
        %v3746 = vld [vmem:[%s3719 + $0x68] sm:$0xf]
        %v3747 = vld [vmem:[%s3719 + $0x6c] sm:$0xf]
        %v3748 = vld [vmem:[%s3719 + $0x70] sm:$0xf]
        %v3749 = vld [vmem:[%s3719 + $0x74] sm:$0xf]
        %v3750 = vld [vmem:[%s3719 + $0x78] sm:$0xf]
        %v3751 = vld [vmem:[%s3719 + $0x7c] sm:$0xf]
        %v3752 = vld [vmem:[%s3719 + $0x80] sm:$0xf]
        %v3753 = vld [vmem:[%s3719 + $0x84] sm:$0xf]
        %v3754 = vld [vmem:[%s3719 + $0x88] sm:$0xf]
        %v3755 = vld [vmem:[%s3719 + $0x8c] sm:$0xf]
        %v3756 = vld [vmem:[%s3719 + $0x90] sm:$0xf]
        %v3757 = vld [vmem:[%s3719 + $0x94] sm:$0xf]
        %v3758 = vld [vmem:[%s3719 + $0x98] sm:$0xf]
        %v3759 = vld [vmem:[%s3719 + $0x9c] sm:$0xf]
        %v3760 = vld [vmem:[%s3719 + $0xa0] sm:$0xf]
        %v3761 = vld [vmem:[%s3719 + $0xa4] sm:$0xf]
        %v3762 = vld [vmem:[%s3719 + $0xa8] sm:$0xf]
        %v3763 = vld [vmem:[%s3719 + $0xac] sm:$0xf]
        %v3764 = vld [vmem:[%s3719 + $0xb0] sm:$0xf]
        %v3765 = vld [vmem:[%s3719 + $0xb4] sm:$0xf]
        %v3766 = vld [vmem:[%s3719 + $0xb8] sm:$0xf]
        %v3767 = vld [vmem:[%s3719 + $0xbc] sm:$0xf]
        %v3768 = vld [vmem:[%s3719 + $0xc0] sm:$0xf]
        %v3769 = vld [vmem:[%s3719 + $0xc4] sm:$0xf]
        %v3770 = vld [vmem:[%s3719 + $0xc8] sm:$0xf]
        %v3771 = vld [vmem:[%s3719 + $0xcc] sm:$0xf]
        %v3772 = vld [vmem:[%s3719 + $0xd0] sm:$0xf]
        %v3773 = vld [vmem:[%s3719 + $0xd4] sm:$0xf]
        %v3774 = vld [vmem:[%s3719 + $0xd8] sm:$0xf]
        %v3775 = vld [vmem:[%s3719 + $0xdc] sm:$0xf]
        %v3776 = vld [vmem:[%s3719 + $0xe0] sm:$0xf]
        %v3777 = vld [vmem:[%s3719 + $0xe4] sm:$0xf]
        %v3778 = vld [vmem:[%s3719 + $0xe8] sm:$0xf]
        %v3779 = vld [vmem:[%s3719 + $0xec] sm:$0xf]
        %v3780 = vld [vmem:[%s3719 + $0xf0] sm:$0xf]
        %v3781 = vld [vmem:[%s3719 + $0xf4] sm:$0xf]
        %v3782 = vld [vmem:[%s3719 + $0xf8] sm:$0xf]
        %v3783 = vld [vmem:[%s3719 + $0xfc] sm:$0xf]
        %v3784 = vld [vmem:[%s3719 + $0x100] sm:$0xf]
        %v3785 = vld [vmem:[%s3719 + $0x104] sm:$0xf]
        %v3786 = vld [vmem:[%s3719 + $0x108] sm:$0xf]
        %v3787 = vld [vmem:[%s3719 + $0x10c] sm:$0xf]
        %v3788 = vld [vmem:[%s3719 + $0x110] sm:$0xf]
        %v3789 = vld [vmem:[%s3719 + $0x114] sm:$0xf]
        %v3790 = vld [vmem:[%s3719 + $0x118] sm:$0xf]
        %v3791 = vld [vmem:[%s3719 + $0x11c] sm:$0xf]
        %v3792 = vld [vmem:[%s3719 + $0x120] sm:$0xf]
        %v3793 = vld [vmem:[%s3719 + $0x124] sm:$0xf]
        %v3794 = vld [vmem:[%s3719 + $0x128] sm:$0xf]
        %v3795 = vld [vmem:[%s3719 + $0x12c] sm:$0xf]
        %v3796 = vld [vmem:[%s3719 + $0x130] sm:$0xf]
        %v3797 = vld [vmem:[%s3719 + $0x134] sm:$0xf]
        %v3798 = vld [vmem:[%s3719 + $0x138] sm:$0xf]
        %v3799 = vld [vmem:[%s3719 + $0x13c] sm:$0xf]
        %v3800 = vld [vmem:[%s3719 + $0x140] sm:$0xf]
        %v3801 = vld [vmem:[%s3719 + $0x144] sm:$0xf]
        %v3802 = vld [vmem:[%s3719 + $0x148] sm:$0xf]
        %v3803 = vld [vmem:[%s3719 + $0x14c] sm:$0xf]
        %v3804 = vld [vmem:[%s3719 + $0x150] sm:$0xf]
        %v3805 = vld [vmem:[%s3719 + $0x154] sm:$0xf]
        %v3806 = vld [vmem:[%s3719 + $0x158] sm:$0xf]
        %v3807 = vld [vmem:[%s3719 + $0x15c] sm:$0xf]
        %v3808 = vld [vmem:[%s3719 + $0x160] sm:$0xf]
        %v3809 = vld [vmem:[%s3719 + $0x164] sm:$0xf]
        %v3810 = vld [vmem:[%s3719 + $0x168] sm:$0xf]
        %v3811 = vld [vmem:[%s3719 + $0x16c] sm:$0xf]
        %v3812 = vld [vmem:[%s3719 + $0x170] sm:$0xf]
        %v3813 = vld [vmem:[%s3719 + $0x174] sm:$0xf]
        %v3814 = vld [vmem:[%s3719 + $0x178] sm:$0xf]
        %v3815 = vld [vmem:[%s3719 + $0x17c] sm:$0xf]
        %v3816 = vld [vmem:[%s3719 + $0x180] sm:$0xf]
        %v3817 = vld [vmem:[%s3719 + $0x184] sm:$0xf]
        %v3818 = vld [vmem:[%s3719 + $0x188] sm:$0xf]
        %v3819 = vld [vmem:[%s3719 + $0x18c] sm:$0xf]
        %s3820 = scalar_lea.vmem %s480, 32
        %v3821 = vld [vmem:[%s3820] sm:$0xff]
        %v3822 = vld [vmem:[%s3820 + $0x8] sm:$0xff]
        %v3831 = vunpack.c.l.b16 %v3711
        %v3832 = vunpack.c.h.b16 %v3711
        %v3833 = vunpack.c.l.b16 %v3712
        %v3834 = vunpack.c.h.b16 %v3712
        %v3835 = vunpack.c.l.b16 %v3713
        %v3836 = vunpack.c.h.b16 %v3713
        %v3837 = vunpack.c.l.b16 %v3714
        %v3838 = vunpack.c.l.b16 %v3715
        %v3839 = vunpack.c.h.b16 %v3715
        %v3840 = vunpack.c.l.b16 %v3716
        %v3841 = vunpack.c.h.b16 %v3716
        %v3842 = vunpack.c.l.b16 %v3717
        %v3843 = vunpack.c.h.b16 %v3717
        %v3844 = vunpack.c.l.b16 %v3718
        %v3845 = vpack.c.b16 %v3838, %v3831
        %v3846 = vpack.c.b16 %v3839, %v3832
        %v3847 = vpack.c.b16 %v3840, %v3833
        %v3848 = vpack.c.b16 %v3841, %v3834
        %v3849 = vpack.c.b16 %v3842, %v3835
        %v3850 = vpack.c.b16 %v3843, %v3836
        %v3851 = vpack.c.b16 %v3844, %v3837
        %v3958 = vunpack.c.l.b16 %v3720
        %v3959 = vunpack.c.l.b16 %v3721
        %v3960 = vunpack.c.l.b16 %v3722
        %v3961 = vunpack.c.l.b16 %v3723
        %v3962 = vunpack.c.l.b16 %v3724
        %v3963 = vunpack.c.l.b16 %v3725
        %v3964 = vunpack.c.l.b16 %v3726
        %v3965 = vunpack.c.l.b16 %v3727
        %v3966 = vunpack.c.l.b16 %v3728
        %v3967 = vunpack.c.l.b16 %v3729
        %v3968 = vunpack.c.l.b16 %v3730
        %v3969 = vunpack.c.l.b16 %v3731
        %v3970 = vunpack.c.l.b16 %v3732
        %v3971 = vunpack.c.l.b16 %v3733
        %v3972 = vunpack.c.l.b16 %v3734
        %v3973 = vunpack.c.l.b16 %v3735
        %v3974 = vunpack.c.l.b16 %v3736
        %v3975 = vunpack.c.l.b16 %v3737
        %v3976 = vunpack.c.l.b16 %v3738
        %v3977 = vunpack.c.l.b16 %v3739
        %v3978 = vunpack.c.l.b16 %v3740
        %v3979 = vunpack.c.l.b16 %v3741
        %v3980 = vunpack.c.l.b16 %v3742
        %v3981 = vunpack.c.l.b16 %v3743
        %v3982 = vunpack.c.l.b16 %v3744
        %v3983 = vunpack.c.l.b16 %v3745
        %v3984 = vunpack.c.l.b16 %v3746
        %v3985 = vunpack.c.l.b16 %v3747
        %v3986 = vunpack.c.l.b16 %v3748
        %v3987 = vunpack.c.l.b16 %v3749
        %v3988 = vunpack.c.l.b16 %v3750
        %v3989 = vunpack.c.l.b16 %v3751
        %v3990 = vunpack.c.l.b16 %v3752
        %v3991 = vunpack.c.l.b16 %v3753
        %v3992 = vunpack.c.l.b16 %v3754
        %v3993 = vunpack.c.l.b16 %v3755
        %v3994 = vunpack.c.l.b16 %v3756
        %v3995 = vunpack.c.l.b16 %v3757
        %v3996 = vunpack.c.l.b16 %v3758
        %v3997 = vunpack.c.l.b16 %v3759
        %v3998 = vunpack.c.l.b16 %v3760
        %v3999 = vunpack.c.l.b16 %v3761
        %v4000 = vunpack.c.l.b16 %v3762
        %v4001 = vunpack.c.l.b16 %v3763
        %v4002 = vunpack.c.l.b16 %v3764
        %v4003 = vunpack.c.l.b16 %v3765
        %v4004 = vunpack.c.l.b16 %v3766
        %v4005 = vunpack.c.l.b16 %v3767
        %v4006 = vunpack.c.l.b16 %v3768
        %v4007 = vunpack.c.l.b16 %v3769
        %v4008 = vunpack.c.l.b16 %v3770
        %v4009 = vunpack.c.l.b16 %v3771
        %v4010 = vunpack.c.l.b16 %v3772
        %v4011 = vunpack.c.l.b16 %v3773
        %v4012 = vunpack.c.l.b16 %v3774
        %v4013 = vunpack.c.l.b16 %v3775
        %v4014 = vunpack.c.l.b16 %v3776
        %v4015 = vunpack.c.l.b16 %v3777
        %v4016 = vunpack.c.l.b16 %v3778
        %v4017 = vunpack.c.l.b16 %v3779
        %v4018 = vunpack.c.l.b16 %v3780
        %v4019 = vunpack.c.l.b16 %v3781
        %v4020 = vunpack.c.l.b16 %v3782
        %v4021 = vunpack.c.l.b16 %v3783
        %v4022 = vunpack.c.l.b16 %v3784
        %v4023 = vunpack.c.l.b16 %v3785
        %v4024 = vunpack.c.l.b16 %v3786
        %v4025 = vunpack.c.l.b16 %v3787
        %v4026 = vunpack.c.l.b16 %v3788
        %v4027 = vunpack.c.l.b16 %v3789
        %v4028 = vunpack.c.l.b16 %v3790
        %v4029 = vunpack.c.l.b16 %v3791
        %v4030 = vunpack.c.l.b16 %v3792
        %v4031 = vunpack.c.l.b16 %v3793
        %v4032 = vunpack.c.l.b16 %v3794
        %v4033 = vunpack.c.l.b16 %v3795
        %v4034 = vunpack.c.l.b16 %v3796
        %v4035 = vunpack.c.l.b16 %v3797
        %v4036 = vunpack.c.l.b16 %v3798
        %v4037 = vunpack.c.l.b16 %v3799
        %v4038 = vunpack.c.l.b16 %v3800
        %v4039 = vunpack.c.l.b16 %v3801
        %v4040 = vunpack.c.l.b16 %v3802
        %v4041 = vunpack.c.l.b16 %v3803
        %v4042 = vunpack.c.l.b16 %v3804
        %v4043 = vunpack.c.l.b16 %v3805
        %v4044 = vunpack.c.l.b16 %v3806
        %v4045 = vunpack.c.l.b16 %v3807
        %v4046 = vunpack.c.l.b16 %v3808
        %v4047 = vunpack.c.l.b16 %v3809
        %v4048 = vunpack.c.l.b16 %v3810
        %v4049 = vunpack.c.l.b16 %v3811
        %v4050 = vunpack.c.l.b16 %v3812
        %v4051 = vunpack.c.l.b16 %v3813
        %v4052 = vunpack.c.l.b16 %v3814
        %v4053 = vunpack.c.l.b16 %v3815
        %v4054 = vunpack.c.l.b16 %v3816
        %v4055 = vunpack.c.l.b16 %v3817
        %v4056 = vunpack.c.l.b16 %v3818
        %v4057 = vunpack.c.l.b16 %v3819
        %v4058 = vpack.c.b16 %v3959, %v3958
        %v4059 = vpack.c.b16 %v3961, %v3960
        %v4060 = vpack.c.b16 %v3963, %v3962
        %v4061 = vpack.c.b16 %v3965, %v3964
        %v4062 = vpack.c.b16 %v3967, %v3966
        %v4063 = vpack.c.b16 %v3969, %v3968
        %v4064 = vpack.c.b16 %v3971, %v3970
        %v4065 = vpack.c.b16 %v3973, %v3972
        %v4066 = vpack.c.b16 %v3975, %v3974
        %v4067 = vpack.c.b16 %v3977, %v3976
        %v4068 = vpack.c.b16 %v3979, %v3978
        %v4069 = vpack.c.b16 %v3981, %v3980
        %v4070 = vpack.c.b16 %v3983, %v3982
        %v4071 = vpack.c.b16 %v3985, %v3984
        %v4072 = vpack.c.b16 %v3987, %v3986
        %v4073 = vpack.c.b16 %v3989, %v3988
        %v4074 = vpack.c.b16 %v3991, %v3990
        %v4075 = vpack.c.b16 %v3993, %v3992
        %v4076 = vpack.c.b16 %v3995, %v3994
        %v4077 = vpack.c.b16 %v3997, %v3996
        %v4078 = vpack.c.b16 %v3999, %v3998
        %v4079 = vpack.c.b16 %v4001, %v4000
        %v4080 = vpack.c.b16 %v4003, %v4002
        %v4081 = vpack.c.b16 %v4005, %v4004
        %v4082 = vpack.c.b16 %v4007, %v4006
        %v4083 = vpack.c.b16 %v4009, %v4008
        %v4084 = vpack.c.b16 %v4011, %v4010
        %v4085 = vpack.c.b16 %v4013, %v4012
        %v4086 = vpack.c.b16 %v4015, %v4014
        %v4087 = vpack.c.b16 %v4017, %v4016
        %v4088 = vpack.c.b16 %v4019, %v4018
        %v4089 = vpack.c.b16 %v4021, %v4020
        %v4090 = vpack.c.b16 %v4023, %v4022
        %v4091 = vpack.c.b16 %v4025, %v4024
        %v4092 = vpack.c.b16 %v4027, %v4026
        %v4093 = vpack.c.b16 %v4029, %v4028
        %v4094 = vpack.c.b16 %v4031, %v4030
        %v4095 = vpack.c.b16 %v4033, %v4032
        %v4096 = vpack.c.b16 %v4035, %v4034
        %v4097 = vpack.c.b16 %v4037, %v4036
        %v4098 = vpack.c.b16 %v4039, %v4038
        %v4099 = vpack.c.b16 %v4041, %v4040
        %v4100 = vpack.c.b16 %v4043, %v4042
        %v4101 = vpack.c.b16 %v4045, %v4044
        %v4102 = vpack.c.b16 %v4047, %v4046
        %v4103 = vpack.c.b16 %v4049, %v4048
        %v4104 = vpack.c.b16 %v4051, %v4050
        %v4105 = vpack.c.b16 %v4053, %v4052
        %v4106 = vpack.c.b16 %v4055, %v4054
        %v4107 = vpack.c.b16 %v4057, %v4056
        %v4159 = vsel %vm1979, %v3851, 0
        %4161 = vmatpush.bf16.msra.mxu0 %v4065
        %4162 = vmatpush.bf16.msra.mxu0 %v4064
        %4163 = vmatpush.bf16.msra.mxu0 %v4063
        %4164 = vmatpush.bf16.msra.mxu0 %v4062
        %4165 = vmatpush.bf16.msra.mxu0 %v4061
        %4166 = vmatpush.bf16.msra.mxu0 %v4060
        %4167 = vmatpush.bf16.msra.mxu0 %v4059
        %4168 = vmatpush.bf16.msra.mxu0 %v4058
        %4169 = vmatmul.bf16.gmra.mxu0 %v3845
        %v4170 = vpop.f32.mrf.mxu0
        %v4171 = vadd.f32 %v3821, %v4170
        %v4172 = vpop.f32.mrf.mxu0
        %v4173 = vadd.f32 %v3822, %v4172
        %4174 = vdwg.mxu0
        %4175 = vmatpush.bf16.msra.mxu0 %v4073
        %4176 = vmatpush.bf16.msra.mxu0 %v4072
        %4177 = vmatpush.bf16.msra.mxu0 %v4071
        %4178 = vmatpush.bf16.msra.mxu0 %v4070
        %4179 = vmatpush.bf16.msra.mxu0 %v4069
        %4180 = vmatpush.bf16.msra.mxu0 %v4068
        %4181 = vmatpush.bf16.msra.mxu0 %v4067
        %4182 = vmatpush.bf16.msra.mxu0 %v4066
        %4183 = vmatmul.bf16.gmra.mxu0 %v3846
        %v4184 = vpop.f32.mrf.mxu0
        %v4185 = vadd.f32 %v4171, %v4184
        %v4186 = vpop.f32.mrf.mxu0
        %v4187 = vadd.f32 %v4173, %v4186
        %4188 = vdwg.mxu0
        %4189 = vmatpush.bf16.msra.mxu0 %v4081
        %4190 = vmatpush.bf16.msra.mxu0 %v4080
        %4191 = vmatpush.bf16.msra.mxu0 %v4079
        %4192 = vmatpush.bf16.msra.mxu0 %v4078
        %4193 = vmatpush.bf16.msra.mxu0 %v4077
        %4194 = vmatpush.bf16.msra.mxu0 %v4076
        %4195 = vmatpush.bf16.msra.mxu0 %v4075
        %4196 = vmatpush.bf16.msra.mxu0 %v4074
        %4197 = vmatmul.bf16.gmra.mxu0 %v3847
        %v4198 = vpop.f32.mrf.mxu0
        %v4199 = vadd.f32 %v4185, %v4198
        %v4200 = vpop.f32.mrf.mxu0
        %v4201 = vadd.f32 %v4187, %v4200
        %4202 = vdwg.mxu0
        %4203 = vmatpush.bf16.msra.mxu0 %v4089
        %4204 = vmatpush.bf16.msra.mxu0 %v4088
        %4205 = vmatpush.bf16.msra.mxu0 %v4087
        %4206 = vmatpush.bf16.msra.mxu0 %v4086
        %4207 = vmatpush.bf16.msra.mxu0 %v4085
        %4208 = vmatpush.bf16.msra.mxu0 %v4084
        %4209 = vmatpush.bf16.msra.mxu0 %v4083
        %4210 = vmatpush.bf16.msra.mxu0 %v4082
        %4211 = vmatmul.bf16.gmra.mxu0 %v3848
        %v4212 = vpop.f32.mrf.mxu0
        %v4213 = vadd.f32 %v4199, %v4212
        %v4214 = vpop.f32.mrf.mxu0
        %v4215 = vadd.f32 %v4201, %v4214
        %4216 = vdwg.mxu0
        %4217 = vmatpush.bf16.msra.mxu0 %v4097
        %4218 = vmatpush.bf16.msra.mxu0 %v4096
        %4219 = vmatpush.bf16.msra.mxu0 %v4095
        %4220 = vmatpush.bf16.msra.mxu0 %v4094
        %4221 = vmatpush.bf16.msra.mxu0 %v4093
        %4222 = vmatpush.bf16.msra.mxu0 %v4092
        %4223 = vmatpush.bf16.msra.mxu0 %v4091
        %4224 = vmatpush.bf16.msra.mxu0 %v4090
        %4225 = vmatmul.bf16.gmra.mxu0 %v3849
        %v4226 = vpop.f32.mrf.mxu0
        %v4227 = vadd.f32 %v4213, %v4226
        %v4228 = vpop.f32.mrf.mxu0
        %v4229 = vadd.f32 %v4215, %v4228
        %4230 = vdwg.mxu0
        %4231 = vmatpush.bf16.msra.mxu0 %v4105
        %4232 = vmatpush.bf16.msra.mxu0 %v4104
        %4233 = vmatpush.bf16.msra.mxu0 %v4103
        %4234 = vmatpush.bf16.msra.mxu0 %v4102
        %4235 = vmatpush.bf16.msra.mxu0 %v4101
        %4236 = vmatpush.bf16.msra.mxu0 %v4100
        %4237 = vmatpush.bf16.msra.mxu0 %v4099
        %4238 = vmatpush.bf16.msra.mxu0 %v4098
        %4239 = vmatmul.bf16.gmra.mxu0 %v3850
        %v4240 = vpop.f32.mrf.mxu0
        %v4241 = vadd.f32 %v4227, %v4240
        %v4242 = vpop.f32.mrf.mxu0
        %v4243 = vadd.f32 %v4229, %v4242
        %4244 = vdwg.mxu0
        %4245 = vmatpush.bf16.msra.mxu0 0
        %4246 = vmatpush.bf16.msra.mxu0 0
        %4247 = vmatpush.bf16.msra.mxu0 0
        %4248 = vmatpush.bf16.msra.mxu0 0
        %4249 = vmatpush.bf16.msra.mxu0 0
        %4250 = vmatpush.bf16.msra.mxu0 0
        %4251 = vmatpush.bf16.msra.mxu0 %v4107
        %4252 = vmatpush.bf16.msra.mxu0 %v4106
        %4253 = vmatmul.bf16.gmra.mxu0 %v4159
        %v4254 = vpop.f32.mrf.mxu0
        %v4255 = vadd.f32 %v4241, %v4254
        %v4256 = vpop.f32.mrf.mxu0
        %v4257 = vadd.f32 %v4243, %v4256
        %4258 = vdwg.mxu0
        %v4259 = vxor.u32 %v4255, 2147483648
        %v4260 = vxor.u32 %v4257, 2147483648
        %v4261 = vmul.f32 %v4259, 1.442695
        %v4262 = vpow.pop %v4261
        %v4263 = vmul.f32 %v4260, 1.442695
        %v4264 = vpow.pop %v4263
        %v4265 = vadd.f32 %v4262, 1.0
        %v4266 = vadd.f32 %v4264, 1.0
        %v4267 = vrcp.pop %v4265
        %v4268 = vmul.f32 %v4265, %v4267
        %v4269 = vsub.f32 1.0, %v4268
        %v4270 = vmul.f32 %v4267, %v4269
        %v4271 = vadd.f32 %v4267, %v4270
        %vm4272 = vweird.f32 %v4265
        %vm4273 = vweird.f32 %v4267
        %vm4274 = vmor %vm4272, %vm4273
        %v4275 = vsel %vm4274, %v4267, %v4271
        %v4276 = vand.u32 2147483647, %v4265
        %vm4277 = vcmp.eq.f32.partialorder %v4276, 8.507059e+37
        %v4278 = vand.u32 %v4265, 2147483648
        %v4279 = vor.u32 1.1754944e-38, %v4278
        %v4280 = vsel %vm4277, %v4279, %v4275
        %v4281 = vmul.f32 1.0, %v4280
        %v4282 = vrcp.pop %v4266
        %v4283 = vmul.f32 %v4266, %v4282
        %v4284 = vsub.f32 1.0, %v4283
        %v4285 = vmul.f32 %v4282, %v4284
        %v4286 = vadd.f32 %v4282, %v4285
        %vm4287 = vweird.f32 %v4266
        %vm4288 = vweird.f32 %v4282
        %vm4289 = vmor %vm4287, %vm4288
        %v4290 = vsel %vm4289, %v4282, %v4286
        %v4291 = vand.u32 2147483647, %v4266
        %vm4292 = vcmp.eq.f32.partialorder %v4291, 8.507059e+37
        %v4293 = vand.u32 %v4266, 2147483648
        %v4294 = vor.u32 1.1754944e-38, %v4293
        %v4295 = vsel %vm4292, %v4294, %v4290
        %v4296 = vmul.f32 1.0, %v4295
        %v4297 = vtanh.pop %v3707
        %v4298 = vtanh.pop %v3708
        %v4299 = vmul.f32 %v4281, %v4297
        %v4300 = vmul.f32 %v4296, %v4298
        %v4301 = vpack.c.bf16 %v4299, %v4299
        %v4302 = vpack.c.bf16 %v4300, %v4300
        %4303 = vst.msk [vmem:[#allocation2 + $0x8] sm:$0xf] %vm615, %v4301
        %4304 = vst.msk [vmem:[#allocation2 + $0xc] sm:$0xf] %vm615, %v4302
        %v4305 = vld [vmem:[#allocation2] sm:$0x8]
        %v4306 = vld [vmem:[#allocation2 + $0x4] sm:$0xf]
        %v4307 = vld [vmem:[#allocation2 + $0x8] sm:$0x7]
        %v4308 = vsel %vm582, %v4305, 0
        %v4309 = vsel %vm589, %v4306, 0
        %v4310 = vsel %vm596, %v4307, 0
        %v4314 = vrot.slane %v4308, 7
        %v4315 = vrot.slane %v4314, 4
        %v4316 = vrot.slane %v4309, 7
        %v4317 = vsel %vm605, %v4315, %v4316
        %v4318 = vrot.slane %v4316, 4
        %v4319 = vrot.slane %v4310, 7
        %v4320 = vsel %vm605, %v4318, %v4319
        %4323 = vst.msk [vmem:[#allocation4] sm:$0xf] %vm615, %v4317
        %4324 = vst.msk [vmem:[#allocation4 + $0x1c] sm:$0xf] %vm615, %v4320
        %v4325 = vld [vmem:[#allocation2] sm:$0x8]
        %v4326 = vld [vmem:[#allocation2 + $0x4] sm:$0xf]
        %v4327 = vld [vmem:[#allocation2 + $0x8] sm:$0xf]
        %v4328 = vsel %vm657, %v4325, 0
        %v4329 = vsel %vm664, %v4326, 0
        %v4330 = vsel %vm671, %v4327, 0
        %v4332 = vshrl.u32 %v4328, 16
        %v4334 = vrot.slane %v4332, 7
        %v4335 = vrot.slane %v4334, 4
        %v4337 = vshrl.u32 %v4329, 16
        %v4339 = vrot.slane %v4337, 7
        %v4340 = vshll.u32 %v4329, 16
        %v4342 = vor.u32 %v4339, %v4340
        %v4343 = vsel %vm677, %v4335, %v4342
        %v4344 = vrot.slane %v4339, 4
        %v4346 = vshrl.u32 %v4330, 16
        %v4348 = vrot.slane %v4346, 7
        %v4349 = vshll.u32 %v4330, 16
        %v4351 = vor.u32 %v4348, %v4349
        %v4352 = vsel %vm677, %v4344, %v4351
        %4353 = vrot.lane.b32.xlu0 %v4343, 32
        %v4354 = vpop.permute.xlu0 %4353
        %4355 = vrot.lane.b32.xlu0 %v4352, 32
        %v4356 = vpop.permute.xlu0 %4355
        %4359 = vst.msk [vmem:[#allocation4] sm:$0xf] %vm706, %v4354
        %4360 = vst.msk [vmem:[#allocation4 + $0x1c] sm:$0xf] %vm706, %v4356
        %v4361 = vld [vmem:[#allocation2 + $0x4] sm:$0xf]
        %v4362 = vld [vmem:[#allocation2 + $0x8] sm:$0xf]
        %4365 = vrot.lane.b32.xlu0 %v4361, 64
        %v4366 = vpop.permute.xlu0 %4365
        %4367 = vrot.lane.b32.xlu0 %v4362, 64
        %v4368 = vpop.permute.xlu0 %4367
        %4371 = vst.msk [vmem:[#allocation4] sm:$0xf] %vm719, %v4366
        %4372 = vst.msk [vmem:[#allocation4 + $0x1c] sm:$0xf] %vm719, %v4368
        %v4373 = vld [vmem:[#allocation2 + $0x4] sm:$0xf]
        %v4374 = vld [vmem:[#allocation2 + $0x8] sm:$0xf]
        %v4375 = vld [vmem:[#allocation2 + $0xc] sm:$0x1]
        %v4376 = vsel %vm756, %v4373, 0
        %v4377 = vsel %vm763, %v4374, 0
        %v4378 = vsel %vm770, %v4375, 0
        %v4380 = vshrl.u32 %v4376, 16
        %v4382 = vrot.slane %v4380, 4
        %v4383 = vshll.u32 %v4376, 16
        %v4385 = vrot.slane %v4383, 5
        %v4386 = vor.u32 %v4382, %v4385
        %v4387 = vrot.slane %v4386, 4
        %v4389 = vshll.u32 %v4377, 16
        %v4391 = vrot.slane %v4389, 5
        %v4392 = vsel %vm631, %v4387, %v4391
        %v4393 = vshrl.u32 %v4377, 16
        %v4395 = vrot.slane %v4393, 4
        %v4396 = vor.u32 %v4395, %v4391
        %v4397 = vrot.slane %v4396, 4
        %v4399 = vshll.u32 %v4378, 16
        %v4401 = vrot.slane %v4399, 5
        %v4402 = vsel %vm631, %v4397, %v4401
        %4403 = vrot.lane.b32.xlu0 %v4392, 96
        %v4404 = vpop.permute.xlu0 %4403
        %4405 = vrot.lane.b32.xlu0 %v4402, 96
        %v4406 = vpop.permute.xlu0 %4405
        %4409 = vst.msk [vmem:[#allocation4] sm:$0xf] %vm804, %v4404
        %4410 = vst.msk [vmem:[#allocation4 + $0x1c] sm:$0xf] %vm804, %v4406
        %v4411 = vld [vmem:[#allocation2 + $0x4] sm:$0xe]
        %v4412 = vld [vmem:[#allocation2 + $0x8] sm:$0xf]
        %v4413 = vld [vmem:[#allocation2 + $0xc] sm:$0x1]
        %v4414 = vsel %vm829, %v4411, 0
        %v4415 = vsel %vm836, %v4412, 0
        %v4416 = vsel %vm843, %v4413, 0
        %v4420 = vrot.slane %v4414, 5
        %v4421 = vrot.slane %v4420, 4
        %v4422 = vrot.slane %v4415, 5
        %v4423 = vsel %vm570, %v4421, %v4422
        %v4424 = vrot.slane %v4422, 4
        %v4425 = vrot.slane %v4416, 5
        %v4426 = vsel %vm570, %v4424, %v4425
        %4429 = vst.msk [vmem:[#allocation4 + $0x4] sm:$0xf] %vm615, %v4423
        %4430 = vst.msk [vmem:[#allocation4 + $0x20] sm:$0xf] %vm615, %v4426
        %v4431 = vld [vmem:[#allocation2 + $0x4] sm:$0xe]
        %v4432 = vld [vmem:[#allocation2 + $0x8] sm:$0xf]
        %v4433 = vld [vmem:[#allocation2 + $0xc] sm:$0x1]
        %v4434 = vsel %vm875, %v4431, 0
        %v4435 = vsel %vm882, %v4432, 0
        %v4436 = vsel %vm889, %v4433, 0
        %v4440 = vrot.slane %v4434, 5
        %v4441 = vrot.slane %v4440, 4
        %v4442 = vrot.slane %v4435, 5
        %v4443 = vsel %vm570, %v4441, %v4442
        %v4444 = vrot.slane %v4442, 4
        %v4445 = vrot.slane %v4436, 5
        %v4446 = vsel %vm570, %v4444, %v4445
        %4447 = vrot.lane.b32.xlu0 %v4443, 32
        %v4448 = vpop.permute.xlu0 %4447
        %4449 = vrot.lane.b32.xlu0 %v4446, 32
        %v4450 = vpop.permute.xlu0 %4449
        %4453 = vst.msk [vmem:[#allocation4 + $0x4] sm:$0xf] %vm706, %v4448
        %4454 = vst.msk [vmem:[#allocation4 + $0x20] sm:$0xf] %vm706, %v4450
        %v4455 = vld [vmem:[#allocation2 + $0x4] sm:$0xe]
        %v4456 = vld [vmem:[#allocation2 + $0x8] sm:$0xf]
        %v4457 = vld [vmem:[#allocation2 + $0xc] sm:$0x3]
        %v4458 = vsel %vm932, %v4455, 0
        %v4459 = vsel %vm939, %v4456, 0
        %v4460 = vsel %vm946, %v4457, 0
        %v4462 = vshrl.u32 %v4458, 16
        %v4464 = vrot.slane %v4462, 5
        %v4465 = vshll.u32 %v4458, 16
        %v4467 = vrot.slane %v4465, 6
        %v4468 = vor.u32 %v4464, %v4467
        %v4469 = vrot.slane %v4468, 4
        %v4471 = vshrl.u32 %v4459, 16
        %v4473 = vrot.slane %v4471, 5
        %v4474 = vshll.u32 %v4459, 16
        %v4476 = vrot.slane %v4474, 6
        %v4477 = vor.u32 %v4473, %v4476
        %v4478 = vsel %vm952, %v4469, %v4477
        %v4479 = vrot.slane %v4477, 4
        %v4481 = vshrl.u32 %v4460, 16
        %v4483 = vrot.slane %v4481, 5
        %v4484 = vshll.u32 %v4460, 16
        %v4486 = vrot.slane %v4484, 6
        %v4487 = vor.u32 %v4483, %v4486
        %v4488 = vsel %vm952, %v4479, %v4487
        %4489 = vrot.lane.b32.xlu0 %v4478, 64
        %v4490 = vpop.permute.xlu0 %4489
        %4491 = vrot.lane.b32.xlu0 %v4488, 64
        %v4492 = vpop.permute.xlu0 %4491
        %4495 = vst.msk [vmem:[#allocation4 + $0x4] sm:$0xf] %vm719, %v4490
        %4496 = vst.msk [vmem:[#allocation4 + $0x20] sm:$0xf] %vm719, %v4492
        %v4497 = vld [vmem:[#allocation2 + $0x4] sm:$0xc]
        %v4498 = vld [vmem:[#allocation2 + $0x8] sm:$0xf]
        %v4499 = vld [vmem:[#allocation2 + $0xc] sm:$0x3]
        %v4503 = vrot.slane %v4497, 6
        %v4504 = vrot.slane %v4503, 4
        %v4505 = vrot.slane %v4498, 6
        %v4506 = vsel %vm997, %v4504, %v4505
        %v4507 = vrot.slane %v4505, 4
        %v4508 = vrot.slane %v4499, 6
        %v4509 = vsel %vm997, %v4507, %v4508
        %4510 = vrot.lane.b32.xlu0 %v4506, 96
        %v4511 = vpop.permute.xlu0 %4510
        %4512 = vrot.lane.b32.xlu0 %v4509, 96
        %v4513 = vpop.permute.xlu0 %4512
        %4516 = vst.msk [vmem:[#allocation4 + $0x4] sm:$0xf] %vm804, %v4511
        %4517 = vst.msk [vmem:[#allocation4 + $0x20] sm:$0xf] %vm804, %v4513
        %v4518 = vld [vmem:[#allocation2 + $0x4] sm:$0xc]
        %v4519 = vld [vmem:[#allocation2 + $0x8] sm:$0xf]
        %v4520 = vld [vmem:[#allocation2 + $0xc] sm:$0x7]
        %v4521 = vsel %vm1031, %v4518, 0
        %v4522 = vsel %vm1038, %v4519, 0
        %v4523 = vsel %vm1045, %v4520, 0
        %v4525 = vshrl.u32 %v4521, 16
        %v4527 = vrot.slane %v4525, 6
        %v4528 = vshll.u32 %v4521, 16
        %v4530 = vrot.slane %v4528, 7
        %v4531 = vor.u32 %v4527, %v4530
        %v4532 = vrot.slane %v4531, 4
        %v4534 = vshrl.u32 %v4522, 16
        %v4536 = vrot.slane %v4534, 6
        %v4537 = vshll.u32 %v4522, 16
        %v4539 = vrot.slane %v4537, 7
        %v4540 = vor.u32 %v4536, %v4539
        %v4541 = vsel %vm916, %v4532, %v4540
        %v4542 = vrot.slane %v4540, 4
        %v4544 = vshrl.u32 %v4523, 16
        %v4546 = vrot.slane %v4544, 6
        %v4547 = vshll.u32 %v4523, 16
        %v4549 = vrot.slane %v4547, 7
        %v4550 = vor.u32 %v4546, %v4549
        %v4551 = vsel %vm916, %v4542, %v4550
        %4554 = vst.msk [vmem:[#allocation4 + $0x8] sm:$0xf] %vm615, %v4541
        %4555 = vst.msk [vmem:[#allocation4 + $0x24] sm:$0xf] %vm615, %v4551
        %v4556 = vld [vmem:[#allocation2 + $0x4] sm:$0x8]
        %v4557 = vld [vmem:[#allocation2 + $0x8] sm:$0xf]
        %v4558 = vld [vmem:[#allocation2 + $0xc] sm:$0x7]
        %v4559 = vsel %vm1095, %v4556, 0
        %v4560 = vsel %vm1102, %v4557, 0
        %v4561 = vsel %vm1109, %v4558, 0
        %v4565 = vrot.slane %v4559, 7
        %v4566 = vrot.slane %v4565, 4
        %v4567 = vrot.slane %v4560, 7
        %v4568 = vsel %vm605, %v4566, %v4567
        %v4569 = vrot.slane %v4567, 4
        %v4570 = vrot.slane %v4561, 7
        %v4571 = vsel %vm605, %v4569, %v4570
        %4572 = vrot.lane.b32.xlu0 %v4568, 32
        %v4573 = vpop.permute.xlu0 %4572
        %4574 = vrot.lane.b32.xlu0 %v4571, 32
        %v4575 = vpop.permute.xlu0 %4574
        %4578 = vst.msk [vmem:[#allocation4 + $0x8] sm:$0xf] %vm706, %v4573
        %4579 = vst.msk [vmem:[#allocation4 + $0x24] sm:$0xf] %vm706, %v4575
        %v4580 = vld [vmem:[#allocation2 + $0x4] sm:$0x8]
        %v4581 = vld [vmem:[#allocation2 + $0x8] sm:$0xf]
        %v4582 = vld [vmem:[#allocation2 + $0xc] sm:$0x7]
        %v4583 = vsel %vm582, %v4580, 0
        %v4584 = vsel %vm589, %v4581, 0
        %v4585 = vsel %vm596, %v4582, 0
        %v4589 = vrot.slane %v4583, 7
        %v4590 = vrot.slane %v4589, 4
        %v4591 = vrot.slane %v4584, 7
        %v4592 = vsel %vm605, %v4590, %v4591
        %v4593 = vrot.slane %v4591, 4
        %v4594 = vrot.slane %v4585, 7
        %v4595 = vsel %vm605, %v4593, %v4594
        %4596 = vrot.lane.b32.xlu0 %v4592, 64
        %v4597 = vpop.permute.xlu0 %4596
        %4598 = vrot.lane.b32.xlu0 %v4595, 64
        %v4599 = vpop.permute.xlu0 %4598
        %4602 = vst.msk [vmem:[#allocation4 + $0x8] sm:$0xf] %vm719, %v4597
        %4603 = vst.msk [vmem:[#allocation4 + $0x24] sm:$0xf] %vm719, %v4599
        %v4604 = vld [vmem:[#allocation2 + $0x4] sm:$0x8]
        %v4605 = vld [vmem:[#allocation2 + $0x8] sm:$0xf]
        %v4606 = vld [vmem:[#allocation2 + $0xc] sm:$0xf]
        %v4607 = vsel %vm657, %v4604, 0
        %v4608 = vsel %vm664, %v4605, 0
        %v4609 = vsel %vm671, %v4606, 0
        %v4611 = vshrl.u32 %v4607, 16
        %v4613 = vrot.slane %v4611, 7
        %v4614 = vrot.slane %v4613, 4
        %v4616 = vshrl.u32 %v4608, 16
        %v4618 = vrot.slane %v4616, 7
        %v4619 = vshll.u32 %v4608, 16
        %v4621 = vor.u32 %v4618, %v4619
        %v4622 = vsel %vm677, %v4614, %v4621
        %v4623 = vrot.slane %v4618, 4
        %v4625 = vshrl.u32 %v4609, 16
        %v4627 = vrot.slane %v4625, 7
        %v4628 = vshll.u32 %v4609, 16
        %v4630 = vor.u32 %v4627, %v4628
        %v4631 = vsel %vm677, %v4623, %v4630
        %4632 = vrot.lane.b32.xlu0 %v4622, 96
        %v4633 = vpop.permute.xlu0 %4632
        %4634 = vrot.lane.b32.xlu0 %v4631, 96
        %v4635 = vpop.permute.xlu0 %4634
        %4638 = vst.msk [vmem:[#allocation4 + $0x8] sm:$0xf] %vm804, %v4633
        %4639 = vst.msk [vmem:[#allocation4 + $0x24] sm:$0xf] %vm804, %v4635
        %v4640 = vld [vmem:[#allocation2 + $0x8] sm:$0xf]
        %v4641 = vld [vmem:[#allocation2 + $0xc] sm:$0xf]
        %4642 = vst.msk [vmem:[#allocation4 + $0xc] sm:$0xf] %vm615, %v4640
        %4643 = vst.msk [vmem:[#allocation4 + $0x28] sm:$0xf] %vm615, %v4641
        %v4644 = vld [vmem:[#allocation2 + $0x8] sm:$0xf]
        %v4645 = vld [vmem:[#allocation2 + $0xc] sm:$0xf]
        %v4646 = vld [vmem:[#allocation2 + $0x10] sm:$0x1]
        %v4647 = vsel %vm756, %v4644, 0
        %v4648 = vsel %vm763, %v4645, 0
        %v4649 = vsel %vm770, %v4646, 0
        %v4651 = vshrl.u32 %v4647, 16
        %v4653 = vrot.slane %v4651, 4
        %v4654 = vshll.u32 %v4647, 16
        %v4656 = vrot.slane %v4654, 5
        %v4657 = vor.u32 %v4653, %v4656
        %v4658 = vrot.slane %v4657, 4
        %v4660 = vshll.u32 %v4648, 16
        %v4662 = vrot.slane %v4660, 5
        %v4663 = vsel %vm631, %v4658, %v4662
        %v4664 = vshrl.u32 %v4648, 16
        %v4666 = vrot.slane %v4664, 4
        %v4667 = vor.u32 %v4666, %v4662
        %v4668 = vrot.slane %v4667, 4
        %v4670 = vshll.u32 %v4649, 16
        %v4672 = vrot.slane %v4670, 5
        %v4673 = vsel %vm631, %v4668, %v4672
        %4674 = vrot.lane.b32.xlu0 %v4663, 32
        %v4675 = vpop.permute.xlu0 %4674
        %4676 = vrot.lane.b32.xlu0 %v4673, 32
        %v4677 = vpop.permute.xlu0 %4676
        %4680 = vst.msk [vmem:[#allocation4 + $0xc] sm:$0xf] %vm706, %v4675
        %4681 = vst.msk [vmem:[#allocation4 + $0x28] sm:$0xf] %vm706, %v4677
        %v4682 = vld [vmem:[#allocation2 + $0x8] sm:$0xe]
        %v4683 = vld [vmem:[#allocation2 + $0xc] sm:$0xf]
        %v4684 = vld [vmem:[#allocation2 + $0x10] sm:$0x1]
        %v4685 = vsel %vm829, %v4682, 0
        %v4686 = vsel %vm836, %v4683, 0
        %v4687 = vsel %vm843, %v4684, 0
        %v4691 = vrot.slane %v4685, 5
        %v4692 = vrot.slane %v4691, 4
        %v4693 = vrot.slane %v4686, 5
        %v4694 = vsel %vm570, %v4692, %v4693
        %v4695 = vrot.slane %v4693, 4
        %v4696 = vrot.slane %v4687, 5
        %v4697 = vsel %vm570, %v4695, %v4696
        %4698 = vrot.lane.b32.xlu0 %v4694, 64
        %v4699 = vpop.permute.xlu0 %4698
        %4700 = vrot.lane.b32.xlu0 %v4697, 64
        %v4701 = vpop.permute.xlu0 %4700
        %4704 = vst.msk [vmem:[#allocation4 + $0xc] sm:$0xf] %vm719, %v4699
        %4705 = vst.msk [vmem:[#allocation4 + $0x28] sm:$0xf] %vm719, %v4701
        %v4706 = vld [vmem:[#allocation2 + $0x8] sm:$0xe]
        %v4707 = vld [vmem:[#allocation2 + $0xc] sm:$0xf]
        %v4708 = vld [vmem:[#allocation2 + $0x10] sm:$0x1]
        %v4709 = vsel %vm875, %v4706, 0
        %v4710 = vsel %vm882, %v4707, 0
        %v4711 = vsel %vm889, %v4708, 0
        %v4715 = vrot.slane %v4709, 5
        %v4716 = vrot.slane %v4715, 4
        %v4717 = vrot.slane %v4710, 5
        %v4718 = vsel %vm570, %v4716, %v4717
        %v4719 = vrot.slane %v4717, 4
        %v4720 = vrot.slane %v4711, 5
        %v4721 = vsel %vm570, %v4719, %v4720
        %4722 = vrot.lane.b32.xlu0 %v4718, 96
        %v4723 = vpop.permute.xlu0 %4722
        %4724 = vrot.lane.b32.xlu0 %v4721, 96
        %v4725 = vpop.permute.xlu0 %4724
        %4728 = vst.msk [vmem:[#allocation4 + $0xc] sm:$0xf] %vm804, %v4723
        %4729 = vst.msk [vmem:[#allocation4 + $0x28] sm:$0xf] %vm804, %v4725
        %v4730 = vld [vmem:[#allocation2 + $0x8] sm:$0xe]
        %v4731 = vld [vmem:[#allocation2 + $0xc] sm:$0xf]
        %v4732 = vld [vmem:[#allocation2 + $0x10] sm:$0x3]
        %v4733 = vsel %vm932, %v4730, 0
        %v4734 = vsel %vm939, %v4731, 0
        %v4735 = vsel %vm946, %v4732, 0
        %v4737 = vshrl.u32 %v4733, 16
        %v4739 = vrot.slane %v4737, 5
        %v4740 = vshll.u32 %v4733, 16
        %v4742 = vrot.slane %v4740, 6
        %v4743 = vor.u32 %v4739, %v4742
        %v4744 = vrot.slane %v4743, 4
        %v4746 = vshrl.u32 %v4734, 16
        %v4748 = vrot.slane %v4746, 5
        %v4749 = vshll.u32 %v4734, 16
        %v4751 = vrot.slane %v4749, 6
        %v4752 = vor.u32 %v4748, %v4751
        %v4753 = vsel %vm952, %v4744, %v4752
        %v4754 = vrot.slane %v4752, 4
        %v4756 = vshrl.u32 %v4735, 16
        %v4758 = vrot.slane %v4756, 5
        %v4759 = vshll.u32 %v4735, 16
        %v4761 = vrot.slane %v4759, 6
        %v4762 = vor.u32 %v4758, %v4761
        %v4763 = vsel %vm952, %v4754, %v4762
        %4766 = vst.msk [vmem:[#allocation4 + $0x10] sm:$0xf] %vm615, %v4753
        %4767 = vst.msk [vmem:[#allocation4 + $0x2c] sm:$0xf] %vm615, %v4763
        %v4768 = vld [vmem:[#allocation2 + $0x8] sm:$0xc]
        %v4769 = vld [vmem:[#allocation2 + $0xc] sm:$0xf]
        %v4770 = vld [vmem:[#allocation2 + $0x10] sm:$0x3]
        %v4774 = vrot.slane %v4768, 6
        %v4775 = vrot.slane %v4774, 4
        %v4776 = vrot.slane %v4769, 6
        %v4777 = vsel %vm997, %v4775, %v4776
        %v4778 = vrot.slane %v4776, 4
        %v4779 = vrot.slane %v4770, 6
        %v4780 = vsel %vm997, %v4778, %v4779
        %4781 = vrot.lane.b32.xlu0 %v4777, 32
        %v4782 = vpop.permute.xlu0 %4781
        %4783 = vrot.lane.b32.xlu0 %v4780, 32
        %v4784 = vpop.permute.xlu0 %4783
        %4787 = vst.msk [vmem:[#allocation4 + $0x10] sm:$0xf] %vm706, %v4782
        %4788 = vst.msk [vmem:[#allocation4 + $0x2c] sm:$0xf] %vm706, %v4784
        %v4789 = vld [vmem:[#allocation2 + $0x8] sm:$0xc]
        %v4790 = vld [vmem:[#allocation2 + $0xc] sm:$0xf]
        %v4791 = vld [vmem:[#allocation2 + $0x10] sm:$0x7]
        %v4792 = vsel %vm1031, %v4789, 0
        %v4793 = vsel %vm1038, %v4790, 0
        %v4794 = vsel %vm1045, %v4791, 0
        %v4796 = vshrl.u32 %v4792, 16
        %v4798 = vrot.slane %v4796, 6
        %v4799 = vshll.u32 %v4792, 16
        %v4801 = vrot.slane %v4799, 7
        %v4802 = vor.u32 %v4798, %v4801
        %v4803 = vrot.slane %v4802, 4
        %v4805 = vshrl.u32 %v4793, 16
        %v4807 = vrot.slane %v4805, 6
        %v4808 = vshll.u32 %v4793, 16
        %v4810 = vrot.slane %v4808, 7
        %v4811 = vor.u32 %v4807, %v4810
        %v4812 = vsel %vm916, %v4803, %v4811
        %v4813 = vrot.slane %v4811, 4
        %v4815 = vshrl.u32 %v4794, 16
        %v4817 = vrot.slane %v4815, 6
        %v4818 = vshll.u32 %v4794, 16
        %v4820 = vrot.slane %v4818, 7
        %v4821 = vor.u32 %v4817, %v4820
        %v4822 = vsel %vm916, %v4813, %v4821
        %4823 = vrot.lane.b32.xlu0 %v4812, 64
        %v4824 = vpop.permute.xlu0 %4823
        %4825 = vrot.lane.b32.xlu0 %v4822, 64
        %v4826 = vpop.permute.xlu0 %4825
        %4829 = vst.msk [vmem:[#allocation4 + $0x10] sm:$0xf] %vm719, %v4824
        %4830 = vst.msk [vmem:[#allocation4 + $0x2c] sm:$0xf] %vm719, %v4826
        %v4831 = vld [vmem:[#allocation2 + $0x8] sm:$0x8]
        %v4832 = vld [vmem:[#allocation2 + $0xc] sm:$0xf]
        %v4833 = vld [vmem:[#allocation2 + $0x10] sm:$0x7]
        %v4834 = vsel %vm1095, %v4831, 0
        %v4835 = vsel %vm1102, %v4832, 0
        %v4836 = vsel %vm1109, %v4833, 0
        %v4840 = vrot.slane %v4834, 7
        %v4841 = vrot.slane %v4840, 4
        %v4842 = vrot.slane %v4835, 7
        %v4843 = vsel %vm605, %v4841, %v4842
        %v4844 = vrot.slane %v4842, 4
        %v4845 = vrot.slane %v4836, 7
        %v4846 = vsel %vm605, %v4844, %v4845
        %4847 = vrot.lane.b32.xlu0 %v4843, 96
        %v4848 = vpop.permute.xlu0 %4847
        %4849 = vrot.lane.b32.xlu0 %v4846, 96
        %v4850 = vpop.permute.xlu0 %4849
        %4853 = vst.msk [vmem:[#allocation4 + $0x10] sm:$0xf] %vm804, %v4848
        %4854 = vst.msk [vmem:[#allocation4 + $0x2c] sm:$0xf] %vm804, %v4850
        %v4855 = vld [vmem:[#allocation2 + $0x8] sm:$0x8]
        %v4856 = vld [vmem:[#allocation2 + $0xc] sm:$0xf]
        %v4857 = vld [vmem:[#allocation2 + $0x10] sm:$0x7]
        %v4858 = vsel %vm582, %v4855, 0
        %v4859 = vsel %vm589, %v4856, 0
        %v4860 = vsel %vm596, %v4857, 0
        %v4864 = vrot.slane %v4858, 7
        %v4865 = vrot.slane %v4864, 4
        %v4866 = vrot.slane %v4859, 7
        %v4867 = vsel %vm605, %v4865, %v4866
        %v4868 = vrot.slane %v4866, 4
        %v4869 = vrot.slane %v4860, 7
        %v4870 = vsel %vm605, %v4868, %v4869
        %4873 = vst.msk [vmem:[#allocation4 + $0x14] sm:$0xf] %vm615, %v4867
        %4874 = vst.msk [vmem:[#allocation4 + $0x30] sm:$0xf] %vm615, %v4870
        %v4875 = vld [vmem:[#allocation2 + $0x8] sm:$0x8]
        %v4876 = vld [vmem:[#allocation2 + $0xc] sm:$0xf]
        %v4877 = vld [vmem:[#allocation2 + $0x10] sm:$0xf]
        %v4878 = vsel %vm657, %v4875, 0
        %v4879 = vsel %vm664, %v4876, 0
        %v4880 = vsel %vm671, %v4877, 0
        %v4882 = vshrl.u32 %v4878, 16
        %v4884 = vrot.slane %v4882, 7
        %v4885 = vrot.slane %v4884, 4
        %v4887 = vshrl.u32 %v4879, 16
        %v4889 = vrot.slane %v4887, 7
        %v4890 = vshll.u32 %v4879, 16
        %v4892 = vor.u32 %v4889, %v4890
        %v4893 = vsel %vm677, %v4885, %v4892
        %v4894 = vrot.slane %v4889, 4
        %v4896 = vshrl.u32 %v4880, 16
        %v4898 = vrot.slane %v4896, 7
        %v4899 = vshll.u32 %v4880, 16
        %v4901 = vor.u32 %v4898, %v4899
        %v4902 = vsel %vm677, %v4894, %v4901
        %4903 = vrot.lane.b32.xlu0 %v4893, 32
        %v4904 = vpop.permute.xlu0 %4903
        %4905 = vrot.lane.b32.xlu0 %v4902, 32
        %v4906 = vpop.permute.xlu0 %4905
        %4909 = vst.msk [vmem:[#allocation4 + $0x14] sm:$0xf] %vm706, %v4904
        %4910 = vst.msk [vmem:[#allocation4 + $0x30] sm:$0xf] %vm706, %v4906
        %v4911 = vld [vmem:[#allocation2 + $0xc] sm:$0xf]
        %v4912 = vld [vmem:[#allocation2 + $0x10] sm:$0xf]
        %4915 = vrot.lane.b32.xlu0 %v4911, 64
        %v4916 = vpop.permute.xlu0 %4915
        %4917 = vrot.lane.b32.xlu0 %v4912, 64
        %v4918 = vpop.permute.xlu0 %4917
        %4921 = vst.msk [vmem:[#allocation4 + $0x14] sm:$0xf] %vm719, %v4916
        %4922 = vst.msk [vmem:[#allocation4 + $0x30] sm:$0xf] %vm719, %v4918
        %v4923 = vld [vmem:[#allocation2 + $0xc] sm:$0xf]
        %v4924 = vld [vmem:[#allocation2 + $0x10] sm:$0xf]
        %v4925 = vld [vmem:[#allocation2 + $0x14] sm:$0x1]
        %v4926 = vsel %vm756, %v4923, 0
        %v4927 = vsel %vm763, %v4924, 0
        %v4928 = vsel %vm770, %v4925, 0
        %v4930 = vshrl.u32 %v4926, 16
        %v4932 = vrot.slane %v4930, 4
        %v4933 = vshll.u32 %v4926, 16
        %v4935 = vrot.slane %v4933, 5
        %v4936 = vor.u32 %v4932, %v4935
        %v4937 = vrot.slane %v4936, 4
        %v4939 = vshll.u32 %v4927, 16
        %v4941 = vrot.slane %v4939, 5
        %v4942 = vsel %vm631, %v4937, %v4941
        %v4943 = vshrl.u32 %v4927, 16
        %v4945 = vrot.slane %v4943, 4
        %v4946 = vor.u32 %v4945, %v4941
        %v4947 = vrot.slane %v4946, 4
        %v4949 = vshll.u32 %v4928, 16
        %v4951 = vrot.slane %v4949, 5
        %v4952 = vsel %vm631, %v4947, %v4951
        %4953 = vrot.lane.b32.xlu0 %v4942, 96
        %v4954 = vpop.permute.xlu0 %4953
        %4955 = vrot.lane.b32.xlu0 %v4952, 96
        %v4956 = vpop.permute.xlu0 %4955
        %4959 = vst.msk [vmem:[#allocation4 + $0x14] sm:$0xf] %vm804, %v4954
        %4960 = vst.msk [vmem:[#allocation4 + $0x30] sm:$0xf] %vm804, %v4956
        %v4961 = vld [vmem:[#allocation2 + $0xc] sm:$0xe]
        %v4962 = vld [vmem:[#allocation2 + $0x10] sm:$0xf]
        %v4963 = vld [vmem:[#allocation2 + $0x14] sm:$0x1]
        %v4964 = vsel %vm829, %v4961, 0
        %v4965 = vsel %vm836, %v4962, 0
        %v4966 = vsel %vm843, %v4963, 0
        %v4970 = vrot.slane %v4964, 5
        %v4971 = vrot.slane %v4970, 4
        %v4972 = vrot.slane %v4965, 5
        %v4973 = vsel %vm570, %v4971, %v4972
        %v4974 = vrot.slane %v4972, 4
        %v4975 = vrot.slane %v4966, 5
        %v4976 = vsel %vm570, %v4974, %v4975
        %4979 = vst.msk [vmem:[#allocation4 + $0x18] sm:$0xf] %vm615, %v4973
        %4980 = vst.msk [vmem:[#allocation4 + $0x34] sm:$0xf] %vm615, %v4976
        %v4981 = vld [vmem:[#allocation4] sm:$0xff]
        %v4982 = vld [vmem:[#allocation4 + $0x8] sm:$0xff]
        %v4983 = vld [vmem:[#allocation4 + $0x10] sm:$0xff]
        %v4984 = vld [vmem:[#allocation4 + $0x18] sm:$0xf]
        %v4985 = vld [vmem:[#allocation4 + $0x1c] sm:$0xff]
        %v4986 = vld [vmem:[#allocation4 + $0x24] sm:$0xff]
        %v4987 = vld [vmem:[#allocation4 + $0x2c] sm:$0xff]
        %v4988 = vld [vmem:[#allocation4 + $0x34] sm:$0xf]
        %v4989 = vld [vmem:[%s5] sm:$0xf]
        %v4990 = vld [vmem:[%s5 + $0x4] sm:$0xf]
        %v4991 = vld [vmem:[%s5 + $0x8] sm:$0xf]
        %v4992 = vld [vmem:[%s5 + $0xc] sm:$0xf]
        %v4993 = vld [vmem:[%s5 + $0x10] sm:$0xf]
        %v4994 = vld [vmem:[%s5 + $0x14] sm:$0xf]
        %v4995 = vld [vmem:[%s5 + $0x18] sm:$0xf]
        %v4996 = vld [vmem:[%s5 + $0x1c] sm:$0xf]
        %v4997 = vld [vmem:[%s5 + $0x20] sm:$0xf]
        %v4998 = vld [vmem:[%s5 + $0x24] sm:$0xf]
        %v4999 = vld [vmem:[%s5 + $0x28] sm:$0xf]
        %v5000 = vld [vmem:[%s5 + $0x2c] sm:$0xf]
        %v5001 = vld [vmem:[%s5 + $0x30] sm:$0xf]
        %v5002 = vld [vmem:[%s5 + $0x34] sm:$0xf]
        %v5003 = vld [vmem:[%s5 + $0x38] sm:$0xf]
        %v5004 = vld [vmem:[%s5 + $0x3c] sm:$0xf]
        %v5005 = vld [vmem:[%s5 + $0x40] sm:$0xf]
        %v5006 = vld [vmem:[%s5 + $0x44] sm:$0xf]
        %v5007 = vld [vmem:[%s5 + $0x48] sm:$0xf]
        %v5008 = vld [vmem:[%s5 + $0x4c] sm:$0xf]
        %v5009 = vld [vmem:[%s5 + $0x50] sm:$0xf]
        %v5010 = vld [vmem:[%s5 + $0x54] sm:$0xf]
        %v5011 = vld [vmem:[%s5 + $0x58] sm:$0xf]
        %v5012 = vld [vmem:[%s5 + $0x5c] sm:$0xf]
        %v5013 = vld [vmem:[%s5 + $0x60] sm:$0xf]
        %v5014 = vld [vmem:[%s5 + $0x64] sm:$0xf]
        %v5015 = vld [vmem:[%s5 + $0x68] sm:$0xf]
        %v5016 = vld [vmem:[%s5 + $0x6c] sm:$0xf]
        %v5017 = vld [vmem:[%s5 + $0x70] sm:$0xf]
        %v5018 = vld [vmem:[%s5 + $0x74] sm:$0xf]
        %v5019 = vld [vmem:[%s5 + $0x78] sm:$0xf]
        %v5020 = vld [vmem:[%s5 + $0x7c] sm:$0xf]
        %v5021 = vld [vmem:[%s5 + $0x80] sm:$0xf]
        %v5022 = vld [vmem:[%s5 + $0x84] sm:$0xf]
        %v5023 = vld [vmem:[%s5 + $0x88] sm:$0xf]
        %v5024 = vld [vmem:[%s5 + $0x8c] sm:$0xf]
        %v5025 = vld [vmem:[%s5 + $0x90] sm:$0xf]
        %v5026 = vld [vmem:[%s5 + $0x94] sm:$0xf]
        %v5027 = vld [vmem:[%s5 + $0x98] sm:$0xf]
        %v5028 = vld [vmem:[%s5 + $0x9c] sm:$0xf]
        %v5029 = vld [vmem:[%s5 + $0xa0] sm:$0xf]
        %v5030 = vld [vmem:[%s5 + $0xa4] sm:$0xf]
        %v5031 = vld [vmem:[%s5 + $0xa8] sm:$0xf]
        %v5032 = vld [vmem:[%s5 + $0xac] sm:$0xf]
        %v5033 = vld [vmem:[%s5 + $0xb0] sm:$0xf]
        %v5034 = vld [vmem:[%s5 + $0xb4] sm:$0xf]
        %v5035 = vld [vmem:[%s5 + $0xb8] sm:$0xf]
        %v5036 = vld [vmem:[%s5 + $0xbc] sm:$0xf]
        %v5037 = vld [vmem:[%s5 + $0xc0] sm:$0xf]
        %v5038 = vld [vmem:[%s5 + $0xc4] sm:$0xf]
        %v5039 = vld [vmem:[%s5 + $0xc8] sm:$0xf]
        %v5040 = vld [vmem:[%s5 + $0xcc] sm:$0xf]
        %v5041 = vld [vmem:[%s5 + $0xd0] sm:$0xf]
        %v5042 = vld [vmem:[%s5 + $0xd4] sm:$0xf]
        %v5043 = vld [vmem:[%s5 + $0xd8] sm:$0xf]
        %v5044 = vld [vmem:[%s5 + $0xdc] sm:$0xf]
        %v5045 = vld [vmem:[%s5 + $0xe0] sm:$0xf]
        %v5046 = vld [vmem:[%s5 + $0xe4] sm:$0xf]
        %v5047 = vld [vmem:[%s5 + $0xe8] sm:$0xf]
        %v5048 = vld [vmem:[%s5 + $0xec] sm:$0xf]
        %v5049 = vld [vmem:[%s5 + $0xf0] sm:$0xf]
        %v5050 = vld [vmem:[%s5 + $0xf4] sm:$0xf]
        %v5051 = vld [vmem:[%s5 + $0xf8] sm:$0xf]
        %v5052 = vld [vmem:[%s5 + $0xfc] sm:$0xf]
        %v5053 = vld [vmem:[%s5 + $0x100] sm:$0xf]
        %v5054 = vld [vmem:[%s5 + $0x104] sm:$0xf]
        %v5055 = vld [vmem:[%s5 + $0x108] sm:$0xf]
        %v5056 = vld [vmem:[%s5 + $0x10c] sm:$0xf]
        %v5057 = vld [vmem:[%s5 + $0x110] sm:$0xf]
        %v5058 = vld [vmem:[%s5 + $0x114] sm:$0xf]
        %v5059 = vld [vmem:[%s5 + $0x118] sm:$0xf]
        %v5060 = vld [vmem:[%s5 + $0x11c] sm:$0xf]
        %v5061 = vld [vmem:[%s5 + $0x120] sm:$0xf]
        %v5062 = vld [vmem:[%s5 + $0x124] sm:$0xf]
        %v5063 = vld [vmem:[%s5 + $0x128] sm:$0xf]
        %v5064 = vld [vmem:[%s5 + $0x12c] sm:$0xf]
        %v5065 = vld [vmem:[%s5 + $0x130] sm:$0xf]
        %v5066 = vld [vmem:[%s5 + $0x134] sm:$0xf]
        %v5067 = vld [vmem:[%s5 + $0x138] sm:$0xf]
        %v5068 = vld [vmem:[%s5 + $0x13c] sm:$0xf]
        %v5069 = vld [vmem:[%s5 + $0x140] sm:$0xf]
        %v5070 = vld [vmem:[%s5 + $0x144] sm:$0xf]
        %v5071 = vld [vmem:[%s5 + $0x148] sm:$0xf]
        %v5072 = vld [vmem:[%s5 + $0x14c] sm:$0xf]
        %v5073 = vld [vmem:[%s5 + $0x150] sm:$0xf]
        %v5074 = vld [vmem:[%s5 + $0x154] sm:$0xf]
        %v5075 = vld [vmem:[%s5 + $0x158] sm:$0xf]
        %v5076 = vld [vmem:[%s5 + $0x15c] sm:$0xf]
        %v5077 = vld [vmem:[%s5 + $0x160] sm:$0xf]
        %v5078 = vld [vmem:[%s5 + $0x164] sm:$0xf]
        %v5079 = vld [vmem:[%s5 + $0x168] sm:$0xf]
        %v5080 = vld [vmem:[%s5 + $0x16c] sm:$0xf]
        %v5081 = vld [vmem:[%s5 + $0x170] sm:$0xf]
        %v5082 = vld [vmem:[%s5 + $0x174] sm:$0xf]
        %v5083 = vld [vmem:[%s5 + $0x178] sm:$0xf]
        %v5084 = vld [vmem:[%s5 + $0x17c] sm:$0xf]
        %v5085 = vld [vmem:[%s5 + $0x180] sm:$0xf]
        %v5086 = vld [vmem:[%s5 + $0x184] sm:$0xf]
        %v5087 = vld [vmem:[%s5 + $0x188] sm:$0xf]
        %v5088 = vld [vmem:[%s5 + $0x18c] sm:$0xf]
        %v5089 = vld [vmem:[%s6] sm:$0x1]
        %v5091 = vperm.slane %v5089, 0
        %v5101 = vunpack.c.l.b16 %v4981
        %v5102 = vunpack.c.h.b16 %v4981
        %v5103 = vunpack.c.l.b16 %v4982
        %v5104 = vunpack.c.h.b16 %v4982
        %v5105 = vunpack.c.l.b16 %v4983
        %v5106 = vunpack.c.h.b16 %v4983
        %v5107 = vunpack.c.l.b16 %v4984
        %v5108 = vunpack.c.l.b16 %v4985
        %v5109 = vunpack.c.h.b16 %v4985
        %v5110 = vunpack.c.l.b16 %v4986
        %v5111 = vunpack.c.h.b16 %v4986
        %v5112 = vunpack.c.l.b16 %v4987
        %v5113 = vunpack.c.h.b16 %v4987
        %v5114 = vunpack.c.l.b16 %v4988
        %v5115 = vpack.c.b16 %v5108, %v5101
        %v5116 = vpack.c.b16 %v5109, %v5102
        %v5117 = vpack.c.b16 %v5110, %v5103
        %v5118 = vpack.c.b16 %v5111, %v5104
        %v5119 = vpack.c.b16 %v5112, %v5105
        %v5120 = vpack.c.b16 %v5113, %v5106
        %v5121 = vpack.c.b16 %v5114, %v5107
        %v5228 = vunpack.c.l.b16 %v4989
        %v5229 = vunpack.c.l.b16 %v4990
        %v5230 = vunpack.c.l.b16 %v4991
        %v5231 = vunpack.c.l.b16 %v4992
        %v5232 = vunpack.c.l.b16 %v4993
        %v5233 = vunpack.c.l.b16 %v4994
        %v5234 = vunpack.c.l.b16 %v4995
        %v5235 = vunpack.c.l.b16 %v4996
        %v5236 = vunpack.c.l.b16 %v4997
        %v5237 = vunpack.c.l.b16 %v4998
        %v5238 = vunpack.c.l.b16 %v4999
        %v5239 = vunpack.c.l.b16 %v5000
        %v5240 = vunpack.c.l.b16 %v5001
        %v5241 = vunpack.c.l.b16 %v5002
        %v5242 = vunpack.c.l.b16 %v5003
        %v5243 = vunpack.c.l.b16 %v5004
        %v5244 = vunpack.c.l.b16 %v5005
        %v5245 = vunpack.c.l.b16 %v5006
        %v5246 = vunpack.c.l.b16 %v5007
        %v5247 = vunpack.c.l.b16 %v5008
        %v5248 = vunpack.c.l.b16 %v5009
        %v5249 = vunpack.c.l.b16 %v5010
        %v5250 = vunpack.c.l.b16 %v5011
        %v5251 = vunpack.c.l.b16 %v5012
        %v5252 = vunpack.c.l.b16 %v5013
        %v5253 = vunpack.c.l.b16 %v5014
        %v5254 = vunpack.c.l.b16 %v5015
        %v5255 = vunpack.c.l.b16 %v5016
        %v5256 = vunpack.c.l.b16 %v5017
        %v5257 = vunpack.c.l.b16 %v5018
        %v5258 = vunpack.c.l.b16 %v5019
        %v5259 = vunpack.c.l.b16 %v5020
        %v5260 = vunpack.c.l.b16 %v5021
        %v5261 = vunpack.c.l.b16 %v5022
        %v5262 = vunpack.c.l.b16 %v5023
        %v5263 = vunpack.c.l.b16 %v5024
        %v5264 = vunpack.c.l.b16 %v5025
        %v5265 = vunpack.c.l.b16 %v5026
        %v5266 = vunpack.c.l.b16 %v5027
        %v5267 = vunpack.c.l.b16 %v5028
        %v5268 = vunpack.c.l.b16 %v5029
        %v5269 = vunpack.c.l.b16 %v5030
        %v5270 = vunpack.c.l.b16 %v5031
        %v5271 = vunpack.c.l.b16 %v5032
        %v5272 = vunpack.c.l.b16 %v5033
        %v5273 = vunpack.c.l.b16 %v5034
        %v5274 = vunpack.c.l.b16 %v5035
        %v5275 = vunpack.c.l.b16 %v5036
        %v5276 = vunpack.c.l.b16 %v5037
        %v5277 = vunpack.c.l.b16 %v5038
        %v5278 = vunpack.c.l.b16 %v5039
        %v5279 = vunpack.c.l.b16 %v5040
        %v5280 = vunpack.c.l.b16 %v5041
        %v5281 = vunpack.c.l.b16 %v5042
        %v5282 = vunpack.c.l.b16 %v5043
        %v5283 = vunpack.c.l.b16 %v5044
        %v5284 = vunpack.c.l.b16 %v5045
        %v5285 = vunpack.c.l.b16 %v5046
        %v5286 = vunpack.c.l.b16 %v5047
        %v5287 = vunpack.c.l.b16 %v5048
        %v5288 = vunpack.c.l.b16 %v5049
        %v5289 = vunpack.c.l.b16 %v5050
        %v5290 = vunpack.c.l.b16 %v5051
        %v5291 = vunpack.c.l.b16 %v5052
        %v5292 = vunpack.c.l.b16 %v5053
        %v5293 = vunpack.c.l.b16 %v5054
        %v5294 = vunpack.c.l.b16 %v5055
        %v5295 = vunpack.c.l.b16 %v5056
        %v5296 = vunpack.c.l.b16 %v5057
        %v5297 = vunpack.c.l.b16 %v5058
        %v5298 = vunpack.c.l.b16 %v5059
        %v5299 = vunpack.c.l.b16 %v5060
        %v5300 = vunpack.c.l.b16 %v5061
        %v5301 = vunpack.c.l.b16 %v5062
        %v5302 = vunpack.c.l.b16 %v5063
        %v5303 = vunpack.c.l.b16 %v5064
        %v5304 = vunpack.c.l.b16 %v5065
        %v5305 = vunpack.c.l.b16 %v5066
        %v5306 = vunpack.c.l.b16 %v5067
        %v5307 = vunpack.c.l.b16 %v5068
        %v5308 = vunpack.c.l.b16 %v5069
        %v5309 = vunpack.c.l.b16 %v5070
        %v5310 = vunpack.c.l.b16 %v5071
        %v5311 = vunpack.c.l.b16 %v5072
        %v5312 = vunpack.c.l.b16 %v5073
        %v5313 = vunpack.c.l.b16 %v5074
        %v5314 = vunpack.c.l.b16 %v5075
        %v5315 = vunpack.c.l.b16 %v5076
        %v5316 = vunpack.c.l.b16 %v5077
        %v5317 = vunpack.c.l.b16 %v5078
        %v5318 = vunpack.c.l.b16 %v5079
        %v5319 = vunpack.c.l.b16 %v5080
        %v5320 = vunpack.c.l.b16 %v5081
        %v5321 = vunpack.c.l.b16 %v5082
        %v5322 = vunpack.c.l.b16 %v5083
        %v5323 = vunpack.c.l.b16 %v5084
        %v5324 = vunpack.c.l.b16 %v5085
        %v5325 = vunpack.c.l.b16 %v5086
        %v5326 = vunpack.c.l.b16 %v5087
        %v5327 = vunpack.c.l.b16 %v5088
        %v5328 = vpack.c.b16 %v5229, %v5228
        %v5329 = vpack.c.b16 %v5231, %v5230
        %v5330 = vpack.c.b16 %v5233, %v5232
        %v5331 = vpack.c.b16 %v5235, %v5234
        %v5332 = vpack.c.b16 %v5237, %v5236
        %v5333 = vpack.c.b16 %v5239, %v5238
        %v5334 = vpack.c.b16 %v5241, %v5240
        %v5335 = vpack.c.b16 %v5243, %v5242
        %v5336 = vpack.c.b16 %v5245, %v5244
        %v5337 = vpack.c.b16 %v5247, %v5246
        %v5338 = vpack.c.b16 %v5249, %v5248
        %v5339 = vpack.c.b16 %v5251, %v5250
        %v5340 = vpack.c.b16 %v5253, %v5252
        %v5341 = vpack.c.b16 %v5255, %v5254
        %v5342 = vpack.c.b16 %v5257, %v5256
        %v5343 = vpack.c.b16 %v5259, %v5258
        %v5344 = vpack.c.b16 %v5261, %v5260
        %v5345 = vpack.c.b16 %v5263, %v5262
        %v5346 = vpack.c.b16 %v5265, %v5264
        %v5347 = vpack.c.b16 %v5267, %v5266
        %v5348 = vpack.c.b16 %v5269, %v5268
        %v5349 = vpack.c.b16 %v5271, %v5270
        %v5350 = vpack.c.b16 %v5273, %v5272
        %v5351 = vpack.c.b16 %v5275, %v5274
        %v5352 = vpack.c.b16 %v5277, %v5276
        %v5353 = vpack.c.b16 %v5279, %v5278
        %v5354 = vpack.c.b16 %v5281, %v5280
        %v5355 = vpack.c.b16 %v5283, %v5282
        %v5356 = vpack.c.b16 %v5285, %v5284
        %v5357 = vpack.c.b16 %v5287, %v5286
        %v5358 = vpack.c.b16 %v5289, %v5288
        %v5359 = vpack.c.b16 %v5291, %v5290
        %v5360 = vpack.c.b16 %v5293, %v5292
        %v5361 = vpack.c.b16 %v5295, %v5294
        %v5362 = vpack.c.b16 %v5297, %v5296
        %v5363 = vpack.c.b16 %v5299, %v5298
        %v5364 = vpack.c.b16 %v5301, %v5300
        %v5365 = vpack.c.b16 %v5303, %v5302
        %v5366 = vpack.c.b16 %v5305, %v5304
        %v5367 = vpack.c.b16 %v5307, %v5306
        %v5368 = vpack.c.b16 %v5309, %v5308
        %v5369 = vpack.c.b16 %v5311, %v5310
        %v5370 = vpack.c.b16 %v5313, %v5312
        %v5371 = vpack.c.b16 %v5315, %v5314
        %v5372 = vpack.c.b16 %v5317, %v5316
        %v5373 = vpack.c.b16 %v5319, %v5318
        %v5374 = vpack.c.b16 %v5321, %v5320
        %v5375 = vpack.c.b16 %v5323, %v5322
        %v5376 = vpack.c.b16 %v5325, %v5324
        %v5377 = vpack.c.b16 %v5327, %v5326
        %v5429 = vsel %vm1979, %v5121, 0
        %5431 = vmatpush.bf16.msra.mxu0 %v5335
        %5432 = vmatpush.bf16.msra.mxu0 %v5334
        %5433 = vmatpush.bf16.msra.mxu0 %v5333
        %5434 = vmatpush.bf16.msra.mxu0 %v5332
        %5435 = vmatpush.bf16.msra.mxu0 %v5331
        %5436 = vmatpush.bf16.msra.mxu0 %v5330
        %5437 = vmatpush.bf16.msra.mxu0 %v5329
        %5438 = vmatpush.bf16.msra.mxu0 %v5328
        %5439 = vmatmul.bf16.gmra.mxu0 %v5115
        %v5440 = vpop.f32.mrf.mxu0
        %v5441 = vadd.f32 %v5091, %v5440
        %v5442 = vpop.f32.mrf.mxu0
        %v5443 = vadd.f32 %v5091, %v5442
        %5444 = vdwg.mxu0
        %5445 = vmatpush.bf16.msra.mxu0 %v5343
        %5446 = vmatpush.bf16.msra.mxu0 %v5342
        %5447 = vmatpush.bf16.msra.mxu0 %v5341
        %5448 = vmatpush.bf16.msra.mxu0 %v5340
        %5449 = vmatpush.bf16.msra.mxu0 %v5339
        %5450 = vmatpush.bf16.msra.mxu0 %v5338
        %5451 = vmatpush.bf16.msra.mxu0 %v5337
        %5452 = vmatpush.bf16.msra.mxu0 %v5336
        %5453 = vmatmul.bf16.gmra.mxu0 %v5116
        %v5454 = vpop.f32.mrf.mxu0
        %v5455 = vadd.f32 %v5441, %v5454
        %v5456 = vpop.f32.mrf.mxu0
        %v5457 = vadd.f32 %v5443, %v5456
        %5458 = vdwg.mxu0
        %5459 = vmatpush.bf16.msra.mxu0 %v5351
        %5460 = vmatpush.bf16.msra.mxu0 %v5350
        %5461 = vmatpush.bf16.msra.mxu0 %v5349
        %5462 = vmatpush.bf16.msra.mxu0 %v5348
        %5463 = vmatpush.bf16.msra.mxu0 %v5347
        %5464 = vmatpush.bf16.msra.mxu0 %v5346
        %5465 = vmatpush.bf16.msra.mxu0 %v5345
        %5466 = vmatpush.bf16.msra.mxu0 %v5344
        %5467 = vmatmul.bf16.gmra.mxu0 %v5117
        %v5468 = vpop.f32.mrf.mxu0
        %v5469 = vadd.f32 %v5455, %v5468
        %v5470 = vpop.f32.mrf.mxu0
        %v5471 = vadd.f32 %v5457, %v5470
        %5472 = vdwg.mxu0
        %5473 = vmatpush.bf16.msra.mxu0 %v5359
        %5474 = vmatpush.bf16.msra.mxu0 %v5358
        %5475 = vmatpush.bf16.msra.mxu0 %v5357
        %5476 = vmatpush.bf16.msra.mxu0 %v5356
        %5477 = vmatpush.bf16.msra.mxu0 %v5355
        %5478 = vmatpush.bf16.msra.mxu0 %v5354
        %5479 = vmatpush.bf16.msra.mxu0 %v5353
        %5480 = vmatpush.bf16.msra.mxu0 %v5352
        %5481 = vmatmul.bf16.gmra.mxu0 %v5118
        %v5482 = vpop.f32.mrf.mxu0
        %v5483 = vadd.f32 %v5469, %v5482
        %v5484 = vpop.f32.mrf.mxu0
        %v5485 = vadd.f32 %v5471, %v5484
        %5486 = vdwg.mxu0
        %5487 = vmatpush.bf16.msra.mxu0 %v5367
        %5488 = vmatpush.bf16.msra.mxu0 %v5366
        %5489 = vmatpush.bf16.msra.mxu0 %v5365
        %5490 = vmatpush.bf16.msra.mxu0 %v5364
        %5491 = vmatpush.bf16.msra.mxu0 %v5363
        %5492 = vmatpush.bf16.msra.mxu0 %v5362
        %5493 = vmatpush.bf16.msra.mxu0 %v5361
        %5494 = vmatpush.bf16.msra.mxu0 %v5360
        %5495 = vmatmul.bf16.gmra.mxu0 %v5119
        %v5496 = vpop.f32.mrf.mxu0
        %v5497 = vadd.f32 %v5483, %v5496
        %v5498 = vpop.f32.mrf.mxu0
        %v5499 = vadd.f32 %v5485, %v5498
        %5500 = vdwg.mxu0
        %5501 = vmatpush.bf16.msra.mxu0 %v5375
        %5502 = vmatpush.bf16.msra.mxu0 %v5374
        %5503 = vmatpush.bf16.msra.mxu0 %v5373
        %5504 = vmatpush.bf16.msra.mxu0 %v5372
        %5505 = vmatpush.bf16.msra.mxu0 %v5371
        %5506 = vmatpush.bf16.msra.mxu0 %v5370
        %5507 = vmatpush.bf16.msra.mxu0 %v5369
        %5508 = vmatpush.bf16.msra.mxu0 %v5368
        %5509 = vmatmul.bf16.gmra.mxu0 %v5120
        %v5510 = vpop.f32.mrf.mxu0
        %v5511 = vadd.f32 %v5497, %v5510
        %v5512 = vpop.f32.mrf.mxu0
        %v5513 = vadd.f32 %v5499, %v5512
        %5514 = vdwg.mxu0
        %5515 = vmatpush.bf16.msra.mxu0 0
        %5516 = vmatpush.bf16.msra.mxu0 0
        %5517 = vmatpush.bf16.msra.mxu0 0
        %5518 = vmatpush.bf16.msra.mxu0 0
        %5519 = vmatpush.bf16.msra.mxu0 0
        %5520 = vmatpush.bf16.msra.mxu0 0
        %5521 = vmatpush.bf16.msra.mxu0 %v5377
        %5522 = vmatpush.bf16.msra.mxu0 %v5376
        %5523 = vmatmul.bf16.gmra.mxu0 %v5429
        %v5524 = vpop.f32.mrf.mxu0
        %v5525 = vadd.f32 %v5511, %v5524
        %v5526 = vpop.f32.mrf.mxu0
        %v5527 = vadd.f32 %v5513, %v5526
        %5528 = vdwg.mxu0
        %v5529 = vmax.f32 %v5525, 0.0
        %v5530 = vmax.f32 %v5527, 0.0
        %vm5531 = vcmp.ne.f32.partialorder %v5525, %v5525
        %vm5532 = vcmp.ne.f32.partialorder %v5527, %v5527
        %v5533 = vadd.f32 %v5525, 0.0
        %v5534 = vadd.f32 %v5527, 0.0
        %v5535 = vand.u32 2147483647, %v5525
        %v5536 = vand.u32 2147483647, %v5527
        %v5537 = vsub.f32 0.0, %v5535
        %v5538 = vsub.f32 0.0, %v5536
        %v5539 = vmul.f32 %v5537, 1.442695
        %v5540 = vpow.pop %v5539
        %v5541 = vmul.f32 %v5538, 1.442695
        %v5542 = vpow.pop %v5541
        %v5543 = vadd.f32 %v5540, 1.0
        %v5544 = vlog2.pop %v5543
        %v5545 = vmul.f32 %v5544, 0.6931472
        %v5546 = vmul.f32 -0.5, %v5540
        %v5547 = vadd.f32 %v5546, 1.0
        %v5548 = vmul.f32 %v5547, %v5540
        %v5549 = vand.u32 2147483647, %v5540
        %vm5550 = vcmp.lt.f32.partialorder %v5549, 0.0004427343
        %v5551 = vsel %vm5550, %v5548, %v5545
        %v5552 = vadd.f32 %v5542, 1.0
        %v5553 = vlog2.pop %v5552
        %v5554 = vmul.f32 %v5553, 0.6931472
        %v5555 = vmul.f32 -0.5, %v5542
        %v5556 = vadd.f32 %v5555, 1.0
        %v5557 = vmul.f32 %v5556, %v5542
        %v5558 = vand.u32 2147483647, %v5542
        %vm5559 = vcmp.lt.f32.partialorder %v5558, 0.0004427343
        %v5560 = vsel %vm5559, %v5557, %v5554
        %v5561 = vadd.f32 %v5529, %v5551
        %v5562 = vadd.f32 %v5530, %v5560
        %v5563 = vsel %vm5531, %v5533, %v5561
        %v5564 = vsel %vm5532, %v5534, %v5562
        %v5565 = vadd.f32 %v5563, 1e-06
        %v5566 = vadd.f32 %v5564, 1e-06
        %v5567 = vld [vmem:[%s473] sm:$0xff]
        %v5568 = vld [vmem:[%s473 + $0x8] sm:$0xff]
        %5571 = vrot.lane.b32.xlu0 %v5567, 8
        %v5572 = vpop.permute.xlu0 %5571
        %5573 = vrot.lane.b32.xlu0 %v5568, 8
        %v5574 = vpop.permute.xlu0 %5573
        %v5577 = vmul.f32 %v5565, %v5572
        %v5578 = vmul.f32 %v5566, %v5574
        %5581 = vrot.lane.b32.xlu0 %v5577, 120
        %v5582 = vpop.permute.xlu0 %5581
        %5583 = vrot.lane.b32.xlu0 %v5578, 120
        %v5584 = vpop.permute.xlu0 %5583
        %v5587 = vadd.f32 %v5525, %v5582
        %v5588 = vadd.f32 %v5527, %v5584
        %v5589 = vrcp.pop %v2117
        %v5590 = vrcp.pop %v2118
        %v5591 = vrcp.pop %v5565
        %v5592 = vrcp.pop %v5566
        %v5593 = vsub.f32 %v5525, %v2077
        %v5594 = vsub.f32 %v5527, %v2079
        %v5595 = vld [vmem:[%s466] sm:$0xff]
        %v5596 = vld [vmem:[%s466 + $0x8] sm:$0xff]
        %v5597 = vmul.f32 %v2117, %v5591
        %v5598 = vmul.f32 %v2118, %v5592
        %v5599 = vlog2.pop %v5597
        %v5600 = vmul.f32 %v5599, 0.6931472
        %v5601 = vlog2.pop %v5598
        %v5602 = vmul.f32 %v5601, 0.6931472
        %v5603 = vmul.f32 %v5565, %v5565
        %v5604 = vmul.f32 %v5566, %v5566
        %v5605 = vmul.f32 %v5593, %v5593
        %v5606 = vmul.f32 %v5594, %v5594
        %5609 = vrot.lane.b32.xlu0 %v5605, 8
        %v5610 = vpop.permute.xlu0 %5609
        %5611 = vrot.lane.b32.xlu0 %v5606, 8
        %v5612 = vpop.permute.xlu0 %5611
        %v5615 = vadd.f32 %v5603, %v5610
        %v5616 = vadd.f32 %v5604, %v5612
        %v5617 = vmul.f32 %v5615, 0.5
        %v5618 = vmul.f32 %v5616, 0.5
        %v5619 = vmul.f32 %v5589, %v5589
        %v5620 = vmul.f32 %v5590, %v5590
        %v5621 = vmul.f32 %v5617, %v5619
        %v5622 = vmul.f32 %v5618, %v5620
        %v5623 = vadd.f32 %v5600, %v5621
        %v5624 = vadd.f32 %v5602, %v5622
        %v5625 = vsub.f32 %v5623, 0.5
        %v5626 = vsub.f32 %v5624, 0.5
        %5629 = vrot.lane.b32.xlu0 %v5625, 120
        %v5630 = vpop.permute.xlu0 %5629
        %5631 = vrot.lane.b32.xlu0 %v5626, 120
        %v5632 = vpop.permute.xlu0 %5631
        %v5635 = vadd.f32 %v5595, %v5630
        %v5636 = vadd.f32 %v5596, %v5632
        %vm5637 = vcmask 64512
        %5638 = vst.msk [vmem:[%s466] sm:$0xff] %vm5637, %v5635
        %5639 = vst.msk [vmem:[%s466 + $0x8] sm:$0xff] %vm5637, %v5636
        %v5640 = vpack.c.bf16 %v5587, %v5587
        %v5641 = vpack.c.bf16 %v5588, %v5588
        %vm5642 = vcmask 60416
        %5643 = vst.msk [vmem:[#allocation3 + $0x8] sm:$0xf] %vm5642, %v5640
        %5644 = vst.msk [vmem:[#allocation3 + $0xc] sm:$0xf] %vm5642, %v5641
        %v5645 = vld [vmem:[#allocation3] sm:$0x8]
        %v5646 = vld [vmem:[#allocation3 + $0x4] sm:$0xf]
        %v5647 = vld [vmem:[#allocation3 + $0x8] sm:$0x7]
        %v5648 = vsel %vm582, %v5645, 0
        %v5649 = vsel %vm589, %v5646, 0
        %v5650 = vsel %vm596, %v5647, 0
        %v5654 = vrot.slane %v5648, 7
        %v5655 = vrot.slane %v5654, 4
        %v5656 = vrot.slane %v5649, 7
        %v5657 = vsel %vm605, %v5655, %v5656
        %v5658 = vrot.slane %v5656, 4
        %v5659 = vrot.slane %v5650, 7
        %v5660 = vsel %vm605, %v5658, %v5659
        %5663 = vst.msk [vmem:[#allocation5] sm:$0xf] %vm5642, %v5657
        %5664 = vst.msk [vmem:[#allocation5 + $0x8] sm:$0xf] %vm5642, %v5660
        %v5665 = vld [vmem:[#allocation3] sm:$0x8]
        %v5666 = vld [vmem:[#allocation3 + $0x4] sm:$0xf]
        %v5667 = vld [vmem:[#allocation3 + $0x8] sm:$0xf]
        %v5668 = vsel %vm657, %v5665, 0
        %v5669 = vsel %vm664, %v5666, 0
        %v5670 = vsel %vm671, %v5667, 0
        %v5672 = vshrl.u32 %v5668, 16
        %v5674 = vrot.slane %v5672, 7
        %v5675 = vrot.slane %v5674, 4
        %v5677 = vshrl.u32 %v5669, 16
        %v5679 = vrot.slane %v5677, 7
        %v5680 = vshll.u32 %v5669, 16
        %v5682 = vor.u32 %v5679, %v5680
        %v5683 = vsel %vm677, %v5675, %v5682
        %v5684 = vrot.slane %v5679, 4
        %v5686 = vshrl.u32 %v5670, 16
        %v5688 = vrot.slane %v5686, 7
        %v5689 = vshll.u32 %v5670, 16
        %v5691 = vor.u32 %v5688, %v5689
        %v5692 = vsel %vm677, %v5684, %v5691
        %5693 = vrot.lane.b32.xlu0 %v5683, 8
        %v5694 = vpop.permute.xlu0 %5693
        %5695 = vrot.lane.b32.xlu0 %v5692, 8
        %v5696 = vpop.permute.xlu0 %5695
        %vm5699 = vcmask 126016
        %5700 = vst.msk [vmem:[#allocation5] sm:$0xf] %vm5699, %v5694
        %5701 = vst.msk [vmem:[#allocation5 + $0x8] sm:$0xf] %vm5699, %v5696
        %v5702 = vld [vmem:[#allocation3 + $0x4] sm:$0xf]
        %v5703 = vld [vmem:[#allocation3 + $0x8] sm:$0xf]
        %5706 = vrot.lane.b32.xlu0 %v5702, 16
        %v5707 = vpop.permute.xlu0 %5706
        %5708 = vrot.lane.b32.xlu0 %v5703, 16
        %v5709 = vpop.permute.xlu0 %5708
        %vm5712 = vcmask 191616
        %5713 = vst.msk [vmem:[#allocation5] sm:$0xf] %vm5712, %v5707
        %5714 = vst.msk [vmem:[#allocation5 + $0x8] sm:$0xf] %vm5712, %v5709
        %v5715 = vld [vmem:[#allocation3 + $0x4] sm:$0xf]
        %v5716 = vld [vmem:[#allocation3 + $0x8] sm:$0xf]
        %v5717 = vld [vmem:[#allocation3 + $0xc] sm:$0x1]
        %v5718 = vsel %vm756, %v5715, 0
        %v5719 = vsel %vm763, %v5716, 0
        %v5720 = vsel %vm770, %v5717, 0
        %v5722 = vshrl.u32 %v5718, 16
        %v5724 = vrot.slane %v5722, 4
        %v5725 = vshll.u32 %v5718, 16
        %v5727 = vrot.slane %v5725, 5
        %v5728 = vor.u32 %v5724, %v5727
        %v5729 = vrot.slane %v5728, 4
        %v5731 = vshll.u32 %v5719, 16
        %v5733 = vrot.slane %v5731, 5
        %v5734 = vsel %vm631, %v5729, %v5733
        %v5735 = vshrl.u32 %v5719, 16
        %v5737 = vrot.slane %v5735, 4
        %v5738 = vor.u32 %v5737, %v5733
        %v5739 = vrot.slane %v5738, 4
        %v5741 = vshll.u32 %v5720, 16
        %v5743 = vrot.slane %v5741, 5
        %v5744 = vsel %vm631, %v5739, %v5743
        %5745 = vrot.lane.b32.xlu0 %v5734, 24
        %v5746 = vpop.permute.xlu0 %5745
        %5747 = vrot.lane.b32.xlu0 %v5744, 24
        %v5748 = vpop.permute.xlu0 %5747
        %vm5751 = vcmask 257216
        %5752 = vst.msk [vmem:[#allocation5] sm:$0xf] %vm5751, %v5746
        %5753 = vst.msk [vmem:[#allocation5 + $0x8] sm:$0xf] %vm5751, %v5748
        %v5754 = vld [vmem:[#allocation3 + $0x4] sm:$0xe]
        %v5755 = vld [vmem:[#allocation3 + $0x8] sm:$0xf]
        %v5756 = vld [vmem:[#allocation3 + $0xc] sm:$0x1]
        %v5757 = vsel %vm829, %v5754, 0
        %v5758 = vsel %vm836, %v5755, 0
        %v5759 = vsel %vm843, %v5756, 0
        %v5763 = vrot.slane %v5757, 5
        %v5764 = vrot.slane %v5763, 4
        %v5765 = vrot.slane %v5758, 5
        %v5766 = vsel %vm570, %v5764, %v5765
        %v5767 = vrot.slane %v5765, 4
        %v5768 = vrot.slane %v5759, 5
        %v5769 = vsel %vm570, %v5767, %v5768
        %5770 = vrot.lane.b32.xlu0 %v5766, 32
        %v5771 = vpop.permute.xlu0 %5770
        %5772 = vrot.lane.b32.xlu0 %v5769, 32
        %v5773 = vpop.permute.xlu0 %5772
        %vm5776 = vcmask 322816
        %5777 = vst.msk [vmem:[#allocation5] sm:$0xf] %vm5776, %v5771
        %5778 = vst.msk [vmem:[#allocation5 + $0x8] sm:$0xf] %vm5776, %v5773
        %v5779 = vld [vmem:[#allocation3 + $0x4] sm:$0xe]
        %v5780 = vld [vmem:[#allocation3 + $0x8] sm:$0xf]
        %v5781 = vld [vmem:[#allocation3 + $0xc] sm:$0x1]
        %v5782 = vsel %vm875, %v5779, 0
        %v5783 = vsel %vm882, %v5780, 0
        %v5784 = vsel %vm889, %v5781, 0
        %v5788 = vrot.slane %v5782, 5
        %v5789 = vrot.slane %v5788, 4
        %v5790 = vrot.slane %v5783, 5
        %v5791 = vsel %vm570, %v5789, %v5790
        %v5792 = vrot.slane %v5790, 4
        %v5793 = vrot.slane %v5784, 5
        %v5794 = vsel %vm570, %v5792, %v5793
        %5795 = vrot.lane.b32.xlu0 %v5791, 40
        %v5796 = vpop.permute.xlu0 %5795
        %5797 = vrot.lane.b32.xlu0 %v5794, 40
        %v5798 = vpop.permute.xlu0 %5797
        %vm5801 = vcmask 388416
        %5802 = vst.msk [vmem:[#allocation5] sm:$0xf] %vm5801, %v5796
        %5803 = vst.msk [vmem:[#allocation5 + $0x8] sm:$0xf] %vm5801, %v5798
        %v5804 = vld [vmem:[#allocation3 + $0x4] sm:$0xe]
        %v5805 = vld [vmem:[#allocation3 + $0x8] sm:$0xf]
        %v5806 = vld [vmem:[#allocation3 + $0xc] sm:$0x3]
        %v5807 = vsel %vm932, %v5804, 0
        %v5808 = vsel %vm939, %v5805, 0
        %v5809 = vsel %vm946, %v5806, 0
        %v5811 = vshrl.u32 %v5807, 16
        %v5813 = vrot.slane %v5811, 5
        %v5814 = vshll.u32 %v5807, 16
        %v5816 = vrot.slane %v5814, 6
        %v5817 = vor.u32 %v5813, %v5816
        %v5818 = vrot.slane %v5817, 4
        %v5820 = vshrl.u32 %v5808, 16
        %v5822 = vrot.slane %v5820, 5
        %v5823 = vshll.u32 %v5808, 16
        %v5825 = vrot.slane %v5823, 6
        %v5826 = vor.u32 %v5822, %v5825
        %v5827 = vsel %vm952, %v5818, %v5826
        %v5828 = vrot.slane %v5826, 4
        %v5830 = vshrl.u32 %v5809, 16
        %v5832 = vrot.slane %v5830, 5
        %v5833 = vshll.u32 %v5809, 16
        %v5835 = vrot.slane %v5833, 6
        %v5836 = vor.u32 %v5832, %v5835
        %v5837 = vsel %vm952, %v5828, %v5836
        %5838 = vrot.lane.b32.xlu0 %v5827, 48
        %v5839 = vpop.permute.xlu0 %5838
        %5840 = vrot.lane.b32.xlu0 %v5837, 48
        %v5841 = vpop.permute.xlu0 %5840
        %vm5844 = vcmask 454016
        %5845 = vst.msk [vmem:[#allocation5] sm:$0xf] %vm5844, %v5839
        %5846 = vst.msk [vmem:[#allocation5 + $0x8] sm:$0xf] %vm5844, %v5841
        %v5847 = vld [vmem:[#allocation3 + $0x4] sm:$0xc]
        %v5848 = vld [vmem:[#allocation3 + $0x8] sm:$0xf]
        %v5849 = vld [vmem:[#allocation3 + $0xc] sm:$0x3]
        %v5853 = vrot.slane %v5847, 6
        %v5854 = vrot.slane %v5853, 4
        %v5855 = vrot.slane %v5848, 6
        %v5856 = vsel %vm997, %v5854, %v5855
        %v5857 = vrot.slane %v5855, 4
        %v5858 = vrot.slane %v5849, 6
        %v5859 = vsel %vm997, %v5857, %v5858
        %5860 = vrot.lane.b32.xlu0 %v5856, 56
        %v5861 = vpop.permute.xlu0 %5860
        %5862 = vrot.lane.b32.xlu0 %v5859, 56
        %v5863 = vpop.permute.xlu0 %5862
        %vm5866 = vcmask 519616
        %5867 = vst.msk [vmem:[#allocation5] sm:$0xf] %vm5866, %v5861
        %5868 = vst.msk [vmem:[#allocation5 + $0x8] sm:$0xf] %vm5866, %v5863
        %v5869 = vld [vmem:[#allocation3 + $0x4] sm:$0xc]
        %v5870 = vld [vmem:[#allocation3 + $0x8] sm:$0xf]
        %v5871 = vld [vmem:[#allocation3 + $0xc] sm:$0x7]
        %v5872 = vsel %vm1031, %v5869, 0
        %v5873 = vsel %vm1038, %v5870, 0
        %v5874 = vsel %vm1045, %v5871, 0
        %v5876 = vshrl.u32 %v5872, 16
        %v5878 = vrot.slane %v5876, 6
        %v5879 = vshll.u32 %v5872, 16
        %v5881 = vrot.slane %v5879, 7
        %v5882 = vor.u32 %v5878, %v5881
        %v5883 = vrot.slane %v5882, 4
        %v5885 = vshrl.u32 %v5873, 16
        %v5887 = vrot.slane %v5885, 6
        %v5888 = vshll.u32 %v5873, 16
        %v5890 = vrot.slane %v5888, 7
        %v5891 = vor.u32 %v5887, %v5890
        %v5892 = vsel %vm916, %v5883, %v5891
        %v5893 = vrot.slane %v5891, 4
        %v5895 = vshrl.u32 %v5874, 16
        %v5897 = vrot.slane %v5895, 6
        %v5898 = vshll.u32 %v5874, 16
        %v5900 = vrot.slane %v5898, 7
        %v5901 = vor.u32 %v5897, %v5900
        %v5902 = vsel %vm916, %v5893, %v5901
        %5903 = vrot.lane.b32.xlu0 %v5892, 64
        %v5904 = vpop.permute.xlu0 %5903
        %5905 = vrot.lane.b32.xlu0 %v5902, 64
        %v5906 = vpop.permute.xlu0 %5905
        %vm5909 = vcmask 585216
        %5910 = vst.msk [vmem:[#allocation5] sm:$0xf] %vm5909, %v5904
        %5911 = vst.msk [vmem:[#allocation5 + $0x8] sm:$0xf] %vm5909, %v5906
        %v5912 = vld [vmem:[#allocation3 + $0x4] sm:$0x8]
        %v5913 = vld [vmem:[#allocation3 + $0x8] sm:$0xf]
        %v5914 = vld [vmem:[#allocation3 + $0xc] sm:$0x7]
        %v5915 = vsel %vm1095, %v5912, 0
        %v5916 = vsel %vm1102, %v5913, 0
        %v5917 = vsel %vm1109, %v5914, 0
        %v5921 = vrot.slane %v5915, 7
        %v5922 = vrot.slane %v5921, 4
        %v5923 = vrot.slane %v5916, 7
        %v5924 = vsel %vm605, %v5922, %v5923
        %v5925 = vrot.slane %v5923, 4
        %v5926 = vrot.slane %v5917, 7
        %v5927 = vsel %vm605, %v5925, %v5926
        %5928 = vrot.lane.b32.xlu0 %v5924, 72
        %v5929 = vpop.permute.xlu0 %5928
        %5930 = vrot.lane.b32.xlu0 %v5927, 72
        %v5931 = vpop.permute.xlu0 %5930
        %vm5934 = vcmask 650816
        %5935 = vst.msk [vmem:[#allocation5] sm:$0xf] %vm5934, %v5929
        %5936 = vst.msk [vmem:[#allocation5 + $0x8] sm:$0xf] %vm5934, %v5931
        %v5937 = vld [vmem:[#allocation3 + $0x4] sm:$0x8]
        %v5938 = vld [vmem:[#allocation3 + $0x8] sm:$0xf]
        %v5939 = vld [vmem:[#allocation3 + $0xc] sm:$0x7]
        %v5940 = vsel %vm582, %v5937, 0
        %v5941 = vsel %vm589, %v5938, 0
        %v5942 = vsel %vm596, %v5939, 0
        %v5946 = vrot.slane %v5940, 7
        %v5947 = vrot.slane %v5946, 4
        %v5948 = vrot.slane %v5941, 7
        %v5949 = vsel %vm605, %v5947, %v5948
        %v5950 = vrot.slane %v5948, 4
        %v5951 = vrot.slane %v5942, 7
        %v5952 = vsel %vm605, %v5950, %v5951
        %5953 = vrot.lane.b32.xlu0 %v5949, 80
        %v5954 = vpop.permute.xlu0 %5953
        %5955 = vrot.lane.b32.xlu0 %v5952, 80
        %v5956 = vpop.permute.xlu0 %5955
        %vm5959 = vcmask 716416
        %5960 = vst.msk [vmem:[#allocation5] sm:$0xf] %vm5959, %v5954
        %5961 = vst.msk [vmem:[#allocation5 + $0x8] sm:$0xf] %vm5959, %v5956
        %v5962 = vld [vmem:[#allocation3 + $0x4] sm:$0x8]
        %v5963 = vld [vmem:[#allocation3 + $0x8] sm:$0xf]
        %v5964 = vld [vmem:[#allocation3 + $0xc] sm:$0xf]
        %v5965 = vsel %vm657, %v5962, 0
        %v5966 = vsel %vm664, %v5963, 0
        %v5967 = vsel %vm671, %v5964, 0
        %v5969 = vshrl.u32 %v5965, 16
        %v5971 = vrot.slane %v5969, 7
        %v5972 = vrot.slane %v5971, 4
        %v5974 = vshrl.u32 %v5966, 16
        %v5976 = vrot.slane %v5974, 7
        %v5977 = vshll.u32 %v5966, 16
        %v5979 = vor.u32 %v5976, %v5977
        %v5980 = vsel %vm677, %v5972, %v5979
        %v5981 = vrot.slane %v5976, 4
        %v5983 = vshrl.u32 %v5967, 16
        %v5985 = vrot.slane %v5983, 7
        %v5986 = vshll.u32 %v5967, 16
        %v5988 = vor.u32 %v5985, %v5986
        %v5989 = vsel %vm677, %v5981, %v5988
        %5990 = vrot.lane.b32.xlu0 %v5980, 88
        %v5991 = vpop.permute.xlu0 %5990
        %5992 = vrot.lane.b32.xlu0 %v5989, 88
        %v5993 = vpop.permute.xlu0 %5992
        %vm5996 = vcmask 782016
        %5997 = vst.msk [vmem:[#allocation5] sm:$0xf] %vm5996, %v5991
        %5998 = vst.msk [vmem:[#allocation5 + $0x8] sm:$0xf] %vm5996, %v5993
        %v5999 = vld [vmem:[#allocation3 + $0x8] sm:$0xf]
        %v6000 = vld [vmem:[#allocation3 + $0xc] sm:$0xf]
        %6003 = vrot.lane.b32.xlu0 %v5999, 96
        %v6004 = vpop.permute.xlu0 %6003
        %6005 = vrot.lane.b32.xlu0 %v6000, 96
        %v6006 = vpop.permute.xlu0 %6005
        %vm6009 = vcmask 847616
        %6010 = vst.msk [vmem:[#allocation5] sm:$0xf] %vm6009, %v6004
        %6011 = vst.msk [vmem:[#allocation5 + $0x8] sm:$0xf] %vm6009, %v6006
        %v6012 = vld [vmem:[#allocation3 + $0x8] sm:$0xf]
        %v6013 = vld [vmem:[#allocation3 + $0xc] sm:$0xf]
        %v6014 = vld [vmem:[#allocation3 + $0x10] sm:$0x1]
        %v6015 = vsel %vm756, %v6012, 0
        %v6016 = vsel %vm763, %v6013, 0
        %v6017 = vsel %vm770, %v6014, 0
        %v6019 = vshrl.u32 %v6015, 16
        %v6021 = vrot.slane %v6019, 4
        %v6022 = vshll.u32 %v6015, 16
        %v6024 = vrot.slane %v6022, 5
        %v6025 = vor.u32 %v6021, %v6024
        %v6026 = vrot.slane %v6025, 4
        %v6028 = vshll.u32 %v6016, 16
        %v6030 = vrot.slane %v6028, 5
        %v6031 = vsel %vm631, %v6026, %v6030
        %v6032 = vshrl.u32 %v6016, 16
        %v6034 = vrot.slane %v6032, 4
        %v6035 = vor.u32 %v6034, %v6030
        %v6036 = vrot.slane %v6035, 4
        %v6038 = vshll.u32 %v6017, 16
        %v6040 = vrot.slane %v6038, 5
        %v6041 = vsel %vm631, %v6036, %v6040
        %6042 = vrot.lane.b32.xlu0 %v6031, 104
        %v6043 = vpop.permute.xlu0 %6042
        %6044 = vrot.lane.b32.xlu0 %v6041, 104
        %v6045 = vpop.permute.xlu0 %6044
        %vm6048 = vcmask 913216
        %6049 = vst.msk [vmem:[#allocation5] sm:$0xf] %vm6048, %v6043
        %6050 = vst.msk [vmem:[#allocation5 + $0x8] sm:$0xf] %vm6048, %v6045
        %v6051 = vld [vmem:[#allocation3 + $0x8] sm:$0xe]
        %v6052 = vld [vmem:[#allocation3 + $0xc] sm:$0xf]
        %v6053 = vld [vmem:[#allocation3 + $0x10] sm:$0x1]
        %v6054 = vsel %vm829, %v6051, 0
        %v6055 = vsel %vm836, %v6052, 0
        %v6056 = vsel %vm843, %v6053, 0
        %v6060 = vrot.slane %v6054, 5
        %v6061 = vrot.slane %v6060, 4
        %v6062 = vrot.slane %v6055, 5
        %v6063 = vsel %vm570, %v6061, %v6062
        %v6064 = vrot.slane %v6062, 4
        %v6065 = vrot.slane %v6056, 5
        %v6066 = vsel %vm570, %v6064, %v6065
        %6067 = vrot.lane.b32.xlu0 %v6063, 112
        %v6068 = vpop.permute.xlu0 %6067
        %6069 = vrot.lane.b32.xlu0 %v6066, 112
        %v6070 = vpop.permute.xlu0 %6069
        %vm6073 = vcmask 978816
        %6074 = vst.msk [vmem:[#allocation5] sm:$0xf] %vm6073, %v6068
        %6075 = vst.msk [vmem:[#allocation5 + $0x8] sm:$0xf] %vm6073, %v6070
        %v6076 = vld [vmem:[#allocation3 + $0x8] sm:$0xe]
        %v6077 = vld [vmem:[#allocation3 + $0xc] sm:$0xf]
        %v6078 = vld [vmem:[#allocation3 + $0x10] sm:$0x1]
        %v6079 = vsel %vm875, %v6076, 0
        %v6080 = vsel %vm882, %v6077, 0
        %v6081 = vsel %vm889, %v6078, 0
        %v6085 = vrot.slane %v6079, 5
        %v6086 = vrot.slane %v6085, 4
        %v6087 = vrot.slane %v6080, 5
        %v6088 = vsel %vm570, %v6086, %v6087
        %v6089 = vrot.slane %v6087, 4
        %v6090 = vrot.slane %v6081, 5
        %v6091 = vsel %vm570, %v6089, %v6090
        %6092 = vrot.lane.b32.xlu0 %v6088, 120
        %v6093 = vpop.permute.xlu0 %6092
        %6094 = vrot.lane.b32.xlu0 %v6091, 120
        %v6095 = vpop.permute.xlu0 %6094
        %vm6098 = vcmask 1044416
        %6099 = vst.msk [vmem:[#allocation5] sm:$0xf] %vm6098, %v6093
        %6100 = vst.msk [vmem:[#allocation5 + $0x8] sm:$0xf] %vm6098, %v6095
        %v6101 = vld [vmem:[#allocation3 + $0x8] sm:$0xe]
        %v6102 = vld [vmem:[#allocation3 + $0xc] sm:$0xf]
        %v6103 = vld [vmem:[#allocation3 + $0x10] sm:$0x3]
        %v6104 = vsel %vm932, %v6101, 0
        %v6105 = vsel %vm939, %v6102, 0
        %v6106 = vsel %vm946, %v6103, 0
        %v6108 = vshrl.u32 %v6104, 16
        %v6110 = vrot.slane %v6108, 5
        %v6111 = vshll.u32 %v6104, 16
        %v6113 = vrot.slane %v6111, 6
        %v6114 = vor.u32 %v6110, %v6113
        %v6115 = vrot.slane %v6114, 4
        %v6117 = vshrl.u32 %v6105, 16
        %v6119 = vrot.slane %v6117, 5
        %v6120 = vshll.u32 %v6105, 16
        %v6122 = vrot.slane %v6120, 6
        %v6123 = vor.u32 %v6119, %v6122
        %v6124 = vsel %vm952, %v6115, %v6123
        %v6125 = vrot.slane %v6123, 4
        %v6127 = vshrl.u32 %v6106, 16
        %v6129 = vrot.slane %v6127, 5
        %v6130 = vshll.u32 %v6106, 16
        %v6132 = vrot.slane %v6130, 6
        %v6133 = vor.u32 %v6129, %v6132
        %v6134 = vsel %vm952, %v6125, %v6133
        %6137 = vst.msk [vmem:[#allocation5 + $0x4] sm:$0xf] %vm5642, %v6124
        %6138 = vst.msk [vmem:[#allocation5 + $0xc] sm:$0xf] %vm5642, %v6134
        %v6139 = vld [vmem:[#allocation3 + $0x8] sm:$0xc]
        %v6140 = vld [vmem:[#allocation3 + $0xc] sm:$0xf]
        %v6141 = vld [vmem:[#allocation3 + $0x10] sm:$0x3]
        %v6145 = vrot.slane %v6139, 6
        %v6146 = vrot.slane %v6145, 4
        %v6147 = vrot.slane %v6140, 6
        %v6148 = vsel %vm997, %v6146, %v6147
        %v6149 = vrot.slane %v6147, 4
        %v6150 = vrot.slane %v6141, 6
        %v6151 = vsel %vm997, %v6149, %v6150
        %6152 = vrot.lane.b32.xlu0 %v6148, 8
        %v6153 = vpop.permute.xlu0 %6152
        %6154 = vrot.lane.b32.xlu0 %v6151, 8
        %v6155 = vpop.permute.xlu0 %6154
        %6158 = vst.msk [vmem:[#allocation5 + $0x4] sm:$0xf] %vm5699, %v6153
        %6159 = vst.msk [vmem:[#allocation5 + $0xc] sm:$0xf] %vm5699, %v6155
        %v6160 = vld [vmem:[#allocation3 + $0x8] sm:$0xc]
        %v6161 = vld [vmem:[#allocation3 + $0xc] sm:$0xf]
        %v6162 = vld [vmem:[#allocation3 + $0x10] sm:$0x7]
        %v6163 = vsel %vm1031, %v6160, 0
        %v6164 = vsel %vm1038, %v6161, 0
        %v6165 = vsel %vm1045, %v6162, 0
        %v6167 = vshrl.u32 %v6163, 16
        %v6169 = vrot.slane %v6167, 6
        %v6170 = vshll.u32 %v6163, 16
        %v6172 = vrot.slane %v6170, 7
        %v6173 = vor.u32 %v6169, %v6172
        %v6174 = vrot.slane %v6173, 4
        %v6176 = vshrl.u32 %v6164, 16
        %v6178 = vrot.slane %v6176, 6
        %v6179 = vshll.u32 %v6164, 16
        %v6181 = vrot.slane %v6179, 7
        %v6182 = vor.u32 %v6178, %v6181
        %v6183 = vsel %vm916, %v6174, %v6182
        %v6184 = vrot.slane %v6182, 4
        %v6186 = vshrl.u32 %v6165, 16
        %v6188 = vrot.slane %v6186, 6
        %v6189 = vshll.u32 %v6165, 16
        %v6191 = vrot.slane %v6189, 7
        %v6192 = vor.u32 %v6188, %v6191
        %v6193 = vsel %vm916, %v6184, %v6192
        %6194 = vrot.lane.b32.xlu0 %v6183, 16
        %v6195 = vpop.permute.xlu0 %6194
        %6196 = vrot.lane.b32.xlu0 %v6193, 16
        %v6197 = vpop.permute.xlu0 %6196
        %6200 = vst.msk [vmem:[#allocation5 + $0x4] sm:$0xf] %vm5712, %v6195
        %6201 = vst.msk [vmem:[#allocation5 + $0xc] sm:$0xf] %vm5712, %v6197
        %v6202 = vld [vmem:[#allocation3 + $0x8] sm:$0x8]
        %v6203 = vld [vmem:[#allocation3 + $0xc] sm:$0xf]
        %v6204 = vld [vmem:[#allocation3 + $0x10] sm:$0x7]
        %v6205 = vsel %vm1095, %v6202, 0
        %v6206 = vsel %vm1102, %v6203, 0
        %v6207 = vsel %vm1109, %v6204, 0
        %v6211 = vrot.slane %v6205, 7
        %v6212 = vrot.slane %v6211, 4
        %v6213 = vrot.slane %v6206, 7
        %v6214 = vsel %vm605, %v6212, %v6213
        %v6215 = vrot.slane %v6213, 4
        %v6216 = vrot.slane %v6207, 7
        %v6217 = vsel %vm605, %v6215, %v6216
        %6218 = vrot.lane.b32.xlu0 %v6214, 24
        %v6219 = vpop.permute.xlu0 %6218
        %6220 = vrot.lane.b32.xlu0 %v6217, 24
        %v6221 = vpop.permute.xlu0 %6220
        %6224 = vst.msk [vmem:[#allocation5 + $0x4] sm:$0xf] %vm5751, %v6219
        %6225 = vst.msk [vmem:[#allocation5 + $0xc] sm:$0xf] %vm5751, %v6221
        %v6226 = vld [vmem:[#allocation3 + $0x8] sm:$0x8]
        %v6227 = vld [vmem:[#allocation3 + $0xc] sm:$0xf]
        %v6228 = vld [vmem:[#allocation3 + $0x10] sm:$0x7]
        %v6229 = vsel %vm582, %v6226, 0
        %v6230 = vsel %vm589, %v6227, 0
        %v6231 = vsel %vm596, %v6228, 0
        %v6235 = vrot.slane %v6229, 7
        %v6236 = vrot.slane %v6235, 4
        %v6237 = vrot.slane %v6230, 7
        %v6238 = vsel %vm605, %v6236, %v6237
        %v6239 = vrot.slane %v6237, 4
        %v6240 = vrot.slane %v6231, 7
        %v6241 = vsel %vm605, %v6239, %v6240
        %6242 = vrot.lane.b32.xlu0 %v6238, 32
        %v6243 = vpop.permute.xlu0 %6242
        %6244 = vrot.lane.b32.xlu0 %v6241, 32
        %v6245 = vpop.permute.xlu0 %6244
        %6248 = vst.msk [vmem:[#allocation5 + $0x4] sm:$0xf] %vm5776, %v6243
        %6249 = vst.msk [vmem:[#allocation5 + $0xc] sm:$0xf] %vm5776, %v6245
        %v6250 = vld [vmem:[#allocation3 + $0x8] sm:$0x8]
        %v6251 = vld [vmem:[#allocation3 + $0xc] sm:$0xf]
        %v6252 = vld [vmem:[#allocation3 + $0x10] sm:$0xf]
        %v6253 = vsel %vm657, %v6250, 0
        %v6254 = vsel %vm664, %v6251, 0
        %v6255 = vsel %vm671, %v6252, 0
        %v6257 = vshrl.u32 %v6253, 16
        %v6259 = vrot.slane %v6257, 7
        %v6260 = vrot.slane %v6259, 4
        %v6262 = vshrl.u32 %v6254, 16
        %v6264 = vrot.slane %v6262, 7
        %v6265 = vshll.u32 %v6254, 16
        %v6267 = vor.u32 %v6264, %v6265
        %v6268 = vsel %vm677, %v6260, %v6267
        %v6269 = vrot.slane %v6264, 4
        %v6271 = vshrl.u32 %v6255, 16
        %v6273 = vrot.slane %v6271, 7
        %v6274 = vshll.u32 %v6255, 16
        %v6276 = vor.u32 %v6273, %v6274
        %v6277 = vsel %vm677, %v6269, %v6276
        %6278 = vrot.lane.b32.xlu0 %v6268, 40
        %v6279 = vpop.permute.xlu0 %6278
        %6280 = vrot.lane.b32.xlu0 %v6277, 40
        %v6281 = vpop.permute.xlu0 %6280
        %6284 = vst.msk [vmem:[#allocation5 + $0x4] sm:$0xf] %vm5801, %v6279
        %6285 = vst.msk [vmem:[#allocation5 + $0xc] sm:$0xf] %vm5801, %v6281
        %v6286 = vld [vmem:[#allocation3 + $0xc] sm:$0xf]
        %v6287 = vld [vmem:[#allocation3 + $0x10] sm:$0xf]
        %6290 = vrot.lane.b32.xlu0 %v6286, 48
        %v6291 = vpop.permute.xlu0 %6290
        %6292 = vrot.lane.b32.xlu0 %v6287, 48
        %v6293 = vpop.permute.xlu0 %6292
        %6296 = vst.msk [vmem:[#allocation5 + $0x4] sm:$0xf] %vm5844, %v6291
        %6297 = vst.msk [vmem:[#allocation5 + $0xc] sm:$0xf] %vm5844, %v6293
        %v6298 = vld [vmem:[#allocation3 + $0xc] sm:$0xf]
        %v6299 = vld [vmem:[#allocation3 + $0x10] sm:$0xf]
        %v6300 = vld [vmem:[#allocation3 + $0x14] sm:$0x1]
        %v6301 = vsel %vm756, %v6298, 0
        %v6302 = vsel %vm763, %v6299, 0
        %v6303 = vsel %vm770, %v6300, 0
        %v6305 = vshrl.u32 %v6301, 16
        %v6307 = vrot.slane %v6305, 4
        %v6308 = vshll.u32 %v6301, 16
        %v6310 = vrot.slane %v6308, 5
        %v6311 = vor.u32 %v6307, %v6310
        %v6312 = vrot.slane %v6311, 4
        %v6314 = vshll.u32 %v6302, 16
        %v6316 = vrot.slane %v6314, 5
        %v6317 = vsel %vm631, %v6312, %v6316
        %v6318 = vshrl.u32 %v6302, 16
        %v6320 = vrot.slane %v6318, 4
        %v6321 = vor.u32 %v6320, %v6316
        %v6322 = vrot.slane %v6321, 4
        %v6324 = vshll.u32 %v6303, 16
        %v6326 = vrot.slane %v6324, 5
        %v6327 = vsel %vm631, %v6322, %v6326
        %6328 = vrot.lane.b32.xlu0 %v6317, 56
        %v6329 = vpop.permute.xlu0 %6328
        %6330 = vrot.lane.b32.xlu0 %v6327, 56
        %v6331 = vpop.permute.xlu0 %6330
        %6334 = vst.msk [vmem:[#allocation5 + $0x4] sm:$0xf] %vm5866, %v6329
        %6335 = vst.msk [vmem:[#allocation5 + $0xc] sm:$0xf] %vm5866, %v6331
        %v6336 = vld [vmem:[#allocation3 + $0xc] sm:$0xe]
        %v6337 = vld [vmem:[#allocation3 + $0x10] sm:$0xf]
        %v6338 = vld [vmem:[#allocation3 + $0x14] sm:$0x1]
        %v6339 = vsel %vm829, %v6336, 0
        %v6340 = vsel %vm836, %v6337, 0
        %v6341 = vsel %vm843, %v6338, 0
        %v6345 = vrot.slane %v6339, 5
        %v6346 = vrot.slane %v6345, 4
        %v6347 = vrot.slane %v6340, 5
        %v6348 = vsel %vm570, %v6346, %v6347
        %v6349 = vrot.slane %v6347, 4
        %v6350 = vrot.slane %v6341, 5
        %v6351 = vsel %vm570, %v6349, %v6350
        %6352 = vrot.lane.b32.xlu0 %v6348, 64
        %v6353 = vpop.permute.xlu0 %6352
        %6354 = vrot.lane.b32.xlu0 %v6351, 64
        %v6355 = vpop.permute.xlu0 %6354
        %6358 = vst.msk [vmem:[#allocation5 + $0x4] sm:$0xf] %vm5909, %v6353
        %6359 = vst.msk [vmem:[#allocation5 + $0xc] sm:$0xf] %vm5909, %v6355
        %v6360 = vld [vmem:[#allocation5] sm:$0xff]
        %v6361 = vld [vmem:[#allocation5 + $0x8] sm:$0xff]
        %v6362 = vld [vmem:[%s7] sm:$0xf]
        %v6363 = vld [vmem:[%s7 + $0x4] sm:$0xf]
        %v6364 = vld [vmem:[%s7 + $0x8] sm:$0xf]
        %v6365 = vld [vmem:[%s7 + $0xc] sm:$0xf]
        %v6366 = vld [vmem:[%s7 + $0x10] sm:$0xf]
        %v6367 = vld [vmem:[%s7 + $0x14] sm:$0xf]
        %v6368 = vld [vmem:[%s7 + $0x18] sm:$0xf]
        %v6369 = vld [vmem:[%s7 + $0x1c] sm:$0xf]
        %v6370 = vld [vmem:[%s7 + $0x20] sm:$0xf]
        %v6371 = vld [vmem:[%s7 + $0x24] sm:$0xf]
        %v6372 = vld [vmem:[%s7 + $0x28] sm:$0xf]
        %v6373 = vld [vmem:[%s7 + $0x2c] sm:$0xf]
        %v6374 = vld [vmem:[%s7 + $0x30] sm:$0xf]
        %v6375 = vld [vmem:[%s7 + $0x34] sm:$0xf]
        %v6376 = vld [vmem:[%s7 + $0x38] sm:$0xf]
        %v6377 = vld [vmem:[%s7 + $0x3c] sm:$0xf]
        %v6378 = vld [vmem:[%s7 + $0x40] sm:$0xf]
        %v6379 = vld [vmem:[%s7 + $0x44] sm:$0xf]
        %v6380 = vld [vmem:[%s7 + $0x48] sm:$0xf]
        %v6381 = vld [vmem:[%s7 + $0x4c] sm:$0xf]
        %v6382 = vld [vmem:[%s7 + $0x50] sm:$0xf]
        %v6383 = vld [vmem:[%s7 + $0x54] sm:$0xf]
        %v6384 = vld [vmem:[%s7 + $0x58] sm:$0xf]
        %v6385 = vld [vmem:[%s7 + $0x5c] sm:$0xf]
        %v6386 = vld [vmem:[%s7 + $0x60] sm:$0xf]
        %v6387 = vld [vmem:[%s485] sm:$0xff]
        %v6388 = vld [vmem:[%s485 + $0x8] sm:$0xff]
        %v6391 = vunpack.c.l.b16 %v6360
        %v6392 = vunpack.c.h.b16 %v6360
        %v6393 = vunpack.c.l.b16 %v6361
        %v6394 = vunpack.c.h.b16 %v6361
        %v6395 = vpack.c.b16 %v6393, %v6391
        %v6396 = vpack.c.b16 %v6394, %v6392
        %v6423 = vunpack.c.l.b16 %v6362
        %v6424 = vunpack.c.l.b16 %v6363
        %v6425 = vunpack.c.l.b16 %v6364
        %v6426 = vunpack.c.l.b16 %v6365
        %v6427 = vunpack.c.l.b16 %v6366
        %v6428 = vunpack.c.l.b16 %v6367
        %v6429 = vunpack.c.l.b16 %v6368
        %v6430 = vunpack.c.l.b16 %v6369
        %v6431 = vunpack.c.l.b16 %v6370
        %v6432 = vunpack.c.l.b16 %v6371
        %v6433 = vunpack.c.l.b16 %v6372
        %v6434 = vunpack.c.l.b16 %v6373
        %v6435 = vunpack.c.l.b16 %v6374
        %v6436 = vunpack.c.l.b16 %v6375
        %v6437 = vunpack.c.l.b16 %v6376
        %v6438 = vunpack.c.l.b16 %v6377
        %v6439 = vunpack.c.l.b16 %v6378
        %v6440 = vunpack.c.l.b16 %v6379
        %v6441 = vunpack.c.l.b16 %v6380
        %v6442 = vunpack.c.l.b16 %v6381
        %v6443 = vunpack.c.l.b16 %v6382
        %v6444 = vunpack.c.l.b16 %v6383
        %v6445 = vunpack.c.l.b16 %v6384
        %v6446 = vunpack.c.l.b16 %v6385
        %v6447 = vunpack.c.l.b16 %v6386
        %v6448 = vpack.c.b16 %v6424, %v6423
        %v6449 = vpack.c.b16 %v6426, %v6425
        %v6450 = vpack.c.b16 %v6428, %v6427
        %v6451 = vpack.c.b16 %v6430, %v6429
        %v6452 = vpack.c.b16 %v6432, %v6431
        %v6453 = vpack.c.b16 %v6434, %v6433
        %v6454 = vpack.c.b16 %v6436, %v6435
        %v6455 = vpack.c.b16 %v6438, %v6437
        %v6456 = vpack.c.b16 %v6440, %v6439
        %v6457 = vpack.c.b16 %v6442, %v6441
        %v6458 = vpack.c.b16 %v6444, %v6443
        %v6459 = vpack.c.b16 %v6446, %v6445
        %v6460 = vpack.c.b16 %v6447, %v6447
        %vm6473 = vcmask 588800
        %v6475 = vsel %vm6473, %v6396, 0
        %vm6477 = vcmask 1043456
        %v6479 = vsel %vm6477, %v6460, 0
        %6481 = vmatpush.bf16.msra.mxu0 %v6455
        %6482 = vmatpush.bf16.msra.mxu0 %v6454
        %6483 = vmatpush.bf16.msra.mxu0 %v6453
        %6484 = vmatpush.bf16.msra.mxu0 %v6452
        %6485 = vmatpush.bf16.msra.mxu0 %v6451
        %6486 = vmatpush.bf16.msra.mxu0 %v6450
        %6487 = vmatpush.bf16.msra.mxu0 %v6449
        %6488 = vmatpush.bf16.msra.mxu0 %v6448
        %6489 = vmatmul.bf16.gmra.mxu0 %v6395
        %v6490 = vpop.f32.mrf.mxu0
        %v6491 = vadd.f32 %v6387, %v6490
        %v6492 = vpop.f32.mrf.mxu0
        %v6493 = vadd.f32 %v6388, %v6492
        %6494 = vdwg.mxu0
        %6495 = vmatpush.bf16.msra.mxu0 0
        %6496 = vmatpush.bf16.msra.mxu0 0
        %6497 = vmatpush.bf16.msra.mxu0 0
        %6498 = vmatpush.bf16.msra.mxu0 %v6479
        %6499 = vmatpush.bf16.msra.mxu0 %v6459
        %6500 = vmatpush.bf16.msra.mxu0 %v6458
        %6501 = vmatpush.bf16.msra.mxu0 %v6457
        %6502 = vmatpush.bf16.msra.mxu0 %v6456
        %6503 = vmatmul.bf16.gmra.mxu0 %v6475
        %v6504 = vpop.f32.mrf.mxu0
        %v6505 = vadd.f32 %v6491, %v6504
        %v6506 = vpop.f32.mrf.mxu0
        %v6507 = vadd.f32 %v6493, %v6506
        %6508 = vdwg.mxu0
        %v6509 = vxor.u32 %v6505, 2147483648
        %v6510 = vxor.u32 %v6507, 2147483648
        %v6511 = vmul.f32 %v6509, 1.442695
        %v6512 = vpow.pop %v6511
        %v6513 = vmul.f32 %v6510, 1.442695
        %v6514 = vpow.pop %v6513
        %v6515 = vadd.f32 %v6512, 1.0
        %v6516 = vadd.f32 %v6514, 1.0
        %v6517 = vrcp.pop %v6515
        %v6518 = vmul.f32 %v6515, %v6517
        %v6519 = vsub.f32 1.0, %v6518
        %v6520 = vmul.f32 %v6517, %v6519
        %v6521 = vadd.f32 %v6517, %v6520
        %vm6522 = vweird.f32 %v6515
        %vm6523 = vweird.f32 %v6517
        %vm6524 = vmor %vm6522, %vm6523
        %v6525 = vsel %vm6524, %v6517, %v6521
        %v6526 = vand.u32 2147483647, %v6515
        %vm6527 = vcmp.eq.f32.partialorder %v6526, 8.507059e+37
        %v6528 = vand.u32 %v6515, 2147483648
        %v6529 = vor.u32 1.1754944e-38, %v6528
        %v6530 = vsel %vm6527, %v6529, %v6525
        %v6531 = vmul.f32 1.0, %v6530
        %v6532 = vrcp.pop %v6516
        %v6533 = vmul.f32 %v6516, %v6532
        %v6534 = vsub.f32 1.0, %v6533
        %v6535 = vmul.f32 %v6532, %v6534
        %v6536 = vadd.f32 %v6532, %v6535
        %vm6537 = vweird.f32 %v6516
        %vm6538 = vweird.f32 %v6532
        %vm6539 = vmor %vm6537, %vm6538
        %v6540 = vsel %vm6539, %v6532, %v6536
        %v6541 = vand.u32 2147483647, %v6516
        %vm6542 = vcmp.eq.f32.partialorder %v6541, 8.507059e+37
        %v6543 = vand.u32 %v6516, 2147483648
        %v6544 = vor.u32 1.1754944e-38, %v6543
        %v6545 = vsel %vm6542, %v6544, %v6540
        %v6546 = vmul.f32 1.0, %v6545
        %s6547 = scalar_lea.vmem %s7, 100
        %v6548 = vld [vmem:[%s6547] sm:$0xf]
        %v6549 = vld [vmem:[%s6547 + $0x4] sm:$0xf]
        %v6550 = vld [vmem:[%s6547 + $0x8] sm:$0xf]
        %v6551 = vld [vmem:[%s6547 + $0xc] sm:$0xf]
        %v6552 = vld [vmem:[%s6547 + $0x10] sm:$0xf]
        %v6553 = vld [vmem:[%s6547 + $0x14] sm:$0xf]
        %v6554 = vld [vmem:[%s6547 + $0x18] sm:$0xf]
        %v6555 = vld [vmem:[%s6547 + $0x1c] sm:$0xf]
        %v6556 = vld [vmem:[%s6547 + $0x20] sm:$0xf]
        %v6557 = vld [vmem:[%s6547 + $0x24] sm:$0xf]
        %v6558 = vld [vmem:[%s6547 + $0x28] sm:$0xf]
        %v6559 = vld [vmem:[%s6547 + $0x2c] sm:$0xf]
        %v6560 = vld [vmem:[%s6547 + $0x30] sm:$0xf]
        %v6561 = vld [vmem:[%s6547 + $0x34] sm:$0xf]
        %v6562 = vld [vmem:[%s6547 + $0x38] sm:$0xf]
        %v6563 = vld [vmem:[%s6547 + $0x3c] sm:$0xf]
        %v6564 = vld [vmem:[%s6547 + $0x40] sm:$0xf]
        %v6565 = vld [vmem:[%s6547 + $0x44] sm:$0xf]
        %v6566 = vld [vmem:[%s6547 + $0x48] sm:$0xf]
        %v6567 = vld [vmem:[%s6547 + $0x4c] sm:$0xf]
        %v6568 = vld [vmem:[%s6547 + $0x50] sm:$0xf]
        %v6569 = vld [vmem:[%s6547 + $0x54] sm:$0xf]
        %v6570 = vld [vmem:[%s6547 + $0x58] sm:$0xf]
        %v6571 = vld [vmem:[%s6547 + $0x5c] sm:$0xf]
        %v6572 = vld [vmem:[%s6547 + $0x60] sm:$0xf]
        %s6573 = scalar_lea.vmem %s485, 16
        %v6574 = vld [vmem:[%s6573] sm:$0xff]
        %v6575 = vld [vmem:[%s6573 + $0x8] sm:$0xff]
        %v6601 = vunpack.c.l.b16 %v6548
        %v6602 = vunpack.c.l.b16 %v6549
        %v6603 = vunpack.c.l.b16 %v6550
        %v6604 = vunpack.c.l.b16 %v6551
        %v6605 = vunpack.c.l.b16 %v6552
        %v6606 = vunpack.c.l.b16 %v6553
        %v6607 = vunpack.c.l.b16 %v6554
        %v6608 = vunpack.c.l.b16 %v6555
        %v6609 = vunpack.c.l.b16 %v6556
        %v6610 = vunpack.c.l.b16 %v6557
        %v6611 = vunpack.c.l.b16 %v6558
        %v6612 = vunpack.c.l.b16 %v6559
        %v6613 = vunpack.c.l.b16 %v6560
        %v6614 = vunpack.c.l.b16 %v6561
        %v6615 = vunpack.c.l.b16 %v6562
        %v6616 = vunpack.c.l.b16 %v6563
        %v6617 = vunpack.c.l.b16 %v6564
        %v6618 = vunpack.c.l.b16 %v6565
        %v6619 = vunpack.c.l.b16 %v6566
        %v6620 = vunpack.c.l.b16 %v6567
        %v6621 = vunpack.c.l.b16 %v6568
        %v6622 = vunpack.c.l.b16 %v6569
        %v6623 = vunpack.c.l.b16 %v6570
        %v6624 = vunpack.c.l.b16 %v6571
        %v6625 = vunpack.c.l.b16 %v6572
        %v6626 = vpack.c.b16 %v6602, %v6601
        %v6627 = vpack.c.b16 %v6604, %v6603
        %v6628 = vpack.c.b16 %v6606, %v6605
        %v6629 = vpack.c.b16 %v6608, %v6607
        %v6630 = vpack.c.b16 %v6610, %v6609
        %v6631 = vpack.c.b16 %v6612, %v6611
        %v6632 = vpack.c.b16 %v6614, %v6613
        %v6633 = vpack.c.b16 %v6616, %v6615
        %v6634 = vpack.c.b16 %v6618, %v6617
        %v6635 = vpack.c.b16 %v6620, %v6619
        %v6636 = vpack.c.b16 %v6622, %v6621
        %v6637 = vpack.c.b16 %v6624, %v6623
        %v6638 = vpack.c.b16 %v6625, %v6625
        %v6652 = vsel %vm6477, %v6638, 0
        %6654 = vmatpush.bf16.msra.mxu0 %v6633
        %6655 = vmatpush.bf16.msra.mxu0 %v6632
        %6656 = vmatpush.bf16.msra.mxu0 %v6631
        %6657 = vmatpush.bf16.msra.mxu0 %v6630
        %6658 = vmatpush.bf16.msra.mxu0 %v6629
        %6659 = vmatpush.bf16.msra.mxu0 %v6628
        %6660 = vmatpush.bf16.msra.mxu0 %v6627
        %6661 = vmatpush.bf16.msra.mxu0 %v6626
        %6662 = vmatmul.bf16.gmra.mxu0 %v6395
        %v6663 = vpop.f32.mrf.mxu0
        %v6664 = vadd.f32 %v6574, %v6663
        %v6665 = vpop.f32.mrf.mxu0
        %v6666 = vadd.f32 %v6575, %v6665
        %6667 = vdwg.mxu0
        %6668 = vmatpush.bf16.msra.mxu0 0
        %6669 = vmatpush.bf16.msra.mxu0 0
        %6670 = vmatpush.bf16.msra.mxu0 0
        %6671 = vmatpush.bf16.msra.mxu0 %v6652
        %6672 = vmatpush.bf16.msra.mxu0 %v6637
        %6673 = vmatpush.bf16.msra.mxu0 %v6636
        %6674 = vmatpush.bf16.msra.mxu0 %v6635
        %6675 = vmatpush.bf16.msra.mxu0 %v6634
        %6676 = vmatmul.bf16.gmra.mxu0 %v6475
        %v6677 = vpop.f32.mrf.mxu0
        %v6678 = vadd.f32 %v6664, %v6677
        %v6679 = vpop.f32.mrf.mxu0
        %v6680 = vadd.f32 %v6666, %v6679
        %6681 = vdwg.mxu0
        %v6682 = vxor.u32 %v6678, 2147483648
        %v6683 = vxor.u32 %v6680, 2147483648
        %v6684 = vmul.f32 %v6682, 1.442695
        %v6685 = vpow.pop %v6684
        %v6686 = vmul.f32 %v6683, 1.442695
        %v6687 = vpow.pop %v6686
        %v6688 = vadd.f32 %v6685, 1.0
        %v6689 = vadd.f32 %v6687, 1.0
        %v6690 = vrcp.pop %v6688
        %v6691 = vmul.f32 %v6688, %v6690
        %v6692 = vsub.f32 1.0, %v6691
        %v6693 = vmul.f32 %v6690, %v6692
        %v6694 = vadd.f32 %v6690, %v6693
        %vm6695 = vweird.f32 %v6688
        %vm6696 = vweird.f32 %v6690
        %vm6697 = vmor %vm6695, %vm6696
        %v6698 = vsel %vm6697, %v6690, %v6694
        %v6699 = vand.u32 2147483647, %v6688
        %vm6700 = vcmp.eq.f32.partialorder %v6699, 8.507059e+37
        %v6701 = vand.u32 %v6688, 2147483648
        %v6702 = vor.u32 1.1754944e-38, %v6701
        %v6703 = vsel %vm6700, %v6702, %v6698
        %v6704 = vmul.f32 1.0, %v6703
        %v6705 = vrcp.pop %v6689
        %v6706 = vmul.f32 %v6689, %v6705
        %v6707 = vsub.f32 1.0, %v6706
        %v6708 = vmul.f32 %v6705, %v6707
        %v6709 = vadd.f32 %v6705, %v6708
        %vm6710 = vweird.f32 %v6689
        %vm6711 = vweird.f32 %v6705
        %vm6712 = vmor %vm6710, %vm6711
        %v6713 = vsel %vm6712, %v6705, %v6709
        %v6714 = vand.u32 2147483647, %v6689
        %vm6715 = vcmp.eq.f32.partialorder %v6714, 8.507059e+37
        %v6716 = vand.u32 %v6689, 2147483648
        %v6717 = vor.u32 1.1754944e-38, %v6716
        %v6718 = vsel %vm6715, %v6717, %v6713
        %v6719 = vmul.f32 1.0, %v6718
        %s6720 = scalar_lea.vmem %s7, 300
        %v6721 = vld [vmem:[%s6720] sm:$0xf]
        %v6722 = vld [vmem:[%s6720 + $0x4] sm:$0xf]
        %v6723 = vld [vmem:[%s6720 + $0x8] sm:$0xf]
        %v6724 = vld [vmem:[%s6720 + $0xc] sm:$0xf]
        %v6725 = vld [vmem:[%s6720 + $0x10] sm:$0xf]
        %v6726 = vld [vmem:[%s6720 + $0x14] sm:$0xf]
        %v6727 = vld [vmem:[%s6720 + $0x18] sm:$0xf]
        %v6728 = vld [vmem:[%s6720 + $0x1c] sm:$0xf]
        %v6729 = vld [vmem:[%s6720 + $0x20] sm:$0xf]
        %v6730 = vld [vmem:[%s6720 + $0x24] sm:$0xf]
        %v6731 = vld [vmem:[%s6720 + $0x28] sm:$0xf]
        %v6732 = vld [vmem:[%s6720 + $0x2c] sm:$0xf]
        %v6733 = vld [vmem:[%s6720 + $0x30] sm:$0xf]
        %v6734 = vld [vmem:[%s6720 + $0x34] sm:$0xf]
        %v6735 = vld [vmem:[%s6720 + $0x38] sm:$0xf]
        %v6736 = vld [vmem:[%s6720 + $0x3c] sm:$0xf]
        %v6737 = vld [vmem:[%s6720 + $0x40] sm:$0xf]
        %v6738 = vld [vmem:[%s6720 + $0x44] sm:$0xf]
        %v6739 = vld [vmem:[%s6720 + $0x48] sm:$0xf]
        %v6740 = vld [vmem:[%s6720 + $0x4c] sm:$0xf]
        %v6741 = vld [vmem:[%s6720 + $0x50] sm:$0xf]
        %v6742 = vld [vmem:[%s6720 + $0x54] sm:$0xf]
        %v6743 = vld [vmem:[%s6720 + $0x58] sm:$0xf]
        %v6744 = vld [vmem:[%s6720 + $0x5c] sm:$0xf]
        %v6745 = vld [vmem:[%s6720 + $0x60] sm:$0xf]
        %s6746 = scalar_lea.vmem %s485, 48
        %v6747 = vld [vmem:[%s6746] sm:$0xff]
        %v6748 = vld [vmem:[%s6746 + $0x8] sm:$0xff]
        %v6774 = vunpack.c.l.b16 %v6721
        %v6775 = vunpack.c.l.b16 %v6722
        %v6776 = vunpack.c.l.b16 %v6723
        %v6777 = vunpack.c.l.b16 %v6724
        %v6778 = vunpack.c.l.b16 %v6725
        %v6779 = vunpack.c.l.b16 %v6726
        %v6780 = vunpack.c.l.b16 %v6727
        %v6781 = vunpack.c.l.b16 %v6728
        %v6782 = vunpack.c.l.b16 %v6729
        %v6783 = vunpack.c.l.b16 %v6730
        %v6784 = vunpack.c.l.b16 %v6731
        %v6785 = vunpack.c.l.b16 %v6732
        %v6786 = vunpack.c.l.b16 %v6733
        %v6787 = vunpack.c.l.b16 %v6734
        %v6788 = vunpack.c.l.b16 %v6735
        %v6789 = vunpack.c.l.b16 %v6736
        %v6790 = vunpack.c.l.b16 %v6737
        %v6791 = vunpack.c.l.b16 %v6738
        %v6792 = vunpack.c.l.b16 %v6739
        %v6793 = vunpack.c.l.b16 %v6740
        %v6794 = vunpack.c.l.b16 %v6741
        %v6795 = vunpack.c.l.b16 %v6742
        %v6796 = vunpack.c.l.b16 %v6743
        %v6797 = vunpack.c.l.b16 %v6744
        %v6798 = vunpack.c.l.b16 %v6745
        %v6799 = vpack.c.b16 %v6775, %v6774
        %v6800 = vpack.c.b16 %v6777, %v6776
        %v6801 = vpack.c.b16 %v6779, %v6778
        %v6802 = vpack.c.b16 %v6781, %v6780
        %v6803 = vpack.c.b16 %v6783, %v6782
        %v6804 = vpack.c.b16 %v6785, %v6784
        %v6805 = vpack.c.b16 %v6787, %v6786
        %v6806 = vpack.c.b16 %v6789, %v6788
        %v6807 = vpack.c.b16 %v6791, %v6790
        %v6808 = vpack.c.b16 %v6793, %v6792
        %v6809 = vpack.c.b16 %v6795, %v6794
        %v6810 = vpack.c.b16 %v6797, %v6796
        %v6811 = vpack.c.b16 %v6798, %v6798
        %v6825 = vsel %vm6477, %v6811, 0
        %6827 = vmatpush.bf16.msra.mxu0 %v6806
        %6828 = vmatpush.bf16.msra.mxu0 %v6805
        %6829 = vmatpush.bf16.msra.mxu0 %v6804
        %6830 = vmatpush.bf16.msra.mxu0 %v6803
        %6831 = vmatpush.bf16.msra.mxu0 %v6802
        %6832 = vmatpush.bf16.msra.mxu0 %v6801
        %6833 = vmatpush.bf16.msra.mxu0 %v6800
        %6834 = vmatpush.bf16.msra.mxu0 %v6799
        %6835 = vmatmul.bf16.gmra.mxu0 %v6395
        %v6836 = vpop.f32.mrf.mxu0
        %v6837 = vadd.f32 %v6747, %v6836
        %v6838 = vpop.f32.mrf.mxu0
        %v6839 = vadd.f32 %v6748, %v6838
        %6840 = vdwg.mxu0
        %6841 = vmatpush.bf16.msra.mxu0 0
        %6842 = vmatpush.bf16.msra.mxu0 0
        %6843 = vmatpush.bf16.msra.mxu0 0
        %6844 = vmatpush.bf16.msra.mxu0 %v6825
        %6845 = vmatpush.bf16.msra.mxu0 %v6810
        %6846 = vmatpush.bf16.msra.mxu0 %v6809
        %6847 = vmatpush.bf16.msra.mxu0 %v6808
        %6848 = vmatpush.bf16.msra.mxu0 %v6807
        %6849 = vmatmul.bf16.gmra.mxu0 %v6475
        %v6850 = vpop.f32.mrf.mxu0
        %v6851 = vadd.f32 %v6837, %v6850
        %v6852 = vpop.f32.mrf.mxu0
        %v6853 = vadd.f32 %v6839, %v6852
        %6854 = vdwg.mxu0
        %v6855 = vtanh.pop %v6851
        %v6856 = vtanh.pop %v6853
        %v6857 = vld [vmem:[#allocation7] sm:$0xff]
        %v6858 = vld [vmem:[#allocation7 + $0x8] sm:$0xff]
        %v6859 = vmul.f32 %v6531, %v6857
        %v6860 = vmul.f32 %v6546, %v6858
        %v6861 = vmul.f32 %v6704, %v6855
        %v6862 = vmul.f32 %v6719, %v6856
        %v6863 = vadd.f32 %v6859, %v6861
        %v6864 = vadd.f32 %v6860, %v6862
        %6865 = vst.msk [vmem:[#allocation7] sm:$0xff] %vm1979, %v6863
        %6866 = vst.msk [vmem:[#allocation7 + $0x8] sm:$0xff] %vm1979, %v6864
        %v6867 = vld [vmem:[#allocation5] sm:$0xff]
        %v6868 = vld [vmem:[#allocation5 + $0x8] sm:$0xff]
        %s6869 = scalar_lea.vmem %s7, 200
        %v6870 = vld [vmem:[%s6869] sm:$0xf]
        %v6871 = vld [vmem:[%s6869 + $0x4] sm:$0xf]
        %v6872 = vld [vmem:[%s6869 + $0x8] sm:$0xf]
        %v6873 = vld [vmem:[%s6869 + $0xc] sm:$0xf]
        %v6874 = vld [vmem:[%s6869 + $0x10] sm:$0xf]
        %v6875 = vld [vmem:[%s6869 + $0x14] sm:$0xf]
        %v6876 = vld [vmem:[%s6869 + $0x18] sm:$0xf]
        %v6877 = vld [vmem:[%s6869 + $0x1c] sm:$0xf]
        %v6878 = vld [vmem:[%s6869 + $0x20] sm:$0xf]
        %v6879 = vld [vmem:[%s6869 + $0x24] sm:$0xf]
        %v6880 = vld [vmem:[%s6869 + $0x28] sm:$0xf]
        %v6881 = vld [vmem:[%s6869 + $0x2c] sm:$0xf]
        %v6882 = vld [vmem:[%s6869 + $0x30] sm:$0xf]
        %v6883 = vld [vmem:[%s6869 + $0x34] sm:$0xf]
        %v6884 = vld [vmem:[%s6869 + $0x38] sm:$0xf]
        %v6885 = vld [vmem:[%s6869 + $0x3c] sm:$0xf]
        %v6886 = vld [vmem:[%s6869 + $0x40] sm:$0xf]
        %v6887 = vld [vmem:[%s6869 + $0x44] sm:$0xf]
        %v6888 = vld [vmem:[%s6869 + $0x48] sm:$0xf]
        %v6889 = vld [vmem:[%s6869 + $0x4c] sm:$0xf]
        %v6890 = vld [vmem:[%s6869 + $0x50] sm:$0xf]
        %v6891 = vld [vmem:[%s6869 + $0x54] sm:$0xf]
        %v6892 = vld [vmem:[%s6869 + $0x58] sm:$0xf]
        %v6893 = vld [vmem:[%s6869 + $0x5c] sm:$0xf]
        %v6894 = vld [vmem:[%s6869 + $0x60] sm:$0xf]
        %s6895 = scalar_lea.vmem %s485, 32
        %v6896 = vld [vmem:[%s6895] sm:$0xff]
        %v6897 = vld [vmem:[%s6895 + $0x8] sm:$0xff]
        %v6900 = vunpack.c.l.b16 %v6867
        %v6901 = vunpack.c.h.b16 %v6867
        %v6902 = vunpack.c.l.b16 %v6868
        %v6903 = vunpack.c.h.b16 %v6868
        %v6904 = vpack.c.b16 %v6902, %v6900
        %v6905 = vpack.c.b16 %v6903, %v6901
        %v6932 = vunpack.c.l.b16 %v6870
        %v6933 = vunpack.c.l.b16 %v6871
        %v6934 = vunpack.c.l.b16 %v6872
        %v6935 = vunpack.c.l.b16 %v6873
        %v6936 = vunpack.c.l.b16 %v6874
        %v6937 = vunpack.c.l.b16 %v6875
        %v6938 = vunpack.c.l.b16 %v6876
        %v6939 = vunpack.c.l.b16 %v6877
        %v6940 = vunpack.c.l.b16 %v6878
        %v6941 = vunpack.c.l.b16 %v6879
        %v6942 = vunpack.c.l.b16 %v6880
        %v6943 = vunpack.c.l.b16 %v6881
        %v6944 = vunpack.c.l.b16 %v6882
        %v6945 = vunpack.c.l.b16 %v6883
        %v6946 = vunpack.c.l.b16 %v6884
        %v6947 = vunpack.c.l.b16 %v6885
        %v6948 = vunpack.c.l.b16 %v6886
        %v6949 = vunpack.c.l.b16 %v6887
        %v6950 = vunpack.c.l.b16 %v6888
        %v6951 = vunpack.c.l.b16 %v6889
        %v6952 = vunpack.c.l.b16 %v6890
        %v6953 = vunpack.c.l.b16 %v6891
        %v6954 = vunpack.c.l.b16 %v6892
        %v6955 = vunpack.c.l.b16 %v6893
        %v6956 = vunpack.c.l.b16 %v6894
        %v6957 = vpack.c.b16 %v6933, %v6932
        %v6958 = vpack.c.b16 %v6935, %v6934
        %v6959 = vpack.c.b16 %v6937, %v6936
        %v6960 = vpack.c.b16 %v6939, %v6938
        %v6961 = vpack.c.b16 %v6941, %v6940
        %v6962 = vpack.c.b16 %v6943, %v6942
        %v6963 = vpack.c.b16 %v6945, %v6944
        %v6964 = vpack.c.b16 %v6947, %v6946
        %v6965 = vpack.c.b16 %v6949, %v6948
        %v6966 = vpack.c.b16 %v6951, %v6950
        %v6967 = vpack.c.b16 %v6953, %v6952
        %v6968 = vpack.c.b16 %v6955, %v6954
        %v6969 = vpack.c.b16 %v6956, %v6956
        %v6983 = vsel %vm6473, %v6905, 0
        %v6986 = vsel %vm6477, %v6969, 0
        %6988 = vmatpush.bf16.msra.mxu0 %v6964
        %6989 = vmatpush.bf16.msra.mxu0 %v6963
        %6990 = vmatpush.bf16.msra.mxu0 %v6962
        %6991 = vmatpush.bf16.msra.mxu0 %v6961
        %6992 = vmatpush.bf16.msra.mxu0 %v6960
        %6993 = vmatpush.bf16.msra.mxu0 %v6959
        %6994 = vmatpush.bf16.msra.mxu0 %v6958
        %6995 = vmatpush.bf16.msra.mxu0 %v6957
        %6996 = vmatmul.bf16.gmra.mxu0 %v6904
        %v6997 = vpop.f32.mrf.mxu0
        %v6998 = vadd.f32 %v6896, %v6997
        %v6999 = vpop.f32.mrf.mxu0
        %v7000 = vadd.f32 %v6897, %v6999
        %7001 = vdwg.mxu0
        %7002 = vmatpush.bf16.msra.mxu0 0
        %7003 = vmatpush.bf16.msra.mxu0 0
        %7004 = vmatpush.bf16.msra.mxu0 0
        %7005 = vmatpush.bf16.msra.mxu0 %v6986
        %7006 = vmatpush.bf16.msra.mxu0 %v6968
        %7007 = vmatpush.bf16.msra.mxu0 %v6967
        %7008 = vmatpush.bf16.msra.mxu0 %v6966
        %7009 = vmatpush.bf16.msra.mxu0 %v6965
        %7010 = vmatmul.bf16.gmra.mxu0 %v6983
        %v7011 = vpop.f32.mrf.mxu0
        %v7012 = vadd.f32 %v6998, %v7011
        %v7013 = vpop.f32.mrf.mxu0
        %v7014 = vadd.f32 %v7000, %v7013
        %7015 = vdwg.mxu0
        %v7016 = vxor.u32 %v7012, 2147483648
        %v7017 = vxor.u32 %v7014, 2147483648
        %v7018 = vmul.f32 %v7016, 1.442695
        %v7019 = vpow.pop %v7018
        %v7020 = vmul.f32 %v7017, 1.442695
        %v7021 = vpow.pop %v7020
        %v7022 = vadd.f32 %v7019, 1.0
        %v7023 = vadd.f32 %v7021, 1.0
        %v7024 = vrcp.pop %v7022
        %v7025 = vmul.f32 %v7022, %v7024
        %v7026 = vsub.f32 1.0, %v7025
        %v7027 = vmul.f32 %v7024, %v7026
        %v7028 = vadd.f32 %v7024, %v7027
        %vm7029 = vweird.f32 %v7022
        %vm7030 = vweird.f32 %v7024
        %vm7031 = vmor %vm7029, %vm7030
        %v7032 = vsel %vm7031, %v7024, %v7028
        %v7033 = vand.u32 2147483647, %v7022
        %vm7034 = vcmp.eq.f32.partialorder %v7033, 8.507059e+37
        %v7035 = vand.u32 %v7022, 2147483648
        %v7036 = vor.u32 1.1754944e-38, %v7035
        %v7037 = vsel %vm7034, %v7036, %v7032
        %v7038 = vmul.f32 1.0, %v7037
        %v7039 = vrcp.pop %v7023
        %v7040 = vmul.f32 %v7023, %v7039
        %v7041 = vsub.f32 1.0, %v7040
        %v7042 = vmul.f32 %v7039, %v7041
        %v7043 = vadd.f32 %v7039, %v7042
        %vm7044 = vweird.f32 %v7023
        %vm7045 = vweird.f32 %v7039
        %vm7046 = vmor %vm7044, %vm7045
        %v7047 = vsel %vm7046, %v7039, %v7043
        %v7048 = vand.u32 2147483647, %v7023
        %vm7049 = vcmp.eq.f32.partialorder %v7048, 8.507059e+37
        %v7050 = vand.u32 %v7023, 2147483648
        %v7051 = vor.u32 1.1754944e-38, %v7050
        %v7052 = vsel %vm7049, %v7051, %v7047
        %v7053 = vmul.f32 1.0, %v7052
        %v7054 = vtanh.pop %v6863
        %v7055 = vtanh.pop %v6864
        %v7056 = vmul.f32 %v7038, %v7054
        %v7057 = vmul.f32 %v7053, %v7055
        %v7058 = vpack.c.bf16 %v7056, %v7056
        %v7059 = vpack.c.bf16 %v7057, %v7057
        %7060 = vst.msk [vmem:[#allocation2 + $0x8] sm:$0xf] %vm615, %v7058
        %7061 = vst.msk [vmem:[#allocation2 + $0xc] sm:$0xf] %vm615, %v7059
        %v7062 = vld [vmem:[%s490] sm:$0xff]
        %v7063 = vld [vmem:[%s490 + $0x8] sm:$0xff]
        %v7064 = vld [vmem:[%s9] sm:$0xf]
        %v7065 = vld [vmem:[%s9 + $0x4] sm:$0xf]
        %v7066 = vld [vmem:[%s9 + $0x8] sm:$0xf]
        %v7067 = vld [vmem:[%s9 + $0xc] sm:$0xf]
        %v7070 = vunpack.c.l.b16 %v7058
        %v7071 = vunpack.c.l.b16 %v7059
        %v7072 = vpack.c.b16 %v7071, %v7070
        %v7077 = vunpack.c.l.b16 %v7064
        %v7078 = vunpack.c.l.b16 %v7065
        %v7079 = vunpack.c.l.b16 %v7066
        %v7080 = vunpack.c.l.b16 %v7067
        %v7081 = vpack.c.b16 %v7078, %v7077
        %v7082 = vpack.c.b16 %v7080, %v7079
        %v7086 = vsel %vm1979, %v7072, 0
        %7088 = vmatpush.bf16.msra.mxu0 0
        %7089 = vmatpush.bf16.msra.mxu0 0
        %7090 = vmatpush.bf16.msra.mxu0 0
        %7091 = vmatpush.bf16.msra.mxu0 0
        %7092 = vmatpush.bf16.msra.mxu0 0
        %7093 = vmatpush.bf16.msra.mxu0 0
        %7094 = vmatpush.bf16.msra.mxu0 %v7082
        %7095 = vmatpush.bf16.msra.mxu0 %v7081
        %7096 = vmatmul.bf16.gmra.mxu0 %v7086
        %v7097 = vpop.f32.mrf.mxu0
        %v7098 = vadd.f32 0.0, %v7097
        %v7099 = vpop.f32.mrf.mxu0
        %v7100 = vadd.f32 0.0, %v7099
        %7101 = vdwg.mxu0
        %v7102 = vadd.f32 %v7062, %v7098
        %v7103 = vadd.f32 %v7063, %v7100
        %7104 = vst [vmem:[%s490] sm:$0xff] %v7102
        %7105 = vst [vmem:[%s490 + $0x8] sm:$0xff] %v7103
        %p7106 = scmp.eq.s32.totalorder %s32, 2
        // Predicated region
        $region69: #{generator_forward.1} parent=63 // pred_check
          %p7107 = pneg %p7106
        $region70: #{generator_forward.1} parent=63 // pred_check_branch
          %7109 = sbr.rel (%p7107) target = $region72
        $region71: #{generator_forward.1} parent=63 // pred_region
          %v7110 = vld [vmem:[%s490] sm:$0xff]
          %v7111 = vld [vmem:[%s490 + $0x8] sm:$0xff]
          %v7112 = vld [vmem:[%s10] sm:$0x1]
          %v7114 = vperm.slane %v7112, 0
          %v7116 = vadd.f32 %v7110, %v7114
          %v7117 = vadd.f32 %v7111, %v7114
          %v7118 = vxor.u32 %v7116, 2147483648
          %v7119 = vxor.u32 %v7117, 2147483648
          %v7120 = vmul.f32 %v7118, 1.442695
          %v7121 = vpow.pop %v7120
          %v7122 = vmul.f32 %v7119, 1.442695
          %v7123 = vpow.pop %v7122
          %v7124 = vadd.f32 %v7121, 1.0
          %v7125 = vadd.f32 %v7123, 1.0
          %v7126 = vrcp.pop %v7124
          %v7127 = vmul.f32 %v7124, %v7126
          %v7128 = vsub.f32 1.0, %v7127
          %v7129 = vmul.f32 %v7126, %v7128
          %v7130 = vadd.f32 %v7126, %v7129
          %vm7131 = vweird.f32 %v7124
          %vm7132 = vweird.f32 %v7126
          %vm7133 = vmor %vm7131, %vm7132
          %v7134 = vsel %vm7133, %v7126, %v7130
          %v7135 = vand.u32 2147483647, %v7124
          %vm7136 = vcmp.eq.f32.partialorder %v7135, 8.507059e+37
          %v7137 = vand.u32 %v7124, 2147483648
          %v7138 = vor.u32 1.1754944e-38, %v7137
          %v7139 = vsel %vm7136, %v7138, %v7134
          %v7140 = vmul.f32 1.0, %v7139
          %v7141 = vrcp.pop %v7125
          %v7142 = vmul.f32 %v7125, %v7141
          %v7143 = vsub.f32 1.0, %v7142
          %v7144 = vmul.f32 %v7141, %v7143
          %v7145 = vadd.f32 %v7141, %v7144
          %vm7146 = vweird.f32 %v7125
          %vm7147 = vweird.f32 %v7141
          %vm7148 = vmor %vm7146, %vm7147
          %v7149 = vsel %vm7148, %v7141, %v7145
          %v7150 = vand.u32 2147483647, %v7125
          %vm7151 = vcmp.eq.f32.partialorder %v7150, 8.507059e+37
          %v7152 = vand.u32 %v7125, 2147483648
          %v7153 = vor.u32 1.1754944e-38, %v7152
          %v7154 = vsel %vm7151, %v7153, %v7149
          %v7155 = vmul.f32 1.0, %v7154
          %7156 = vst [vmem:[%s490] sm:$0xff] %v7140
          %7157 = vst [vmem:[%s490 + $0x8] sm:$0xff] %v7155
        $region72: #{generator_forward.1} parent=63 // pred_fallthru
          _
        %p7158 = scmp.lt.s32.totalorder %s31, 1
        %s7159 = scalar_select %p7158, %s31, 1
        %s7160 = smul.addr %s7159, 2
        %s7161 = smul.addr %s7160, 8
        %s7162 = scalar_lea.vmem %s11, %s7161
        %s7163 = sand.u32 %s323, 1
        %s7164 = scalar_lea.sflag [#allocation9], %s7163
        %s7165 = sand.u32 %s323, 1
        %s7166 = smul.addr %s7165, 16
        %s7167 = scalar_lea.vmem [#allocation8], %s7166
        // Predicated region
        $region73: #{generator_forward.1} parent=63 // pred_check
          %p7168 = pneg %p307
        $region74: #{generator_forward.1} parent=63 // pred_check_branch
          %7170 = sbr.rel (%p7168) target = $region76
        $region75: #{generator_forward.1} parent=63 // pred_region
          _
        $region76: #{generator_forward.1} parent=63 // pred_fallthru
          _
        // Predicated region
        $region77: #{generator_forward.1} parent=63 // pred_check
          %p7171 = pneg %p333
        $region78: #{generator_forward.1} parent=63 // pred_check_branch
          %7173 = sbr.rel (%p7171) target = $region80
        $region79: #{generator_forward.1} parent=63 // pred_region
          %7175 = vsyncadd %s7164, 0
          %s7176 = smul.addr %s31, 2
          %s7177 = smul.addr %s7176, 8
          %s7178 = scalar_lea.hbm %s12, %s7177
          %s7179 = sshll.u32 %s7167, 4
          %s7180 = int_to_ptr.vmem [resolvable:$true] %s7179
          %s7181 = sshll.u32 %s7178, 4
          %s7182 = int_to_ptr.hbm [resolvable:$true] %s7181
          %7187 = dma.vmem_to_hbm [thread:$0]  %s7180, 256, %s7182, %s7164, 128, 128, 8
        $region80: #{generator_forward.1} parent=63 // pred_fallthru
          _
      $region64: #{generator_forward.1} parent=5 // pred_fallthru
        _
      %p7188 = scmp.le.s32.totalorder 2, %s22
      // Predicated region
      $region81: #{generator_forward.1} parent=5 // pred_check
        %p7189 = pneg %p7188
      $region82: #{generator_forward.1} parent=5 // pred_check_branch
        %7191 = sbr.rel (%p7189) target = $region84
      $region83: #{generator_forward.1} parent=5 // pred_region
        %s7192 = ssub.s32 %s22, 2
        // Predicated region
        $region85: #{generator_forward.1} parent=83 // pred_check
          %p7193 = pneg %p313
        $region86: #{generator_forward.1} parent=83 // pred_check_branch
          %7195 = sbr.rel (%p7193) target = $region88
        $region87: #{generator_forward.1} parent=83 // pred_region
          %p7196 = scmp.lt.s32.totalorder %s33, 1
          %s7197 = scalar_select %p7196, %s33, 1
          %s7198 = smul.addr %s7197, 2
          %s7199 = smul.addr %s7198, 8
          %s7200 = scalar_lea.vmem %s11, %s7199
        $region88: #{generator_forward.1} parent=83 // pred_fallthru
          _
        // Predicated region
        $region89: #{generator_forward.1} parent=83 // pred_check
          %p7201 = pneg %p339
        $region90: #{generator_forward.1} parent=83 // pred_check_branch
          %7203 = sbr.rel (%p7201) target = $region92
        $region91: #{generator_forward.1} parent=83 // pred_region
          %s7204 = sand.u32 %s324, 1
          %s7205 = scalar_lea.sflag [#allocation9], %s7204
          %s7206 = sand.u32 %s324, 1
          %s7207 = smul.addr %s7206, 16
          %s7208 = scalar_lea.vmem [#allocation8], %s7207
          %7210 = dma.done %s7205, 256
        $region92: #{generator_forward.1} parent=83 // pred_fallthru
          _
      $region84: #{generator_forward.1} parent=5 // pred_fallthru
        _
    $region6: #{generator_forward.1} parent=1 // loop_footer
      %s26 = sadd.s32 1, %s22
    $region7: #{generator_forward.1} parent=1 // loop_footer_branch
      %21 = sbr.rel target = $region3
    $region8: #{generator_forward.1} parent=1 // loop_exit
      _
    %7211 = vsyncpa [#allocation9], 1
    %s7212 = scalar_lea.sflag [#allocation9], 1
    %7213 = vsyncpa %s7212, 1

</llo_original>
